<compile_context>
chip_gen: v5e
topology: v5e:2x2
jax: 0.10.0
libtpu: 0.0.40
codegen_flags: <defaults>
</compile_context>

<pallas_src>
import jax
import jax.numpy as jnp
from jax.experimental import pallas as pl
from jax.experimental.pallas import tpu as pltpu

NUM_HEADS = 6
HEAD_SIZE = 64
N_EMBD = NUM_HEADS * HEAD_SIZE       # 384
FFN_HIDDEN = 4 * N_EMBD              # 1536
LN_EPS = 1e-5


def _norm(h):
    """LayerNorm without affine (gamma/beta are folded into the next matmul)."""
    mu = jnp.mean(h, axis=-1, keepdims=True)
    var = jnp.mean((h - mu) ** 2, axis=-1, keepdims=True)
    return (h - mu) * jax.lax.rsqrt(var + LN_EPS)


def block_kernel(x_ref,
                 wqkv_ref, bqkv_ref,
                 wp_ref, bp_ref,
                 w1_ref, b1_ref,
                 w2_ref, b2_ref,
                 o_ref,
                 attn_ref):
    nb, T, C = x_ref.shape
    M = nb * T
    x = x_ref[...].reshape(M, C)                       # (M, C) f32

    # ---- LayerNorm 1 (affine folded into wqkv/bqkv) ----
    h1 = _norm(x)

    # ---- Fused QKV projection: one wide bf16 matmul, f32 accumulation.
    #      Gamma/beta of ln1 and the 1/sqrt(D) q-scale are pre-folded into
    #      wqkv / bqkv by the wrapper. ----
    qkv = jnp.dot(h1.astype(jnp.bfloat16), wqkv_ref[...],
                  preferred_element_type=jnp.float32) + bqkv_ref[...]  # (M, 3C)
    q = qkv[:, :C].astype(jnp.bfloat16)                # already scaled
    k = qkv[:, C:2 * C].astype(jnp.bfloat16)
    v = qkv[:, 2 * C:].astype(jnp.bfloat16)

    def split_heads(t):                                # (M, C) -> (H*nb, T, D)
        heads = [t[:, h * HEAD_SIZE:(h + 1) * HEAD_SIZE]
                 for h in range(NUM_HEADS)]
        return jnp.stack(heads, axis=0).reshape(NUM_HEADS * nb, T, HEAD_SIZE)

    qh, kh, vh = split_heads(q), split_heads(k), split_heads(v)

    # ---- Causal attention, all (head, batch) pairs in one batched matmul ----
    wei = jnp.einsum('gqd,gkd->gqk', qh, kh,
                     preferred_element_type=jnp.float32)    # (G, T, T) f32
    row = jax.lax.broadcasted_iota(jnp.int32, (T, T), 0)
    col = jax.lax.broadcasted_iota(jnp.int32, (T, T), 1)
    causal = row >= col
    wei = jnp.where(causal[None, :, :], wei, -jnp.inf)
    wei = wei - jnp.max(wei, axis=-1, keepdims=True)
    e = jnp.exp(wei)
    p = e * pl.reciprocal(jnp.sum(e, axis=-1, keepdims=True), approx=True)

    out_h = jnp.einsum('gqk,gkd->gqd', p.astype(jnp.bfloat16), vh,
                       preferred_element_type=jnp.float32)  # (G, T, D) f32

    # Merge heads back to (M, C) by writing into the VMEM scratch at head
    # offsets (avoids a lane-axis concatenate).
    for h in range(NUM_HEADS):
        attn_ref[:, h * HEAD_SIZE:(h + 1) * HEAD_SIZE] = (
            out_h[h * nb:(h + 1) * nb].reshape(M, HEAD_SIZE))

    attn = jnp.dot(attn_ref[...].astype(jnp.bfloat16), wp_ref[...],
                   preferred_element_type=jnp.float32) + bp_ref[...]

    x1 = x + attn                                      # residual 1 (f32)

    # ---- LayerNorm 2 (affine folded into w1/b1) + FeedForward ----
    h2 = _norm(x1)
    f = jnp.dot(h2.astype(jnp.bfloat16), w1_ref[...],
                preferred_element_type=jnp.float32) + b1_ref[...]
    f = jnp.maximum(f, 0.0)
    f = jnp.dot(f.astype(jnp.bfloat16), w2_ref[...],
                preferred_element_type=jnp.float32) + b2_ref[...]

    o_ref[...] = (x1 + f).reshape(nb, T, C)            # residual 2


def _choose_batch_tile(B, T, target_rows):
    # Largest divisor nb of B with nb*T <= target_rows rows per grid step;
    # prefer leaving >= 2 grid steps so both v7x TensorCores (and the
    # software pipeline) stay fed.
    divisors = [d for d in range(1, B + 1) if B % d == 0]
    fitting = [d for d in divisors if d * T <= target_rows] or [1]
    multi = [d for d in fitting if B // d >= 2]
    return max(multi) if multi else max(fitting)


def transformer_block(x, params, *, target_rows=256):
    B, T, C = x.shape
    assert C == N_EMBD
    (g1, b1_ln, wq, wk, wv, wp, bp, g2, b2_ln, w1, bf1, w2, bf2) = params

    scale = HEAD_SIZE ** -0.5

    # --- Fold LayerNorm1 affine + q-scale into the fused QKV matmul ---
    wqkv = jnp.concatenate([wq, wk, wv], axis=1)                 # (C, 3C) f32
    bqkv = b1_ln @ wqkv                                          # (1, 3C) f32
    wqkv = wqkv * g1.reshape(C, 1)                               # fold gamma
    col_scale = jnp.concatenate(
        [jnp.full((1, C), scale, jnp.float32),
         jnp.ones((1, 2 * C), jnp.float32)], axis=1)
    wqkv = wqkv * col_scale                                      # fold q scale
    bqkv = bqkv * col_scale

    # --- Fold LayerNorm2 affine into the first FFN matmul ---
    b1_fold = bf1 + b2_ln @ w1                                   # (1, 4C) f32
    w1_fold = w1 * g2.reshape(C, 1)

    # Big matrices in bf16 (matmuls accumulate in f32); biases stay f32.
    wqkv_b = wqkv.astype(jnp.bfloat16)
    wp_b = wp.astype(jnp.bfloat16)
    w1_b = w1_fold.astype(jnp.bfloat16)
    w2_b = w2.astype(jnp.bfloat16)

    nb = _choose_batch_tile(B, T, target_rows)
    grid = (B // nb,)

    def _full(shape):
        zeros = (0,) * len(shape)
        return pl.BlockSpec(shape, lambda i, z=zeros: z)

    in_specs = [
        pl.BlockSpec((nb, T, C), lambda i: (i, 0, 0)),     # x tile
        _full((C, 3 * C)), _full((1, 3 * C)),              # Wqkv (bf16), bqkv
        _full((C, C)), _full((1, C)),                      # Wp (bf16), bp
        _full((C, FFN_HIDDEN)), _full((1, FFN_HIDDEN)),    # W1 (bf16), b1 (folded)
        _full((FFN_HIDDEN, C)), _full((1, C)),             # W2 (bf16), b2
    ]
    out_spec = pl.BlockSpec((nb, T, C), lambda i: (i, 0, 0))

    return pl.pallas_call(
        block_kernel,
        out_shape=jax.ShapeDtypeStruct((B, T, C), jnp.float32),
        grid_spec=pltpu.PrefetchScalarGridSpec(
            num_scalar_prefetch=0,
            grid=grid,
            in_specs=in_specs,
            out_specs=out_spec,
            scratch_shapes=[pltpu.VMEM((nb * T, C), jnp.float32)],
        ),
        compiler_params=pltpu.CompilerParams(
            dimension_semantics=("parallel",),
            vmem_limit_bytes=32 << 20,
        ),
    )(x, wqkv_b, bqkv, wp_b, bp, w1_b, b1_fold, w2_b, bf2)


def reference_block(x, params):
    (g1, b1, wq, wk, wv, wp, bp, g2, b2, w1, bf1, w2, bf2) = params

    def ln(h, g, b):
        mu = jnp.mean(h, axis=-1, keepdims=True)
        var = jnp.mean((h - mu) ** 2, axis=-1, keepdims=True)
        return (h - mu) * jax.lax.rsqrt(var + LN_EPS) * g + b

    B, T, C = x.shape
    h1 = ln(x, g1, b1)
    q = h1 @ wq
    k = h1 @ wk
    v = h1 @ wv
    qh = q.reshape(B, T, NUM_HEADS, HEAD_SIZE).transpose(0, 2, 1, 3)
    kh = k.reshape(B, T, NUM_HEADS, HEAD_SIZE).transpose(0, 2, 1, 3)
    vh = v.reshape(B, T, NUM_HEADS, HEAD_SIZE).transpose(0, 2, 1, 3)
    wei = jnp.einsum("bhqd,bhkd->bhqk", qh, kh) * (HEAD_SIZE ** -0.5)
    mask = jnp.tril(jnp.ones((T, T), bool))
    wei = jnp.where(mask, wei, -jnp.inf)
    wei = jax.nn.softmax(wei, axis=-1)
    out = jnp.einsum("bhqk,bhkd->bhqd", wei, vh).transpose(0, 2, 1, 3).reshape(B, T, C)
    x1 = x + out @ wp + bp
    h2 = ln(x1, g2, b2)
    f = jnp.maximum(h2 @ w1 + bf1, 0.0) @ w2 + bf2
    return x1 + f


if __name__ == "__main__":
    key = jax.random.PRNGKey(0)
    keys = jax.random.split(key, 16)

    B, T = 2, 8   # small batch / seq; embed dim fixed at 384 by the module

    x = jax.random.normal(keys[0], (B, T, N_EMBD), jnp.float32)

    s = 0.02
    params = (
        1.0 + s * jax.random.normal(keys[1], (1, N_EMBD), jnp.float32),   # ln1 gamma
        s * jax.random.normal(keys[2], (1, N_EMBD), jnp.float32),         # ln1 beta
        s * jax.random.normal(keys[3], (N_EMBD, N_EMBD), jnp.float32),    # Wq (heads concat)
        s * jax.random.normal(keys[4], (N_EMBD, N_EMBD), jnp.float32),    # Wk
        s * jax.random.normal(keys[5], (N_EMBD, N_EMBD), jnp.float32),    # Wv
        s * jax.random.normal(keys[6], (N_EMBD, N_EMBD), jnp.float32),    # Wp
        s * jax.random.normal(keys[7], (1, N_EMBD), jnp.float32),         # bp
        1.0 + s * jax.random.normal(keys[8], (1, N_EMBD), jnp.float32),   # ln2 gamma
        s * jax.random.normal(keys[9], (1, N_EMBD), jnp.float32),         # ln2 beta
        s * jax.random.normal(keys[10], (N_EMBD, FFN_HIDDEN), jnp.float32),  # W1
        s * jax.random.normal(keys[11], (1, FFN_HIDDEN), jnp.float32),       # b1
        s * jax.random.normal(keys[12], (FFN_HIDDEN, N_EMBD), jnp.float32),  # W2
        s * jax.random.normal(keys[13], (1, N_EMBD), jnp.float32),           # b2
    )

    out = transformer_block(x, params)
    out = jax.block_until_ready(out)

    ref = reference_block(x, params)
    assert out.shape == (B, T, N_EMBD)
    # bf16 matmul operands (f32 accumulation) -> relaxed tolerance.
    assert jnp.allclose(out, ref, atol=2e-2, rtol=2e-2), "mismatch vs reference"

    print("KERNEL_OK")
</pallas_src>

<mosaic_0001>
module attributes {stable_mosaic.version = 11 : i64} {
  func.func @block_kernel(%arg0: i32, %arg1: memref<1x8x384xf32, #tpu.memory_space<vmem>>, %arg2: memref<384x1152xbf16, #tpu.memory_space<vmem>>, %arg3: memref<1x1152xf32, #tpu.memory_space<vmem>>, %arg4: memref<384x384xbf16, #tpu.memory_space<vmem>>, %arg5: memref<1x384xf32, #tpu.memory_space<vmem>>, %arg6: memref<384x1536xbf16, #tpu.memory_space<vmem>>, %arg7: memref<1x1536xf32, #tpu.memory_space<vmem>>, %arg8: memref<1536x384xbf16, #tpu.memory_space<vmem>>, %arg9: memref<1x384xf32, #tpu.memory_space<vmem>>, %arg10: memref<1x8x384xf32, #tpu.memory_space<vmem>>, %arg11: memref<8x384xf32, #tpu.memory_space<vmem>>) attributes {dimension_semantics = [#tpu.dimension_semantics<parallel>], iteration_bounds = array<i64: 2>, scalar_prefetch = 0 : i64, scratch_operands = 1 : i64, tpu.core_type = #tpu.core_type<tc>, window_params = [{transform_indices = @transform_0, window_bounds = array<i64: 1, 8, 384>}, {pipeline_mode = #tpu.pipeline_mode<synchronous>, transform_indices = @transform_1, window_bounds = array<i64: 384, 1152>}, {pipeline_mode = #tpu.pipeline_mode<synchronous>, transform_indices = @transform_2, window_bounds = array<i64: 1, 1152>}, {pipeline_mode = #tpu.pipeline_mode<synchronous>, transform_indices = @transform_3, window_bounds = array<i64: 384, 384>}, {pipeline_mode = #tpu.pipeline_mode<synchronous>, transform_indices = @transform_4, window_bounds = array<i64: 1, 384>}, {pipeline_mode = #tpu.pipeline_mode<synchronous>, transform_indices = @transform_5, window_bounds = array<i64: 384, 1536>}, {pipeline_mode = #tpu.pipeline_mode<synchronous>, transform_indices = @transform_6, window_bounds = array<i64: 1, 1536>}, {pipeline_mode = #tpu.pipeline_mode<synchronous>, transform_indices = @transform_7, window_bounds = array<i64: 1536, 384>}, {pipeline_mode = #tpu.pipeline_mode<synchronous>, transform_indices = @transform_8, window_bounds = array<i64: 1, 384>}, {transform_indices = @transform_9, window_bounds = array<i64: 1, 8, 384>}]} {
    %c0 = arith.constant 0 : index
    %c0_0 = arith.constant 0 : index
    %c0_1 = arith.constant 0 : index
    %0 = vector.load %arg1[%c0, %c0_0, %c0_1] : memref<1x8x384xf32, #tpu.memory_space<vmem>>, vector<1x8x384xf32>
    %1 = vector.shape_cast %0 : vector<1x8x384xf32> to vector<8x384xf32>
    %cst = arith.constant dense<0.000000e+00> : vector<8xf32>
    %2 = vector.multi_reduction <add>, %1, %cst [1] : vector<8x384xf32> to vector<8xf32>
    %3 = vector.shape_cast %2 : vector<8xf32> to vector<8x1xf32>
    %cst_2 = arith.constant 3.840000e+02 : f32
    %4 = vector.broadcast %cst_2 : f32 to vector<8x1xf32>
    %5 = arith.divf %3, %4 : vector<8x1xf32>
    %6 = vector.broadcast %5 : vector<8x1xf32> to vector<8x384xf32>
    %7 = arith.subf %1, %6 : vector<8x384xf32>
    %8 = arith.mulf %7, %7 : vector<8x384xf32>
    %cst_3 = arith.constant dense<0.000000e+00> : vector<8xf32>
    %9 = vector.multi_reduction <add>, %8, %cst_3 [1] : vector<8x384xf32> to vector<8xf32>
    %10 = vector.shape_cast %9 : vector<8xf32> to vector<8x1xf32>
    %cst_4 = arith.constant 3.840000e+02 : f32
    %11 = vector.broadcast %cst_4 : f32 to vector<8x1xf32>
    %12 = arith.divf %10, %11 : vector<8x1xf32>
    %13 = vector.broadcast %5 : vector<8x1xf32> to vector<8x384xf32>
    %14 = arith.subf %1, %13 : vector<8x384xf32>
    %cst_5 = arith.constant 9.99999974E-6 : f32
    %15 = vector.broadcast %cst_5 : f32 to vector<8x1xf32>
    %16 = arith.addf %12, %15 : vector<8x1xf32>
    %17 = math.rsqrt %16 : vector<8x1xf32>
    %18 = vector.broadcast %17 : vector<8x1xf32> to vector<8x384xf32>
    %19 = arith.mulf %14, %18 : vector<8x384xf32>
    %20 = arith.truncf %19 : vector<8x384xf32> to vector<8x384xbf16>
    %c0_6 = arith.constant 0 : index
    %c0_7 = arith.constant 0 : index
    %21 = vector.load %arg2[%c0_6, %c0_7] : memref<384x1152xbf16, #tpu.memory_space<vmem>>, vector<384x1152xbf16>
    %cst_8 = arith.constant dense<0.000000e+00> : vector<8x1152xf32>
    %22 = tpu.matmul %20, %21, %cst_8 {dimension_numbers = #tpu.dot_dimension_numbers<[1], [0], [0], [1], [0, 0, 1, 1], [], []>} : vector<8x384xbf16>, vector<384x1152xbf16>, vector<8x1152xf32> -> vector<8x1152xf32>
    %c0_9 = arith.constant 0 : index
    %c0_10 = arith.constant 0 : index
    %23 = vector.load %arg3[%c0_9, %c0_10] : memref<1x1152xf32, #tpu.memory_space<vmem>>, vector<1x1152xf32>
    %24 = vector.broadcast %23 : vector<1x1152xf32> to vector<8x1152xf32>
    %25 = arith.addf %22, %24 : vector<8x1152xf32>
    %26 = vector.extract_strided_slice %25 {offsets = [0, 0], sizes = [8, 384], strides = [1, 1]} : vector<8x1152xf32> to vector<8x384xf32>
    %27 = arith.truncf %26 : vector<8x384xf32> to vector<8x384xbf16>
    %28 = vector.extract_strided_slice %25 {offsets = [0, 384], sizes = [8, 384], strides = [1, 1]} : vector<8x1152xf32> to vector<8x384xf32>
    %29 = arith.truncf %28 : vector<8x384xf32> to vector<8x384xbf16>
    %30 = vector.extract_strided_slice %25 {offsets = [0, 768], sizes = [8, 384], strides = [1, 1]} : vector<8x1152xf32> to vector<8x384xf32>
    %31 = arith.truncf %30 : vector<8x384xf32> to vector<8x384xbf16>
    %32 = vector.extract_strided_slice %27 {offsets = [0, 0], sizes = [8, 64], strides = [1, 1]} : vector<8x384xbf16> to vector<8x64xbf16>
    %33 = vector.extract_strided_slice %27 {offsets = [0, 64], sizes = [8, 64], strides = [1, 1]} : vector<8x384xbf16> to vector<8x64xbf16>
    %34 = vector.extract_strided_slice %27 {offsets = [0, 128], sizes = [8, 64], strides = [1, 1]} : vector<8x384xbf16> to vector<8x64xbf16>
    %35 = vector.extract_strided_slice %27 {offsets = [0, 192], sizes = [8, 64], strides = [1, 1]} : vector<8x384xbf16> to vector<8x64xbf16>
    %36 = vector.extract_strided_slice %27 {offsets = [0, 256], sizes = [8, 64], strides = [1, 1]} : vector<8x384xbf16> to vector<8x64xbf16>
    %37 = vector.extract_strided_slice %27 {offsets = [0, 320], sizes = [8, 64], strides = [1, 1]} : vector<8x384xbf16> to vector<8x64xbf16>
    %38 = vector.shape_cast %32 : vector<8x64xbf16> to vector<1x8x64xbf16>
    %39 = vector.shape_cast %33 : vector<8x64xbf16> to vector<1x8x64xbf16>
    %40 = vector.shape_cast %34 : vector<8x64xbf16> to vector<1x8x64xbf16>
    %41 = vector.shape_cast %35 : vector<8x64xbf16> to vector<1x8x64xbf16>
    %42 = vector.shape_cast %36 : vector<8x64xbf16> to vector<1x8x64xbf16>
    %43 = vector.shape_cast %37 : vector<8x64xbf16> to vector<1x8x64xbf16>
    %44 = tpu.concatenate %38, %39, %40, %41, %42, %43 in 0 : vector<1x8x64xbf16>, vector<1x8x64xbf16>, vector<1x8x64xbf16>, vector<1x8x64xbf16>, vector<1x8x64xbf16>, vector<1x8x64xbf16> -> vector<6x8x64xbf16>
    %45 = vector.extract_strided_slice %29 {offsets = [0, 0], sizes = [8, 64], strides = [1, 1]} : vector<8x384xbf16> to vector<8x64xbf16>
    %46 = vector.extract_strided_slice %29 {offsets = [0, 64], sizes = [8, 64], strides = [1, 1]} : vector<8x384xbf16> to vector<8x64xbf16>
    %47 = vector.extract_strided_slice %29 {offsets = [0, 128], sizes = [8, 64], strides = [1, 1]} : vector<8x384xbf16> to vector<8x64xbf16>
    %48 = vector.extract_strided_slice %29 {offsets = [0, 192], sizes = [8, 64], strides = [1, 1]} : vector<8x384xbf16> to vector<8x64xbf16>
    %49 = vector.extract_strided_slice %29 {offsets = [0, 256], sizes = [8, 64], strides = [1, 1]} : vector<8x384xbf16> to vector<8x64xbf16>
    %50 = vector.extract_strided_slice %29 {offsets = [0, 320], sizes = [8, 64], strides = [1, 1]} : vector<8x384xbf16> to vector<8x64xbf16>
    %51 = vector.shape_cast %45 : vector<8x64xbf16> to vector<1x8x64xbf16>
    %52 = vector.shape_cast %46 : vector<8x64xbf16> to vector<1x8x64xbf16>
    %53 = vector.shape_cast %47 : vector<8x64xbf16> to vector<1x8x64xbf16>
    %54 = vector.shape_cast %48 : vector<8x64xbf16> to vector<1x8x64xbf16>
    %55 = vector.shape_cast %49 : vector<8x64xbf16> to vector<1x8x64xbf16>
    %56 = vector.shape_cast %50 : vector<8x64xbf16> to vector<1x8x64xbf16>
    %57 = tpu.concatenate %51, %52, %53, %54, %55, %56 in 0 : vector<1x8x64xbf16>, vector<1x8x64xbf16>, vector<1x8x64xbf16>, vector<1x8x64xbf16>, vector<1x8x64xbf16>, vector<1x8x64xbf16> -> vector<6x8x64xbf16>
    %58 = vector.extract_strided_slice %31 {offsets = [0, 0], sizes = [8, 64], strides = [1, 1]} : vector<8x384xbf16> to vector<8x64xbf16>
    %59 = vector.extract_strided_slice %31 {offsets = [0, 64], sizes = [8, 64], strides = [1, 1]} : vector<8x384xbf16> to vector<8x64xbf16>
    %60 = vector.extract_strided_slice %31 {offsets = [0, 128], sizes = [8, 64], strides = [1, 1]} : vector<8x384xbf16> to vector<8x64xbf16>
    %61 = vector.extract_strided_slice %31 {offsets = [0, 192], sizes = [8, 64], strides = [1, 1]} : vector<8x384xbf16> to vector<8x64xbf16>
    %62 = vector.extract_strided_slice %31 {offsets = [0, 256], sizes = [8, 64], strides = [1, 1]} : vector<8x384xbf16> to vector<8x64xbf16>
    %63 = vector.extract_strided_slice %31 {offsets = [0, 320], sizes = [8, 64], strides = [1, 1]} : vector<8x384xbf16> to vector<8x64xbf16>
    %64 = vector.shape_cast %58 : vector<8x64xbf16> to vector<1x8x64xbf16>
    %65 = vector.shape_cast %59 : vector<8x64xbf16> to vector<1x8x64xbf16>
    %66 = vector.shape_cast %60 : vector<8x64xbf16> to vector<1x8x64xbf16>
    %67 = vector.shape_cast %61 : vector<8x64xbf16> to vector<1x8x64xbf16>
    %68 = vector.shape_cast %62 : vector<8x64xbf16> to vector<1x8x64xbf16>
    %69 = vector.shape_cast %63 : vector<8x64xbf16> to vector<1x8x64xbf16>
    %70 = tpu.concatenate %64, %65, %66, %67, %68, %69 in 0 : vector<1x8x64xbf16>, vector<1x8x64xbf16>, vector<1x8x64xbf16>, vector<1x8x64xbf16>, vector<1x8x64xbf16>, vector<1x8x64xbf16> -> vector<6x8x64xbf16>
    "tpu.trace_start"() <{level = 10 : i32, message = "gqd,gkd->gqk"}> : () -> ()
    %cst_11 = arith.constant dense<0.000000e+00> : vector<6x8x8xf32>
    %71 = tpu.matmul %44, %57, %cst_11 {dimension_numbers = #tpu.dot_dimension_numbers<[2], [2], [1], [1], [0, 0, 0, 1, 1, 1], [0], [0]>} : vector<6x8x64xbf16>, vector<6x8x64xbf16>, vector<6x8x8xf32> -> vector<6x8x8xf32>
    "tpu.trace_stop"() : () -> ()
    %72 = tpu.iota {dimensions = array<i32: 0>} : vector<8x8xi32>
    %73 = tpu.iota {dimensions = array<i32: 1>} : vector<8x8xi32>
    %74 = arith.cmpi sge, %72, %73 : vector<8x8xi32>
    %75 = vector.shape_cast %74 : vector<8x8xi1> to vector<1x8x8xi1>
    %cst_12 = arith.constant 0xFF800000 : f32
    %76 = vector.shape_cast %75 : vector<1x8x8xi1> to vector<1x8x8xi1>
    %77 = vector.broadcast %76 : vector<1x8x8xi1> to vector<6x8x8xi1>
    %78 = vector.broadcast %cst_12 : f32 to vector<6x8x8xf32>
    %79 = arith.select %77, %71, %78 : vector<6x8x8xi1>, vector<6x8x8xf32>
    %cst_13 = arith.constant dense<0xFF800000> : vector<6x8xf32>
    %80 = vector.multi_reduction <maximumf>, %79, %cst_13 [2] : vector<6x8x8xf32> to vector<6x8xf32>
    %81 = vector.shape_cast %80 : vector<6x8xf32> to vector<6x8x1xf32>
    %82 = vector.broadcast %81 : vector<6x8x1xf32> to vector<6x8x8xf32>
    %83 = arith.subf %79, %82 : vector<6x8x8xf32>
    %84 = math.exp %83 : vector<6x8x8xf32>
    %cst_14 = arith.constant dense<0.000000e+00> : vector<6x8xf32>
    %85 = vector.multi_reduction <add>, %84, %cst_14 [2] : vector<6x8x8xf32> to vector<6x8xf32>
    %86 = vector.shape_cast %85 : vector<6x8xf32> to vector<6x8x1xf32>
    %87 = tpu.reciprocal %86 {approx = true} : vector<6x8x1xf32> -> vector<6x8x1xf32>
    %88 = vector.broadcast %87 : vector<6x8x1xf32> to vector<6x8x8xf32>
    %89 = arith.mulf %84, %88 : vector<6x8x8xf32>
    %90 = arith.truncf %89 : vector<6x8x8xf32> to vector<6x8x8xbf16>
    "tpu.trace_start"() <{level = 10 : i32, message = "gqk,gkd->gqd"}> : () -> ()
    %cst_15 = arith.constant dense<0.000000e+00> : vector<6x8x64xf32>
    %91 = tpu.matmul %90, %70, %cst_15 {dimension_numbers = #tpu.dot_dimension_numbers<[2], [1], [1], [2], [0, 0, 0, 1, 1, 2], [0], [0]>} : vector<6x8x8xbf16>, vector<6x8x64xbf16>, vector<6x8x64xf32> -> vector<6x8x64xf32>
    "tpu.trace_stop"() : () -> ()
    %92 = vector.extract_strided_slice %91 {offsets = [0, 0, 0], sizes = [1, 8, 64], strides = [1, 1, 1]} : vector<6x8x64xf32> to vector<1x8x64xf32>
    %93 = vector.shape_cast %92 : vector<1x8x64xf32> to vector<8x64xf32>
    %c0_16 = arith.constant 0 : index
    %c0_17 = arith.constant 0 : index
    %94 = vector.load %arg11[%c0_16, %c0_17] : memref<8x384xf32, #tpu.memory_space<vmem>>, vector<8x64xf32>
    tpu.vector_store %arg11[%c0_16, %c0_17], %93 {strides = array<i32>} : memref<8x384xf32, #tpu.memory_space<vmem>>, vector<8x64xf32>,
    %95 = vector.extract_strided_slice %91 {offsets = [1, 0, 0], sizes = [1, 8, 64], strides = [1, 1, 1]} : vector<6x8x64xf32> to vector<1x8x64xf32>
    %96 = vector.shape_cast %95 : vector<1x8x64xf32> to vector<8x64xf32>
    %c0_18 = arith.constant 0 : index
    %c64 = arith.constant 64 : index
    %97 = vector.load %arg11[%c0_18, %c64] : memref<8x384xf32, #tpu.memory_space<vmem>>, vector<8x64xf32>
    tpu.vector_store %arg11[%c0_18, %c64], %96 {strides = array<i32>} : memref<8x384xf32, #tpu.memory_space<vmem>>, vector<8x64xf32>,
    %98 = vector.extract_strided_slice %91 {offsets = [2, 0, 0], sizes = [1, 8, 64], strides = [1, 1, 1]} : vector<6x8x64xf32> to vector<1x8x64xf32>
    %99 = vector.shape_cast %98 : vector<1x8x64xf32> to vector<8x64xf32>
    %c0_19 = arith.constant 0 : index
    %c128 = arith.constant 128 : index
    %100 = vector.load %arg11[%c0_19, %c128] : memref<8x384xf32, #tpu.memory_space<vmem>>, vector<8x64xf32>
    tpu.vector_store %arg11[%c0_19, %c128], %99 {strides = array<i32>} : memref<8x384xf32, #tpu.memory_space<vmem>>, vector<8x64xf32>,
    %101 = vector.extract_strided_slice %91 {offsets = [3, 0, 0], sizes = [1, 8, 64], strides = [1, 1, 1]} : vector<6x8x64xf32> to vector<1x8x64xf32>
    %102 = vector.shape_cast %101 : vector<1x8x64xf32> to vector<8x64xf32>
    %c0_20 = arith.constant 0 : index
    %c192 = arith.constant 192 : index
    %103 = vector.load %arg11[%c0_20, %c192] : memref<8x384xf32, #tpu.memory_space<vmem>>, vector<8x64xf32>
    tpu.vector_store %arg11[%c0_20, %c192], %102 {strides = array<i32>} : memref<8x384xf32, #tpu.memory_space<vmem>>, vector<8x64xf32>,
    %104 = vector.extract_strided_slice %91 {offsets = [4, 0, 0], sizes = [1, 8, 64], strides = [1, 1, 1]} : vector<6x8x64xf32> to vector<1x8x64xf32>
    %105 = vector.shape_cast %104 : vector<1x8x64xf32> to vector<8x64xf32>
    %c0_21 = arith.constant 0 : index
    %c256 = arith.constant 256 : index
    %106 = vector.load %arg11[%c0_21, %c256] : memref<8x384xf32, #tpu.memory_space<vmem>>, vector<8x64xf32>
    tpu.vector_store %arg11[%c0_21, %c256], %105 {strides = array<i32>} : memref<8x384xf32, #tpu.memory_space<vmem>>, vector<8x64xf32>,
    %107 = vector.extract_strided_slice %91 {offsets = [5, 0, 0], sizes = [1, 8, 64], strides = [1, 1, 1]} : vector<6x8x64xf32> to vector<1x8x64xf32>
    %108 = vector.shape_cast %107 : vector<1x8x64xf32> to vector<8x64xf32>
    %c0_22 = arith.constant 0 : index
    %c320 = arith.constant 320 : index
    %109 = vector.load %arg11[%c0_22, %c320] : memref<8x384xf32, #tpu.memory_space<vmem>>, vector<8x64xf32>
    tpu.vector_store %arg11[%c0_22, %c320], %108 {strides = array<i32>} : memref<8x384xf32, #tpu.memory_space<vmem>>, vector<8x64xf32>,
    %c0_23 = arith.constant 0 : index
    %c0_24 = arith.constant 0 : index
    %110 = vector.load %arg11[%c0_23, %c0_24] : memref<8x384xf32, #tpu.memory_space<vmem>>, vector<8x384xf32>
    %111 = arith.truncf %110 : vector<8x384xf32> to vector<8x384xbf16>
    %c0_25 = arith.constant 0 : index
    %c0_26 = arith.constant 0 : index
    %112 = vector.load %arg4[%c0_25, %c0_26] : memref<384x384xbf16, #tpu.memory_space<vmem>>, vector<384x384xbf16>
    %cst_27 = arith.constant dense<0.000000e+00> : vector<8x384xf32>
    %113 = tpu.matmul %111, %112, %cst_27 {dimension_numbers = #tpu.dot_dimension_numbers<[1], [0], [0], [1], [0, 0, 1, 1], [], []>} : vector<8x384xbf16>, vector<384x384xbf16>, vector<8x384xf32> -> vector<8x384xf32>
    %c0_28 = arith.constant 0 : index
    %c0_29 = arith.constant 0 : index
    %114 = vector.load %arg5[%c0_28, %c0_29] : memref<1x384xf32, #tpu.memory_space<vmem>>, vector<1x384xf32>
    %115 = vector.broadcast %114 : vector<1x384xf32> to vector<8x384xf32>
    %116 = arith.addf %113, %115 : vector<8x384xf32>
    %117 = arith.addf %1, %116 : vector<8x384xf32>
    %cst_30 = arith.constant dense<0.000000e+00> : vector<8xf32>
    %118 = vector.multi_reduction <add>, %117, %cst_30 [1] : vector<8x384xf32> to vector<8xf32>
    %119 = vector.shape_cast %118 : vector<8xf32> to vector<8x1xf32>
    %cst_31 = arith.constant 3.840000e+02 : f32
    %120 = vector.broadcast %cst_31 : f32 to vector<8x1xf32>
    %121 = arith.divf %119, %120 : vector<8x1xf32>
    %122 = vector.broadcast %121 : vector<8x1xf32> to vector<8x384xf32>
    %123 = arith.subf %117, %122 : vector<8x384xf32>
    %124 = arith.mulf %123, %123 : vector<8x384xf32>
    %cst_32 = arith.constant dense<0.000000e+00> : vector<8xf32>
    %125 = vector.multi_reduction <add>, %124, %cst_32 [1] : vector<8x384xf32> to vector<8xf32>
    %126 = vector.shape_cast %125 : vector<8xf32> to vector<8x1xf32>
    %cst_33 = arith.constant 3.840000e+02 : f32
    %127 = vector.broadcast %cst_33 : f32 to vector<8x1xf32>
    %128 = arith.divf %126, %127 : vector<8x1xf32>
    %129 = vector.broadcast %121 : vector<8x1xf32> to vector<8x384xf32>
    %130 = arith.subf %117, %129 : vector<8x384xf32>
    %cst_34 = arith.constant 9.99999974E-6 : f32
    %131 = vector.broadcast %cst_34 : f32 to vector<8x1xf32>
    %132 = arith.addf %128, %131 : vector<8x1xf32>
    %133 = math.rsqrt %132 : vector<8x1xf32>
    %134 = vector.broadcast %133 : vector<8x1xf32> to vector<8x384xf32>
    %135 = arith.mulf %130, %134 : vector<8x384xf32>
    %136 = arith.truncf %135 : vector<8x384xf32> to vector<8x384xbf16>
    %c0_35 = arith.constant 0 : index
    %c0_36 = arith.constant 0 : index
    %137 = vector.load %arg6[%c0_35, %c0_36] : memref<384x1536xbf16, #tpu.memory_space<vmem>>, vector<384x1536xbf16>
    %cst_37 = arith.constant dense<0.000000e+00> : vector<8x1536xf32>
    %138 = tpu.matmul %136, %137, %cst_37 {dimension_numbers = #tpu.dot_dimension_numbers<[1], [0], [0], [1], [0, 0, 1, 1], [], []>} : vector<8x384xbf16>, vector<384x1536xbf16>, vector<8x1536xf32> -> vector<8x1536xf32>
    %c0_38 = arith.constant 0 : index
    %c0_39 = arith.constant 0 : index
    %139 = vector.load %arg7[%c0_38, %c0_39] : memref<1x1536xf32, #tpu.memory_space<vmem>>, vector<1x1536xf32>
    %140 = vector.broadcast %139 : vector<1x1536xf32> to vector<8x1536xf32>
    %141 = arith.addf %138, %140 : vector<8x1536xf32>
    %cst_40 = arith.constant 0.000000e+00 : f32
    %142 = vector.broadcast %cst_40 : f32 to vector<8x1536xf32>
    %143 = arith.maximumf %141, %142 : vector<8x1536xf32>
    %144 = arith.truncf %143 : vector<8x1536xf32> to vector<8x1536xbf16>
    %c0_41 = arith.constant 0 : index
    %c0_42 = arith.constant 0 : index
    %145 = vector.load %arg8[%c0_41, %c0_42] : memref<1536x384xbf16, #tpu.memory_space<vmem>>, vector<1536x384xbf16>
    %cst_43 = arith.constant dense<0.000000e+00> : vector<8x384xf32>
    %146 = tpu.matmul %144, %145, %cst_43 {dimension_numbers = #tpu.dot_dimension_numbers<[1], [0], [0], [1], [0, 0, 1, 1], [], []>} : vector<8x1536xbf16>, vector<1536x384xbf16>, vector<8x384xf32> -> vector<8x384xf32>
    %c0_44 = arith.constant 0 : index
    %c0_45 = arith.constant 0 : index
    %147 = vector.load %arg9[%c0_44, %c0_45] : memref<1x384xf32, #tpu.memory_space<vmem>>, vector<1x384xf32>
    %148 = vector.broadcast %147 : vector<1x384xf32> to vector<8x384xf32>
    %149 = arith.addf %146, %148 : vector<8x384xf32>
    %150 = arith.addf %117, %149 : vector<8x384xf32>
    %151 = vector.shape_cast %150 : vector<8x384xf32> to vector<1x8x384xf32>
    %c0_46 = arith.constant 0 : index
    %c0_47 = arith.constant 0 : index
    %c0_48 = arith.constant 0 : index
    %152 = vector.load %arg10[%c0_46, %c0_47, %c0_48] : memref<1x8x384xf32, #tpu.memory_space<vmem>>, vector<1x8x384xf32>
    tpu.vector_store %arg10[%c0_46, %c0_47, %c0_48], %151 {strides = array<i32>} : memref<1x8x384xf32, #tpu.memory_space<vmem>>, vector<1x8x384xf32>,
    return
  }
  func.func @transform_0(%arg0: i32) -> (i32, i32, i32) {
    %c0_i32 = arith.constant 0 : i32
    %c0_i32_0 = arith.constant 0 : i32
    %c0_i32_1 = arith.constant 0 : i32
    return %arg0, %c0_i32, %c0_i32_0 : i32, i32, i32
  }
  func.func @transform_1(%arg0: i32) -> (i32, i32) {
    %c0_i32 = arith.constant 0 : i32
    %c0_i32_0 = arith.constant 0 : i32
    %c0_i32_1 = arith.constant 0 : i32
    return %c0_i32, %c0_i32_0 : i32, i32
  }
  func.func @transform_2(%arg0: i32) -> (i32, i32) {
    %c0_i32 = arith.constant 0 : i32
    %c0_i32_0 = arith.constant 0 : i32
    %c0_i32_1 = arith.constant 0 : i32
    return %c0_i32, %c0_i32_0 : i32, i32
  }
  func.func @transform_3(%arg0: i32) -> (i32, i32) {
    %c0_i32 = arith.constant 0 : i32
    %c0_i32_0 = arith.constant 0 : i32
    %c0_i32_1 = arith.constant 0 : i32
    return %c0_i32, %c0_i32_0 : i32, i32
  }
  func.func @transform_4(%arg0: i32) -> (i32, i32) {
    %c0_i32 = arith.constant 0 : i32
    %c0_i32_0 = arith.constant 0 : i32
    %c0_i32_1 = arith.constant 0 : i32
    return %c0_i32, %c0_i32_0 : i32, i32
  }
  func.func @transform_5(%arg0: i32) -> (i32, i32) {
    %c0_i32 = arith.constant 0 : i32
    %c0_i32_0 = arith.constant 0 : i32
    %c0_i32_1 = arith.constant 0 : i32
    return %c0_i32, %c0_i32_0 : i32, i32
  }
  func.func @transform_6(%arg0: i32) -> (i32, i32) {
    %c0_i32 = arith.constant 0 : i32
    %c0_i32_0 = arith.constant 0 : i32
    %c0_i32_1 = arith.constant 0 : i32
    return %c0_i32, %c0_i32_0 : i32, i32
  }
  func.func @transform_7(%arg0: i32) -> (i32, i32) {
    %c0_i32 = arith.constant 0 : i32
    %c0_i32_0 = arith.constant 0 : i32
    %c0_i32_1 = arith.constant 0 : i32
    return %c0_i32, %c0_i32_0 : i32, i32
  }
  func.func @transform_8(%arg0: i32) -> (i32, i32) {
    %c0_i32 = arith.constant 0 : i32
    %c0_i32_0 = arith.constant 0 : i32
    %c0_i32_1 = arith.constant 0 : i32
    return %c0_i32, %c0_i32_0 : i32, i32
  }
  func.func @transform_9(%arg0: i32) -> (i32, i32, i32) {
    %c0_i32 = arith.constant 0 : i32
    %c0_i32_0 = arith.constant 0 : i32
    %c0_i32_1 = arith.constant 0 : i32
    return %arg0, %c0_i32, %c0_i32_0 : i32, i32, i32
  }
}

</mosaic_0001>

<llo_original>
// kernel: tpu_custom_call.1
$region0: #{tpu_custom_call.1}
  #allocation0 [shape = 'u32[]', space=smem, size = 0x4, offset = 0x4, fixed_abs, tag = 'smem constant byte address 0x4 - core index']
  #allocation1 [shape = 'u32[72,128]{1,0:T(1,128)}', space=vmem, size = 0x9000, scoped, tag = 'internal scratch']
  #allocation2 [shape = 'f32[8,384]{1,0:T(8,128)}', space=vmem, size = 0x3000, scoped, tag = 'scratch operand']
  %s0 = inlined_call_operand.hbm [shape: f32[2,8,384], index: 0, kind: input, shape index: {}]
  %s1 = inlined_call_operand.hbm [shape: bf16[384,1152], index: 1, kind: input, shape index: {}]
  %s2 = inlined_call_operand.hbm [shape: f32[1,1152], index: 2, kind: input, shape index: {}]
  %s3 = inlined_call_operand.hbm [shape: bf16[384,384], index: 3, kind: input, shape index: {}]
  %s4 = inlined_call_operand.hbm [shape: f32[1,384], index: 4, kind: input, shape index: {}]
  %s5 = inlined_call_operand.hbm [shape: bf16[384,1536], index: 5, kind: input, shape index: {}]
  %s6 = inlined_call_operand.hbm [shape: f32[1,1536], index: 6, kind: input, shape index: {}]
  %s7 = inlined_call_operand.hbm [shape: bf16[1536,384], index: 7, kind: input, shape index: {}]
  %s8 = inlined_call_operand.hbm [shape: f32[1,384], index: 8, kind: input, shape index: {}]
  %s9 = inlined_call_operand.hbm [shape: f32[2,8,384], index: 9, kind: output, shape index: {}]
  %s10 = sld [smem:[#allocation0]]
  $region105: #{tpu_custom_call.1} parent=0
    _
  %s12 = ssub.s32 1, %s10
  %s13 = scalar_select 0, %s12, %s10
  $region1: #{tpu_custom_call.1} parent=0
    #allocation3 [shape = 'u8[24576]{0}', space=vmem, size = 0x6000, scoped, tag = 'input window, operand 0']
    #allocation4 [shape = 's32[2]{0}', space=sflag, size = 0x8, scoped, tag = 'scoped memory for tpu_custom_call.1']
    #allocation5 [shape = 's32[2]{0}', space=sflag, size = 0x8, scoped, tag = 'scoped memory for tpu_custom_call.1']
    #allocation6 [shape = 'u8[884736]{0}', space=vmem, size = 0xd8000, scoped, tag = 'input window, operand 1, single buffered']
    #allocation7 [shape = 's32[1]{0}', space=sflag, size = 0x4, scoped, tag = 'scoped memory for tpu_custom_call.1']
    #allocation8 [shape = 'u8[4608]{0}', space=vmem, size = 0x1400, scoped, tag = 'input window, operand 2, single buffered']
    #allocation9 [shape = 'u8[294912]{0}', space=vmem, size = 0x48000, scoped, tag = 'input window, operand 3, single buffered']
    #allocation10 [shape = 's32[1]{0}', space=sflag, size = 0x4, scoped, tag = 'scoped memory for tpu_custom_call.1']
    #allocation11 [shape = 'u8[1536]{0}', space=vmem, size = 0x800, scoped, tag = 'input window, operand 4, single buffered']
    #allocation12 [shape = 'u8[1179648]{0}', space=vmem, size = 0x120000, scoped, tag = 'input window, operand 5, single buffered']
    #allocation13 [shape = 's32[1]{0}', space=sflag, size = 0x4, scoped, tag = 'scoped memory for tpu_custom_call.1']
    #allocation14 [shape = 'u8[6144]{0}', space=vmem, size = 0x1800, scoped, tag = 'input window, operand 6, single buffered']
    #allocation15 [shape = 'u8[1179648]{0}', space=vmem, size = 0x120000, scoped, tag = 'input window, operand 7, single buffered']
    #allocation16 [shape = 's32[1]{0}', space=sflag, size = 0x4, scoped, tag = 'scoped memory for tpu_custom_call.1']
    #allocation17 [shape = 'u8[1536]{0}', space=vmem, size = 0x800, scoped, tag = 'input window, operand 8, single buffered']
    #allocation18 [shape = 'u8[24576]{0}', space=vmem, size = 0x6000, scoped, tag = 'output window, operand 0']
    %14 = vsyncpa [#allocation4], 0
    %s15 = scalar_lea.sflag [#allocation4], 1
    %16 = vsyncpa %s15, 0
    %17 = vsyncpa [#allocation7], 0
    %18 = vsyncpa [#allocation10], 0
    %19 = vsyncpa [#allocation13], 0
    %20 = vsyncpa [#allocation16], 0
    %21 = vsyncpa [#allocation5], 0
    %s22 = scalar_lea.sflag [#allocation5], 1
    %23 = vsyncpa %s22, 0
    loop: start=0, step=1, limit=4
    $region2: #{tpu_custom_call.1} parent=1 // loop_pre_header
      _
    $region3: #{tpu_custom_call.1} parent=1 // loop_header
      %s25 = sphi 0, %s29
      %p26 = scmp.ge.s32.totalorder %s25, 4
      %s35 = sphi 0, %s37
      %s38 = sphi 0, %s35
      %s39 = sphi 0, %s38
      %s55 = sphi 0, %s39
      %s59 = sphi 0, %s59
      %s61 = sphi 0, %s59
      %s62 = sphi 0, %s61
      %s76 = sphi 0, %s62
      %s80 = sphi 0, %s80
      %s82 = sphi 0, %s80
      %s83 = sphi 0, %s82
      %s97 = sphi 0, %s83
      %s101 = sphi 0, %s101
      %s103 = sphi 0, %s101
      %s104 = sphi 0, %s103
      %s118 = sphi 0, %s104
      %s122 = sphi 0, %s122
      %s124 = sphi 0, %s122
      %s125 = sphi 0, %s124
      %s139 = sphi 0, %s125
      %s143 = sphi 0, %s143
      %s145 = sphi 0, %s143
      %s146 = sphi 0, %s145
      %s160 = sphi 0, %s146
      %s164 = sphi 0, %s164
      %s166 = sphi 0, %s164
      %s167 = sphi 0, %s166
      %s181 = sphi 0, %s167
      %s185 = sphi 0, %s185
      %s187 = sphi 0, %s185
      %s188 = sphi 0, %s187
      %s202 = sphi 0, %s188
      %s206 = sphi 0, %s206
      %s208 = sphi 0, %s206
      %s209 = sphi 0, %s208
      %s223 = sphi 0, %s209
      %s229 = sphi 0, %s231
      %s232 = sphi 0, %s229
      %s233 = sphi 0, %s232
      %s249 = sphi 0, %s233
    $region4: #{tpu_custom_call.1} parent=1 // loop_header_branch
      %28 = sbr.rel (%p26) target = $region8
    $region5: #{tpu_custom_call.1} parent=1 // loop_body
      %s30 = ssub.s32 %s25, 1
      %s31 = ssub.s32 %s25, 2
      %s32 = sadd.s32 %s25, 1
      %s33 = ssub.s32 %s25, %s32
      %p34 = scmp.eq.s32.totalorder %s33, 0
      %s36 = sadd.s32 %s35, 1
      %s37 = scalar_select %p34, %s35, %s36
      %p40 = pneg %p34
      %p41 = scmp.eq.s32.totalorder %s25, 1
      %p42 = por %p40, %p41
      %p43 = scmp.ne.s32.totalorder %s35, %s38
      %p44 = scmp.eq.s32.totalorder %s25, 0
      %p45 = por %p43, %p44
      %p46 = scmp.ne.s32.totalorder %s35, %s38
      %p47 = scmp.eq.s32.totalorder %s30, 1
      %p48 = por %p46, %p47
      %p49 = scmp.ne.s32.totalorder %s38, %s39
      %p50 = scmp.eq.s32.totalorder %s30, 0
      %p51 = por %p49, %p50
      %p52 = scmp.ne.s32.totalorder %s38, %s39
      %p53 = scmp.eq.s32.totalorder %s31, 1
      %p54 = por %p52, %p53
      %p56 = scmp.ne.s32.totalorder %s39, %s55
      %p57 = scmp.eq.s32.totalorder %s31, 0
      %p58 = por %p56, %p57
      %s60 = sadd.s32 %s59, 1
      %p63 = scmp.eq.s32.totalorder %s25, 1
      %p64 = scmp.ne.s32.totalorder %s59, %s61
      %p65 = scmp.eq.s32.totalorder %s25, 0
      %p66 = por %p64, %p65
      %p67 = scmp.ne.s32.totalorder %s59, %s61
      %p68 = scmp.eq.s32.totalorder %s30, 1
      %p69 = por %p67, %p68
      %p70 = scmp.ne.s32.totalorder %s61, %s62
      %p71 = scmp.eq.s32.totalorder %s30, 0
      %p72 = por %p70, %p71
      %p73 = scmp.ne.s32.totalorder %s61, %s62
      %p74 = scmp.eq.s32.totalorder %s31, 1
      %p75 = por %p73, %p74
      %p77 = scmp.ne.s32.totalorder %s62, %s76
      %p78 = scmp.eq.s32.totalorder %s31, 0
      %p79 = por %p77, %p78
      %s81 = sadd.s32 %s80, 1
      %p84 = scmp.eq.s32.totalorder %s25, 1
      %p85 = scmp.ne.s32.totalorder %s80, %s82
      %p86 = scmp.eq.s32.totalorder %s25, 0
      %p87 = por %p85, %p86
      %p88 = scmp.ne.s32.totalorder %s80, %s82
      %p89 = scmp.eq.s32.totalorder %s30, 1
      %p90 = por %p88, %p89
      %p91 = scmp.ne.s32.totalorder %s82, %s83
      %p92 = scmp.eq.s32.totalorder %s30, 0
      %p93 = por %p91, %p92
      %p94 = scmp.ne.s32.totalorder %s82, %s83
      %p95 = scmp.eq.s32.totalorder %s31, 1
      %p96 = por %p94, %p95
      %p98 = scmp.ne.s32.totalorder %s83, %s97
      %p99 = scmp.eq.s32.totalorder %s31, 0
      %p100 = por %p98, %p99
      %s102 = sadd.s32 %s101, 1
      %p105 = scmp.eq.s32.totalorder %s25, 1
      %p106 = scmp.ne.s32.totalorder %s101, %s103
      %p107 = scmp.eq.s32.totalorder %s25, 0
      %p108 = por %p106, %p107
      %p109 = scmp.ne.s32.totalorder %s101, %s103
      %p110 = scmp.eq.s32.totalorder %s30, 1
      %p111 = por %p109, %p110
      %p112 = scmp.ne.s32.totalorder %s103, %s104
      %p113 = scmp.eq.s32.totalorder %s30, 0
      %p114 = por %p112, %p113
      %p115 = scmp.ne.s32.totalorder %s103, %s104
      %p116 = scmp.eq.s32.totalorder %s31, 1
      %p117 = por %p115, %p116
      %p119 = scmp.ne.s32.totalorder %s104, %s118
      %p120 = scmp.eq.s32.totalorder %s31, 0
      %p121 = por %p119, %p120
      %s123 = sadd.s32 %s122, 1
      %p126 = scmp.eq.s32.totalorder %s25, 1
      %p127 = scmp.ne.s32.totalorder %s122, %s124
      %p128 = scmp.eq.s32.totalorder %s25, 0
      %p129 = por %p127, %p128
      %p130 = scmp.ne.s32.totalorder %s122, %s124
      %p131 = scmp.eq.s32.totalorder %s30, 1
      %p132 = por %p130, %p131
      %p133 = scmp.ne.s32.totalorder %s124, %s125
      %p134 = scmp.eq.s32.totalorder %s30, 0
      %p135 = por %p133, %p134
      %p136 = scmp.ne.s32.totalorder %s124, %s125
      %p137 = scmp.eq.s32.totalorder %s31, 1
      %p138 = por %p136, %p137
      %p140 = scmp.ne.s32.totalorder %s125, %s139
      %p141 = scmp.eq.s32.totalorder %s31, 0
      %p142 = por %p140, %p141
      %s144 = sadd.s32 %s143, 1
      %p147 = scmp.eq.s32.totalorder %s25, 1
      %p148 = scmp.ne.s32.totalorder %s143, %s145
      %p149 = scmp.eq.s32.totalorder %s25, 0
      %p150 = por %p148, %p149
      %p151 = scmp.ne.s32.totalorder %s143, %s145
      %p152 = scmp.eq.s32.totalorder %s30, 1
      %p153 = por %p151, %p152
      %p154 = scmp.ne.s32.totalorder %s145, %s146
      %p155 = scmp.eq.s32.totalorder %s30, 0
      %p156 = por %p154, %p155
      %p157 = scmp.ne.s32.totalorder %s145, %s146
      %p158 = scmp.eq.s32.totalorder %s31, 1
      %p159 = por %p157, %p158
      %p161 = scmp.ne.s32.totalorder %s146, %s160
      %p162 = scmp.eq.s32.totalorder %s31, 0
      %p163 = por %p161, %p162
      %s165 = sadd.s32 %s164, 1
      %p168 = scmp.eq.s32.totalorder %s25, 1
      %p169 = scmp.ne.s32.totalorder %s164, %s166
      %p170 = scmp.eq.s32.totalorder %s25, 0
      %p171 = por %p169, %p170
      %p172 = scmp.ne.s32.totalorder %s164, %s166
      %p173 = scmp.eq.s32.totalorder %s30, 1
      %p174 = por %p172, %p173
      %p175 = scmp.ne.s32.totalorder %s166, %s167
      %p176 = scmp.eq.s32.totalorder %s30, 0
      %p177 = por %p175, %p176
      %p178 = scmp.ne.s32.totalorder %s166, %s167
      %p179 = scmp.eq.s32.totalorder %s31, 1
      %p180 = por %p178, %p179
      %p182 = scmp.ne.s32.totalorder %s167, %s181
      %p183 = scmp.eq.s32.totalorder %s31, 0
      %p184 = por %p182, %p183
      %s186 = sadd.s32 %s185, 1
      %p189 = scmp.eq.s32.totalorder %s25, 1
      %p190 = scmp.ne.s32.totalorder %s185, %s187
      %p191 = scmp.eq.s32.totalorder %s25, 0
      %p192 = por %p190, %p191
      %p193 = scmp.ne.s32.totalorder %s185, %s187
      %p194 = scmp.eq.s32.totalorder %s30, 1
      %p195 = por %p193, %p194
      %p196 = scmp.ne.s32.totalorder %s187, %s188
      %p197 = scmp.eq.s32.totalorder %s30, 0
      %p198 = por %p196, %p197
      %p199 = scmp.ne.s32.totalorder %s187, %s188
      %p200 = scmp.eq.s32.totalorder %s31, 1
      %p201 = por %p199, %p200
      %p203 = scmp.ne.s32.totalorder %s188, %s202
      %p204 = scmp.eq.s32.totalorder %s31, 0
      %p205 = por %p203, %p204
      %s207 = sadd.s32 %s206, 1
      %p210 = scmp.eq.s32.totalorder %s25, 1
      %p211 = scmp.ne.s32.totalorder %s206, %s208
      %p212 = scmp.eq.s32.totalorder %s25, 0
      %p213 = por %p211, %p212
      %p214 = scmp.ne.s32.totalorder %s206, %s208
      %p215 = scmp.eq.s32.totalorder %s30, 1
      %p216 = por %p214, %p215
      %p217 = scmp.ne.s32.totalorder %s208, %s209
      %p218 = scmp.eq.s32.totalorder %s30, 0
      %p219 = por %p217, %p218
      %p220 = scmp.ne.s32.totalorder %s208, %s209
      %p221 = scmp.eq.s32.totalorder %s31, 1
      %p222 = por %p220, %p221
      %p224 = scmp.ne.s32.totalorder %s209, %s223
      %p225 = scmp.eq.s32.totalorder %s31, 0
      %p226 = por %p224, %p225
      %s227 = ssub.s32 %s25, %s32
      %p228 = scmp.eq.s32.totalorder %s227, 0
      %s230 = sadd.s32 %s229, 1
      %s231 = scalar_select %p228, %s229, %s230
      %p234 = pneg %p228
      %p235 = scmp.eq.s32.totalorder %s25, 1
      %p236 = por %p234, %p235
      %p237 = scmp.ne.s32.totalorder %s229, %s232
      %p238 = scmp.eq.s32.totalorder %s25, 0
      %p239 = por %p237, %p238
      %p240 = scmp.ne.s32.totalorder %s229, %s232
      %p241 = scmp.eq.s32.totalorder %s30, 1
      %p242 = por %p240, %p241
      %p243 = scmp.ne.s32.totalorder %s232, %s233
      %p244 = scmp.eq.s32.totalorder %s30, 0
      %p245 = por %p243, %p244
      %p246 = scmp.ne.s32.totalorder %s232, %s233
      %p247 = scmp.eq.s32.totalorder %s31, 1
      %p248 = por %p246, %p247
      %p250 = scmp.ne.s32.totalorder %s233, %s249
      %p251 = scmp.eq.s32.totalorder %s31, 0
      %p252 = por %p250, %p251
      %p253 = scmp.le.s32.totalorder 1, %s25
      %p254 = scmp.lt.s32.totalorder %s25, 3
      %p255 = pnand %p253, %p254
      %p256 = pneg %p255
      // Predicated region
      $region9: #{tpu_custom_call.1} parent=5 // pred_check
        _
      $region10: #{tpu_custom_call.1} parent=5 // pred_check_branch
        %258 = sbr.rel (%p255) target = $region12
      $region11: #{tpu_custom_call.1} parent=5 // pred_region
        %s259 = ssub.s32 %s25, 1
        // Predicated region
        $region13: #{tpu_custom_call.1} parent=11 // pred_check
          %p260 = pneg %p72
        $region14: #{tpu_custom_call.1} parent=11 // pred_check_branch
          %262 = sbr.rel (%p260) target = $region16
        $region15: #{tpu_custom_call.1} parent=11 // pred_region
          %264 = vsyncadd [#allocation7], 0
          %s265 = sshll.u32 %s1, 4
          %s266 = int_to_ptr.hbm [resolvable:$true] %s265
          %s267 = sshll.u32 [#allocation6], 4
          %s268 = int_to_ptr.vmem [resolvable:$true] %s267
          %273 = dma.hbm_to_vmem [thread:$0]  %s266, 27648, %s268, [#allocation7], 576, 576, 36
        $region16: #{tpu_custom_call.1} parent=11 // pred_fallthru
          _
        // Predicated region
        $region17: #{tpu_custom_call.1} parent=11 // pred_check
          %p274 = pneg %p93
        $region18: #{tpu_custom_call.1} parent=11 // pred_check_branch
          %276 = sbr.rel (%p274) target = $region20
        $region19: #{tpu_custom_call.1} parent=11 // pred_region
          %278 = vsyncadd [#allocation7], 0
          %s280 = sshll.u32 %s2, 4
          %s281 = int_to_ptr.hbm [resolvable:$true] %s280
          %s282 = sshll.u32 [#allocation8], 4
          %s283 = int_to_ptr.vmem [resolvable:$true] %s282
          %285 = dma.hbm_to_vmem [thread:$0]  %s281, 144, %s283, [#allocation7]
        $region20: #{tpu_custom_call.1} parent=11 // pred_fallthru
          _
        // Predicated region
        $region21: #{tpu_custom_call.1} parent=11 // pred_check
          %p286 = pneg %p114
        $region22: #{tpu_custom_call.1} parent=11 // pred_check_branch
          %288 = sbr.rel (%p286) target = $region24
        $region23: #{tpu_custom_call.1} parent=11 // pred_region
          %290 = vsyncadd [#allocation10], 0
          %s291 = sshll.u32 %s3, 4
          %s292 = int_to_ptr.hbm [resolvable:$true] %s291
          %s293 = sshll.u32 [#allocation9], 4
          %s294 = int_to_ptr.vmem [resolvable:$true] %s293
          %299 = dma.hbm_to_vmem [thread:$0]  %s292, 9216, %s294, [#allocation10], 192, 192, 12
        $region24: #{tpu_custom_call.1} parent=11 // pred_fallthru
          _
        // Predicated region
        $region25: #{tpu_custom_call.1} parent=11 // pred_check
          %p300 = pneg %p135
        $region26: #{tpu_custom_call.1} parent=11 // pred_check_branch
          %302 = sbr.rel (%p300) target = $region28
        $region27: #{tpu_custom_call.1} parent=11 // pred_region
          %304 = vsyncadd [#allocation10], 0
          %s306 = sshll.u32 %s4, 4
          %s307 = int_to_ptr.hbm [resolvable:$true] %s306
          %s308 = sshll.u32 [#allocation11], 4
          %s309 = int_to_ptr.vmem [resolvable:$true] %s308
          %311 = dma.hbm_to_vmem [thread:$0]  %s307, 48, %s309, [#allocation10]
        $region28: #{tpu_custom_call.1} parent=11 // pred_fallthru
          _
        // Predicated region
        $region29: #{tpu_custom_call.1} parent=11 // pred_check
          %p312 = pneg %p156
        $region30: #{tpu_custom_call.1} parent=11 // pred_check_branch
          %314 = sbr.rel (%p312) target = $region32
        $region31: #{tpu_custom_call.1} parent=11 // pred_region
          %316 = vsyncadd [#allocation13], 0
          %s317 = sshll.u32 %s5, 4
          %s318 = int_to_ptr.hbm [resolvable:$true] %s317
          %s319 = sshll.u32 [#allocation12], 4
          %s320 = int_to_ptr.vmem [resolvable:$true] %s319
          %325 = dma.hbm_to_vmem [thread:$0]  %s318, 36864, %s320, [#allocation13], 768, 768, 48
        $region32: #{tpu_custom_call.1} parent=11 // pred_fallthru
          _
        // Predicated region
        $region33: #{tpu_custom_call.1} parent=11 // pred_check
          %p326 = pneg %p177
        $region34: #{tpu_custom_call.1} parent=11 // pred_check_branch
          %328 = sbr.rel (%p326) target = $region36
        $region35: #{tpu_custom_call.1} parent=11 // pred_region
          %330 = vsyncadd [#allocation13], 0
          %s332 = sshll.u32 %s6, 4
          %s333 = int_to_ptr.hbm [resolvable:$true] %s332
          %s334 = sshll.u32 [#allocation14], 4
          %s335 = int_to_ptr.vmem [resolvable:$true] %s334
          %337 = dma.hbm_to_vmem [thread:$0]  %s333, 192, %s335, [#allocation13]
        $region36: #{tpu_custom_call.1} parent=11 // pred_fallthru
          _
        // Predicated region
        $region37: #{tpu_custom_call.1} parent=11 // pred_check
          %p338 = pneg %p198
        $region38: #{tpu_custom_call.1} parent=11 // pred_check_branch
          %340 = sbr.rel (%p338) target = $region40
        $region39: #{tpu_custom_call.1} parent=11 // pred_region
          %342 = vsyncadd [#allocation16], 0
          %s343 = sshll.u32 %s7, 4
          %s344 = int_to_ptr.hbm [resolvable:$true] %s343
          %s345 = sshll.u32 [#allocation15], 4
          %s346 = int_to_ptr.vmem [resolvable:$true] %s345
          %351 = dma.hbm_to_vmem [thread:$0]  %s344, 36864, %s346, [#allocation16], 192, 192, 12
        $region40: #{tpu_custom_call.1} parent=11 // pred_fallthru
          _
        // Predicated region
        $region41: #{tpu_custom_call.1} parent=11 // pred_check
          %p352 = pneg %p219
        $region42: #{tpu_custom_call.1} parent=11 // pred_check_branch
          %354 = sbr.rel (%p352) target = $region44
        $region43: #{tpu_custom_call.1} parent=11 // pred_region
          %356 = vsyncadd [#allocation16], 0
          %s358 = sshll.u32 %s8, 4
          %s359 = int_to_ptr.hbm [resolvable:$true] %s358
          %s360 = sshll.u32 [#allocation17], 4
          %s361 = int_to_ptr.vmem [resolvable:$true] %s360
          %363 = dma.hbm_to_vmem [thread:$0]  %s359, 48, %s361, [#allocation16]
        $region44: #{tpu_custom_call.1} parent=11 // pred_fallthru
          _
      $region12: #{tpu_custom_call.1} parent=5 // pred_fallthru
        _
      %p364 = scmp.lt.s32.totalorder %s25, 2
      // Predicated region
      $region45: #{tpu_custom_call.1} parent=5 // pred_check
        %p365 = pneg %p364
      $region46: #{tpu_custom_call.1} parent=5 // pred_check_branch
        %367 = sbr.rel (%p365) target = $region48
      $region47: #{tpu_custom_call.1} parent=5 // pred_region
        // Predicated region
        $region49: #{tpu_custom_call.1} parent=47 // pred_check
          %p368 = pneg %p45
        $region50: #{tpu_custom_call.1} parent=47 // pred_check_branch
          %370 = sbr.rel (%p368) target = $region52
        $region51: #{tpu_custom_call.1} parent=47 // pred_region
          %s371 = sand.u32 %s35, 1
          %s372 = scalar_lea.sflag [#allocation4], %s371
          %s373 = sand.u32 %s35, 1
          %s374 = smul.addr %s373, 24
          %s375 = scalar_lea.vmem [#allocation3], %s374
          %377 = vsyncadd %s372, 0
          %s378 = smul.addr %s25, 3
          %s379 = smul.addr %s378, 8
          %s380 = scalar_lea.hbm %s0, %s379
          %s382 = sshll.u32 %s380, 4
          %s383 = int_to_ptr.hbm [resolvable:$true] %s382
          %s384 = sshll.u32 %s375, 4
          %s385 = int_to_ptr.vmem [resolvable:$true] %s384
          %387 = dma.hbm_to_vmem [thread:$0]  %s383, 384, %s385, %s372
        $region52: #{tpu_custom_call.1} parent=47 // pred_fallthru
          _
      $region48: #{tpu_custom_call.1} parent=5 // pred_fallthru
        _
      %p388 = scmp.le.s32.totalorder 1, %s25
      %p389 = scmp.lt.s32.totalorder %s25, 3
      %p390 = pnand %p388, %p389
      %p391 = pneg %p390
      // Predicated region
      $region53: #{tpu_custom_call.1} parent=5 // pred_check
        _
      $region54: #{tpu_custom_call.1} parent=5 // pred_check_branch
        %393 = sbr.rel (%p390) target = $region56
      $region55: #{tpu_custom_call.1} parent=5 // pred_region
        %s394 = ssub.s32 %s25, 1
        %s395 = sand.u32 %s38, 1
        %s396 = scalar_lea.sflag [#allocation4], %s395
        %s397 = sand.u32 %s38, 1
        %s398 = smul.addr %s397, 24
        %s399 = scalar_lea.vmem [#allocation3], %s398
        // Predicated region
        $region57: #{tpu_custom_call.1} parent=55 // pred_check
          %p400 = pneg %p51
        $region58: #{tpu_custom_call.1} parent=55 // pred_check_branch
          %402 = sbr.rel (%p400) target = $region60
        $region59: #{tpu_custom_call.1} parent=55 // pred_region
          %404 = dma.done %s396, 384
        $region60: #{tpu_custom_call.1} parent=55 // pred_fallthru
          _
        // Predicated region
        $region61: #{tpu_custom_call.1} parent=55 // pred_check
          %p405 = pneg %p72
        $region62: #{tpu_custom_call.1} parent=55 // pred_check_branch
          %407 = sbr.rel (%p405) target = $region64
        $region63: #{tpu_custom_call.1} parent=55 // pred_region
          %409 = dma.done [#allocation7], 27648
        $region64: #{tpu_custom_call.1} parent=55 // pred_fallthru
          _
        // Predicated region
        $region65: #{tpu_custom_call.1} parent=55 // pred_check
          %p410 = pneg %p93
        $region66: #{tpu_custom_call.1} parent=55 // pred_check_branch
          %412 = sbr.rel (%p410) target = $region68
        $region67: #{tpu_custom_call.1} parent=55 // pred_region
          %414 = dma.done [#allocation7], 144
        $region68: #{tpu_custom_call.1} parent=55 // pred_fallthru
          _
        // Predicated region
        $region69: #{tpu_custom_call.1} parent=55 // pred_check
          %p415 = pneg %p114
        $region70: #{tpu_custom_call.1} parent=55 // pred_check_branch
          %417 = sbr.rel (%p415) target = $region72
        $region71: #{tpu_custom_call.1} parent=55 // pred_region
          %419 = dma.done [#allocation10], 9216
        $region72: #{tpu_custom_call.1} parent=55 // pred_fallthru
          _
        // Predicated region
        $region73: #{tpu_custom_call.1} parent=55 // pred_check
          %p420 = pneg %p135
        $region74: #{tpu_custom_call.1} parent=55 // pred_check_branch
          %422 = sbr.rel (%p420) target = $region76
        $region75: #{tpu_custom_call.1} parent=55 // pred_region
          %424 = dma.done [#allocation10], 48
        $region76: #{tpu_custom_call.1} parent=55 // pred_fallthru
          _
        // Predicated region
        $region77: #{tpu_custom_call.1} parent=55 // pred_check
          %p425 = pneg %p156
        $region78: #{tpu_custom_call.1} parent=55 // pred_check_branch
          %427 = sbr.rel (%p425) target = $region80
        $region79: #{tpu_custom_call.1} parent=55 // pred_region
          %429 = dma.done [#allocation13], 36864
        $region80: #{tpu_custom_call.1} parent=55 // pred_fallthru
          _
        // Predicated region
        $region81: #{tpu_custom_call.1} parent=55 // pred_check
          %p430 = pneg %p177
        $region82: #{tpu_custom_call.1} parent=55 // pred_check_branch
          %432 = sbr.rel (%p430) target = $region84
        $region83: #{tpu_custom_call.1} parent=55 // pred_region
          %434 = dma.done [#allocation13], 192
        $region84: #{tpu_custom_call.1} parent=55 // pred_fallthru
          _
        // Predicated region
        $region85: #{tpu_custom_call.1} parent=55 // pred_check
          %p435 = pneg %p198
        $region86: #{tpu_custom_call.1} parent=55 // pred_check_branch
          %437 = sbr.rel (%p435) target = $region88
        $region87: #{tpu_custom_call.1} parent=55 // pred_region
          %439 = dma.done [#allocation16], 36864
        $region88: #{tpu_custom_call.1} parent=55 // pred_fallthru
          _
        // Predicated region
        $region89: #{tpu_custom_call.1} parent=55 // pred_check
          %p440 = pneg %p219
        $region90: #{tpu_custom_call.1} parent=55 // pred_check_branch
          %442 = sbr.rel (%p440) target = $region92
        $region91: #{tpu_custom_call.1} parent=55 // pred_region
          %444 = dma.done [#allocation16], 48
        $region92: #{tpu_custom_call.1} parent=55 // pred_fallthru
          _
        %s445 = sand.u32 %s38, 1
        %s446 = scalar_lea.sflag [#allocation4], %s445
        %s447 = sand.u32 %s38, 1
        %s448 = smul.addr %s447, 24
        %s449 = scalar_lea.vmem [#allocation3], %s448
        %p450 = pneg %p51
        %p451 = pneg %p48
        %p452 = pneg %p72
        %p453 = pneg %p69
        %p454 = pneg %p93
        %p455 = pneg %p90
        %p456 = pneg %p114
        %p457 = pneg %p111
        %p458 = pneg %p135
        %p459 = pneg %p132
        %p460 = pneg %p156
        %p461 = pneg %p153
        %p462 = pneg %p177
        %p463 = pneg %p174
        %p464 = pneg %p198
        %p465 = pneg %p195
        %p466 = pneg %p219
        %p467 = pneg %p216
        %p468 = pneg %p245
        %p469 = pneg %p242
        %s470 = sand.u32 %s232, 1
        %s471 = scalar_lea.sflag [#allocation5], %s470
        %s472 = sand.u32 %s232, 1
        %s473 = smul.addr %s472, 24
        %s474 = scalar_lea.vmem [#allocation18], %s473
        %v476 = vld [vmem:[%s399] sm:$0xff]
        %v477 = vld [vmem:[%s399 + $0x8] sm:$0xff]
        %v478 = vld [vmem:[%s399 + $0x10] sm:$0xff]
        %v479 = vadd.f32 %v476, %v477
        %v480 = vadd.f32 %v479, %v478
        %481 = vadd.xlane.f32.xlu0 %v480
        %v482 = vpop.xlane.xlu0 %481
        %v483 = vrcp.pop 384.0
        %v484 = vmul.f32 384.0, %v483
        %v485 = vsub.f32 1.0, %v484
        %v486 = vmul.f32 %v483, %v485
        %v487 = vadd.f32 %v483, %v486
        %vm488 = vweird.f32 %v483
        %v489 = vsel %vm488, %v483, %v487
        %v490 = vmul.f32 %v482, %v489
        %v491 = vsub.f32 %v476, %v490
        %v492 = vsub.f32 %v477, %v490
        %v493 = vsub.f32 %v478, %v490
        %v494 = vmul.f32 %v491, %v491
        %v495 = vmul.f32 %v492, %v492
        %v496 = vmul.f32 %v493, %v493
        %v497 = vadd.f32 %v494, %v495
        %v498 = vadd.f32 %v497, %v496
        %499 = vadd.xlane.f32.xlu0 %v498
        %v500 = vpop.xlane.xlu0 %499
        %v501 = vmul.f32 %v500, %v489
        %v502 = vadd.f32 %v501, 1e-05
        %v503 = vrsqrt.pop %v502
        %v504 = vmul.f32 %v503, %v502
        %v505 = vmul.f32 %v504, %v503
        %v506 = vmul.f32 0.5, %v505
        %v507 = vsub.f32 1.5, %v506
        %v508 = vmul.f32 %v503, %v507
        %vm509 = vweird.f32 %v502
        %vm510 = vweird.f32 %v503
        %vm511 = vmor %vm509, %vm510
        %v512 = vsel %vm511, %v503, %v508
        %v513 = vmul.f32 %v491, %v512
        %v514 = vmul.f32 %v492, %v512
        %v515 = vmul.f32 %v493, %v512
        %v516 = vpack.c.bf16 %v513, %v513
        %v517 = vpack.c.bf16 %v514, %v514
        %v518 = vpack.c.bf16 %v515, %v515
        %v519 = vld [vmem:[#allocation6] sm:$0xff]
        %v520 = vld [vmem:[#allocation6 + $0x8] sm:$0xff]
        %v521 = vld [vmem:[#allocation6 + $0x10] sm:$0xff]
        %v522 = vld [vmem:[#allocation6 + $0x18] sm:$0xff]
        %v523 = vld [vmem:[#allocation6 + $0x20] sm:$0xf]
        %v524 = vld [vmem:[#allocation6 + $0x24] sm:$0xff]
        %v525 = vld [vmem:[#allocation6 + $0x2c] sm:$0xff]
        %v526 = vld [vmem:[#allocation6 + $0x34] sm:$0xff]
        %v527 = vld [vmem:[#allocation6 + $0x3c] sm:$0xff]
        %v528 = vld [vmem:[#allocation6 + $0x44] sm:$0xf]
        %v529 = vld [vmem:[#allocation6 + $0x48] sm:$0xff]
        %v530 = vld [vmem:[#allocation6 + $0x50] sm:$0xff]
        %v531 = vld [vmem:[#allocation6 + $0x58] sm:$0xff]
        %v532 = vld [vmem:[#allocation6 + $0x60] sm:$0xff]
        %v533 = vld [vmem:[#allocation6 + $0x68] sm:$0xf]
        %v534 = vld [vmem:[#allocation6 + $0x6c] sm:$0xff]
        %v535 = vld [vmem:[#allocation6 + $0x74] sm:$0xff]
        %v536 = vld [vmem:[#allocation6 + $0x7c] sm:$0xff]
        %v537 = vld [vmem:[#allocation6 + $0x84] sm:$0xff]
        %v538 = vld [vmem:[#allocation6 + $0x8c] sm:$0xf]
        %v539 = vld [vmem:[#allocation6 + $0x90] sm:$0xff]
        %v540 = vld [vmem:[#allocation6 + $0x98] sm:$0xff]
        %v541 = vld [vmem:[#allocation6 + $0xa0] sm:$0xff]
        %v542 = vld [vmem:[#allocation6 + $0xa8] sm:$0xff]
        %v543 = vld [vmem:[#allocation6 + $0xb0] sm:$0xf]
        %v544 = vld [vmem:[#allocation6 + $0xb4] sm:$0xff]
        %v545 = vld [vmem:[#allocation6 + $0xbc] sm:$0xff]
        %v546 = vld [vmem:[#allocation6 + $0xc4] sm:$0xff]
        %v547 = vld [vmem:[#allocation6 + $0xcc] sm:$0xff]
        %v548 = vld [vmem:[#allocation6 + $0xd4] sm:$0xf]
        %v549 = vld [vmem:[#allocation6 + $0xd8] sm:$0xff]
        %v550 = vld [vmem:[#allocation6 + $0xe0] sm:$0xff]
        %v551 = vld [vmem:[#allocation6 + $0xe8] sm:$0xff]
        %v552 = vld [vmem:[#allocation6 + $0xf0] sm:$0xff]
        %v553 = vld [vmem:[#allocation6 + $0xf8] sm:$0xf]
        %v554 = vld [vmem:[#allocation6 + $0xfc] sm:$0xff]
        %v555 = vld [vmem:[#allocation6 + $0x104] sm:$0xff]
        %v556 = vld [vmem:[#allocation6 + $0x10c] sm:$0xff]
        %v557 = vld [vmem:[#allocation6 + $0x114] sm:$0xff]
        %v558 = vld [vmem:[#allocation6 + $0x11c] sm:$0xf]
        %v559 = vld [vmem:[#allocation6 + $0x120] sm:$0xff]
        %v560 = vld [vmem:[#allocation6 + $0x128] sm:$0xff]
        %v561 = vld [vmem:[#allocation6 + $0x130] sm:$0xff]
        %v562 = vld [vmem:[#allocation6 + $0x138] sm:$0xff]
        %v563 = vld [vmem:[#allocation6 + $0x140] sm:$0xf]
        %v564 = vld [vmem:[#allocation6 + $0x144] sm:$0xff]
        %v565 = vld [vmem:[#allocation6 + $0x14c] sm:$0xff]
        %v566 = vld [vmem:[#allocation6 + $0x154] sm:$0xff]
        %v567 = vld [vmem:[#allocation6 + $0x15c] sm:$0xff]
        %v568 = vld [vmem:[#allocation6 + $0x164] sm:$0xf]
        %v569 = vld [vmem:[#allocation6 + $0x168] sm:$0xff]
        %v570 = vld [vmem:[#allocation6 + $0x170] sm:$0xff]
        %v571 = vld [vmem:[#allocation6 + $0x178] sm:$0xff]
        %v572 = vld [vmem:[#allocation6 + $0x180] sm:$0xff]
        %v573 = vld [vmem:[#allocation6 + $0x188] sm:$0xf]
        %v574 = vld [vmem:[#allocation6 + $0x18c] sm:$0xff]
        %v575 = vld [vmem:[#allocation6 + $0x194] sm:$0xff]
        %v576 = vld [vmem:[#allocation6 + $0x19c] sm:$0xff]
        %v577 = vld [vmem:[#allocation6 + $0x1a4] sm:$0xff]
        %v578 = vld [vmem:[#allocation6 + $0x1ac] sm:$0xf]
        %v579 = vld [vmem:[#allocation6 + $0x1b0] sm:$0xff]
        %v580 = vld [vmem:[#allocation6 + $0x1b8] sm:$0xff]
        %v581 = vld [vmem:[#allocation6 + $0x1c0] sm:$0xff]
        %v582 = vld [vmem:[#allocation6 + $0x1c8] sm:$0xff]
        %v583 = vld [vmem:[#allocation6 + $0x1d0] sm:$0xf]
        %v584 = vld [vmem:[#allocation6 + $0x1d4] sm:$0xff]
        %v585 = vld [vmem:[#allocation6 + $0x1dc] sm:$0xff]
        %v586 = vld [vmem:[#allocation6 + $0x1e4] sm:$0xff]
        %v587 = vld [vmem:[#allocation6 + $0x1ec] sm:$0xff]
        %v588 = vld [vmem:[#allocation6 + $0x1f4] sm:$0xf]
        %v589 = vld [vmem:[#allocation6 + $0x1f8] sm:$0xff]
        %v590 = vld [vmem:[#allocation6 + $0x200] sm:$0xff]
        %v591 = vld [vmem:[#allocation6 + $0x208] sm:$0xff]
        %v592 = vld [vmem:[#allocation6 + $0x210] sm:$0xff]
        %v593 = vld [vmem:[#allocation6 + $0x218] sm:$0xf]
        %v594 = vld [vmem:[#allocation6 + $0x21c] sm:$0xff]
        %v595 = vld [vmem:[#allocation6 + $0x224] sm:$0xff]
        %v596 = vld [vmem:[#allocation6 + $0x22c] sm:$0xff]
        %v597 = vld [vmem:[#allocation6 + $0x234] sm:$0xff]
        %v598 = vld [vmem:[#allocation6 + $0x23c] sm:$0xf]
        %v599 = vld [vmem:[#allocation6 + $0x240] sm:$0xff]
        %v600 = vld [vmem:[#allocation6 + $0x248] sm:$0xff]
        %v601 = vld [vmem:[#allocation6 + $0x250] sm:$0xff]
        %v602 = vld [vmem:[#allocation6 + $0x258] sm:$0xff]
        %v603 = vld [vmem:[#allocation6 + $0x260] sm:$0xf]
        %v604 = vld [vmem:[#allocation6 + $0x264] sm:$0xff]
        %v605 = vld [vmem:[#allocation6 + $0x26c] sm:$0xff]
        %v606 = vld [vmem:[#allocation6 + $0x274] sm:$0xff]
        %v607 = vld [vmem:[#allocation6 + $0x27c] sm:$0xff]
        %v608 = vld [vmem:[#allocation6 + $0x284] sm:$0xf]
        %v609 = vld [vmem:[#allocation6 + $0x288] sm:$0xff]
        %v610 = vld [vmem:[#allocation6 + $0x290] sm:$0xff]
        %v611 = vld [vmem:[#allocation6 + $0x298] sm:$0xff]
        %v612 = vld [vmem:[#allocation6 + $0x2a0] sm:$0xff]
        %v613 = vld [vmem:[#allocation6 + $0x2a8] sm:$0xf]
        %v614 = vld [vmem:[#allocation6 + $0x2ac] sm:$0xff]
        %v615 = vld [vmem:[#allocation6 + $0x2b4] sm:$0xff]
        %v616 = vld [vmem:[#allocation6 + $0x2bc] sm:$0xff]
        %v617 = vld [vmem:[#allocation6 + $0x2c4] sm:$0xff]
        %v618 = vld [vmem:[#allocation6 + $0x2cc] sm:$0xf]
        %v619 = vld [vmem:[#allocation6 + $0x2d0] sm:$0xff]
        %v620 = vld [vmem:[#allocation6 + $0x2d8] sm:$0xff]
        %v621 = vld [vmem:[#allocation6 + $0x2e0] sm:$0xff]
        %v622 = vld [vmem:[#allocation6 + $0x2e8] sm:$0xff]
        %v623 = vld [vmem:[#allocation6 + $0x2f0] sm:$0xf]
        %v624 = vld [vmem:[#allocation6 + $0x2f4] sm:$0xff]
        %v625 = vld [vmem:[#allocation6 + $0x2fc] sm:$0xff]
        %v626 = vld [vmem:[#allocation6 + $0x304] sm:$0xff]
        %v627 = vld [vmem:[#allocation6 + $0x30c] sm:$0xff]
        %v628 = vld [vmem:[#allocation6 + $0x314] sm:$0xf]
        %v629 = vld [vmem:[#allocation6 + $0x318] sm:$0xff]
        %v630 = vld [vmem:[#allocation6 + $0x320] sm:$0xff]
        %v631 = vld [vmem:[#allocation6 + $0x328] sm:$0xff]
        %v632 = vld [vmem:[#allocation6 + $0x330] sm:$0xff]
        %v633 = vld [vmem:[#allocation6 + $0x338] sm:$0xf]
        %v634 = vld [vmem:[#allocation6 + $0x33c] sm:$0xff]
        %v635 = vld [vmem:[#allocation6 + $0x344] sm:$0xff]
        %v636 = vld [vmem:[#allocation6 + $0x34c] sm:$0xff]
        %v637 = vld [vmem:[#allocation6 + $0x354] sm:$0xff]
        %v638 = vld [vmem:[#allocation6 + $0x35c] sm:$0xf]
        %v639 = vld [vmem:[#allocation6 + $0x360] sm:$0xff]
        %v640 = vld [vmem:[#allocation6 + $0x368] sm:$0xff]
        %v641 = vld [vmem:[#allocation6 + $0x370] sm:$0xff]
        %v642 = vld [vmem:[#allocation6 + $0x378] sm:$0xff]
        %v643 = vld [vmem:[#allocation6 + $0x380] sm:$0xf]
        %v644 = vld [vmem:[#allocation6 + $0x384] sm:$0xff]
        %v645 = vld [vmem:[#allocation6 + $0x38c] sm:$0xff]
        %v646 = vld [vmem:[#allocation6 + $0x394] sm:$0xff]
        %v647 = vld [vmem:[#allocation6 + $0x39c] sm:$0xff]
        %v648 = vld [vmem:[#allocation6 + $0x3a4] sm:$0xf]
        %v649 = vld [vmem:[#allocation6 + $0x3a8] sm:$0xff]
        %v650 = vld [vmem:[#allocation6 + $0x3b0] sm:$0xff]
        %v651 = vld [vmem:[#allocation6 + $0x3b8] sm:$0xff]
        %v652 = vld [vmem:[#allocation6 + $0x3c0] sm:$0xff]
        %v653 = vld [vmem:[#allocation6 + $0x3c8] sm:$0xf]
        %v654 = vld [vmem:[#allocation6 + $0x3cc] sm:$0xff]
        %v655 = vld [vmem:[#allocation6 + $0x3d4] sm:$0xff]
        %v656 = vld [vmem:[#allocation6 + $0x3dc] sm:$0xff]
        %v657 = vld [vmem:[#allocation6 + $0x3e4] sm:$0xff]
        %v658 = vld [vmem:[#allocation6 + $0x3ec] sm:$0xf]
        %v659 = vld [vmem:[#allocation6 + $0x3f0] sm:$0xff]
        %v660 = vld [vmem:[#allocation6 + $0x3f8] sm:$0xff]
        %v661 = vld [vmem:[#allocation6 + $0x400] sm:$0xff]
        %v662 = vld [vmem:[#allocation6 + $0x408] sm:$0xff]
        %v663 = vld [vmem:[#allocation6 + $0x410] sm:$0xf]
        %v664 = vld [vmem:[#allocation6 + $0x414] sm:$0xff]
        %v665 = vld [vmem:[#allocation6 + $0x41c] sm:$0xff]
        %v666 = vld [vmem:[#allocation6 + $0x424] sm:$0xff]
        %v667 = vld [vmem:[#allocation6 + $0x42c] sm:$0xff]
        %v668 = vld [vmem:[#allocation6 + $0x434] sm:$0xf]
        %v669 = vld [vmem:[#allocation6 + $0x438] sm:$0xff]
        %v670 = vld [vmem:[#allocation6 + $0x440] sm:$0xff]
        %v671 = vld [vmem:[#allocation6 + $0x448] sm:$0xff]
        %v672 = vld [vmem:[#allocation6 + $0x450] sm:$0xff]
        %v673 = vld [vmem:[#allocation6 + $0x458] sm:$0xf]
        %v674 = vld [vmem:[#allocation6 + $0x45c] sm:$0xff]
        %v675 = vld [vmem:[#allocation6 + $0x464] sm:$0xff]
        %v676 = vld [vmem:[#allocation6 + $0x46c] sm:$0xff]
        %v677 = vld [vmem:[#allocation6 + $0x474] sm:$0xff]
        %v678 = vld [vmem:[#allocation6 + $0x47c] sm:$0xf]
        %v679 = vld [vmem:[#allocation6 + $0x480] sm:$0xff]
        %v680 = vld [vmem:[#allocation6 + $0x488] sm:$0xff]
        %v681 = vld [vmem:[#allocation6 + $0x490] sm:$0xff]
        %v682 = vld [vmem:[#allocation6 + $0x498] sm:$0xff]
        %v683 = vld [vmem:[#allocation6 + $0x4a0] sm:$0xf]
        %v684 = vld [vmem:[#allocation6 + $0x4a4] sm:$0xff]
        %v685 = vld [vmem:[#allocation6 + $0x4ac] sm:$0xff]
        %v686 = vld [vmem:[#allocation6 + $0x4b4] sm:$0xff]
        %v687 = vld [vmem:[#allocation6 + $0x4bc] sm:$0xff]
        %v688 = vld [vmem:[#allocation6 + $0x4c4] sm:$0xf]
        %v689 = vld [vmem:[#allocation6 + $0x4c8] sm:$0xff]
        %v690 = vld [vmem:[#allocation6 + $0x4d0] sm:$0xff]
        %v691 = vld [vmem:[#allocation6 + $0x4d8] sm:$0xff]
        %v692 = vld [vmem:[#allocation6 + $0x4e0] sm:$0xff]
        %v693 = vld [vmem:[#allocation6 + $0x4e8] sm:$0xf]
        %v694 = vld [vmem:[#allocation6 + $0x4ec] sm:$0xff]
        %v695 = vld [vmem:[#allocation6 + $0x4f4] sm:$0xff]
        %v696 = vld [vmem:[#allocation6 + $0x4fc] sm:$0xff]
        %v697 = vld [vmem:[#allocation6 + $0x504] sm:$0xff]
        %v698 = vld [vmem:[#allocation6 + $0x50c] sm:$0xf]
        %v699 = vld [vmem:[#allocation6 + $0x510] sm:$0xff]
        %v700 = vld [vmem:[#allocation6 + $0x518] sm:$0xff]
        %v701 = vld [vmem:[#allocation6 + $0x520] sm:$0xff]
        %v702 = vld [vmem:[#allocation6 + $0x528] sm:$0xff]
        %v703 = vld [vmem:[#allocation6 + $0x530] sm:$0xf]
        %v704 = vld [vmem:[#allocation6 + $0x534] sm:$0xff]
        %v705 = vld [vmem:[#allocation6 + $0x53c] sm:$0xff]
        %v706 = vld [vmem:[#allocation6 + $0x544] sm:$0xff]
        %v707 = vld [vmem:[#allocation6 + $0x54c] sm:$0xff]
        %v708 = vld [vmem:[#allocation6 + $0x554] sm:$0xf]
        %v709 = vld [vmem:[#allocation6 + $0x558] sm:$0xff]
        %v710 = vld [vmem:[#allocation6 + $0x560] sm:$0xff]
        %v711 = vld [vmem:[#allocation6 + $0x568] sm:$0xff]
        %v712 = vld [vmem:[#allocation6 + $0x570] sm:$0xff]
        %v713 = vld [vmem:[#allocation6 + $0x578] sm:$0xf]
        %v714 = vld [vmem:[#allocation6 + $0x57c] sm:$0xff]
        %v715 = vld [vmem:[#allocation6 + $0x584] sm:$0xff]
        %v716 = vld [vmem:[#allocation6 + $0x58c] sm:$0xff]
        %v717 = vld [vmem:[#allocation6 + $0x594] sm:$0xff]
        %v718 = vld [vmem:[#allocation6 + $0x59c] sm:$0xf]
        %v719 = vld [vmem:[#allocation6 + $0x5a0] sm:$0xff]
        %v720 = vld [vmem:[#allocation6 + $0x5a8] sm:$0xff]
        %v721 = vld [vmem:[#allocation6 + $0x5b0] sm:$0xff]
        %v722 = vld [vmem:[#allocation6 + $0x5b8] sm:$0xff]
        %v723 = vld [vmem:[#allocation6 + $0x5c0] sm:$0xf]
        %v724 = vld [vmem:[#allocation6 + $0x5c4] sm:$0xff]
        %v725 = vld [vmem:[#allocation6 + $0x5cc] sm:$0xff]
        %v726 = vld [vmem:[#allocation6 + $0x5d4] sm:$0xff]
        %v727 = vld [vmem:[#allocation6 + $0x5dc] sm:$0xff]
        %v728 = vld [vmem:[#allocation6 + $0x5e4] sm:$0xf]
        %v729 = vld [vmem:[#allocation6 + $0x5e8] sm:$0xff]
        %v730 = vld [vmem:[#allocation6 + $0x5f0] sm:$0xff]
        %v731 = vld [vmem:[#allocation6 + $0x5f8] sm:$0xff]
        %v732 = vld [vmem:[#allocation6 + $0x600] sm:$0xff]
        %v733 = vld [vmem:[#allocation6 + $0x608] sm:$0xf]
        %v734 = vld [vmem:[#allocation6 + $0x60c] sm:$0xff]
        %v735 = vld [vmem:[#allocation6 + $0x614] sm:$0xff]
        %v736 = vld [vmem:[#allocation6 + $0x61c] sm:$0xff]
        %v737 = vld [vmem:[#allocation6 + $0x624] sm:$0xff]
        %v738 = vld [vmem:[#allocation6 + $0x62c] sm:$0xf]
        %v739 = vld [vmem:[#allocation6 + $0x630] sm:$0xff]
        %v740 = vld [vmem:[#allocation6 + $0x638] sm:$0xff]
        %v741 = vld [vmem:[#allocation6 + $0x640] sm:$0xff]
        %v742 = vld [vmem:[#allocation6 + $0x648] sm:$0xff]
        %v743 = vld [vmem:[#allocation6 + $0x650] sm:$0xf]
        %v744 = vld [vmem:[#allocation6 + $0x654] sm:$0xff]
        %v745 = vld [vmem:[#allocation6 + $0x65c] sm:$0xff]
        %v746 = vld [vmem:[#allocation6 + $0x664] sm:$0xff]
        %v747 = vld [vmem:[#allocation6 + $0x66c] sm:$0xff]
        %v748 = vld [vmem:[#allocation6 + $0x674] sm:$0xf]
        %v749 = vld [vmem:[#allocation6 + $0x678] sm:$0xff]
        %v750 = vld [vmem:[#allocation6 + $0x680] sm:$0xff]
        %v751 = vld [vmem:[#allocation6 + $0x688] sm:$0xff]
        %v752 = vld [vmem:[#allocation6 + $0x690] sm:$0xff]
        %v753 = vld [vmem:[#allocation6 + $0x698] sm:$0xf]
        %v754 = vld [vmem:[#allocation6 + $0x69c] sm:$0xff]
        %v755 = vld [vmem:[#allocation6 + $0x6a4] sm:$0xff]
        %v756 = vld [vmem:[#allocation6 + $0x6ac] sm:$0xff]
        %v757 = vld [vmem:[#allocation6 + $0x6b4] sm:$0xff]
        %v758 = vld [vmem:[#allocation6 + $0x6bc] sm:$0xf]
        %v759 = vld [vmem:[#allocation8] sm:$0xff]
        %v760 = vld [vmem:[#allocation8 + $0x8] sm:$0x1]
        %v763 = vperm.slane %v759, 0
        %v764 = vperm.slane %v759, 1
        %v765 = vperm.slane %v759, 2
        %v766 = vperm.slane %v759, 3
        %v767 = vperm.slane %v759, 4
        %v768 = vperm.slane %v759, 5
        %v769 = vperm.slane %v759, 6
        %v770 = vperm.slane %v759, 7
        %v771 = vperm.slane %v760, 0
        %v1021 = vunpack.c.l.b16 %v519
        %v1022 = vunpack.c.h.b16 %v519
        %v1023 = vunpack.c.l.b16 %v520
        %v1024 = vunpack.c.h.b16 %v520
        %v1025 = vunpack.c.l.b16 %v521
        %v1026 = vunpack.c.h.b16 %v521
        %v1027 = vunpack.c.l.b16 %v522
        %v1028 = vunpack.c.h.b16 %v522
        %v1029 = vunpack.c.l.b16 %v523
        %v1030 = vunpack.c.l.b16 %v524
        %v1031 = vunpack.c.h.b16 %v524
        %v1032 = vunpack.c.l.b16 %v525
        %v1033 = vunpack.c.h.b16 %v525
        %v1034 = vunpack.c.l.b16 %v526
        %v1035 = vunpack.c.h.b16 %v526
        %v1036 = vunpack.c.l.b16 %v527
        %v1037 = vunpack.c.h.b16 %v527
        %v1038 = vunpack.c.l.b16 %v528
        %v1039 = vunpack.c.l.b16 %v529
        %v1040 = vunpack.c.h.b16 %v529
        %v1041 = vunpack.c.l.b16 %v530
        %v1042 = vunpack.c.h.b16 %v530
        %v1043 = vunpack.c.l.b16 %v531
        %v1044 = vunpack.c.h.b16 %v531
        %v1045 = vunpack.c.l.b16 %v532
        %v1046 = vunpack.c.h.b16 %v532
        %v1047 = vunpack.c.l.b16 %v533
        %v1048 = vunpack.c.l.b16 %v534
        %v1049 = vunpack.c.h.b16 %v534
        %v1050 = vunpack.c.l.b16 %v535
        %v1051 = vunpack.c.h.b16 %v535
        %v1052 = vunpack.c.l.b16 %v536
        %v1053 = vunpack.c.h.b16 %v536
        %v1054 = vunpack.c.l.b16 %v537
        %v1055 = vunpack.c.h.b16 %v537
        %v1056 = vunpack.c.l.b16 %v538
        %v1057 = vunpack.c.l.b16 %v539
        %v1058 = vunpack.c.h.b16 %v539
        %v1059 = vunpack.c.l.b16 %v540
        %v1060 = vunpack.c.h.b16 %v540
        %v1061 = vunpack.c.l.b16 %v541
        %v1062 = vunpack.c.h.b16 %v541
        %v1063 = vunpack.c.l.b16 %v542
        %v1064 = vunpack.c.h.b16 %v542
        %v1065 = vunpack.c.l.b16 %v543
        %v1066 = vunpack.c.l.b16 %v544
        %v1067 = vunpack.c.h.b16 %v544
        %v1068 = vunpack.c.l.b16 %v545
        %v1069 = vunpack.c.h.b16 %v545
        %v1070 = vunpack.c.l.b16 %v546
        %v1071 = vunpack.c.h.b16 %v546
        %v1072 = vunpack.c.l.b16 %v547
        %v1073 = vunpack.c.h.b16 %v547
        %v1074 = vunpack.c.l.b16 %v548
        %v1075 = vunpack.c.l.b16 %v549
        %v1076 = vunpack.c.h.b16 %v549
        %v1077 = vunpack.c.l.b16 %v550
        %v1078 = vunpack.c.h.b16 %v550
        %v1079 = vunpack.c.l.b16 %v551
        %v1080 = vunpack.c.h.b16 %v551
        %v1081 = vunpack.c.l.b16 %v552
        %v1082 = vunpack.c.h.b16 %v552
        %v1083 = vunpack.c.l.b16 %v553
        %v1084 = vunpack.c.l.b16 %v554
        %v1085 = vunpack.c.h.b16 %v554
        %v1086 = vunpack.c.l.b16 %v555
        %v1087 = vunpack.c.h.b16 %v555
        %v1088 = vunpack.c.l.b16 %v556
        %v1089 = vunpack.c.h.b16 %v556
        %v1090 = vunpack.c.l.b16 %v557
        %v1091 = vunpack.c.h.b16 %v557
        %v1092 = vunpack.c.l.b16 %v558
        %v1093 = vunpack.c.l.b16 %v559
        %v1094 = vunpack.c.h.b16 %v559
        %v1095 = vunpack.c.l.b16 %v560
        %v1096 = vunpack.c.h.b16 %v560
        %v1097 = vunpack.c.l.b16 %v561
        %v1098 = vunpack.c.h.b16 %v561
        %v1099 = vunpack.c.l.b16 %v562
        %v1100 = vunpack.c.h.b16 %v562
        %v1101 = vunpack.c.l.b16 %v563
        %v1102 = vunpack.c.l.b16 %v564
        %v1103 = vunpack.c.h.b16 %v564
        %v1104 = vunpack.c.l.b16 %v565
        %v1105 = vunpack.c.h.b16 %v565
        %v1106 = vunpack.c.l.b16 %v566
        %v1107 = vunpack.c.h.b16 %v566
        %v1108 = vunpack.c.l.b16 %v567
        %v1109 = vunpack.c.h.b16 %v567
        %v1110 = vunpack.c.l.b16 %v568
        %v1111 = vunpack.c.l.b16 %v569
        %v1112 = vunpack.c.h.b16 %v569
        %v1113 = vunpack.c.l.b16 %v570
        %v1114 = vunpack.c.h.b16 %v570
        %v1115 = vunpack.c.l.b16 %v571
        %v1116 = vunpack.c.h.b16 %v571
        %v1117 = vunpack.c.l.b16 %v572
        %v1118 = vunpack.c.h.b16 %v572
        %v1119 = vunpack.c.l.b16 %v573
        %v1120 = vunpack.c.l.b16 %v574
        %v1121 = vunpack.c.h.b16 %v574
        %v1122 = vunpack.c.l.b16 %v575
        %v1123 = vunpack.c.h.b16 %v575
        %v1124 = vunpack.c.l.b16 %v576
        %v1125 = vunpack.c.h.b16 %v576
        %v1126 = vunpack.c.l.b16 %v577
        %v1127 = vunpack.c.h.b16 %v577
        %v1128 = vunpack.c.l.b16 %v578
        %v1129 = vunpack.c.l.b16 %v579
        %v1130 = vunpack.c.h.b16 %v579
        %v1131 = vunpack.c.l.b16 %v580
        %v1132 = vunpack.c.h.b16 %v580
        %v1133 = vunpack.c.l.b16 %v581
        %v1134 = vunpack.c.h.b16 %v581
        %v1135 = vunpack.c.l.b16 %v582
        %v1136 = vunpack.c.h.b16 %v582
        %v1137 = vunpack.c.l.b16 %v583
        %v1138 = vunpack.c.l.b16 %v584
        %v1139 = vunpack.c.h.b16 %v584
        %v1140 = vunpack.c.l.b16 %v585
        %v1141 = vunpack.c.h.b16 %v585
        %v1142 = vunpack.c.l.b16 %v586
        %v1143 = vunpack.c.h.b16 %v586
        %v1144 = vunpack.c.l.b16 %v587
        %v1145 = vunpack.c.h.b16 %v587
        %v1146 = vunpack.c.l.b16 %v588
        %v1147 = vunpack.c.l.b16 %v589
        %v1148 = vunpack.c.h.b16 %v589
        %v1149 = vunpack.c.l.b16 %v590
        %v1150 = vunpack.c.h.b16 %v590
        %v1151 = vunpack.c.l.b16 %v591
        %v1152 = vunpack.c.h.b16 %v591
        %v1153 = vunpack.c.l.b16 %v592
        %v1154 = vunpack.c.h.b16 %v592
        %v1155 = vunpack.c.l.b16 %v593
        %v1156 = vunpack.c.l.b16 %v594
        %v1157 = vunpack.c.h.b16 %v594
        %v1158 = vunpack.c.l.b16 %v595
        %v1159 = vunpack.c.h.b16 %v595
        %v1160 = vunpack.c.l.b16 %v596
        %v1161 = vunpack.c.h.b16 %v596
        %v1162 = vunpack.c.l.b16 %v597
        %v1163 = vunpack.c.h.b16 %v597
        %v1164 = vunpack.c.l.b16 %v598
        %v1165 = vunpack.c.l.b16 %v599
        %v1166 = vunpack.c.h.b16 %v599
        %v1167 = vunpack.c.l.b16 %v600
        %v1168 = vunpack.c.h.b16 %v600
        %v1169 = vunpack.c.l.b16 %v601
        %v1170 = vunpack.c.h.b16 %v601
        %v1171 = vunpack.c.l.b16 %v602
        %v1172 = vunpack.c.h.b16 %v602
        %v1173 = vunpack.c.l.b16 %v603
        %v1174 = vunpack.c.l.b16 %v604
        %v1175 = vunpack.c.h.b16 %v604
        %v1176 = vunpack.c.l.b16 %v605
        %v1177 = vunpack.c.h.b16 %v605
        %v1178 = vunpack.c.l.b16 %v606
        %v1179 = vunpack.c.h.b16 %v606
        %v1180 = vunpack.c.l.b16 %v607
        %v1181 = vunpack.c.h.b16 %v607
        %v1182 = vunpack.c.l.b16 %v608
        %v1183 = vunpack.c.l.b16 %v609
        %v1184 = vunpack.c.h.b16 %v609
        %v1185 = vunpack.c.l.b16 %v610
        %v1186 = vunpack.c.h.b16 %v610
        %v1187 = vunpack.c.l.b16 %v611
        %v1188 = vunpack.c.h.b16 %v611
        %v1189 = vunpack.c.l.b16 %v612
        %v1190 = vunpack.c.h.b16 %v612
        %v1191 = vunpack.c.l.b16 %v613
        %v1192 = vunpack.c.l.b16 %v614
        %v1193 = vunpack.c.h.b16 %v614
        %v1194 = vunpack.c.l.b16 %v615
        %v1195 = vunpack.c.h.b16 %v615
        %v1196 = vunpack.c.l.b16 %v616
        %v1197 = vunpack.c.h.b16 %v616
        %v1198 = vunpack.c.l.b16 %v617
        %v1199 = vunpack.c.h.b16 %v617
        %v1200 = vunpack.c.l.b16 %v618
        %v1201 = vunpack.c.l.b16 %v619
        %v1202 = vunpack.c.h.b16 %v619
        %v1203 = vunpack.c.l.b16 %v620
        %v1204 = vunpack.c.h.b16 %v620
        %v1205 = vunpack.c.l.b16 %v621
        %v1206 = vunpack.c.h.b16 %v621
        %v1207 = vunpack.c.l.b16 %v622
        %v1208 = vunpack.c.h.b16 %v622
        %v1209 = vunpack.c.l.b16 %v623
        %v1210 = vunpack.c.l.b16 %v624
        %v1211 = vunpack.c.h.b16 %v624
        %v1212 = vunpack.c.l.b16 %v625
        %v1213 = vunpack.c.h.b16 %v625
        %v1214 = vunpack.c.l.b16 %v626
        %v1215 = vunpack.c.h.b16 %v626
        %v1216 = vunpack.c.l.b16 %v627
        %v1217 = vunpack.c.h.b16 %v627
        %v1218 = vunpack.c.l.b16 %v628
        %v1219 = vunpack.c.l.b16 %v629
        %v1220 = vunpack.c.h.b16 %v629
        %v1221 = vunpack.c.l.b16 %v630
        %v1222 = vunpack.c.h.b16 %v630
        %v1223 = vunpack.c.l.b16 %v631
        %v1224 = vunpack.c.h.b16 %v631
        %v1225 = vunpack.c.l.b16 %v632
        %v1226 = vunpack.c.h.b16 %v632
        %v1227 = vunpack.c.l.b16 %v633
        %v1228 = vunpack.c.l.b16 %v634
        %v1229 = vunpack.c.h.b16 %v634
        %v1230 = vunpack.c.l.b16 %v635
        %v1231 = vunpack.c.h.b16 %v635
        %v1232 = vunpack.c.l.b16 %v636
        %v1233 = vunpack.c.h.b16 %v636
        %v1234 = vunpack.c.l.b16 %v637
        %v1235 = vunpack.c.h.b16 %v637
        %v1236 = vunpack.c.l.b16 %v638
        %v1237 = vunpack.c.l.b16 %v639
        %v1238 = vunpack.c.h.b16 %v639
        %v1239 = vunpack.c.l.b16 %v640
        %v1240 = vunpack.c.h.b16 %v640
        %v1241 = vunpack.c.l.b16 %v641
        %v1242 = vunpack.c.h.b16 %v641
        %v1243 = vunpack.c.l.b16 %v642
        %v1244 = vunpack.c.h.b16 %v642
        %v1245 = vunpack.c.l.b16 %v643
        %v1246 = vunpack.c.l.b16 %v644
        %v1247 = vunpack.c.h.b16 %v644
        %v1248 = vunpack.c.l.b16 %v645
        %v1249 = vunpack.c.h.b16 %v645
        %v1250 = vunpack.c.l.b16 %v646
        %v1251 = vunpack.c.h.b16 %v646
        %v1252 = vunpack.c.l.b16 %v647
        %v1253 = vunpack.c.h.b16 %v647
        %v1254 = vunpack.c.l.b16 %v648
        %v1255 = vunpack.c.l.b16 %v649
        %v1256 = vunpack.c.h.b16 %v649
        %v1257 = vunpack.c.l.b16 %v650
        %v1258 = vunpack.c.h.b16 %v650
        %v1259 = vunpack.c.l.b16 %v651
        %v1260 = vunpack.c.h.b16 %v651
        %v1261 = vunpack.c.l.b16 %v652
        %v1262 = vunpack.c.h.b16 %v652
        %v1263 = vunpack.c.l.b16 %v653
        %v1264 = vunpack.c.l.b16 %v654
        %v1265 = vunpack.c.h.b16 %v654
        %v1266 = vunpack.c.l.b16 %v655
        %v1267 = vunpack.c.h.b16 %v655
        %v1268 = vunpack.c.l.b16 %v656
        %v1269 = vunpack.c.h.b16 %v656
        %v1270 = vunpack.c.l.b16 %v657
        %v1271 = vunpack.c.h.b16 %v657
        %v1272 = vunpack.c.l.b16 %v658
        %v1273 = vunpack.c.l.b16 %v659
        %v1274 = vunpack.c.h.b16 %v659
        %v1275 = vunpack.c.l.b16 %v660
        %v1276 = vunpack.c.h.b16 %v660
        %v1277 = vunpack.c.l.b16 %v661
        %v1278 = vunpack.c.h.b16 %v661
        %v1279 = vunpack.c.l.b16 %v662
        %v1280 = vunpack.c.h.b16 %v662
        %v1281 = vunpack.c.l.b16 %v663
        %v1282 = vunpack.c.l.b16 %v664
        %v1283 = vunpack.c.h.b16 %v664
        %v1284 = vunpack.c.l.b16 %v665
        %v1285 = vunpack.c.h.b16 %v665
        %v1286 = vunpack.c.l.b16 %v666
        %v1287 = vunpack.c.h.b16 %v666
        %v1288 = vunpack.c.l.b16 %v667
        %v1289 = vunpack.c.h.b16 %v667
        %v1290 = vunpack.c.l.b16 %v668
        %v1291 = vunpack.c.l.b16 %v669
        %v1292 = vunpack.c.h.b16 %v669
        %v1293 = vunpack.c.l.b16 %v670
        %v1294 = vunpack.c.h.b16 %v670
        %v1295 = vunpack.c.l.b16 %v671
        %v1296 = vunpack.c.h.b16 %v671
        %v1297 = vunpack.c.l.b16 %v672
        %v1298 = vunpack.c.h.b16 %v672
        %v1299 = vunpack.c.l.b16 %v673
        %v1300 = vunpack.c.l.b16 %v674
        %v1301 = vunpack.c.h.b16 %v674
        %v1302 = vunpack.c.l.b16 %v675
        %v1303 = vunpack.c.h.b16 %v675
        %v1304 = vunpack.c.l.b16 %v676
        %v1305 = vunpack.c.h.b16 %v676
        %v1306 = vunpack.c.l.b16 %v677
        %v1307 = vunpack.c.h.b16 %v677
        %v1308 = vunpack.c.l.b16 %v678
        %v1309 = vunpack.c.l.b16 %v679
        %v1310 = vunpack.c.h.b16 %v679
        %v1311 = vunpack.c.l.b16 %v680
        %v1312 = vunpack.c.h.b16 %v680
        %v1313 = vunpack.c.l.b16 %v681
        %v1314 = vunpack.c.h.b16 %v681
        %v1315 = vunpack.c.l.b16 %v682
        %v1316 = vunpack.c.h.b16 %v682
        %v1317 = vunpack.c.l.b16 %v683
        %v1318 = vunpack.c.l.b16 %v684
        %v1319 = vunpack.c.h.b16 %v684
        %v1320 = vunpack.c.l.b16 %v685
        %v1321 = vunpack.c.h.b16 %v685
        %v1322 = vunpack.c.l.b16 %v686
        %v1323 = vunpack.c.h.b16 %v686
        %v1324 = vunpack.c.l.b16 %v687
        %v1325 = vunpack.c.h.b16 %v687
        %v1326 = vunpack.c.l.b16 %v688
        %v1327 = vunpack.c.l.b16 %v689
        %v1328 = vunpack.c.h.b16 %v689
        %v1329 = vunpack.c.l.b16 %v690
        %v1330 = vunpack.c.h.b16 %v690
        %v1331 = vunpack.c.l.b16 %v691
        %v1332 = vunpack.c.h.b16 %v691
        %v1333 = vunpack.c.l.b16 %v692
        %v1334 = vunpack.c.h.b16 %v692
        %v1335 = vunpack.c.l.b16 %v693
        %v1336 = vunpack.c.l.b16 %v694
        %v1337 = vunpack.c.h.b16 %v694
        %v1338 = vunpack.c.l.b16 %v695
        %v1339 = vunpack.c.h.b16 %v695
        %v1340 = vunpack.c.l.b16 %v696
        %v1341 = vunpack.c.h.b16 %v696
        %v1342 = vunpack.c.l.b16 %v697
        %v1343 = vunpack.c.h.b16 %v697
        %v1344 = vunpack.c.l.b16 %v698
        %v1345 = vunpack.c.l.b16 %v699
        %v1346 = vunpack.c.h.b16 %v699
        %v1347 = vunpack.c.l.b16 %v700
        %v1348 = vunpack.c.h.b16 %v700
        %v1349 = vunpack.c.l.b16 %v701
        %v1350 = vunpack.c.h.b16 %v701
        %v1351 = vunpack.c.l.b16 %v702
        %v1352 = vunpack.c.h.b16 %v702
        %v1353 = vunpack.c.l.b16 %v703
        %v1354 = vunpack.c.l.b16 %v704
        %v1355 = vunpack.c.h.b16 %v704
        %v1356 = vunpack.c.l.b16 %v705
        %v1357 = vunpack.c.h.b16 %v705
        %v1358 = vunpack.c.l.b16 %v706
        %v1359 = vunpack.c.h.b16 %v706
        %v1360 = vunpack.c.l.b16 %v707
        %v1361 = vunpack.c.h.b16 %v707
        %v1362 = vunpack.c.l.b16 %v708
        %v1363 = vunpack.c.l.b16 %v709
        %v1364 = vunpack.c.h.b16 %v709
        %v1365 = vunpack.c.l.b16 %v710
        %v1366 = vunpack.c.h.b16 %v710
        %v1367 = vunpack.c.l.b16 %v711
        %v1368 = vunpack.c.h.b16 %v711
        %v1369 = vunpack.c.l.b16 %v712
        %v1370 = vunpack.c.h.b16 %v712
        %v1371 = vunpack.c.l.b16 %v713
        %v1372 = vunpack.c.l.b16 %v714
        %v1373 = vunpack.c.h.b16 %v714
        %v1374 = vunpack.c.l.b16 %v715
        %v1375 = vunpack.c.h.b16 %v715
        %v1376 = vunpack.c.l.b16 %v716
        %v1377 = vunpack.c.h.b16 %v716
        %v1378 = vunpack.c.l.b16 %v717
        %v1379 = vunpack.c.h.b16 %v717
        %v1380 = vunpack.c.l.b16 %v718
        %v1381 = vunpack.c.l.b16 %v719
        %v1382 = vunpack.c.h.b16 %v719
        %v1383 = vunpack.c.l.b16 %v720
        %v1384 = vunpack.c.h.b16 %v720
        %v1385 = vunpack.c.l.b16 %v721
        %v1386 = vunpack.c.h.b16 %v721
        %v1387 = vunpack.c.l.b16 %v722
        %v1388 = vunpack.c.h.b16 %v722
        %v1389 = vunpack.c.l.b16 %v723
        %v1390 = vunpack.c.l.b16 %v724
        %v1391 = vunpack.c.h.b16 %v724
        %v1392 = vunpack.c.l.b16 %v725
        %v1393 = vunpack.c.h.b16 %v725
        %v1394 = vunpack.c.l.b16 %v726
        %v1395 = vunpack.c.h.b16 %v726
        %v1396 = vunpack.c.l.b16 %v727
        %v1397 = vunpack.c.h.b16 %v727
        %v1398 = vunpack.c.l.b16 %v728
        %v1399 = vunpack.c.l.b16 %v729
        %v1400 = vunpack.c.h.b16 %v729
        %v1401 = vunpack.c.l.b16 %v730
        %v1402 = vunpack.c.h.b16 %v730
        %v1403 = vunpack.c.l.b16 %v731
        %v1404 = vunpack.c.h.b16 %v731
        %v1405 = vunpack.c.l.b16 %v732
        %v1406 = vunpack.c.h.b16 %v732
        %v1407 = vunpack.c.l.b16 %v733
        %v1408 = vunpack.c.l.b16 %v734
        %v1409 = vunpack.c.h.b16 %v734
        %v1410 = vunpack.c.l.b16 %v735
        %v1411 = vunpack.c.h.b16 %v735
        %v1412 = vunpack.c.l.b16 %v736
        %v1413 = vunpack.c.h.b16 %v736
        %v1414 = vunpack.c.l.b16 %v737
        %v1415 = vunpack.c.h.b16 %v737
        %v1416 = vunpack.c.l.b16 %v738
        %v1417 = vunpack.c.l.b16 %v739
        %v1418 = vunpack.c.h.b16 %v739
        %v1419 = vunpack.c.l.b16 %v740
        %v1420 = vunpack.c.h.b16 %v740
        %v1421 = vunpack.c.l.b16 %v741
        %v1422 = vunpack.c.h.b16 %v741
        %v1423 = vunpack.c.l.b16 %v742
        %v1424 = vunpack.c.h.b16 %v742
        %v1425 = vunpack.c.l.b16 %v743
        %v1426 = vunpack.c.l.b16 %v744
        %v1427 = vunpack.c.h.b16 %v744
        %v1428 = vunpack.c.l.b16 %v745
        %v1429 = vunpack.c.h.b16 %v745
        %v1430 = vunpack.c.l.b16 %v746
        %v1431 = vunpack.c.h.b16 %v746
        %v1432 = vunpack.c.l.b16 %v747
        %v1433 = vunpack.c.h.b16 %v747
        %v1434 = vunpack.c.l.b16 %v748
        %v1435 = vunpack.c.l.b16 %v749
        %v1436 = vunpack.c.h.b16 %v749
        %v1437 = vunpack.c.l.b16 %v750
        %v1438 = vunpack.c.h.b16 %v750
        %v1439 = vunpack.c.l.b16 %v751
        %v1440 = vunpack.c.h.b16 %v751
        %v1441 = vunpack.c.l.b16 %v752
        %v1442 = vunpack.c.h.b16 %v752
        %v1443 = vunpack.c.l.b16 %v753
        %v1444 = vunpack.c.l.b16 %v754
        %v1445 = vunpack.c.h.b16 %v754
        %v1446 = vunpack.c.l.b16 %v755
        %v1447 = vunpack.c.h.b16 %v755
        %v1448 = vunpack.c.l.b16 %v756
        %v1449 = vunpack.c.h.b16 %v756
        %v1450 = vunpack.c.l.b16 %v757
        %v1451 = vunpack.c.h.b16 %v757
        %v1452 = vunpack.c.l.b16 %v758
        %v1453 = vpack.c.b16 %v1030, %v1021
        %v1454 = vpack.c.b16 %v1031, %v1022
        %v1455 = vpack.c.b16 %v1032, %v1023
        %v1456 = vpack.c.b16 %v1033, %v1024
        %v1457 = vpack.c.b16 %v1034, %v1025
        %v1458 = vpack.c.b16 %v1035, %v1026
        %v1459 = vpack.c.b16 %v1036, %v1027
        %v1460 = vpack.c.b16 %v1037, %v1028
        %v1461 = vpack.c.b16 %v1038, %v1029
        %v1462 = vpack.c.b16 %v1048, %v1039
        %v1463 = vpack.c.b16 %v1049, %v1040
        %v1464 = vpack.c.b16 %v1050, %v1041
        %v1465 = vpack.c.b16 %v1051, %v1042
        %v1466 = vpack.c.b16 %v1052, %v1043
        %v1467 = vpack.c.b16 %v1053, %v1044
        %v1468 = vpack.c.b16 %v1054, %v1045
        %v1469 = vpack.c.b16 %v1055, %v1046
        %v1470 = vpack.c.b16 %v1056, %v1047
        %v1471 = vpack.c.b16 %v1066, %v1057
        %v1472 = vpack.c.b16 %v1067, %v1058
        %v1473 = vpack.c.b16 %v1068, %v1059
        %v1474 = vpack.c.b16 %v1069, %v1060
        %v1475 = vpack.c.b16 %v1070, %v1061
        %v1476 = vpack.c.b16 %v1071, %v1062
        %v1477 = vpack.c.b16 %v1072, %v1063
        %v1478 = vpack.c.b16 %v1073, %v1064
        %v1479 = vpack.c.b16 %v1074, %v1065
        %v1480 = vpack.c.b16 %v1084, %v1075
        %v1481 = vpack.c.b16 %v1085, %v1076
        %v1482 = vpack.c.b16 %v1086, %v1077
        %v1483 = vpack.c.b16 %v1087, %v1078
        %v1484 = vpack.c.b16 %v1088, %v1079
        %v1485 = vpack.c.b16 %v1089, %v1080
        %v1486 = vpack.c.b16 %v1090, %v1081
        %v1487 = vpack.c.b16 %v1091, %v1082
        %v1488 = vpack.c.b16 %v1092, %v1083
        %v1489 = vpack.c.b16 %v1102, %v1093
        %v1490 = vpack.c.b16 %v1103, %v1094
        %v1491 = vpack.c.b16 %v1104, %v1095
        %v1492 = vpack.c.b16 %v1105, %v1096
        %v1493 = vpack.c.b16 %v1106, %v1097
        %v1494 = vpack.c.b16 %v1107, %v1098
        %v1495 = vpack.c.b16 %v1108, %v1099
        %v1496 = vpack.c.b16 %v1109, %v1100
        %v1497 = vpack.c.b16 %v1110, %v1101
        %v1498 = vpack.c.b16 %v1120, %v1111
        %v1499 = vpack.c.b16 %v1121, %v1112
        %v1500 = vpack.c.b16 %v1122, %v1113
        %v1501 = vpack.c.b16 %v1123, %v1114
        %v1502 = vpack.c.b16 %v1124, %v1115
        %v1503 = vpack.c.b16 %v1125, %v1116
        %v1504 = vpack.c.b16 %v1126, %v1117
        %v1505 = vpack.c.b16 %v1127, %v1118
        %v1506 = vpack.c.b16 %v1128, %v1119
        %v1507 = vpack.c.b16 %v1138, %v1129
        %v1508 = vpack.c.b16 %v1139, %v1130
        %v1509 = vpack.c.b16 %v1140, %v1131
        %v1510 = vpack.c.b16 %v1141, %v1132
        %v1511 = vpack.c.b16 %v1142, %v1133
        %v1512 = vpack.c.b16 %v1143, %v1134
        %v1513 = vpack.c.b16 %v1144, %v1135
        %v1514 = vpack.c.b16 %v1145, %v1136
        %v1515 = vpack.c.b16 %v1146, %v1137
        %v1516 = vpack.c.b16 %v1156, %v1147
        %v1517 = vpack.c.b16 %v1157, %v1148
        %v1518 = vpack.c.b16 %v1158, %v1149
        %v1519 = vpack.c.b16 %v1159, %v1150
        %v1520 = vpack.c.b16 %v1160, %v1151
        %v1521 = vpack.c.b16 %v1161, %v1152
        %v1522 = vpack.c.b16 %v1162, %v1153
        %v1523 = vpack.c.b16 %v1163, %v1154
        %v1524 = vpack.c.b16 %v1164, %v1155
        %v1525 = vpack.c.b16 %v1174, %v1165
        %v1526 = vpack.c.b16 %v1175, %v1166
        %v1527 = vpack.c.b16 %v1176, %v1167
        %v1528 = vpack.c.b16 %v1177, %v1168
        %v1529 = vpack.c.b16 %v1178, %v1169
        %v1530 = vpack.c.b16 %v1179, %v1170
        %v1531 = vpack.c.b16 %v1180, %v1171
        %v1532 = vpack.c.b16 %v1181, %v1172
        %v1533 = vpack.c.b16 %v1182, %v1173
        %v1534 = vpack.c.b16 %v1192, %v1183
        %v1535 = vpack.c.b16 %v1193, %v1184
        %v1536 = vpack.c.b16 %v1194, %v1185
        %v1537 = vpack.c.b16 %v1195, %v1186
        %v1538 = vpack.c.b16 %v1196, %v1187
        %v1539 = vpack.c.b16 %v1197, %v1188
        %v1540 = vpack.c.b16 %v1198, %v1189
        %v1541 = vpack.c.b16 %v1199, %v1190
        %v1542 = vpack.c.b16 %v1200, %v1191
        %v1543 = vpack.c.b16 %v1210, %v1201
        %v1544 = vpack.c.b16 %v1211, %v1202
        %v1545 = vpack.c.b16 %v1212, %v1203
        %v1546 = vpack.c.b16 %v1213, %v1204
        %v1547 = vpack.c.b16 %v1214, %v1205
        %v1548 = vpack.c.b16 %v1215, %v1206
        %v1549 = vpack.c.b16 %v1216, %v1207
        %v1550 = vpack.c.b16 %v1217, %v1208
        %v1551 = vpack.c.b16 %v1218, %v1209
        %v1552 = vpack.c.b16 %v1228, %v1219
        %v1553 = vpack.c.b16 %v1229, %v1220
        %v1554 = vpack.c.b16 %v1230, %v1221
        %v1555 = vpack.c.b16 %v1231, %v1222
        %v1556 = vpack.c.b16 %v1232, %v1223
        %v1557 = vpack.c.b16 %v1233, %v1224
        %v1558 = vpack.c.b16 %v1234, %v1225
        %v1559 = vpack.c.b16 %v1235, %v1226
        %v1560 = vpack.c.b16 %v1236, %v1227
        %v1561 = vpack.c.b16 %v1246, %v1237
        %v1562 = vpack.c.b16 %v1247, %v1238
        %v1563 = vpack.c.b16 %v1248, %v1239
        %v1564 = vpack.c.b16 %v1249, %v1240
        %v1565 = vpack.c.b16 %v1250, %v1241
        %v1566 = vpack.c.b16 %v1251, %v1242
        %v1567 = vpack.c.b16 %v1252, %v1243
        %v1568 = vpack.c.b16 %v1253, %v1244
        %v1569 = vpack.c.b16 %v1254, %v1245
        %v1570 = vpack.c.b16 %v1264, %v1255
        %v1571 = vpack.c.b16 %v1265, %v1256
        %v1572 = vpack.c.b16 %v1266, %v1257
        %v1573 = vpack.c.b16 %v1267, %v1258
        %v1574 = vpack.c.b16 %v1268, %v1259
        %v1575 = vpack.c.b16 %v1269, %v1260
        %v1576 = vpack.c.b16 %v1270, %v1261
        %v1577 = vpack.c.b16 %v1271, %v1262
        %v1578 = vpack.c.b16 %v1272, %v1263
        %v1579 = vpack.c.b16 %v1282, %v1273
        %v1580 = vpack.c.b16 %v1283, %v1274
        %v1581 = vpack.c.b16 %v1284, %v1275
        %v1582 = vpack.c.b16 %v1285, %v1276
        %v1583 = vpack.c.b16 %v1286, %v1277
        %v1584 = vpack.c.b16 %v1287, %v1278
        %v1585 = vpack.c.b16 %v1288, %v1279
        %v1586 = vpack.c.b16 %v1289, %v1280
        %v1587 = vpack.c.b16 %v1290, %v1281
        %v1588 = vpack.c.b16 %v1300, %v1291
        %v1589 = vpack.c.b16 %v1301, %v1292
        %v1590 = vpack.c.b16 %v1302, %v1293
        %v1591 = vpack.c.b16 %v1303, %v1294
        %v1592 = vpack.c.b16 %v1304, %v1295
        %v1593 = vpack.c.b16 %v1305, %v1296
        %v1594 = vpack.c.b16 %v1306, %v1297
        %v1595 = vpack.c.b16 %v1307, %v1298
        %v1596 = vpack.c.b16 %v1308, %v1299
        %v1597 = vpack.c.b16 %v1318, %v1309
        %v1598 = vpack.c.b16 %v1319, %v1310
        %v1599 = vpack.c.b16 %v1320, %v1311
        %v1600 = vpack.c.b16 %v1321, %v1312
        %v1601 = vpack.c.b16 %v1322, %v1313
        %v1602 = vpack.c.b16 %v1323, %v1314
        %v1603 = vpack.c.b16 %v1324, %v1315
        %v1604 = vpack.c.b16 %v1325, %v1316
        %v1605 = vpack.c.b16 %v1326, %v1317
        %v1606 = vpack.c.b16 %v1336, %v1327
        %v1607 = vpack.c.b16 %v1337, %v1328
        %v1608 = vpack.c.b16 %v1338, %v1329
        %v1609 = vpack.c.b16 %v1339, %v1330
        %v1610 = vpack.c.b16 %v1340, %v1331
        %v1611 = vpack.c.b16 %v1341, %v1332
        %v1612 = vpack.c.b16 %v1342, %v1333
        %v1613 = vpack.c.b16 %v1343, %v1334
        %v1614 = vpack.c.b16 %v1344, %v1335
        %v1615 = vpack.c.b16 %v1354, %v1345
        %v1616 = vpack.c.b16 %v1355, %v1346
        %v1617 = vpack.c.b16 %v1356, %v1347
        %v1618 = vpack.c.b16 %v1357, %v1348
        %v1619 = vpack.c.b16 %v1358, %v1349
        %v1620 = vpack.c.b16 %v1359, %v1350
        %v1621 = vpack.c.b16 %v1360, %v1351
        %v1622 = vpack.c.b16 %v1361, %v1352
        %v1623 = vpack.c.b16 %v1362, %v1353
        %v1624 = vpack.c.b16 %v1372, %v1363
        %v1625 = vpack.c.b16 %v1373, %v1364
        %v1626 = vpack.c.b16 %v1374, %v1365
        %v1627 = vpack.c.b16 %v1375, %v1366
        %v1628 = vpack.c.b16 %v1376, %v1367
        %v1629 = vpack.c.b16 %v1377, %v1368
        %v1630 = vpack.c.b16 %v1378, %v1369
        %v1631 = vpack.c.b16 %v1379, %v1370
        %v1632 = vpack.c.b16 %v1380, %v1371
        %v1633 = vpack.c.b16 %v1390, %v1381
        %v1634 = vpack.c.b16 %v1391, %v1382
        %v1635 = vpack.c.b16 %v1392, %v1383
        %v1636 = vpack.c.b16 %v1393, %v1384
        %v1637 = vpack.c.b16 %v1394, %v1385
        %v1638 = vpack.c.b16 %v1395, %v1386
        %v1639 = vpack.c.b16 %v1396, %v1387
        %v1640 = vpack.c.b16 %v1397, %v1388
        %v1641 = vpack.c.b16 %v1398, %v1389
        %v1642 = vpack.c.b16 %v1408, %v1399
        %v1643 = vpack.c.b16 %v1409, %v1400
        %v1644 = vpack.c.b16 %v1410, %v1401
        %v1645 = vpack.c.b16 %v1411, %v1402
        %v1646 = vpack.c.b16 %v1412, %v1403
        %v1647 = vpack.c.b16 %v1413, %v1404
        %v1648 = vpack.c.b16 %v1414, %v1405
        %v1649 = vpack.c.b16 %v1415, %v1406
        %v1650 = vpack.c.b16 %v1416, %v1407
        %v1651 = vpack.c.b16 %v1426, %v1417
        %v1652 = vpack.c.b16 %v1427, %v1418
        %v1653 = vpack.c.b16 %v1428, %v1419
        %v1654 = vpack.c.b16 %v1429, %v1420
        %v1655 = vpack.c.b16 %v1430, %v1421
        %v1656 = vpack.c.b16 %v1431, %v1422
        %v1657 = vpack.c.b16 %v1432, %v1423
        %v1658 = vpack.c.b16 %v1433, %v1424
        %v1659 = vpack.c.b16 %v1434, %v1425
        %v1660 = vpack.c.b16 %v1444, %v1435
        %v1661 = vpack.c.b16 %v1445, %v1436
        %v1662 = vpack.c.b16 %v1446, %v1437
        %v1663 = vpack.c.b16 %v1447, %v1438
        %v1664 = vpack.c.b16 %v1448, %v1439
        %v1665 = vpack.c.b16 %v1449, %v1440
        %v1666 = vpack.c.b16 %v1450, %v1441
        %v1667 = vpack.c.b16 %v1451, %v1442
        %v1668 = vpack.c.b16 %v1452, %v1443
        %1885 = vmatpush.bf16.msra.mxu0 %v1516
        %1886 = vmatpush.bf16.msra.mxu0 %v1507
        %1887 = vmatpush.bf16.msra.mxu0 %v1498
        %1888 = vmatpush.bf16.msra.mxu0 %v1489
        %1889 = vmatpush.bf16.msra.mxu0 %v1480
        %1890 = vmatpush.bf16.msra.mxu0 %v1471
        %1891 = vmatpush.bf16.msra.mxu0 %v1462
        %1892 = vmatpush.bf16.msra.mxu0 %v1453
        %1893 = vmatmul.bf16.gmra.mxu0 %v516
        %v1894 = vpop.f32.mrf.mxu0
        %v1895 = vadd.f32 %v763, %v1894
        %v1896 = vpop.f32.mrf.mxu0
        %1897 = vdwg.mxu0
        %1898 = vmatpush.bf16.msra.mxu0 %v1588
        %1899 = vmatpush.bf16.msra.mxu0 %v1579
        %1900 = vmatpush.bf16.msra.mxu0 %v1570
        %1901 = vmatpush.bf16.msra.mxu0 %v1561
        %1902 = vmatpush.bf16.msra.mxu0 %v1552
        %1903 = vmatpush.bf16.msra.mxu0 %v1543
        %1904 = vmatpush.bf16.msra.mxu0 %v1534
        %1905 = vmatpush.bf16.msra.mxu0 %v1525
        %1906 = vmatmul.bf16.gmra.mxu0 %v517
        %v1907 = vpop.f32.mrf.mxu0
        %v1908 = vadd.f32 %v1895, %v1907
        %v1909 = vpop.f32.mrf.mxu0
        %1910 = vdwg.mxu0
        %1911 = vmatpush.bf16.msra.mxu0 %v1660
        %1912 = vmatpush.bf16.msra.mxu0 %v1651
        %1913 = vmatpush.bf16.msra.mxu0 %v1642
        %1914 = vmatpush.bf16.msra.mxu0 %v1633
        %1915 = vmatpush.bf16.msra.mxu0 %v1624
        %1916 = vmatpush.bf16.msra.mxu0 %v1615
        %1917 = vmatpush.bf16.msra.mxu0 %v1606
        %1918 = vmatpush.bf16.msra.mxu0 %v1597
        %1919 = vmatmul.bf16.gmra.mxu0 %v518
        %v1920 = vpop.f32.mrf.mxu0
        %v1921 = vadd.f32 %v1908, %v1920
        %v1922 = vpop.f32.mrf.mxu0
        %1923 = vdwg.mxu0
        %1924 = vmatpush.bf16.msra.mxu0 %v1517
        %1925 = vmatpush.bf16.msra.mxu0 %v1508
        %1926 = vmatpush.bf16.msra.mxu0 %v1499
        %1927 = vmatpush.bf16.msra.mxu0 %v1490
        %1928 = vmatpush.bf16.msra.mxu0 %v1481
        %1929 = vmatpush.bf16.msra.mxu0 %v1472
        %1930 = vmatpush.bf16.msra.mxu0 %v1463
        %1931 = vmatpush.bf16.msra.mxu0 %v1454
        %1932 = vmatmul.bf16.gmra.mxu0 %v516
        %v1933 = vpop.f32.mrf.mxu0
        %v1934 = vadd.f32 %v764, %v1933
        %v1935 = vpop.f32.mrf.mxu0
        %1936 = vdwg.mxu0
        %1937 = vmatpush.bf16.msra.mxu0 %v1589
        %1938 = vmatpush.bf16.msra.mxu0 %v1580
        %1939 = vmatpush.bf16.msra.mxu0 %v1571
        %1940 = vmatpush.bf16.msra.mxu0 %v1562
        %1941 = vmatpush.bf16.msra.mxu0 %v1553
        %1942 = vmatpush.bf16.msra.mxu0 %v1544
        %1943 = vmatpush.bf16.msra.mxu0 %v1535
        %1944 = vmatpush.bf16.msra.mxu0 %v1526
        %1945 = vmatmul.bf16.gmra.mxu0 %v517
        %v1946 = vpop.f32.mrf.mxu0
        %v1947 = vadd.f32 %v1934, %v1946
        %v1948 = vpop.f32.mrf.mxu0
        %1949 = vdwg.mxu0
        %1950 = vmatpush.bf16.msra.mxu0 %v1661
        %1951 = vmatpush.bf16.msra.mxu0 %v1652
        %1952 = vmatpush.bf16.msra.mxu0 %v1643
        %1953 = vmatpush.bf16.msra.mxu0 %v1634
        %1954 = vmatpush.bf16.msra.mxu0 %v1625
        %1955 = vmatpush.bf16.msra.mxu0 %v1616
        %1956 = vmatpush.bf16.msra.mxu0 %v1607
        %1957 = vmatpush.bf16.msra.mxu0 %v1598
        %1958 = vmatmul.bf16.gmra.mxu0 %v518
        %v1959 = vpop.f32.mrf.mxu0
        %v1960 = vadd.f32 %v1947, %v1959
        %v1961 = vpop.f32.mrf.mxu0
        %1962 = vdwg.mxu0
        %1963 = vmatpush.bf16.msra.mxu0 %v1518
        %1964 = vmatpush.bf16.msra.mxu0 %v1509
        %1965 = vmatpush.bf16.msra.mxu0 %v1500
        %1966 = vmatpush.bf16.msra.mxu0 %v1491
        %1967 = vmatpush.bf16.msra.mxu0 %v1482
        %1968 = vmatpush.bf16.msra.mxu0 %v1473
        %1969 = vmatpush.bf16.msra.mxu0 %v1464
        %1970 = vmatpush.bf16.msra.mxu0 %v1455
        %1971 = vmatmul.bf16.gmra.mxu0 %v516
        %v1972 = vpop.f32.mrf.mxu0
        %v1973 = vadd.f32 %v765, %v1972
        %v1974 = vpop.f32.mrf.mxu0
        %1975 = vdwg.mxu0
        %1976 = vmatpush.bf16.msra.mxu0 %v1590
        %1977 = vmatpush.bf16.msra.mxu0 %v1581
        %1978 = vmatpush.bf16.msra.mxu0 %v1572
        %1979 = vmatpush.bf16.msra.mxu0 %v1563
        %1980 = vmatpush.bf16.msra.mxu0 %v1554
        %1981 = vmatpush.bf16.msra.mxu0 %v1545
        %1982 = vmatpush.bf16.msra.mxu0 %v1536
        %1983 = vmatpush.bf16.msra.mxu0 %v1527
        %1984 = vmatmul.bf16.gmra.mxu0 %v517
        %v1985 = vpop.f32.mrf.mxu0
        %v1986 = vadd.f32 %v1973, %v1985
        %v1987 = vpop.f32.mrf.mxu0
        %1988 = vdwg.mxu0
        %1989 = vmatpush.bf16.msra.mxu0 %v1662
        %1990 = vmatpush.bf16.msra.mxu0 %v1653
        %1991 = vmatpush.bf16.msra.mxu0 %v1644
        %1992 = vmatpush.bf16.msra.mxu0 %v1635
        %1993 = vmatpush.bf16.msra.mxu0 %v1626
        %1994 = vmatpush.bf16.msra.mxu0 %v1617
        %1995 = vmatpush.bf16.msra.mxu0 %v1608
        %1996 = vmatpush.bf16.msra.mxu0 %v1599
        %1997 = vmatmul.bf16.gmra.mxu0 %v518
        %v1998 = vpop.f32.mrf.mxu0
        %v1999 = vadd.f32 %v1986, %v1998
        %v2000 = vpop.f32.mrf.mxu0
        %2001 = vdwg.mxu0
        %2002 = vmatpush.bf16.msra.mxu0 %v1519
        %2003 = vmatpush.bf16.msra.mxu0 %v1510
        %2004 = vmatpush.bf16.msra.mxu0 %v1501
        %2005 = vmatpush.bf16.msra.mxu0 %v1492
        %2006 = vmatpush.bf16.msra.mxu0 %v1483
        %2007 = vmatpush.bf16.msra.mxu0 %v1474
        %2008 = vmatpush.bf16.msra.mxu0 %v1465
        %2009 = vmatpush.bf16.msra.mxu0 %v1456
        %2010 = vmatmul.bf16.gmra.mxu0 %v516
        %v2011 = vpop.f32.mrf.mxu0
        %v2012 = vadd.f32 %v766, %v2011
        %v2013 = vpop.f32.mrf.mxu0
        %2014 = vdwg.mxu0
        %2015 = vmatpush.bf16.msra.mxu0 %v1591
        %2016 = vmatpush.bf16.msra.mxu0 %v1582
        %2017 = vmatpush.bf16.msra.mxu0 %v1573
        %2018 = vmatpush.bf16.msra.mxu0 %v1564
        %2019 = vmatpush.bf16.msra.mxu0 %v1555
        %2020 = vmatpush.bf16.msra.mxu0 %v1546
        %2021 = vmatpush.bf16.msra.mxu0 %v1537
        %2022 = vmatpush.bf16.msra.mxu0 %v1528
        %2023 = vmatmul.bf16.gmra.mxu0 %v517
        %v2024 = vpop.f32.mrf.mxu0
        %v2025 = vadd.f32 %v2012, %v2024
        %v2026 = vpop.f32.mrf.mxu0
        %2027 = vdwg.mxu0
        %2028 = vmatpush.bf16.msra.mxu0 %v1663
        %2029 = vmatpush.bf16.msra.mxu0 %v1654
        %2030 = vmatpush.bf16.msra.mxu0 %v1645
        %2031 = vmatpush.bf16.msra.mxu0 %v1636
        %2032 = vmatpush.bf16.msra.mxu0 %v1627
        %2033 = vmatpush.bf16.msra.mxu0 %v1618
        %2034 = vmatpush.bf16.msra.mxu0 %v1609
        %2035 = vmatpush.bf16.msra.mxu0 %v1600
        %2036 = vmatmul.bf16.gmra.mxu0 %v518
        %v2037 = vpop.f32.mrf.mxu0
        %v2038 = vadd.f32 %v2025, %v2037
        %v2039 = vpop.f32.mrf.mxu0
        %2040 = vdwg.mxu0
        %2041 = vmatpush.bf16.msra.mxu0 %v1520
        %2042 = vmatpush.bf16.msra.mxu0 %v1511
        %2043 = vmatpush.bf16.msra.mxu0 %v1502
        %2044 = vmatpush.bf16.msra.mxu0 %v1493
        %2045 = vmatpush.bf16.msra.mxu0 %v1484
        %2046 = vmatpush.bf16.msra.mxu0 %v1475
        %2047 = vmatpush.bf16.msra.mxu0 %v1466
        %2048 = vmatpush.bf16.msra.mxu0 %v1457
        %2049 = vmatmul.bf16.gmra.mxu0 %v516
        %v2050 = vpop.f32.mrf.mxu0
        %v2051 = vadd.f32 %v767, %v2050
        %v2052 = vpop.f32.mrf.mxu0
        %2053 = vdwg.mxu0
        %2054 = vmatpush.bf16.msra.mxu0 %v1592
        %2055 = vmatpush.bf16.msra.mxu0 %v1583
        %2056 = vmatpush.bf16.msra.mxu0 %v1574
        %2057 = vmatpush.bf16.msra.mxu0 %v1565
        %2058 = vmatpush.bf16.msra.mxu0 %v1556
        %2059 = vmatpush.bf16.msra.mxu0 %v1547
        %2060 = vmatpush.bf16.msra.mxu0 %v1538
        %2061 = vmatpush.bf16.msra.mxu0 %v1529
        %2062 = vmatmul.bf16.gmra.mxu0 %v517
        %v2063 = vpop.f32.mrf.mxu0
        %v2064 = vadd.f32 %v2051, %v2063
        %v2065 = vpop.f32.mrf.mxu0
        %2066 = vdwg.mxu0
        %2067 = vmatpush.bf16.msra.mxu0 %v1664
        %2068 = vmatpush.bf16.msra.mxu0 %v1655
        %2069 = vmatpush.bf16.msra.mxu0 %v1646
        %2070 = vmatpush.bf16.msra.mxu0 %v1637
        %2071 = vmatpush.bf16.msra.mxu0 %v1628
        %2072 = vmatpush.bf16.msra.mxu0 %v1619
        %2073 = vmatpush.bf16.msra.mxu0 %v1610
        %2074 = vmatpush.bf16.msra.mxu0 %v1601
        %2075 = vmatmul.bf16.gmra.mxu0 %v518
        %v2076 = vpop.f32.mrf.mxu0
        %v2077 = vadd.f32 %v2064, %v2076
        %v2078 = vpop.f32.mrf.mxu0
        %2079 = vdwg.mxu0
        %2080 = vmatpush.bf16.msra.mxu0 %v1521
        %2081 = vmatpush.bf16.msra.mxu0 %v1512
        %2082 = vmatpush.bf16.msra.mxu0 %v1503
        %2083 = vmatpush.bf16.msra.mxu0 %v1494
        %2084 = vmatpush.bf16.msra.mxu0 %v1485
        %2085 = vmatpush.bf16.msra.mxu0 %v1476
        %2086 = vmatpush.bf16.msra.mxu0 %v1467
        %2087 = vmatpush.bf16.msra.mxu0 %v1458
        %2088 = vmatmul.bf16.gmra.mxu0 %v516
        %v2089 = vpop.f32.mrf.mxu0
        %v2090 = vadd.f32 %v768, %v2089
        %v2091 = vpop.f32.mrf.mxu0
        %2092 = vdwg.mxu0
        %2093 = vmatpush.bf16.msra.mxu0 %v1593
        %2094 = vmatpush.bf16.msra.mxu0 %v1584
        %2095 = vmatpush.bf16.msra.mxu0 %v1575
        %2096 = vmatpush.bf16.msra.mxu0 %v1566
        %2097 = vmatpush.bf16.msra.mxu0 %v1557
        %2098 = vmatpush.bf16.msra.mxu0 %v1548
        %2099 = vmatpush.bf16.msra.mxu0 %v1539
        %2100 = vmatpush.bf16.msra.mxu0 %v1530
        %2101 = vmatmul.bf16.gmra.mxu0 %v517
        %v2102 = vpop.f32.mrf.mxu0
        %v2103 = vadd.f32 %v2090, %v2102
        %v2104 = vpop.f32.mrf.mxu0
        %2105 = vdwg.mxu0
        %2106 = vmatpush.bf16.msra.mxu0 %v1665
        %2107 = vmatpush.bf16.msra.mxu0 %v1656
        %2108 = vmatpush.bf16.msra.mxu0 %v1647
        %2109 = vmatpush.bf16.msra.mxu0 %v1638
        %2110 = vmatpush.bf16.msra.mxu0 %v1629
        %2111 = vmatpush.bf16.msra.mxu0 %v1620
        %2112 = vmatpush.bf16.msra.mxu0 %v1611
        %2113 = vmatpush.bf16.msra.mxu0 %v1602
        %2114 = vmatmul.bf16.gmra.mxu0 %v518
        %v2115 = vpop.f32.mrf.mxu0
        %v2116 = vadd.f32 %v2103, %v2115
        %v2117 = vpop.f32.mrf.mxu0
        %2118 = vdwg.mxu0
        %2119 = vmatpush.bf16.msra.mxu0 %v1522
        %2120 = vmatpush.bf16.msra.mxu0 %v1513
        %2121 = vmatpush.bf16.msra.mxu0 %v1504
        %2122 = vmatpush.bf16.msra.mxu0 %v1495
        %2123 = vmatpush.bf16.msra.mxu0 %v1486
        %2124 = vmatpush.bf16.msra.mxu0 %v1477
        %2125 = vmatpush.bf16.msra.mxu0 %v1468
        %2126 = vmatpush.bf16.msra.mxu0 %v1459
        %2127 = vmatmul.bf16.gmra.mxu0 %v516
        %v2128 = vpop.f32.mrf.mxu0
        %v2129 = vadd.f32 %v769, %v2128
        %v2130 = vpop.f32.mrf.mxu0
        %2131 = vdwg.mxu0
        %2132 = vmatpush.bf16.msra.mxu0 %v1594
        %2133 = vmatpush.bf16.msra.mxu0 %v1585
        %2134 = vmatpush.bf16.msra.mxu0 %v1576
        %2135 = vmatpush.bf16.msra.mxu0 %v1567
        %2136 = vmatpush.bf16.msra.mxu0 %v1558
        %2137 = vmatpush.bf16.msra.mxu0 %v1549
        %2138 = vmatpush.bf16.msra.mxu0 %v1540
        %2139 = vmatpush.bf16.msra.mxu0 %v1531
        %2140 = vmatmul.bf16.gmra.mxu0 %v517
        %v2141 = vpop.f32.mrf.mxu0
        %v2142 = vadd.f32 %v2129, %v2141
        %v2143 = vpop.f32.mrf.mxu0
        %2144 = vdwg.mxu0
        %2145 = vmatpush.bf16.msra.mxu0 %v1666
        %2146 = vmatpush.bf16.msra.mxu0 %v1657
        %2147 = vmatpush.bf16.msra.mxu0 %v1648
        %2148 = vmatpush.bf16.msra.mxu0 %v1639
        %2149 = vmatpush.bf16.msra.mxu0 %v1630
        %2150 = vmatpush.bf16.msra.mxu0 %v1621
        %2151 = vmatpush.bf16.msra.mxu0 %v1612
        %2152 = vmatpush.bf16.msra.mxu0 %v1603
        %2153 = vmatmul.bf16.gmra.mxu0 %v518
        %v2154 = vpop.f32.mrf.mxu0
        %v2155 = vadd.f32 %v2142, %v2154
        %v2156 = vpop.f32.mrf.mxu0
        %2157 = vdwg.mxu0
        %2158 = vmatpush.bf16.msra.mxu0 %v1523
        %2159 = vmatpush.bf16.msra.mxu0 %v1514
        %2160 = vmatpush.bf16.msra.mxu0 %v1505
        %2161 = vmatpush.bf16.msra.mxu0 %v1496
        %2162 = vmatpush.bf16.msra.mxu0 %v1487
        %2163 = vmatpush.bf16.msra.mxu0 %v1478
        %2164 = vmatpush.bf16.msra.mxu0 %v1469
        %2165 = vmatpush.bf16.msra.mxu0 %v1460
        %2166 = vmatmul.bf16.gmra.mxu0 %v516
        %v2167 = vpop.f32.mrf.mxu0
        %v2168 = vadd.f32 %v770, %v2167
        %v2169 = vpop.f32.mrf.mxu0
        %2170 = vdwg.mxu0
        %2171 = vmatpush.bf16.msra.mxu0 %v1595
        %2172 = vmatpush.bf16.msra.mxu0 %v1586
        %2173 = vmatpush.bf16.msra.mxu0 %v1577
        %2174 = vmatpush.bf16.msra.mxu0 %v1568
        %2175 = vmatpush.bf16.msra.mxu0 %v1559
        %2176 = vmatpush.bf16.msra.mxu0 %v1550
        %2177 = vmatpush.bf16.msra.mxu0 %v1541
        %2178 = vmatpush.bf16.msra.mxu0 %v1532
        %2179 = vmatmul.bf16.gmra.mxu0 %v517
        %v2180 = vpop.f32.mrf.mxu0
        %v2181 = vadd.f32 %v2168, %v2180
        %v2182 = vpop.f32.mrf.mxu0
        %2183 = vdwg.mxu0
        %2184 = vmatpush.bf16.msra.mxu0 %v1667
        %2185 = vmatpush.bf16.msra.mxu0 %v1658
        %2186 = vmatpush.bf16.msra.mxu0 %v1649
        %2187 = vmatpush.bf16.msra.mxu0 %v1640
        %2188 = vmatpush.bf16.msra.mxu0 %v1631
        %2189 = vmatpush.bf16.msra.mxu0 %v1622
        %2190 = vmatpush.bf16.msra.mxu0 %v1613
        %2191 = vmatpush.bf16.msra.mxu0 %v1604
        %2192 = vmatmul.bf16.gmra.mxu0 %v518
        %v2193 = vpop.f32.mrf.mxu0
        %v2194 = vadd.f32 %v2181, %v2193
        %v2195 = vpop.f32.mrf.mxu0
        %2196 = vdwg.mxu0
        %2197 = vmatpush.bf16.msra.mxu0 %v1524
        %2198 = vmatpush.bf16.msra.mxu0 %v1515
        %2199 = vmatpush.bf16.msra.mxu0 %v1506
        %2200 = vmatpush.bf16.msra.mxu0 %v1497
        %2201 = vmatpush.bf16.msra.mxu0 %v1488
        %2202 = vmatpush.bf16.msra.mxu0 %v1479
        %2203 = vmatpush.bf16.msra.mxu0 %v1470
        %2204 = vmatpush.bf16.msra.mxu0 %v1461
        %2205 = vmatmul.bf16.gmra.mxu0 %v516
        %v2206 = vpop.f32.mrf.mxu0
        %v2207 = vadd.f32 %v771, %v2206
        %v2208 = vpop.f32.mrf.mxu0
        %2209 = vdwg.mxu0
        %2210 = vmatpush.bf16.msra.mxu0 %v1596
        %2211 = vmatpush.bf16.msra.mxu0 %v1587
        %2212 = vmatpush.bf16.msra.mxu0 %v1578
        %2213 = vmatpush.bf16.msra.mxu0 %v1569
        %2214 = vmatpush.bf16.msra.mxu0 %v1560
        %2215 = vmatpush.bf16.msra.mxu0 %v1551
        %2216 = vmatpush.bf16.msra.mxu0 %v1542
        %2217 = vmatpush.bf16.msra.mxu0 %v1533
        %2218 = vmatmul.bf16.gmra.mxu0 %v517
        %v2219 = vpop.f32.mrf.mxu0
        %v2220 = vadd.f32 %v2207, %v2219
        %v2221 = vpop.f32.mrf.mxu0
        %2222 = vdwg.mxu0
        %2223 = vmatpush.bf16.msra.mxu0 %v1668
        %2224 = vmatpush.bf16.msra.mxu0 %v1659
        %2225 = vmatpush.bf16.msra.mxu0 %v1650
        %2226 = vmatpush.bf16.msra.mxu0 %v1641
        %2227 = vmatpush.bf16.msra.mxu0 %v1632
        %2228 = vmatpush.bf16.msra.mxu0 %v1623
        %2229 = vmatpush.bf16.msra.mxu0 %v1614
        %2230 = vmatpush.bf16.msra.mxu0 %v1605
        %2231 = vmatmul.bf16.gmra.mxu0 %v518
        %v2232 = vpop.f32.mrf.mxu0
        %v2233 = vadd.f32 %v2220, %v2232
        %v2234 = vpop.f32.mrf.mxu0
        %2235 = vdwg.mxu0
        %v2236 = vpack.c.bf16 %v1960, %v1921
        %v2237 = vpack.c.bf16 %v1999, %v1999
        %v2238 = vpack.c.bf16 %v2077, %v2038
        %v2239 = vpack.c.bf16 %v2116, %v2116
        %v2240 = vpack.c.bf16 %v2194, %v2155
        %v2241 = vpack.c.bf16 %v2233, %v2233
        %v2243 = vrot.slane %v2236, 4
        %2244 = vrot.lane.b32.xlu0 %v2236, 64
        %v2245 = vpop.permute.xlu0 %2244
        %v2246 = vrot.slane %v2245, 4
        %2248 = vrot.lane.b32.xlu0 %v2237, 64
        %v2249 = vpop.permute.xlu0 %2248
        %v2251 = vrot.slane %v2238, 4
        %2252 = vrot.lane.b32.xlu0 %v2238, 64
        %v2253 = vpop.permute.xlu0 %2252
        %v2254 = vrot.slane %v2253, 4
        %2256 = vrot.lane.b32.xlu0 %v2239, 64
        %v2257 = vpop.permute.xlu0 %2256
        %v2259 = vrot.slane %v2240, 4
        %2260 = vrot.lane.b32.xlu0 %v2240, 64
        %v2261 = vpop.permute.xlu0 %2260
        %v2262 = vrot.slane %v2261, 4
        %2264 = vrot.lane.b32.xlu0 %v2241, 64
        %v2265 = vpop.permute.xlu0 %2264
        %vm2266 = vcmask 523264
        %v2268 = vsel %vm2266, %v2236, 0
        %v2271 = vsel %vm2266, %v2238, 0
        %2273 = vmatpush.bf16.xpose.msra.mxu0 0
        %2274 = vmatpush.bf16.xpose.msra.mxu0 0
        %2275 = vmatpush.bf16.xpose.msra.mxu0 0
        %2276 = vmatpush.bf16.xpose.msra.mxu0 0
        %2277 = vmatpush.bf16.xpose.msra.mxu0 0
        %2278 = vmatpush.bf16.xpose.msra.mxu0 0
        %2279 = vmatpush.bf16.xpose.msra.mxu0 0
        %2280 = vmatpush.bf16.xpose.msra.mxu0 %v2271
        %2281 = vmatmul.bf16.gmra.mxu0 %v2268
        %v2282 = vpop.f32.mrf.mxu0
        %v2283 = vadd.f32 0.0, %v2282
        %v2284 = vpop.f32.mrf.mxu0
        %2285 = vdwg.mxu0
        %v2287 = vsel %vm2266, %v2245, 0
        %v2290 = vsel %vm2266, %v2253, 0
        %2292 = vmatpush.bf16.xpose.msra.mxu0 0
        %2293 = vmatpush.bf16.xpose.msra.mxu0 0
        %2294 = vmatpush.bf16.xpose.msra.mxu0 0
        %2295 = vmatpush.bf16.xpose.msra.mxu0 0
        %2296 = vmatpush.bf16.xpose.msra.mxu0 0
        %2297 = vmatpush.bf16.xpose.msra.mxu0 0
        %2298 = vmatpush.bf16.xpose.msra.mxu0 0
        %2299 = vmatpush.bf16.xpose.msra.mxu0 %v2290
        %2300 = vmatmul.bf16.gmra.mxu0 %v2287
        %v2301 = vpop.f32.mrf.mxu0
        %v2302 = vadd.f32 0.0, %v2301
        %v2303 = vpop.f32.mrf.mxu0
        %2304 = vdwg.mxu0
        %v2306 = vsel %vm2266, %v2243, 0
        %v2309 = vsel %vm2266, %v2251, 0
        %2311 = vmatpush.bf16.xpose.msra.mxu0 0
        %2312 = vmatpush.bf16.xpose.msra.mxu0 0
        %2313 = vmatpush.bf16.xpose.msra.mxu0 0
        %2314 = vmatpush.bf16.xpose.msra.mxu0 0
        %2315 = vmatpush.bf16.xpose.msra.mxu0 0
        %2316 = vmatpush.bf16.xpose.msra.mxu0 0
        %2317 = vmatpush.bf16.xpose.msra.mxu0 0
        %2318 = vmatpush.bf16.xpose.msra.mxu0 %v2309
        %2319 = vmatmul.bf16.gmra.mxu0 %v2306
        %v2320 = vpop.f32.mrf.mxu0
        %v2321 = vadd.f32 0.0, %v2320
        %v2322 = vpop.f32.mrf.mxu0
        %2323 = vdwg.mxu0
        %v2325 = vsel %vm2266, %v2246, 0
        %v2328 = vsel %vm2266, %v2254, 0
        %2330 = vmatpush.bf16.xpose.msra.mxu0 0
        %2331 = vmatpush.bf16.xpose.msra.mxu0 0
        %2332 = vmatpush.bf16.xpose.msra.mxu0 0
        %2333 = vmatpush.bf16.xpose.msra.mxu0 0
        %2334 = vmatpush.bf16.xpose.msra.mxu0 0
        %2335 = vmatpush.bf16.xpose.msra.mxu0 0
        %2336 = vmatpush.bf16.xpose.msra.mxu0 0
        %2337 = vmatpush.bf16.xpose.msra.mxu0 %v2328
        %2338 = vmatmul.bf16.gmra.mxu0 %v2325
        %v2339 = vpop.f32.mrf.mxu0
        %v2340 = vadd.f32 0.0, %v2339
        %v2341 = vpop.f32.mrf.mxu0
        %2342 = vdwg.mxu0
        %v2344 = vsel %vm2266, %v2237, 0
        %v2347 = vsel %vm2266, %v2239, 0
        %2349 = vmatpush.bf16.xpose.msra.mxu0 0
        %2350 = vmatpush.bf16.xpose.msra.mxu0 0
        %2351 = vmatpush.bf16.xpose.msra.mxu0 0
        %2352 = vmatpush.bf16.xpose.msra.mxu0 0
        %2353 = vmatpush.bf16.xpose.msra.mxu0 0
        %2354 = vmatpush.bf16.xpose.msra.mxu0 0
        %2355 = vmatpush.bf16.xpose.msra.mxu0 0
        %2356 = vmatpush.bf16.xpose.msra.mxu0 %v2347
        %2357 = vmatmul.bf16.gmra.mxu0 %v2344
        %v2358 = vpop.f32.mrf.mxu0
        %v2359 = vadd.f32 0.0, %v2358
        %v2360 = vpop.f32.mrf.mxu0
        %2361 = vdwg.mxu0
        %v2363 = vsel %vm2266, %v2249, 0
        %v2366 = vsel %vm2266, %v2257, 0
        %2368 = vmatpush.bf16.xpose.msra.mxu0 0
        %2369 = vmatpush.bf16.xpose.msra.mxu0 0
        %2370 = vmatpush.bf16.xpose.msra.mxu0 0
        %2371 = vmatpush.bf16.xpose.msra.mxu0 0
        %2372 = vmatpush.bf16.xpose.msra.mxu0 0
        %2373 = vmatpush.bf16.xpose.msra.mxu0 0
        %2374 = vmatpush.bf16.xpose.msra.mxu0 0
        %2375 = vmatpush.bf16.xpose.msra.mxu0 %v2366
        %2376 = vmatmul.bf16.gmra.mxu0 %v2363
        %v2377 = vpop.f32.mrf.mxu0
        %v2378 = vadd.f32 0.0, %v2377
        %v2379 = vpop.f32.mrf.mxu0
        %2380 = vdwg.mxu0
        %v2381 = vlaneseq
        %v2382 = vshrl.u32 %v2381, 7
        %v2383 = vlaneseq
        %v2384 = vand.u32 %v2383, 127
        %vm2385 = vcmp.ge.s32.totalorder %v2382, %v2384
        %v2386 = vsel %vm2385, 1, 0
        %vm2387 = vcmp.eq.s32.totalorder %v2386, 1
        %v2388 = vsel %vm2387, %v2283, -inf
        %v2389 = vsel %vm2387, %v2302, -inf
        %v2390 = vsel %vm2387, %v2321, -inf
        %v2391 = vsel %vm2387, %v2340, -inf
        %v2392 = vsel %vm2387, %v2359, -inf
        %v2393 = vsel %vm2387, %v2378, -inf
        %vm2394 = vcmask 64512
        %v2395 = vsel %vm2394, %v2388, -inf
        %2396 = vmax.xlane.f32.xlu0 %v2395
        %v2397 = vpop.xlane.xlu0 %2396
        %v2398 = vsel %vm2394, %v2389, -inf
        %2399 = vmax.xlane.f32.xlu0 %v2398
        %v2400 = vpop.xlane.xlu0 %2399
        %v2401 = vsel %vm2394, %v2390, -inf
        %2402 = vmax.xlane.f32.xlu0 %v2401
        %v2403 = vpop.xlane.xlu0 %2402
        %v2404 = vsel %vm2394, %v2391, -inf
        %2405 = vmax.xlane.f32.xlu0 %v2404
        %v2406 = vpop.xlane.xlu0 %2405
        %v2407 = vsel %vm2394, %v2392, -inf
        %2408 = vmax.xlane.f32.xlu0 %v2407
        %v2409 = vpop.xlane.xlu0 %2408
        %v2410 = vsel %vm2394, %v2393, -inf
        %2411 = vmax.xlane.f32.xlu0 %v2410
        %v2412 = vpop.xlane.xlu0 %2411
        %v2413 = vsub.f32 %v2388, %v2397
        %v2414 = vsub.f32 %v2389, %v2400
        %v2415 = vsub.f32 %v2390, %v2403
        %v2416 = vsub.f32 %v2391, %v2406
        %v2417 = vsub.f32 %v2392, %v2409
        %v2418 = vsub.f32 %v2393, %v2412
        %v2419 = vmul.f32 %v2413, 1.442695
        %v2420 = vpow.pop %v2419
        %v2421 = vmul.f32 %v2414, 1.442695
        %v2422 = vpow.pop %v2421
        %v2423 = vmul.f32 %v2415, 1.442695
        %v2424 = vpow.pop %v2423
        %v2425 = vmul.f32 %v2416, 1.442695
        %v2426 = vpow.pop %v2425
        %v2427 = vmul.f32 %v2417, 1.442695
        %v2428 = vpow.pop %v2427
        %v2429 = vmul.f32 %v2418, 1.442695
        %v2430 = vpow.pop %v2429
        %v2431 = vsel %vm2394, %v2420, 0.0
        %2432 = vadd.xlane.f32.xlu0 %v2431
        %v2433 = vpop.xlane.xlu0 %2432
        %v2434 = vsel %vm2394, %v2422, 0.0
        %2435 = vadd.xlane.f32.xlu0 %v2434
        %v2436 = vpop.xlane.xlu0 %2435
        %v2437 = vsel %vm2394, %v2424, 0.0
        %2438 = vadd.xlane.f32.xlu0 %v2437
        %v2439 = vpop.xlane.xlu0 %2438
        %v2440 = vsel %vm2394, %v2426, 0.0
        %2441 = vadd.xlane.f32.xlu0 %v2440
        %v2442 = vpop.xlane.xlu0 %2441
        %v2443 = vsel %vm2394, %v2428, 0.0
        %2444 = vadd.xlane.f32.xlu0 %v2443
        %v2445 = vpop.xlane.xlu0 %2444
        %v2446 = vsel %vm2394, %v2430, 0.0
        %2447 = vadd.xlane.f32.xlu0 %v2446
        %v2448 = vpop.xlane.xlu0 %2447
        %v2449 = vrcp.pop %v2433
        %v2450 = vrcp.pop %v2436
        %v2451 = vrcp.pop %v2439
        %v2452 = vrcp.pop %v2442
        %v2453 = vrcp.pop %v2445
        %v2454 = vrcp.pop %v2448
        %v2455 = vmul.f32 %v2420, %v2449
        %v2456 = vmul.f32 %v2422, %v2450
        %v2457 = vmul.f32 %v2424, %v2451
        %v2458 = vmul.f32 %v2426, %v2452
        %v2459 = vmul.f32 %v2428, %v2453
        %v2460 = vmul.f32 %v2430, %v2454
        %v2461 = vpack.c.bf16 %v2455, %v2455
        %v2462 = vpack.c.bf16 %v2456, %v2456
        %v2463 = vpack.c.bf16 %v2457, %v2457
        %v2464 = vpack.c.bf16 %v2458, %v2458
        %v2465 = vpack.c.bf16 %v2459, %v2459
        %v2466 = vpack.c.bf16 %v2460, %v2460
        %v2468 = vsel %vm2394, %v2461, 0
        %vm2470 = vcmask 1043456
        %v2472 = vsel %vm2470, %v2240, 0
        %2474 = vmatpush.bf16.msra.mxu0 0
        %2475 = vmatpush.bf16.msra.mxu0 0
        %2476 = vmatpush.bf16.msra.mxu0 0
        %2477 = vmatpush.bf16.msra.mxu0 0
        %2478 = vmatpush.bf16.msra.mxu0 0
        %2479 = vmatpush.bf16.msra.mxu0 0
        %2480 = vmatpush.bf16.msra.mxu0 0
        %2481 = vmatpush.bf16.msra.mxu0 %v2472
        %2482 = vmatmul.bf16.gmra.mxu0 %v2468
        %v2483 = vpop.f32.mrf.mxu0
        %v2484 = vadd.f32 0.0, %v2483
        %v2485 = vpop.f32.mrf.mxu0
        %2486 = vdwg.mxu0
        %v2488 = vsel %vm2394, %v2462, 0
        %v2491 = vsel %vm2470, %v2261, 0
        %2493 = vmatpush.bf16.msra.mxu0 0
        %2494 = vmatpush.bf16.msra.mxu0 0
        %2495 = vmatpush.bf16.msra.mxu0 0
        %2496 = vmatpush.bf16.msra.mxu0 0
        %2497 = vmatpush.bf16.msra.mxu0 0
        %2498 = vmatpush.bf16.msra.mxu0 0
        %2499 = vmatpush.bf16.msra.mxu0 0
        %2500 = vmatpush.bf16.msra.mxu0 %v2491
        %2501 = vmatmul.bf16.gmra.mxu0 %v2488
        %v2502 = vpop.f32.mrf.mxu0
        %v2503 = vadd.f32 0.0, %v2502
        %v2504 = vpop.f32.mrf.mxu0
        %2505 = vdwg.mxu0
        %v2507 = vsel %vm2394, %v2463, 0
        %v2510 = vsel %vm2470, %v2259, 0
        %2512 = vmatpush.bf16.msra.mxu0 0
        %2513 = vmatpush.bf16.msra.mxu0 0
        %2514 = vmatpush.bf16.msra.mxu0 0
        %2515 = vmatpush.bf16.msra.mxu0 0
        %2516 = vmatpush.bf16.msra.mxu0 0
        %2517 = vmatpush.bf16.msra.mxu0 0
        %2518 = vmatpush.bf16.msra.mxu0 0
        %2519 = vmatpush.bf16.msra.mxu0 %v2510
        %2520 = vmatmul.bf16.gmra.mxu0 %v2507
        %v2521 = vpop.f32.mrf.mxu0
        %v2522 = vadd.f32 0.0, %v2521
        %v2523 = vpop.f32.mrf.mxu0
        %2524 = vdwg.mxu0
        %v2526 = vsel %vm2394, %v2464, 0
        %v2529 = vsel %vm2470, %v2262, 0
        %2531 = vmatpush.bf16.msra.mxu0 0
        %2532 = vmatpush.bf16.msra.mxu0 0
        %2533 = vmatpush.bf16.msra.mxu0 0
        %2534 = vmatpush.bf16.msra.mxu0 0
        %2535 = vmatpush.bf16.msra.mxu0 0
        %2536 = vmatpush.bf16.msra.mxu0 0
        %2537 = vmatpush.bf16.msra.mxu0 0
        %2538 = vmatpush.bf16.msra.mxu0 %v2529
        %2539 = vmatmul.bf16.gmra.mxu0 %v2526
        %v2540 = vpop.f32.mrf.mxu0
        %v2541 = vadd.f32 0.0, %v2540
        %v2542 = vpop.f32.mrf.mxu0
        %2543 = vdwg.mxu0
        %v2545 = vsel %vm2394, %v2465, 0
        %v2548 = vsel %vm2470, %v2241, 0
        %2550 = vmatpush.bf16.msra.mxu0 0
        %2551 = vmatpush.bf16.msra.mxu0 0
        %2552 = vmatpush.bf16.msra.mxu0 0
        %2553 = vmatpush.bf16.msra.mxu0 0
        %2554 = vmatpush.bf16.msra.mxu0 0
        %2555 = vmatpush.bf16.msra.mxu0 0
        %2556 = vmatpush.bf16.msra.mxu0 0
        %2557 = vmatpush.bf16.msra.mxu0 %v2548
        %2558 = vmatmul.bf16.gmra.mxu0 %v2545
        %v2559 = vpop.f32.mrf.mxu0
        %v2560 = vadd.f32 0.0, %v2559
        %v2561 = vpop.f32.mrf.mxu0
        %2562 = vdwg.mxu0
        %v2564 = vsel %vm2394, %v2466, 0
        %v2567 = vsel %vm2470, %v2265, 0
        %2569 = vmatpush.bf16.msra.mxu0 0
        %2570 = vmatpush.bf16.msra.mxu0 0
        %2571 = vmatpush.bf16.msra.mxu0 0
        %2572 = vmatpush.bf16.msra.mxu0 0
        %2573 = vmatpush.bf16.msra.mxu0 0
        %2574 = vmatpush.bf16.msra.mxu0 0
        %2575 = vmatpush.bf16.msra.mxu0 0
        %2576 = vmatpush.bf16.msra.mxu0 %v2567
        %2577 = vmatmul.bf16.gmra.mxu0 %v2564
        %v2578 = vpop.f32.mrf.mxu0
        %v2579 = vadd.f32 0.0, %v2578
        %v2580 = vpop.f32.mrf.mxu0
        %2581 = vdwg.mxu0
        %2582 = vst.msk [vmem:[#allocation2] sm:$0xff] %vm2266, %v2484
        %2584 = vrot.lane.b32.xlu0 %v2503, 64
        %v2585 = vpop.permute.xlu0 %2584
        %vm2587 = vcmask 1048064
        %2588 = vst.msk [vmem:[#allocation2] sm:$0xff] %vm2587, %v2585
        %2589 = vst.msk [vmem:[#allocation2 + $0x8] sm:$0xff] %vm2266, %v2522
        %2591 = vrot.lane.b32.xlu0 %v2541, 64
        %v2592 = vpop.permute.xlu0 %2591
        %2594 = vst.msk [vmem:[#allocation2 + $0x8] sm:$0xff] %vm2587, %v2592
        %2595 = vst.msk [vmem:[#allocation2 + $0x10] sm:$0xff] %vm2266, %v2560
        %2597 = vrot.lane.b32.xlu0 %v2579, 64
        %v2598 = vpop.permute.xlu0 %2597
        %2600 = vst.msk [vmem:[#allocation2 + $0x10] sm:$0xff] %vm2587, %v2598
        %v2601 = vld [vmem:[#allocation2] sm:$0xff]
        %v2602 = vld [vmem:[#allocation2 + $0x8] sm:$0xff]
        %v2603 = vld [vmem:[#allocation2 + $0x10] sm:$0xff]
        %v2604 = vpack.c.bf16 %v2601, %v2601
        %v2605 = vpack.c.bf16 %v2602, %v2602
        %v2606 = vpack.c.bf16 %v2603, %v2603
        %v2607 = vld [vmem:[#allocation9] sm:$0xff]
        %v2608 = vld [vmem:[#allocation9 + $0x8] sm:$0xf]
        %v2609 = vld [vmem:[#allocation9 + $0xc] sm:$0xff]
        %v2610 = vld [vmem:[#allocation9 + $0x14] sm:$0xf]
        %v2611 = vld [vmem:[#allocation9 + $0x18] sm:$0xff]
        %v2612 = vld [vmem:[#allocation9 + $0x20] sm:$0xf]
        %v2613 = vld [vmem:[#allocation9 + $0x24] sm:$0xff]
        %v2614 = vld [vmem:[#allocation9 + $0x2c] sm:$0xf]
        %v2615 = vld [vmem:[#allocation9 + $0x30] sm:$0xff]
        %v2616 = vld [vmem:[#allocation9 + $0x38] sm:$0xf]
        %v2617 = vld [vmem:[#allocation9 + $0x3c] sm:$0xff]
        %v2618 = vld [vmem:[#allocation9 + $0x44] sm:$0xf]
        %v2619 = vld [vmem:[#allocation9 + $0x48] sm:$0xff]
        %v2620 = vld [vmem:[#allocation9 + $0x50] sm:$0xf]
        %v2621 = vld [vmem:[#allocation9 + $0x54] sm:$0xff]
        %v2622 = vld [vmem:[#allocation9 + $0x5c] sm:$0xf]
        %v2623 = vld [vmem:[#allocation9 + $0x60] sm:$0xff]
        %v2624 = vld [vmem:[#allocation9 + $0x68] sm:$0xf]
        %v2625 = vld [vmem:[#allocation9 + $0x6c] sm:$0xff]
        %v2626 = vld [vmem:[#allocation9 + $0x74] sm:$0xf]
        %v2627 = vld [vmem:[#allocation9 + $0x78] sm:$0xff]
        %v2628 = vld [vmem:[#allocation9 + $0x80] sm:$0xf]
        %v2629 = vld [vmem:[#allocation9 + $0x84] sm:$0xff]
        %v2630 = vld [vmem:[#allocation9 + $0x8c] sm:$0xf]
        %v2631 = vld [vmem:[#allocation9 + $0x90] sm:$0xff]
        %v2632 = vld [vmem:[#allocation9 + $0x98] sm:$0xf]
        %v2633 = vld [vmem:[#allocation9 + $0x9c] sm:$0xff]
        %v2634 = vld [vmem:[#allocation9 + $0xa4] sm:$0xf]
        %v2635 = vld [vmem:[#allocation9 + $0xa8] sm:$0xff]
        %v2636 = vld [vmem:[#allocation9 + $0xb0] sm:$0xf]
        %v2637 = vld [vmem:[#allocation9 + $0xb4] sm:$0xff]
        %v2638 = vld [vmem:[#allocation9 + $0xbc] sm:$0xf]
        %v2639 = vld [vmem:[#allocation9 + $0xc0] sm:$0xff]
        %v2640 = vld [vmem:[#allocation9 + $0xc8] sm:$0xf]
        %v2641 = vld [vmem:[#allocation9 + $0xcc] sm:$0xff]
        %v2642 = vld [vmem:[#allocation9 + $0xd4] sm:$0xf]
        %v2643 = vld [vmem:[#allocation9 + $0xd8] sm:$0xff]
        %v2644 = vld [vmem:[#allocation9 + $0xe0] sm:$0xf]
        %v2645 = vld [vmem:[#allocation9 + $0xe4] sm:$0xff]
        %v2646 = vld [vmem:[#allocation9 + $0xec] sm:$0xf]
        %v2647 = vld [vmem:[#allocation9 + $0xf0] sm:$0xff]
        %v2648 = vld [vmem:[#allocation9 + $0xf8] sm:$0xf]
        %v2649 = vld [vmem:[#allocation9 + $0xfc] sm:$0xff]
        %v2650 = vld [vmem:[#allocation9 + $0x104] sm:$0xf]
        %v2651 = vld [vmem:[#allocation9 + $0x108] sm:$0xff]
        %v2652 = vld [vmem:[#allocation9 + $0x110] sm:$0xf]
        %v2653 = vld [vmem:[#allocation9 + $0x114] sm:$0xff]
        %v2654 = vld [vmem:[#allocation9 + $0x11c] sm:$0xf]
        %v2655 = vld [vmem:[#allocation9 + $0x120] sm:$0xff]
        %v2656 = vld [vmem:[#allocation9 + $0x128] sm:$0xf]
        %v2657 = vld [vmem:[#allocation9 + $0x12c] sm:$0xff]
        %v2658 = vld [vmem:[#allocation9 + $0x134] sm:$0xf]
        %v2659 = vld [vmem:[#allocation9 + $0x138] sm:$0xff]
        %v2660 = vld [vmem:[#allocation9 + $0x140] sm:$0xf]
        %v2661 = vld [vmem:[#allocation9 + $0x144] sm:$0xff]
        %v2662 = vld [vmem:[#allocation9 + $0x14c] sm:$0xf]
        %v2663 = vld [vmem:[#allocation9 + $0x150] sm:$0xff]
        %v2664 = vld [vmem:[#allocation9 + $0x158] sm:$0xf]
        %v2665 = vld [vmem:[#allocation9 + $0x15c] sm:$0xff]
        %v2666 = vld [vmem:[#allocation9 + $0x164] sm:$0xf]
        %v2667 = vld [vmem:[#allocation9 + $0x168] sm:$0xff]
        %v2668 = vld [vmem:[#allocation9 + $0x170] sm:$0xf]
        %v2669 = vld [vmem:[#allocation9 + $0x174] sm:$0xff]
        %v2670 = vld [vmem:[#allocation9 + $0x17c] sm:$0xf]
        %v2671 = vld [vmem:[#allocation9 + $0x180] sm:$0xff]
        %v2672 = vld [vmem:[#allocation9 + $0x188] sm:$0xf]
        %v2673 = vld [vmem:[#allocation9 + $0x18c] sm:$0xff]
        %v2674 = vld [vmem:[#allocation9 + $0x194] sm:$0xf]
        %v2675 = vld [vmem:[#allocation9 + $0x198] sm:$0xff]
        %v2676 = vld [vmem:[#allocation9 + $0x1a0] sm:$0xf]
        %v2677 = vld [vmem:[#allocation9 + $0x1a4] sm:$0xff]
        %v2678 = vld [vmem:[#allocation9 + $0x1ac] sm:$0xf]
        %v2679 = vld [vmem:[#allocation9 + $0x1b0] sm:$0xff]
        %v2680 = vld [vmem:[#allocation9 + $0x1b8] sm:$0xf]
        %v2681 = vld [vmem:[#allocation9 + $0x1bc] sm:$0xff]
        %v2682 = vld [vmem:[#allocation9 + $0x1c4] sm:$0xf]
        %v2683 = vld [vmem:[#allocation9 + $0x1c8] sm:$0xff]
        %v2684 = vld [vmem:[#allocation9 + $0x1d0] sm:$0xf]
        %v2685 = vld [vmem:[#allocation9 + $0x1d4] sm:$0xff]
        %v2686 = vld [vmem:[#allocation9 + $0x1dc] sm:$0xf]
        %v2687 = vld [vmem:[#allocation9 + $0x1e0] sm:$0xff]
        %v2688 = vld [vmem:[#allocation9 + $0x1e8] sm:$0xf]
        %v2689 = vld [vmem:[#allocation9 + $0x1ec] sm:$0xff]
        %v2690 = vld [vmem:[#allocation9 + $0x1f4] sm:$0xf]
        %v2691 = vld [vmem:[#allocation9 + $0x1f8] sm:$0xff]
        %v2692 = vld [vmem:[#allocation9 + $0x200] sm:$0xf]
        %v2693 = vld [vmem:[#allocation9 + $0x204] sm:$0xff]
        %v2694 = vld [vmem:[#allocation9 + $0x20c] sm:$0xf]
        %v2695 = vld [vmem:[#allocation9 + $0x210] sm:$0xff]
        %v2696 = vld [vmem:[#allocation9 + $0x218] sm:$0xf]
        %v2697 = vld [vmem:[#allocation9 + $0x21c] sm:$0xff]
        %v2698 = vld [vmem:[#allocation9 + $0x224] sm:$0xf]
        %v2699 = vld [vmem:[#allocation9 + $0x228] sm:$0xff]
        %v2700 = vld [vmem:[#allocation9 + $0x230] sm:$0xf]
        %v2701 = vld [vmem:[#allocation9 + $0x234] sm:$0xff]
        %v2702 = vld [vmem:[#allocation9 + $0x23c] sm:$0xf]
        %v2703 = vld [vmem:[#allocation11] sm:$0x7]
        %v2705 = vperm.slane %v2703, 0
        %v2706 = vperm.slane %v2703, 1
        %v2707 = vperm.slane %v2703, 2
        %v2807 = vunpack.c.l.b16 %v2607
        %v2808 = vunpack.c.h.b16 %v2607
        %v2809 = vunpack.c.l.b16 %v2608
        %v2810 = vunpack.c.l.b16 %v2609
        %v2811 = vunpack.c.h.b16 %v2609
        %v2812 = vunpack.c.l.b16 %v2610
        %v2813 = vunpack.c.l.b16 %v2611
        %v2814 = vunpack.c.h.b16 %v2611
        %v2815 = vunpack.c.l.b16 %v2612
        %v2816 = vunpack.c.l.b16 %v2613
        %v2817 = vunpack.c.h.b16 %v2613
        %v2818 = vunpack.c.l.b16 %v2614
        %v2819 = vunpack.c.l.b16 %v2615
        %v2820 = vunpack.c.h.b16 %v2615
        %v2821 = vunpack.c.l.b16 %v2616
        %v2822 = vunpack.c.l.b16 %v2617
        %v2823 = vunpack.c.h.b16 %v2617
        %v2824 = vunpack.c.l.b16 %v2618
        %v2825 = vunpack.c.l.b16 %v2619
        %v2826 = vunpack.c.h.b16 %v2619
        %v2827 = vunpack.c.l.b16 %v2620
        %v2828 = vunpack.c.l.b16 %v2621
        %v2829 = vunpack.c.h.b16 %v2621
        %v2830 = vunpack.c.l.b16 %v2622
        %v2831 = vunpack.c.l.b16 %v2623
        %v2832 = vunpack.c.h.b16 %v2623
        %v2833 = vunpack.c.l.b16 %v2624
        %v2834 = vunpack.c.l.b16 %v2625
        %v2835 = vunpack.c.h.b16 %v2625
        %v2836 = vunpack.c.l.b16 %v2626
        %v2837 = vunpack.c.l.b16 %v2627
        %v2838 = vunpack.c.h.b16 %v2627
        %v2839 = vunpack.c.l.b16 %v2628
        %v2840 = vunpack.c.l.b16 %v2629
        %v2841 = vunpack.c.h.b16 %v2629
        %v2842 = vunpack.c.l.b16 %v2630
        %v2843 = vunpack.c.l.b16 %v2631
        %v2844 = vunpack.c.h.b16 %v2631
        %v2845 = vunpack.c.l.b16 %v2632
        %v2846 = vunpack.c.l.b16 %v2633
        %v2847 = vunpack.c.h.b16 %v2633
        %v2848 = vunpack.c.l.b16 %v2634
        %v2849 = vunpack.c.l.b16 %v2635
        %v2850 = vunpack.c.h.b16 %v2635
        %v2851 = vunpack.c.l.b16 %v2636
        %v2852 = vunpack.c.l.b16 %v2637
        %v2853 = vunpack.c.h.b16 %v2637
        %v2854 = vunpack.c.l.b16 %v2638
        %v2855 = vunpack.c.l.b16 %v2639
        %v2856 = vunpack.c.h.b16 %v2639
        %v2857 = vunpack.c.l.b16 %v2640
        %v2858 = vunpack.c.l.b16 %v2641
        %v2859 = vunpack.c.h.b16 %v2641
        %v2860 = vunpack.c.l.b16 %v2642
        %v2861 = vunpack.c.l.b16 %v2643
        %v2862 = vunpack.c.h.b16 %v2643
        %v2863 = vunpack.c.l.b16 %v2644
        %v2864 = vunpack.c.l.b16 %v2645
        %v2865 = vunpack.c.h.b16 %v2645
        %v2866 = vunpack.c.l.b16 %v2646
        %v2867 = vunpack.c.l.b16 %v2647
        %v2868 = vunpack.c.h.b16 %v2647
        %v2869 = vunpack.c.l.b16 %v2648
        %v2870 = vunpack.c.l.b16 %v2649
        %v2871 = vunpack.c.h.b16 %v2649
        %v2872 = vunpack.c.l.b16 %v2650
        %v2873 = vunpack.c.l.b16 %v2651
        %v2874 = vunpack.c.h.b16 %v2651
        %v2875 = vunpack.c.l.b16 %v2652
        %v2876 = vunpack.c.l.b16 %v2653
        %v2877 = vunpack.c.h.b16 %v2653
        %v2878 = vunpack.c.l.b16 %v2654
        %v2879 = vunpack.c.l.b16 %v2655
        %v2880 = vunpack.c.h.b16 %v2655
        %v2881 = vunpack.c.l.b16 %v2656
        %v2882 = vunpack.c.l.b16 %v2657
        %v2883 = vunpack.c.h.b16 %v2657
        %v2884 = vunpack.c.l.b16 %v2658
        %v2885 = vunpack.c.l.b16 %v2659
        %v2886 = vunpack.c.h.b16 %v2659
        %v2887 = vunpack.c.l.b16 %v2660
        %v2888 = vunpack.c.l.b16 %v2661
        %v2889 = vunpack.c.h.b16 %v2661
        %v2890 = vunpack.c.l.b16 %v2662
        %v2891 = vunpack.c.l.b16 %v2663
        %v2892 = vunpack.c.h.b16 %v2663
        %v2893 = vunpack.c.l.b16 %v2664
        %v2894 = vunpack.c.l.b16 %v2665
        %v2895 = vunpack.c.h.b16 %v2665
        %v2896 = vunpack.c.l.b16 %v2666
        %v2897 = vunpack.c.l.b16 %v2667
        %v2898 = vunpack.c.h.b16 %v2667
        %v2899 = vunpack.c.l.b16 %v2668
        %v2900 = vunpack.c.l.b16 %v2669
        %v2901 = vunpack.c.h.b16 %v2669
        %v2902 = vunpack.c.l.b16 %v2670
        %v2903 = vunpack.c.l.b16 %v2671
        %v2904 = vunpack.c.h.b16 %v2671
        %v2905 = vunpack.c.l.b16 %v2672
        %v2906 = vunpack.c.l.b16 %v2673
        %v2907 = vunpack.c.h.b16 %v2673
        %v2908 = vunpack.c.l.b16 %v2674
        %v2909 = vunpack.c.l.b16 %v2675
        %v2910 = vunpack.c.h.b16 %v2675
        %v2911 = vunpack.c.l.b16 %v2676
        %v2912 = vunpack.c.l.b16 %v2677
        %v2913 = vunpack.c.h.b16 %v2677
        %v2914 = vunpack.c.l.b16 %v2678
        %v2915 = vunpack.c.l.b16 %v2679
        %v2916 = vunpack.c.h.b16 %v2679
        %v2917 = vunpack.c.l.b16 %v2680
        %v2918 = vunpack.c.l.b16 %v2681
        %v2919 = vunpack.c.h.b16 %v2681
        %v2920 = vunpack.c.l.b16 %v2682
        %v2921 = vunpack.c.l.b16 %v2683
        %v2922 = vunpack.c.h.b16 %v2683
        %v2923 = vunpack.c.l.b16 %v2684
        %v2924 = vunpack.c.l.b16 %v2685
        %v2925 = vunpack.c.h.b16 %v2685
        %v2926 = vunpack.c.l.b16 %v2686
        %v2927 = vunpack.c.l.b16 %v2687
        %v2928 = vunpack.c.h.b16 %v2687
        %v2929 = vunpack.c.l.b16 %v2688
        %v2930 = vunpack.c.l.b16 %v2689
        %v2931 = vunpack.c.h.b16 %v2689
        %v2932 = vunpack.c.l.b16 %v2690
        %v2933 = vunpack.c.l.b16 %v2691
        %v2934 = vunpack.c.h.b16 %v2691
        %v2935 = vunpack.c.l.b16 %v2692
        %v2936 = vunpack.c.l.b16 %v2693
        %v2937 = vunpack.c.h.b16 %v2693
        %v2938 = vunpack.c.l.b16 %v2694
        %v2939 = vunpack.c.l.b16 %v2695
        %v2940 = vunpack.c.h.b16 %v2695
        %v2941 = vunpack.c.l.b16 %v2696
        %v2942 = vunpack.c.l.b16 %v2697
        %v2943 = vunpack.c.h.b16 %v2697
        %v2944 = vunpack.c.l.b16 %v2698
        %v2945 = vunpack.c.l.b16 %v2699
        %v2946 = vunpack.c.h.b16 %v2699
        %v2947 = vunpack.c.l.b16 %v2700
        %v2948 = vunpack.c.l.b16 %v2701
        %v2949 = vunpack.c.h.b16 %v2701
        %v2950 = vunpack.c.l.b16 %v2702
        %v2951 = vpack.c.b16 %v2810, %v2807
        %v2952 = vpack.c.b16 %v2811, %v2808
        %v2953 = vpack.c.b16 %v2812, %v2809
        %v2954 = vpack.c.b16 %v2816, %v2813
        %v2955 = vpack.c.b16 %v2817, %v2814
        %v2956 = vpack.c.b16 %v2818, %v2815
        %v2957 = vpack.c.b16 %v2822, %v2819
        %v2958 = vpack.c.b16 %v2823, %v2820
        %v2959 = vpack.c.b16 %v2824, %v2821
        %v2960 = vpack.c.b16 %v2828, %v2825
        %v2961 = vpack.c.b16 %v2829, %v2826
        %v2962 = vpack.c.b16 %v2830, %v2827
        %v2963 = vpack.c.b16 %v2834, %v2831
        %v2964 = vpack.c.b16 %v2835, %v2832
        %v2965 = vpack.c.b16 %v2836, %v2833
        %v2966 = vpack.c.b16 %v2840, %v2837
        %v2967 = vpack.c.b16 %v2841, %v2838
        %v2968 = vpack.c.b16 %v2842, %v2839
        %v2969 = vpack.c.b16 %v2846, %v2843
        %v2970 = vpack.c.b16 %v2847, %v2844
        %v2971 = vpack.c.b16 %v2848, %v2845
        %v2972 = vpack.c.b16 %v2852, %v2849
        %v2973 = vpack.c.b16 %v2853, %v2850
        %v2974 = vpack.c.b16 %v2854, %v2851
        %v2975 = vpack.c.b16 %v2858, %v2855
        %v2976 = vpack.c.b16 %v2859, %v2856
        %v2977 = vpack.c.b16 %v2860, %v2857
        %v2978 = vpack.c.b16 %v2864, %v2861
        %v2979 = vpack.c.b16 %v2865, %v2862
        %v2980 = vpack.c.b16 %v2866, %v2863
        %v2981 = vpack.c.b16 %v2870, %v2867
        %v2982 = vpack.c.b16 %v2871, %v2868
        %v2983 = vpack.c.b16 %v2872, %v2869
        %v2984 = vpack.c.b16 %v2876, %v2873
        %v2985 = vpack.c.b16 %v2877, %v2874
        %v2986 = vpack.c.b16 %v2878, %v2875
        %v2987 = vpack.c.b16 %v2882, %v2879
        %v2988 = vpack.c.b16 %v2883, %v2880
        %v2989 = vpack.c.b16 %v2884, %v2881
        %v2990 = vpack.c.b16 %v2888, %v2885
        %v2991 = vpack.c.b16 %v2889, %v2886
        %v2992 = vpack.c.b16 %v2890, %v2887
        %v2993 = vpack.c.b16 %v2894, %v2891
        %v2994 = vpack.c.b16 %v2895, %v2892
        %v2995 = vpack.c.b16 %v2896, %v2893
        %v2996 = vpack.c.b16 %v2900, %v2897
        %v2997 = vpack.c.b16 %v2901, %v2898
        %v2998 = vpack.c.b16 %v2902, %v2899
        %v2999 = vpack.c.b16 %v2906, %v2903
        %v3000 = vpack.c.b16 %v2907, %v2904
        %v3001 = vpack.c.b16 %v2908, %v2905
        %v3002 = vpack.c.b16 %v2912, %v2909
        %v3003 = vpack.c.b16 %v2913, %v2910
        %v3004 = vpack.c.b16 %v2914, %v2911
        %v3005 = vpack.c.b16 %v2918, %v2915
        %v3006 = vpack.c.b16 %v2919, %v2916
        %v3007 = vpack.c.b16 %v2920, %v2917
        %v3008 = vpack.c.b16 %v2924, %v2921
        %v3009 = vpack.c.b16 %v2925, %v2922
        %v3010 = vpack.c.b16 %v2926, %v2923
        %v3011 = vpack.c.b16 %v2930, %v2927
        %v3012 = vpack.c.b16 %v2931, %v2928
        %v3013 = vpack.c.b16 %v2932, %v2929
        %v3014 = vpack.c.b16 %v2936, %v2933
        %v3015 = vpack.c.b16 %v2937, %v2934
        %v3016 = vpack.c.b16 %v2938, %v2935
        %v3017 = vpack.c.b16 %v2942, %v2939
        %v3018 = vpack.c.b16 %v2943, %v2940
        %v3019 = vpack.c.b16 %v2944, %v2941
        %v3020 = vpack.c.b16 %v2948, %v2945
        %v3021 = vpack.c.b16 %v2949, %v2946
        %v3022 = vpack.c.b16 %v2950, %v2947
        %3095 = vmatpush.bf16.msra.mxu0 %v2972
        %3096 = vmatpush.bf16.msra.mxu0 %v2969
        %3097 = vmatpush.bf16.msra.mxu0 %v2966
        %3098 = vmatpush.bf16.msra.mxu0 %v2963
        %3099 = vmatpush.bf16.msra.mxu0 %v2960
        %3100 = vmatpush.bf16.msra.mxu0 %v2957
        %3101 = vmatpush.bf16.msra.mxu0 %v2954
        %3102 = vmatpush.bf16.msra.mxu0 %v2951
        %3103 = vmatmul.bf16.gmra.mxu0 %v2604
        %v3104 = vpop.f32.mrf.mxu0
        %v3105 = vadd.f32 %v2705, %v3104
        %v3106 = vpop.f32.mrf.mxu0
        %3107 = vdwg.mxu0
        %3108 = vmatpush.bf16.msra.mxu0 %v2996
        %3109 = vmatpush.bf16.msra.mxu0 %v2993
        %3110 = vmatpush.bf16.msra.mxu0 %v2990
        %3111 = vmatpush.bf16.msra.mxu0 %v2987
        %3112 = vmatpush.bf16.msra.mxu0 %v2984
        %3113 = vmatpush.bf16.msra.mxu0 %v2981
        %3114 = vmatpush.bf16.msra.mxu0 %v2978
        %3115 = vmatpush.bf16.msra.mxu0 %v2975
        %3116 = vmatmul.bf16.gmra.mxu0 %v2605
        %v3117 = vpop.f32.mrf.mxu0
        %v3118 = vadd.f32 %v3105, %v3117
        %v3119 = vpop.f32.mrf.mxu0
        %3120 = vdwg.mxu0
        %3121 = vmatpush.bf16.msra.mxu0 %v3020
        %3122 = vmatpush.bf16.msra.mxu0 %v3017
        %3123 = vmatpush.bf16.msra.mxu0 %v3014
        %3124 = vmatpush.bf16.msra.mxu0 %v3011
        %3125 = vmatpush.bf16.msra.mxu0 %v3008
        %3126 = vmatpush.bf16.msra.mxu0 %v3005
        %3127 = vmatpush.bf16.msra.mxu0 %v3002
        %3128 = vmatpush.bf16.msra.mxu0 %v2999
        %3129 = vmatmul.bf16.gmra.mxu0 %v2606
        %v3130 = vpop.f32.mrf.mxu0
        %v3131 = vadd.f32 %v3118, %v3130
        %v3132 = vpop.f32.mrf.mxu0
        %3133 = vdwg.mxu0
        %3134 = vmatpush.bf16.msra.mxu0 %v2973
        %3135 = vmatpush.bf16.msra.mxu0 %v2970
        %3136 = vmatpush.bf16.msra.mxu0 %v2967
        %3137 = vmatpush.bf16.msra.mxu0 %v2964
        %3138 = vmatpush.bf16.msra.mxu0 %v2961
        %3139 = vmatpush.bf16.msra.mxu0 %v2958
        %3140 = vmatpush.bf16.msra.mxu0 %v2955
        %3141 = vmatpush.bf16.msra.mxu0 %v2952
        %3142 = vmatmul.bf16.gmra.mxu0 %v2604
        %v3143 = vpop.f32.mrf.mxu0
        %v3144 = vadd.f32 %v2706, %v3143
        %v3145 = vpop.f32.mrf.mxu0
        %3146 = vdwg.mxu0
        %3147 = vmatpush.bf16.msra.mxu0 %v2997
        %3148 = vmatpush.bf16.msra.mxu0 %v2994
        %3149 = vmatpush.bf16.msra.mxu0 %v2991
        %3150 = vmatpush.bf16.msra.mxu0 %v2988
        %3151 = vmatpush.bf16.msra.mxu0 %v2985
        %3152 = vmatpush.bf16.msra.mxu0 %v2982
        %3153 = vmatpush.bf16.msra.mxu0 %v2979
        %3154 = vmatpush.bf16.msra.mxu0 %v2976
        %3155 = vmatmul.bf16.gmra.mxu0 %v2605
        %v3156 = vpop.f32.mrf.mxu0
        %v3157 = vadd.f32 %v3144, %v3156
        %v3158 = vpop.f32.mrf.mxu0
        %3159 = vdwg.mxu0
        %3160 = vmatpush.bf16.msra.mxu0 %v3021
        %3161 = vmatpush.bf16.msra.mxu0 %v3018
        %3162 = vmatpush.bf16.msra.mxu0 %v3015
        %3163 = vmatpush.bf16.msra.mxu0 %v3012
        %3164 = vmatpush.bf16.msra.mxu0 %v3009
        %3165 = vmatpush.bf16.msra.mxu0 %v3006
        %3166 = vmatpush.bf16.msra.mxu0 %v3003
        %3167 = vmatpush.bf16.msra.mxu0 %v3000
        %3168 = vmatmul.bf16.gmra.mxu0 %v2606
        %v3169 = vpop.f32.mrf.mxu0
        %v3170 = vadd.f32 %v3157, %v3169
        %v3171 = vpop.f32.mrf.mxu0
        %3172 = vdwg.mxu0
        %3173 = vmatpush.bf16.msra.mxu0 %v2974
        %3174 = vmatpush.bf16.msra.mxu0 %v2971
        %3175 = vmatpush.bf16.msra.mxu0 %v2968
        %3176 = vmatpush.bf16.msra.mxu0 %v2965
        %3177 = vmatpush.bf16.msra.mxu0 %v2962
        %3178 = vmatpush.bf16.msra.mxu0 %v2959
        %3179 = vmatpush.bf16.msra.mxu0 %v2956
        %3180 = vmatpush.bf16.msra.mxu0 %v2953
        %3181 = vmatmul.bf16.gmra.mxu0 %v2604
        %v3182 = vpop.f32.mrf.mxu0
        %v3183 = vadd.f32 %v2707, %v3182
        %v3184 = vpop.f32.mrf.mxu0
        %3185 = vdwg.mxu0
        %3186 = vmatpush.bf16.msra.mxu0 %v2998
        %3187 = vmatpush.bf16.msra.mxu0 %v2995
        %3188 = vmatpush.bf16.msra.mxu0 %v2992
        %3189 = vmatpush.bf16.msra.mxu0 %v2989
        %3190 = vmatpush.bf16.msra.mxu0 %v2986
        %3191 = vmatpush.bf16.msra.mxu0 %v2983
        %3192 = vmatpush.bf16.msra.mxu0 %v2980
        %3193 = vmatpush.bf16.msra.mxu0 %v2977
        %3194 = vmatmul.bf16.gmra.mxu0 %v2605
        %v3195 = vpop.f32.mrf.mxu0
        %v3196 = vadd.f32 %v3183, %v3195
        %v3197 = vpop.f32.mrf.mxu0
        %3198 = vdwg.mxu0
        %3199 = vmatpush.bf16.msra.mxu0 %v3022
        %3200 = vmatpush.bf16.msra.mxu0 %v3019
        %3201 = vmatpush.bf16.msra.mxu0 %v3016
        %3202 = vmatpush.bf16.msra.mxu0 %v3013
        %3203 = vmatpush.bf16.msra.mxu0 %v3010
        %3204 = vmatpush.bf16.msra.mxu0 %v3007
        %3205 = vmatpush.bf16.msra.mxu0 %v3004
        %3206 = vmatpush.bf16.msra.mxu0 %v3001
        %3207 = vmatmul.bf16.gmra.mxu0 %v2606
        %v3208 = vpop.f32.mrf.mxu0
        %v3209 = vadd.f32 %v3196, %v3208
        %v3210 = vpop.f32.mrf.mxu0
        %3211 = vdwg.mxu0
        %v3212 = vadd.f32 %v476, %v3131
        %v3213 = vadd.f32 %v477, %v3170
        %v3214 = vadd.f32 %v478, %v3209
        %v3215 = vadd.f32 %v3212, %v3213
        %v3216 = vadd.f32 %v3215, %v3214
        %3217 = vadd.xlane.f32.xlu0 %v3216
        %v3218 = vpop.xlane.xlu0 %3217
        %v3219 = vmul.f32 %v3218, %v489
        %v3220 = vsub.f32 %v3212, %v3219
        %v3221 = vsub.f32 %v3213, %v3219
        %v3222 = vsub.f32 %v3214, %v3219
        %v3223 = vmul.f32 %v3220, %v3220
        %v3224 = vmul.f32 %v3221, %v3221
        %v3225 = vmul.f32 %v3222, %v3222
        %v3226 = vadd.f32 %v3223, %v3224
        %v3227 = vadd.f32 %v3226, %v3225
        %3228 = vadd.xlane.f32.xlu0 %v3227
        %v3229 = vpop.xlane.xlu0 %3228
        %v3230 = vmul.f32 %v3229, %v489
        %v3231 = vadd.f32 %v3230, 1e-05
        %v3232 = vrsqrt.pop %v3231
        %v3233 = vmul.f32 %v3232, %v3231
        %v3234 = vmul.f32 %v3233, %v3232
        %v3235 = vmul.f32 0.5, %v3234
        %v3236 = vsub.f32 1.5, %v3235
        %v3237 = vmul.f32 %v3232, %v3236
        %vm3238 = vweird.f32 %v3231
        %vm3239 = vweird.f32 %v3232
        %vm3240 = vmor %vm3238, %vm3239
        %v3241 = vsel %vm3240, %v3232, %v3237
        %v3242 = vmul.f32 %v3220, %v3241
        %v3243 = vmul.f32 %v3221, %v3241
        %v3244 = vmul.f32 %v3222, %v3241
        %v3245 = vpack.c.bf16 %v3242, %v3242
        %v3246 = vpack.c.bf16 %v3243, %v3243
        %v3247 = vpack.c.bf16 %v3244, %v3244
        %v3248 = vld [vmem:[#allocation12] sm:$0xff]
        %v3249 = vld [vmem:[#allocation12 + $0x8] sm:$0xff]
        %v3250 = vld [vmem:[#allocation12 + $0x10] sm:$0xff]
        %v3251 = vld [vmem:[#allocation12 + $0x18] sm:$0xff]
        %v3252 = vld [vmem:[#allocation12 + $0x20] sm:$0xff]
        %v3253 = vld [vmem:[#allocation12 + $0x28] sm:$0xff]
        %v3254 = vld [vmem:[#allocation12 + $0x30] sm:$0xff]
        %v3255 = vld [vmem:[#allocation12 + $0x38] sm:$0xff]
        %v3256 = vld [vmem:[#allocation12 + $0x40] sm:$0xff]
        %v3257 = vld [vmem:[#allocation12 + $0x48] sm:$0xff]
        %v3258 = vld [vmem:[#allocation12 + $0x50] sm:$0xff]
        %v3259 = vld [vmem:[#allocation12 + $0x58] sm:$0xff]
        %v3260 = vld [vmem:[#allocation12 + $0x60] sm:$0xff]
        %v3261 = vld [vmem:[#allocation12 + $0x68] sm:$0xff]
        %v3262 = vld [vmem:[#allocation12 + $0x70] sm:$0xff]
        %v3263 = vld [vmem:[#allocation12 + $0x78] sm:$0xff]
        %v3264 = vld [vmem:[#allocation12 + $0x80] sm:$0xff]
        %v3265 = vld [vmem:[#allocation12 + $0x88] sm:$0xff]
        %v3266 = vld [vmem:[#allocation12 + $0x90] sm:$0xff]
        %v3267 = vld [vmem:[#allocation12 + $0x98] sm:$0xff]
        %v3268 = vld [vmem:[#allocation12 + $0xa0] sm:$0xff]
        %v3269 = vld [vmem:[#allocation12 + $0xa8] sm:$0xff]
        %v3270 = vld [vmem:[#allocation12 + $0xb0] sm:$0xff]
        %v3271 = vld [vmem:[#allocation12 + $0xb8] sm:$0xff]
        %v3272 = vld [vmem:[#allocation12 + $0xc0] sm:$0xff]
        %v3273 = vld [vmem:[#allocation12 + $0xc8] sm:$0xff]
        %v3274 = vld [vmem:[#allocation12 + $0xd0] sm:$0xff]
        %v3275 = vld [vmem:[#allocation12 + $0xd8] sm:$0xff]
        %v3276 = vld [vmem:[#allocation12 + $0xe0] sm:$0xff]
        %v3277 = vld [vmem:[#allocation12 + $0xe8] sm:$0xff]
        %v3278 = vld [vmem:[#allocation12 + $0xf0] sm:$0xff]
        %v3279 = vld [vmem:[#allocation12 + $0xf8] sm:$0xff]
        %v3280 = vld [vmem:[#allocation12 + $0x100] sm:$0xff]
        %v3281 = vld [vmem:[#allocation12 + $0x108] sm:$0xff]
        %v3282 = vld [vmem:[#allocation12 + $0x110] sm:$0xff]
        %v3283 = vld [vmem:[#allocation12 + $0x118] sm:$0xff]
        %v3284 = vld [vmem:[#allocation12 + $0x120] sm:$0xff]
        %v3285 = vld [vmem:[#allocation12 + $0x128] sm:$0xff]
        %v3286 = vld [vmem:[#allocation12 + $0x130] sm:$0xff]
        %v3287 = vld [vmem:[#allocation12 + $0x138] sm:$0xff]
        %v3288 = vld [vmem:[#allocation12 + $0x140] sm:$0xff]
        %v3289 = vld [vmem:[#allocation12 + $0x148] sm:$0xff]
        %v3290 = vld [vmem:[#allocation12 + $0x150] sm:$0xff]
        %v3291 = vld [vmem:[#allocation12 + $0x158] sm:$0xff]
        %v3292 = vld [vmem:[#allocation12 + $0x160] sm:$0xff]
        %v3293 = vld [vmem:[#allocation12 + $0x168] sm:$0xff]
        %v3294 = vld [vmem:[#allocation12 + $0x170] sm:$0xff]
        %v3295 = vld [vmem:[#allocation12 + $0x178] sm:$0xff]
        %v3296 = vld [vmem:[#allocation12 + $0x180] sm:$0xff]
        %v3297 = vld [vmem:[#allocation12 + $0x188] sm:$0xff]
        %v3298 = vld [vmem:[#allocation12 + $0x190] sm:$0xff]
        %v3299 = vld [vmem:[#allocation12 + $0x198] sm:$0xff]
        %v3300 = vld [vmem:[#allocation12 + $0x1a0] sm:$0xff]
        %v3301 = vld [vmem:[#allocation12 + $0x1a8] sm:$0xff]
        %v3302 = vld [vmem:[#allocation12 + $0x1b0] sm:$0xff]
        %v3303 = vld [vmem:[#allocation12 + $0x1b8] sm:$0xff]
        %v3304 = vld [vmem:[#allocation12 + $0x1c0] sm:$0xff]
        %v3305 = vld [vmem:[#allocation12 + $0x1c8] sm:$0xff]
        %v3306 = vld [vmem:[#allocation12 + $0x1d0] sm:$0xff]
        %v3307 = vld [vmem:[#allocation12 + $0x1d8] sm:$0xff]
        %v3308 = vld [vmem:[#allocation12 + $0x1e0] sm:$0xff]
        %v3309 = vld [vmem:[#allocation12 + $0x1e8] sm:$0xff]
        %v3310 = vld [vmem:[#allocation12 + $0x1f0] sm:$0xff]
        %v3311 = vld [vmem:[#allocation12 + $0x1f8] sm:$0xff]
        %v3312 = vld [vmem:[#allocation12 + $0x200] sm:$0xff]
        %v3313 = vld [vmem:[#allocation12 + $0x208] sm:$0xff]
        %v3314 = vld [vmem:[#allocation12 + $0x210] sm:$0xff]
        %v3315 = vld [vmem:[#allocation12 + $0x218] sm:$0xff]
        %v3316 = vld [vmem:[#allocation12 + $0x220] sm:$0xff]
        %v3317 = vld [vmem:[#allocation12 + $0x228] sm:$0xff]
        %v3318 = vld [vmem:[#allocation12 + $0x230] sm:$0xff]
        %v3319 = vld [vmem:[#allocation12 + $0x238] sm:$0xff]
        %v3320 = vld [vmem:[#allocation12 + $0x240] sm:$0xff]
        %v3321 = vld [vmem:[#allocation12 + $0x248] sm:$0xff]
        %v3322 = vld [vmem:[#allocation12 + $0x250] sm:$0xff]
        %v3323 = vld [vmem:[#allocation12 + $0x258] sm:$0xff]
        %v3324 = vld [vmem:[#allocation12 + $0x260] sm:$0xff]
        %v3325 = vld [vmem:[#allocation12 + $0x268] sm:$0xff]
        %v3326 = vld [vmem:[#allocation12 + $0x270] sm:$0xff]
        %v3327 = vld [vmem:[#allocation12 + $0x278] sm:$0xff]
        %v3328 = vld [vmem:[#allocation12 + $0x280] sm:$0xff]
        %v3329 = vld [vmem:[#allocation12 + $0x288] sm:$0xff]
        %v3330 = vld [vmem:[#allocation12 + $0x290] sm:$0xff]
        %v3331 = vld [vmem:[#allocation12 + $0x298] sm:$0xff]
        %v3332 = vld [vmem:[#allocation12 + $0x2a0] sm:$0xff]
        %v3333 = vld [vmem:[#allocation12 + $0x2a8] sm:$0xff]
        %v3334 = vld [vmem:[#allocation12 + $0x2b0] sm:$0xff]
        %v3335 = vld [vmem:[#allocation12 + $0x2b8] sm:$0xff]
        %v3336 = vld [vmem:[#allocation12 + $0x2c0] sm:$0xff]
        %v3337 = vld [vmem:[#allocation12 + $0x2c8] sm:$0xff]
        %v3338 = vld [vmem:[#allocation12 + $0x2d0] sm:$0xff]
        %v3339 = vld [vmem:[#allocation12 + $0x2d8] sm:$0xff]
        %v3340 = vld [vmem:[#allocation12 + $0x2e0] sm:$0xff]
        %v3341 = vld [vmem:[#allocation12 + $0x2e8] sm:$0xff]
        %v3342 = vld [vmem:[#allocation12 + $0x2f0] sm:$0xff]
        %v3343 = vld [vmem:[#allocation12 + $0x2f8] sm:$0xff]
        %v3344 = vld [vmem:[#allocation12 + $0x300] sm:$0xff]
        %v3345 = vld [vmem:[#allocation12 + $0x308] sm:$0xff]
        %v3346 = vld [vmem:[#allocation12 + $0x310] sm:$0xff]
        %v3347 = vld [vmem:[#allocation12 + $0x318] sm:$0xff]
        %v3348 = vld [vmem:[#allocation12 + $0x320] sm:$0xff]
        %v3349 = vld [vmem:[#allocation12 + $0x328] sm:$0xff]
        %v3350 = vld [vmem:[#allocation12 + $0x330] sm:$0xff]
        %v3351 = vld [vmem:[#allocation12 + $0x338] sm:$0xff]
        %v3352 = vld [vmem:[#allocation12 + $0x340] sm:$0xff]
        %v3353 = vld [vmem:[#allocation12 + $0x348] sm:$0xff]
        %v3354 = vld [vmem:[#allocation12 + $0x350] sm:$0xff]
        %v3355 = vld [vmem:[#allocation12 + $0x358] sm:$0xff]
        %v3356 = vld [vmem:[#allocation12 + $0x360] sm:$0xff]
        %v3357 = vld [vmem:[#allocation12 + $0x368] sm:$0xff]
        %v3358 = vld [vmem:[#allocation12 + $0x370] sm:$0xff]
        %v3359 = vld [vmem:[#allocation12 + $0x378] sm:$0xff]
        %v3360 = vld [vmem:[#allocation12 + $0x380] sm:$0xff]
        %v3361 = vld [vmem:[#allocation12 + $0x388] sm:$0xff]
        %v3362 = vld [vmem:[#allocation12 + $0x390] sm:$0xff]
        %v3363 = vld [vmem:[#allocation12 + $0x398] sm:$0xff]
        %v3364 = vld [vmem:[#allocation12 + $0x3a0] sm:$0xff]
        %v3365 = vld [vmem:[#allocation12 + $0x3a8] sm:$0xff]
        %v3366 = vld [vmem:[#allocation12 + $0x3b0] sm:$0xff]
        %v3367 = vld [vmem:[#allocation12 + $0x3b8] sm:$0xff]
        %v3368 = vld [vmem:[#allocation12 + $0x3c0] sm:$0xff]
        %v3369 = vld [vmem:[#allocation12 + $0x3c8] sm:$0xff]
        %v3370 = vld [vmem:[#allocation12 + $0x3d0] sm:$0xff]
        %v3371 = vld [vmem:[#allocation12 + $0x3d8] sm:$0xff]
        %v3372 = vld [vmem:[#allocation12 + $0x3e0] sm:$0xff]
        %v3373 = vld [vmem:[#allocation12 + $0x3e8] sm:$0xff]
        %v3374 = vld [vmem:[#allocation12 + $0x3f0] sm:$0xff]
        %v3375 = vld [vmem:[#allocation12 + $0x3f8] sm:$0xff]
        %v3376 = vld [vmem:[#allocation12 + $0x400] sm:$0xff]
        %v3377 = vld [vmem:[#allocation12 + $0x408] sm:$0xff]
        %v3378 = vld [vmem:[#allocation12 + $0x410] sm:$0xff]
        %v3379 = vld [vmem:[#allocation12 + $0x418] sm:$0xff]
        %v3380 = vld [vmem:[#allocation12 + $0x420] sm:$0xff]
        %v3381 = vld [vmem:[#allocation12 + $0x428] sm:$0xff]
        %v3382 = vld [vmem:[#allocation12 + $0x430] sm:$0xff]
        %v3383 = vld [vmem:[#allocation12 + $0x438] sm:$0xff]
        %v3384 = vld [vmem:[#allocation12 + $0x440] sm:$0xff]
        %v3385 = vld [vmem:[#allocation12 + $0x448] sm:$0xff]
        %v3386 = vld [vmem:[#allocation12 + $0x450] sm:$0xff]
        %v3387 = vld [vmem:[#allocation12 + $0x458] sm:$0xff]
        %v3388 = vld [vmem:[#allocation12 + $0x460] sm:$0xff]
        %v3389 = vld [vmem:[#allocation12 + $0x468] sm:$0xff]
        %v3390 = vld [vmem:[#allocation12 + $0x470] sm:$0xff]
        %v3391 = vld [vmem:[#allocation12 + $0x478] sm:$0xff]
        %v3392 = vld [vmem:[#allocation12 + $0x480] sm:$0xff]
        %v3393 = vld [vmem:[#allocation12 + $0x488] sm:$0xff]
        %v3394 = vld [vmem:[#allocation12 + $0x490] sm:$0xff]
        %v3395 = vld [vmem:[#allocation12 + $0x498] sm:$0xff]
        %v3396 = vld [vmem:[#allocation12 + $0x4a0] sm:$0xff]
        %v3397 = vld [vmem:[#allocation12 + $0x4a8] sm:$0xff]
        %v3398 = vld [vmem:[#allocation12 + $0x4b0] sm:$0xff]
        %v3399 = vld [vmem:[#allocation12 + $0x4b8] sm:$0xff]
        %v3400 = vld [vmem:[#allocation12 + $0x4c0] sm:$0xff]
        %v3401 = vld [vmem:[#allocation12 + $0x4c8] sm:$0xff]
        %v3402 = vld [vmem:[#allocation12 + $0x4d0] sm:$0xff]
        %v3403 = vld [vmem:[#allocation12 + $0x4d8] sm:$0xff]
        %v3404 = vld [vmem:[#allocation12 + $0x4e0] sm:$0xff]
        %v3405 = vld [vmem:[#allocation12 + $0x4e8] sm:$0xff]
        %v3406 = vld [vmem:[#allocation12 + $0x4f0] sm:$0xff]
        %v3407 = vld [vmem:[#allocation12 + $0x4f8] sm:$0xff]
        %v3408 = vld [vmem:[#allocation12 + $0x500] sm:$0xff]
        %v3409 = vld [vmem:[#allocation12 + $0x508] sm:$0xff]
        %v3410 = vld [vmem:[#allocation12 + $0x510] sm:$0xff]
        %v3411 = vld [vmem:[#allocation12 + $0x518] sm:$0xff]
        %v3412 = vld [vmem:[#allocation12 + $0x520] sm:$0xff]
        %v3413 = vld [vmem:[#allocation12 + $0x528] sm:$0xff]
        %v3414 = vld [vmem:[#allocation12 + $0x530] sm:$0xff]
        %v3415 = vld [vmem:[#allocation12 + $0x538] sm:$0xff]
        %v3416 = vld [vmem:[#allocation12 + $0x540] sm:$0xff]
        %v3417 = vld [vmem:[#allocation12 + $0x548] sm:$0xff]
        %v3418 = vld [vmem:[#allocation12 + $0x550] sm:$0xff]
        %v3419 = vld [vmem:[#allocation12 + $0x558] sm:$0xff]
        %v3420 = vld [vmem:[#allocation12 + $0x560] sm:$0xff]
        %v3421 = vld [vmem:[#allocation12 + $0x568] sm:$0xff]
        %v3422 = vld [vmem:[#allocation12 + $0x570] sm:$0xff]
        %v3423 = vld [vmem:[#allocation12 + $0x578] sm:$0xff]
        %v3424 = vld [vmem:[#allocation12 + $0x580] sm:$0xff]
        %v3425 = vld [vmem:[#allocation12 + $0x588] sm:$0xff]
        %v3426 = vld [vmem:[#allocation12 + $0x590] sm:$0xff]
        %v3427 = vld [vmem:[#allocation12 + $0x598] sm:$0xff]
        %v3428 = vld [vmem:[#allocation12 + $0x5a0] sm:$0xff]
        %v3429 = vld [vmem:[#allocation12 + $0x5a8] sm:$0xff]
        %v3430 = vld [vmem:[#allocation12 + $0x5b0] sm:$0xff]
        %v3431 = vld [vmem:[#allocation12 + $0x5b8] sm:$0xff]
        %v3432 = vld [vmem:[#allocation12 + $0x5c0] sm:$0xff]
        %v3433 = vld [vmem:[#allocation12 + $0x5c8] sm:$0xff]
        %v3434 = vld [vmem:[#allocation12 + $0x5d0] sm:$0xff]
        %v3435 = vld [vmem:[#allocation12 + $0x5d8] sm:$0xff]
        %v3436 = vld [vmem:[#allocation12 + $0x5e0] sm:$0xff]
        %v3437 = vld [vmem:[#allocation12 + $0x5e8] sm:$0xff]
        %v3438 = vld [vmem:[#allocation12 + $0x5f0] sm:$0xff]
        %v3439 = vld [vmem:[#allocation12 + $0x5f8] sm:$0xff]
        %v3440 = vld [vmem:[#allocation12 + $0x600] sm:$0xff]
        %v3441 = vld [vmem:[#allocation12 + $0x608] sm:$0xff]
        %v3442 = vld [vmem:[#allocation12 + $0x610] sm:$0xff]
        %v3443 = vld [vmem:[#allocation12 + $0x618] sm:$0xff]
        %v3444 = vld [vmem:[#allocation12 + $0x620] sm:$0xff]
        %v3445 = vld [vmem:[#allocation12 + $0x628] sm:$0xff]
        %v3446 = vld [vmem:[#allocation12 + $0x630] sm:$0xff]
        %v3447 = vld [vmem:[#allocation12 + $0x638] sm:$0xff]
        %v3448 = vld [vmem:[#allocation12 + $0x640] sm:$0xff]
        %v3449 = vld [vmem:[#allocation12 + $0x648] sm:$0xff]
        %v3450 = vld [vmem:[#allocation12 + $0x650] sm:$0xff]
        %v3451 = vld [vmem:[#allocation12 + $0x658] sm:$0xff]
        %v3452 = vld [vmem:[#allocation12 + $0x660] sm:$0xff]
        %v3453 = vld [vmem:[#allocation12 + $0x668] sm:$0xff]
        %v3454 = vld [vmem:[#allocation12 + $0x670] sm:$0xff]
        %v3455 = vld [vmem:[#allocation12 + $0x678] sm:$0xff]
        %v3456 = vld [vmem:[#allocation12 + $0x680] sm:$0xff]
        %v3457 = vld [vmem:[#allocation12 + $0x688] sm:$0xff]
        %v3458 = vld [vmem:[#allocation12 + $0x690] sm:$0xff]
        %v3459 = vld [vmem:[#allocation12 + $0x698] sm:$0xff]
        %v3460 = vld [vmem:[#allocation12 + $0x6a0] sm:$0xff]
        %v3461 = vld [vmem:[#allocation12 + $0x6a8] sm:$0xff]
        %v3462 = vld [vmem:[#allocation12 + $0x6b0] sm:$0xff]
        %v3463 = vld [vmem:[#allocation12 + $0x6b8] sm:$0xff]
        %v3464 = vld [vmem:[#allocation12 + $0x6c0] sm:$0xff]
        %v3465 = vld [vmem:[#allocation12 + $0x6c8] sm:$0xff]
        %v3466 = vld [vmem:[#allocation12 + $0x6d0] sm:$0xff]
        %v3467 = vld [vmem:[#allocation12 + $0x6d8] sm:$0xff]
        %v3468 = vld [vmem:[#allocation12 + $0x6e0] sm:$0xff]
        %v3469 = vld [vmem:[#allocation12 + $0x6e8] sm:$0xff]
        %v3470 = vld [vmem:[#allocation12 + $0x6f0] sm:$0xff]
        %v3471 = vld [vmem:[#allocation12 + $0x6f8] sm:$0xff]
        %v3472 = vld [vmem:[#allocation12 + $0x700] sm:$0xff]
        %v3473 = vld [vmem:[#allocation12 + $0x708] sm:$0xff]
        %v3474 = vld [vmem:[#allocation12 + $0x710] sm:$0xff]
        %v3475 = vld [vmem:[#allocation12 + $0x718] sm:$0xff]
        %v3476 = vld [vmem:[#allocation12 + $0x720] sm:$0xff]
        %v3477 = vld [vmem:[#allocation12 + $0x728] sm:$0xff]
        %v3478 = vld [vmem:[#allocation12 + $0x730] sm:$0xff]
        %v3479 = vld [vmem:[#allocation12 + $0x738] sm:$0xff]
        %v3480 = vld [vmem:[#allocation12 + $0x740] sm:$0xff]
        %v3481 = vld [vmem:[#allocation12 + $0x748] sm:$0xff]
        %v3482 = vld [vmem:[#allocation12 + $0x750] sm:$0xff]
        %v3483 = vld [vmem:[#allocation12 + $0x758] sm:$0xff]
        %v3484 = vld [vmem:[#allocation12 + $0x760] sm:$0xff]
        %v3485 = vld [vmem:[#allocation12 + $0x768] sm:$0xff]
        %v3486 = vld [vmem:[#allocation12 + $0x770] sm:$0xff]
        %v3487 = vld [vmem:[#allocation12 + $0x778] sm:$0xff]
        %v3488 = vld [vmem:[#allocation12 + $0x780] sm:$0xff]
        %v3489 = vld [vmem:[#allocation12 + $0x788] sm:$0xff]
        %v3490 = vld [vmem:[#allocation12 + $0x790] sm:$0xff]
        %v3491 = vld [vmem:[#allocation12 + $0x798] sm:$0xff]
        %v3492 = vld [vmem:[#allocation12 + $0x7a0] sm:$0xff]
        %v3493 = vld [vmem:[#allocation12 + $0x7a8] sm:$0xff]
        %v3494 = vld [vmem:[#allocation12 + $0x7b0] sm:$0xff]
        %v3495 = vld [vmem:[#allocation12 + $0x7b8] sm:$0xff]
        %v3496 = vld [vmem:[#allocation12 + $0x7c0] sm:$0xff]
        %v3497 = vld [vmem:[#allocation12 + $0x7c8] sm:$0xff]
        %v3498 = vld [vmem:[#allocation12 + $0x7d0] sm:$0xff]
        %v3499 = vld [vmem:[#allocation12 + $0x7d8] sm:$0xff]
        %v3500 = vld [vmem:[#allocation12 + $0x7e0] sm:$0xff]
        %v3501 = vld [vmem:[#allocation12 + $0x7e8] sm:$0xff]
        %v3502 = vld [vmem:[#allocation12 + $0x7f0] sm:$0xff]
        %v3503 = vld [vmem:[#allocation12 + $0x7f8] sm:$0xff]
        %v3504 = vld [vmem:[#allocation12 + $0x800] sm:$0xff]
        %v3505 = vld [vmem:[#allocation12 + $0x808] sm:$0xff]
        %v3506 = vld [vmem:[#allocation12 + $0x810] sm:$0xff]
        %v3507 = vld [vmem:[#allocation12 + $0x818] sm:$0xff]
        %v3508 = vld [vmem:[#allocation12 + $0x820] sm:$0xff]
        %v3509 = vld [vmem:[#allocation12 + $0x828] sm:$0xff]
        %v3510 = vld [vmem:[#allocation12 + $0x830] sm:$0xff]
        %v3511 = vld [vmem:[#allocation12 + $0x838] sm:$0xff]
        %v3512 = vld [vmem:[#allocation12 + $0x840] sm:$0xff]
        %v3513 = vld [vmem:[#allocation12 + $0x848] sm:$0xff]
        %v3514 = vld [vmem:[#allocation12 + $0x850] sm:$0xff]
        %v3515 = vld [vmem:[#allocation12 + $0x858] sm:$0xff]
        %v3516 = vld [vmem:[#allocation12 + $0x860] sm:$0xff]
        %v3517 = vld [vmem:[#allocation12 + $0x868] sm:$0xff]
        %v3518 = vld [vmem:[#allocation12 + $0x870] sm:$0xff]
        %v3519 = vld [vmem:[#allocation12 + $0x878] sm:$0xff]
        %v3520 = vld [vmem:[#allocation12 + $0x880] sm:$0xff]
        %v3521 = vld [vmem:[#allocation12 + $0x888] sm:$0xff]
        %v3522 = vld [vmem:[#allocation12 + $0x890] sm:$0xff]
        %v3523 = vld [vmem:[#allocation12 + $0x898] sm:$0xff]
        %v3524 = vld [vmem:[#allocation12 + $0x8a0] sm:$0xff]
        %v3525 = vld [vmem:[#allocation12 + $0x8a8] sm:$0xff]
        %v3526 = vld [vmem:[#allocation12 + $0x8b0] sm:$0xff]
        %v3527 = vld [vmem:[#allocation12 + $0x8b8] sm:$0xff]
        %v3528 = vld [vmem:[#allocation12 + $0x8c0] sm:$0xff]
        %v3529 = vld [vmem:[#allocation12 + $0x8c8] sm:$0xff]
        %v3530 = vld [vmem:[#allocation12 + $0x8d0] sm:$0xff]
        %v3531 = vld [vmem:[#allocation12 + $0x8d8] sm:$0xff]
        %v3532 = vld [vmem:[#allocation12 + $0x8e0] sm:$0xff]
        %v3533 = vld [vmem:[#allocation12 + $0x8e8] sm:$0xff]
        %v3534 = vld [vmem:[#allocation12 + $0x8f0] sm:$0xff]
        %v3535 = vld [vmem:[#allocation12 + $0x8f8] sm:$0xff]
        %v3536 = vld [vmem:[#allocation14] sm:$0xff]
        %v3537 = vld [vmem:[#allocation14 + $0x8] sm:$0xf]
        %v3540 = vperm.slane %v3536, 0
        %v3541 = vperm.slane %v3536, 1
        %v3542 = vperm.slane %v3536, 2
        %v3543 = vperm.slane %v3536, 3
        %v3544 = vperm.slane %v3536, 4
        %v3545 = vperm.slane %v3536, 5
        %v3546 = vperm.slane %v3536, 6
        %v3547 = vperm.slane %v3536, 7
        %v3548 = vperm.slane %v3537, 0
        %v3549 = vperm.slane %v3537, 1
        %v3550 = vperm.slane %v3537, 2
        %v3551 = vperm.slane %v3537, 3
        %v3852 = vunpack.c.l.b16 %v3248
        %v3853 = vunpack.c.h.b16 %v3248
        %v3854 = vunpack.c.l.b16 %v3249
        %v3855 = vunpack.c.h.b16 %v3249
        %v3856 = vunpack.c.l.b16 %v3250
        %v3857 = vunpack.c.h.b16 %v3250
        %v3858 = vunpack.c.l.b16 %v3251
        %v3859 = vunpack.c.h.b16 %v3251
        %v3860 = vunpack.c.l.b16 %v3252
        %v3861 = vunpack.c.h.b16 %v3252
        %v3862 = vunpack.c.l.b16 %v3253
        %v3863 = vunpack.c.h.b16 %v3253
        %v3864 = vunpack.c.l.b16 %v3254
        %v3865 = vunpack.c.h.b16 %v3254
        %v3866 = vunpack.c.l.b16 %v3255
        %v3867 = vunpack.c.h.b16 %v3255
        %v3868 = vunpack.c.l.b16 %v3256
        %v3869 = vunpack.c.h.b16 %v3256
        %v3870 = vunpack.c.l.b16 %v3257
        %v3871 = vunpack.c.h.b16 %v3257
        %v3872 = vunpack.c.l.b16 %v3258
        %v3873 = vunpack.c.h.b16 %v3258
        %v3874 = vunpack.c.l.b16 %v3259
        %v3875 = vunpack.c.h.b16 %v3259
        %v3876 = vunpack.c.l.b16 %v3260
        %v3877 = vunpack.c.h.b16 %v3260
        %v3878 = vunpack.c.l.b16 %v3261
        %v3879 = vunpack.c.h.b16 %v3261
        %v3880 = vunpack.c.l.b16 %v3262
        %v3881 = vunpack.c.h.b16 %v3262
        %v3882 = vunpack.c.l.b16 %v3263
        %v3883 = vunpack.c.h.b16 %v3263
        %v3884 = vunpack.c.l.b16 %v3264
        %v3885 = vunpack.c.h.b16 %v3264
        %v3886 = vunpack.c.l.b16 %v3265
        %v3887 = vunpack.c.h.b16 %v3265
        %v3888 = vunpack.c.l.b16 %v3266
        %v3889 = vunpack.c.h.b16 %v3266
        %v3890 = vunpack.c.l.b16 %v3267
        %v3891 = vunpack.c.h.b16 %v3267
        %v3892 = vunpack.c.l.b16 %v3268
        %v3893 = vunpack.c.h.b16 %v3268
        %v3894 = vunpack.c.l.b16 %v3269
        %v3895 = vunpack.c.h.b16 %v3269
        %v3896 = vunpack.c.l.b16 %v3270
        %v3897 = vunpack.c.h.b16 %v3270
        %v3898 = vunpack.c.l.b16 %v3271
        %v3899 = vunpack.c.h.b16 %v3271
        %v3900 = vunpack.c.l.b16 %v3272
        %v3901 = vunpack.c.h.b16 %v3272
        %v3902 = vunpack.c.l.b16 %v3273
        %v3903 = vunpack.c.h.b16 %v3273
        %v3904 = vunpack.c.l.b16 %v3274
        %v3905 = vunpack.c.h.b16 %v3274
        %v3906 = vunpack.c.l.b16 %v3275
        %v3907 = vunpack.c.h.b16 %v3275
        %v3908 = vunpack.c.l.b16 %v3276
        %v3909 = vunpack.c.h.b16 %v3276
        %v3910 = vunpack.c.l.b16 %v3277
        %v3911 = vunpack.c.h.b16 %v3277
        %v3912 = vunpack.c.l.b16 %v3278
        %v3913 = vunpack.c.h.b16 %v3278
        %v3914 = vunpack.c.l.b16 %v3279
        %v3915 = vunpack.c.h.b16 %v3279
        %v3916 = vunpack.c.l.b16 %v3280
        %v3917 = vunpack.c.h.b16 %v3280
        %v3918 = vunpack.c.l.b16 %v3281
        %v3919 = vunpack.c.h.b16 %v3281
        %v3920 = vunpack.c.l.b16 %v3282
        %v3921 = vunpack.c.h.b16 %v3282
        %v3922 = vunpack.c.l.b16 %v3283
        %v3923 = vunpack.c.h.b16 %v3283
        %v3924 = vunpack.c.l.b16 %v3284
        %v3925 = vunpack.c.h.b16 %v3284
        %v3926 = vunpack.c.l.b16 %v3285
        %v3927 = vunpack.c.h.b16 %v3285
        %v3928 = vunpack.c.l.b16 %v3286
        %v3929 = vunpack.c.h.b16 %v3286
        %v3930 = vunpack.c.l.b16 %v3287
        %v3931 = vunpack.c.h.b16 %v3287
        %v3932 = vunpack.c.l.b16 %v3288
        %v3933 = vunpack.c.h.b16 %v3288
        %v3934 = vunpack.c.l.b16 %v3289
        %v3935 = vunpack.c.h.b16 %v3289
        %v3936 = vunpack.c.l.b16 %v3290
        %v3937 = vunpack.c.h.b16 %v3290
        %v3938 = vunpack.c.l.b16 %v3291
        %v3939 = vunpack.c.h.b16 %v3291
        %v3940 = vunpack.c.l.b16 %v3292
        %v3941 = vunpack.c.h.b16 %v3292
        %v3942 = vunpack.c.l.b16 %v3293
        %v3943 = vunpack.c.h.b16 %v3293
        %v3944 = vunpack.c.l.b16 %v3294
        %v3945 = vunpack.c.h.b16 %v3294
        %v3946 = vunpack.c.l.b16 %v3295
        %v3947 = vunpack.c.h.b16 %v3295
        %v3948 = vunpack.c.l.b16 %v3296
        %v3949 = vunpack.c.h.b16 %v3296
        %v3950 = vunpack.c.l.b16 %v3297
        %v3951 = vunpack.c.h.b16 %v3297
        %v3952 = vunpack.c.l.b16 %v3298
        %v3953 = vunpack.c.h.b16 %v3298
        %v3954 = vunpack.c.l.b16 %v3299
        %v3955 = vunpack.c.h.b16 %v3299
        %v3956 = vunpack.c.l.b16 %v3300
        %v3957 = vunpack.c.h.b16 %v3300
        %v3958 = vunpack.c.l.b16 %v3301
        %v3959 = vunpack.c.h.b16 %v3301
        %v3960 = vunpack.c.l.b16 %v3302
        %v3961 = vunpack.c.h.b16 %v3302
        %v3962 = vunpack.c.l.b16 %v3303
        %v3963 = vunpack.c.h.b16 %v3303
        %v3964 = vunpack.c.l.b16 %v3304
        %v3965 = vunpack.c.h.b16 %v3304
        %v3966 = vunpack.c.l.b16 %v3305
        %v3967 = vunpack.c.h.b16 %v3305
        %v3968 = vunpack.c.l.b16 %v3306
        %v3969 = vunpack.c.h.b16 %v3306
        %v3970 = vunpack.c.l.b16 %v3307
        %v3971 = vunpack.c.h.b16 %v3307
        %v3972 = vunpack.c.l.b16 %v3308
        %v3973 = vunpack.c.h.b16 %v3308
        %v3974 = vunpack.c.l.b16 %v3309
        %v3975 = vunpack.c.h.b16 %v3309
        %v3976 = vunpack.c.l.b16 %v3310
        %v3977 = vunpack.c.h.b16 %v3310
        %v3978 = vunpack.c.l.b16 %v3311
        %v3979 = vunpack.c.h.b16 %v3311
        %v3980 = vunpack.c.l.b16 %v3312
        %v3981 = vunpack.c.h.b16 %v3312
        %v3982 = vunpack.c.l.b16 %v3313
        %v3983 = vunpack.c.h.b16 %v3313
        %v3984 = vunpack.c.l.b16 %v3314
        %v3985 = vunpack.c.h.b16 %v3314
        %v3986 = vunpack.c.l.b16 %v3315
        %v3987 = vunpack.c.h.b16 %v3315
        %v3988 = vunpack.c.l.b16 %v3316
        %v3989 = vunpack.c.h.b16 %v3316
        %v3990 = vunpack.c.l.b16 %v3317
        %v3991 = vunpack.c.h.b16 %v3317
        %v3992 = vunpack.c.l.b16 %v3318
        %v3993 = vunpack.c.h.b16 %v3318
        %v3994 = vunpack.c.l.b16 %v3319
        %v3995 = vunpack.c.h.b16 %v3319
        %v3996 = vunpack.c.l.b16 %v3320
        %v3997 = vunpack.c.h.b16 %v3320
        %v3998 = vunpack.c.l.b16 %v3321
        %v3999 = vunpack.c.h.b16 %v3321
        %v4000 = vunpack.c.l.b16 %v3322
        %v4001 = vunpack.c.h.b16 %v3322
        %v4002 = vunpack.c.l.b16 %v3323
        %v4003 = vunpack.c.h.b16 %v3323
        %v4004 = vunpack.c.l.b16 %v3324
        %v4005 = vunpack.c.h.b16 %v3324
        %v4006 = vunpack.c.l.b16 %v3325
        %v4007 = vunpack.c.h.b16 %v3325
        %v4008 = vunpack.c.l.b16 %v3326
        %v4009 = vunpack.c.h.b16 %v3326
        %v4010 = vunpack.c.l.b16 %v3327
        %v4011 = vunpack.c.h.b16 %v3327
        %v4012 = vunpack.c.l.b16 %v3328
        %v4013 = vunpack.c.h.b16 %v3328
        %v4014 = vunpack.c.l.b16 %v3329
        %v4015 = vunpack.c.h.b16 %v3329
        %v4016 = vunpack.c.l.b16 %v3330
        %v4017 = vunpack.c.h.b16 %v3330
        %v4018 = vunpack.c.l.b16 %v3331
        %v4019 = vunpack.c.h.b16 %v3331
        %v4020 = vunpack.c.l.b16 %v3332
        %v4021 = vunpack.c.h.b16 %v3332
        %v4022 = vunpack.c.l.b16 %v3333
        %v4023 = vunpack.c.h.b16 %v3333
        %v4024 = vunpack.c.l.b16 %v3334
        %v4025 = vunpack.c.h.b16 %v3334
        %v4026 = vunpack.c.l.b16 %v3335
        %v4027 = vunpack.c.h.b16 %v3335
        %v4028 = vunpack.c.l.b16 %v3336
        %v4029 = vunpack.c.h.b16 %v3336
        %v4030 = vunpack.c.l.b16 %v3337
        %v4031 = vunpack.c.h.b16 %v3337
        %v4032 = vunpack.c.l.b16 %v3338
        %v4033 = vunpack.c.h.b16 %v3338
        %v4034 = vunpack.c.l.b16 %v3339
        %v4035 = vunpack.c.h.b16 %v3339
        %v4036 = vunpack.c.l.b16 %v3340
        %v4037 = vunpack.c.h.b16 %v3340
        %v4038 = vunpack.c.l.b16 %v3341
        %v4039 = vunpack.c.h.b16 %v3341
        %v4040 = vunpack.c.l.b16 %v3342
        %v4041 = vunpack.c.h.b16 %v3342
        %v4042 = vunpack.c.l.b16 %v3343
        %v4043 = vunpack.c.h.b16 %v3343
        %v4044 = vunpack.c.l.b16 %v3344
        %v4045 = vunpack.c.h.b16 %v3344
        %v4046 = vunpack.c.l.b16 %v3345
        %v4047 = vunpack.c.h.b16 %v3345
        %v4048 = vunpack.c.l.b16 %v3346
        %v4049 = vunpack.c.h.b16 %v3346
        %v4050 = vunpack.c.l.b16 %v3347
        %v4051 = vunpack.c.h.b16 %v3347
        %v4052 = vunpack.c.l.b16 %v3348
        %v4053 = vunpack.c.h.b16 %v3348
        %v4054 = vunpack.c.l.b16 %v3349
        %v4055 = vunpack.c.h.b16 %v3349
        %v4056 = vunpack.c.l.b16 %v3350
        %v4057 = vunpack.c.h.b16 %v3350
        %v4058 = vunpack.c.l.b16 %v3351
        %v4059 = vunpack.c.h.b16 %v3351
        %v4060 = vunpack.c.l.b16 %v3352
        %v4061 = vunpack.c.h.b16 %v3352
        %v4062 = vunpack.c.l.b16 %v3353
        %v4063 = vunpack.c.h.b16 %v3353
        %v4064 = vunpack.c.l.b16 %v3354
        %v4065 = vunpack.c.h.b16 %v3354
        %v4066 = vunpack.c.l.b16 %v3355
        %v4067 = vunpack.c.h.b16 %v3355
        %v4068 = vunpack.c.l.b16 %v3356
        %v4069 = vunpack.c.h.b16 %v3356
        %v4070 = vunpack.c.l.b16 %v3357
        %v4071 = vunpack.c.h.b16 %v3357
        %v4072 = vunpack.c.l.b16 %v3358
        %v4073 = vunpack.c.h.b16 %v3358
        %v4074 = vunpack.c.l.b16 %v3359
        %v4075 = vunpack.c.h.b16 %v3359
        %v4076 = vunpack.c.l.b16 %v3360
        %v4077 = vunpack.c.h.b16 %v3360
        %v4078 = vunpack.c.l.b16 %v3361
        %v4079 = vunpack.c.h.b16 %v3361
        %v4080 = vunpack.c.l.b16 %v3362
        %v4081 = vunpack.c.h.b16 %v3362
        %v4082 = vunpack.c.l.b16 %v3363
        %v4083 = vunpack.c.h.b16 %v3363
        %v4084 = vunpack.c.l.b16 %v3364
        %v4085 = vunpack.c.h.b16 %v3364
        %v4086 = vunpack.c.l.b16 %v3365
        %v4087 = vunpack.c.h.b16 %v3365
        %v4088 = vunpack.c.l.b16 %v3366
        %v4089 = vunpack.c.h.b16 %v3366
        %v4090 = vunpack.c.l.b16 %v3367
        %v4091 = vunpack.c.h.b16 %v3367
        %v4092 = vunpack.c.l.b16 %v3368
        %v4093 = vunpack.c.h.b16 %v3368
        %v4094 = vunpack.c.l.b16 %v3369
        %v4095 = vunpack.c.h.b16 %v3369
        %v4096 = vunpack.c.l.b16 %v3370
        %v4097 = vunpack.c.h.b16 %v3370
        %v4098 = vunpack.c.l.b16 %v3371
        %v4099 = vunpack.c.h.b16 %v3371
        %v4100 = vunpack.c.l.b16 %v3372
        %v4101 = vunpack.c.h.b16 %v3372
        %v4102 = vunpack.c.l.b16 %v3373
        %v4103 = vunpack.c.h.b16 %v3373
        %v4104 = vunpack.c.l.b16 %v3374
        %v4105 = vunpack.c.h.b16 %v3374
        %v4106 = vunpack.c.l.b16 %v3375
        %v4107 = vunpack.c.h.b16 %v3375
        %v4108 = vunpack.c.l.b16 %v3376
        %v4109 = vunpack.c.h.b16 %v3376
        %v4110 = vunpack.c.l.b16 %v3377
        %v4111 = vunpack.c.h.b16 %v3377
        %v4112 = vunpack.c.l.b16 %v3378
        %v4113 = vunpack.c.h.b16 %v3378
        %v4114 = vunpack.c.l.b16 %v3379
        %v4115 = vunpack.c.h.b16 %v3379
        %v4116 = vunpack.c.l.b16 %v3380
        %v4117 = vunpack.c.h.b16 %v3380
        %v4118 = vunpack.c.l.b16 %v3381
        %v4119 = vunpack.c.h.b16 %v3381
        %v4120 = vunpack.c.l.b16 %v3382
        %v4121 = vunpack.c.h.b16 %v3382
        %v4122 = vunpack.c.l.b16 %v3383
        %v4123 = vunpack.c.h.b16 %v3383
        %v4124 = vunpack.c.l.b16 %v3384
        %v4125 = vunpack.c.h.b16 %v3384
        %v4126 = vunpack.c.l.b16 %v3385
        %v4127 = vunpack.c.h.b16 %v3385
        %v4128 = vunpack.c.l.b16 %v3386
        %v4129 = vunpack.c.h.b16 %v3386
        %v4130 = vunpack.c.l.b16 %v3387
        %v4131 = vunpack.c.h.b16 %v3387
        %v4132 = vunpack.c.l.b16 %v3388
        %v4133 = vunpack.c.h.b16 %v3388
        %v4134 = vunpack.c.l.b16 %v3389
        %v4135 = vunpack.c.h.b16 %v3389
        %v4136 = vunpack.c.l.b16 %v3390
        %v4137 = vunpack.c.h.b16 %v3390
        %v4138 = vunpack.c.l.b16 %v3391
        %v4139 = vunpack.c.h.b16 %v3391
        %v4140 = vunpack.c.l.b16 %v3392
        %v4141 = vunpack.c.h.b16 %v3392
        %v4142 = vunpack.c.l.b16 %v3393
        %v4143 = vunpack.c.h.b16 %v3393
        %v4144 = vunpack.c.l.b16 %v3394
        %v4145 = vunpack.c.h.b16 %v3394
        %v4146 = vunpack.c.l.b16 %v3395
        %v4147 = vunpack.c.h.b16 %v3395
        %v4148 = vunpack.c.l.b16 %v3396
        %v4149 = vunpack.c.h.b16 %v3396
        %v4150 = vunpack.c.l.b16 %v3397
        %v4151 = vunpack.c.h.b16 %v3397
        %v4152 = vunpack.c.l.b16 %v3398
        %v4153 = vunpack.c.h.b16 %v3398
        %v4154 = vunpack.c.l.b16 %v3399
        %v4155 = vunpack.c.h.b16 %v3399
        %v4156 = vunpack.c.l.b16 %v3400
        %v4157 = vunpack.c.h.b16 %v3400
        %v4158 = vunpack.c.l.b16 %v3401
        %v4159 = vunpack.c.h.b16 %v3401
        %v4160 = vunpack.c.l.b16 %v3402
        %v4161 = vunpack.c.h.b16 %v3402
        %v4162 = vunpack.c.l.b16 %v3403
        %v4163 = vunpack.c.h.b16 %v3403
        %v4164 = vunpack.c.l.b16 %v3404
        %v4165 = vunpack.c.h.b16 %v3404
        %v4166 = vunpack.c.l.b16 %v3405
        %v4167 = vunpack.c.h.b16 %v3405
        %v4168 = vunpack.c.l.b16 %v3406
        %v4169 = vunpack.c.h.b16 %v3406
        %v4170 = vunpack.c.l.b16 %v3407
        %v4171 = vunpack.c.h.b16 %v3407
        %v4172 = vunpack.c.l.b16 %v3408
        %v4173 = vunpack.c.h.b16 %v3408
        %v4174 = vunpack.c.l.b16 %v3409
        %v4175 = vunpack.c.h.b16 %v3409
        %v4176 = vunpack.c.l.b16 %v3410
        %v4177 = vunpack.c.h.b16 %v3410
        %v4178 = vunpack.c.l.b16 %v3411
        %v4179 = vunpack.c.h.b16 %v3411
        %v4180 = vunpack.c.l.b16 %v3412
        %v4181 = vunpack.c.h.b16 %v3412
        %v4182 = vunpack.c.l.b16 %v3413
        %v4183 = vunpack.c.h.b16 %v3413
        %v4184 = vunpack.c.l.b16 %v3414
        %v4185 = vunpack.c.h.b16 %v3414
        %v4186 = vunpack.c.l.b16 %v3415
        %v4187 = vunpack.c.h.b16 %v3415
        %v4188 = vunpack.c.l.b16 %v3416
        %v4189 = vunpack.c.h.b16 %v3416
        %v4190 = vunpack.c.l.b16 %v3417
        %v4191 = vunpack.c.h.b16 %v3417
        %v4192 = vunpack.c.l.b16 %v3418
        %v4193 = vunpack.c.h.b16 %v3418
        %v4194 = vunpack.c.l.b16 %v3419
        %v4195 = vunpack.c.h.b16 %v3419
        %v4196 = vunpack.c.l.b16 %v3420
        %v4197 = vunpack.c.h.b16 %v3420
        %v4198 = vunpack.c.l.b16 %v3421
        %v4199 = vunpack.c.h.b16 %v3421
        %v4200 = vunpack.c.l.b16 %v3422
        %v4201 = vunpack.c.h.b16 %v3422
        %v4202 = vunpack.c.l.b16 %v3423
        %v4203 = vunpack.c.h.b16 %v3423
        %v4204 = vunpack.c.l.b16 %v3424
        %v4205 = vunpack.c.h.b16 %v3424
        %v4206 = vunpack.c.l.b16 %v3425
        %v4207 = vunpack.c.h.b16 %v3425
        %v4208 = vunpack.c.l.b16 %v3426
        %v4209 = vunpack.c.h.b16 %v3426
        %v4210 = vunpack.c.l.b16 %v3427
        %v4211 = vunpack.c.h.b16 %v3427
        %v4212 = vunpack.c.l.b16 %v3428
        %v4213 = vunpack.c.h.b16 %v3428
        %v4214 = vunpack.c.l.b16 %v3429
        %v4215 = vunpack.c.h.b16 %v3429
        %v4216 = vunpack.c.l.b16 %v3430
        %v4217 = vunpack.c.h.b16 %v3430
        %v4218 = vunpack.c.l.b16 %v3431
        %v4219 = vunpack.c.h.b16 %v3431
        %v4220 = vunpack.c.l.b16 %v3432
        %v4221 = vunpack.c.h.b16 %v3432
        %v4222 = vunpack.c.l.b16 %v3433
        %v4223 = vunpack.c.h.b16 %v3433
        %v4224 = vunpack.c.l.b16 %v3434
        %v4225 = vunpack.c.h.b16 %v3434
        %v4226 = vunpack.c.l.b16 %v3435
        %v4227 = vunpack.c.h.b16 %v3435
        %v4228 = vunpack.c.l.b16 %v3436
        %v4229 = vunpack.c.h.b16 %v3436
        %v4230 = vunpack.c.l.b16 %v3437
        %v4231 = vunpack.c.h.b16 %v3437
        %v4232 = vunpack.c.l.b16 %v3438
        %v4233 = vunpack.c.h.b16 %v3438
        %v4234 = vunpack.c.l.b16 %v3439
        %v4235 = vunpack.c.h.b16 %v3439
        %v4236 = vunpack.c.l.b16 %v3440
        %v4237 = vunpack.c.h.b16 %v3440
        %v4238 = vunpack.c.l.b16 %v3441
        %v4239 = vunpack.c.h.b16 %v3441
        %v4240 = vunpack.c.l.b16 %v3442
        %v4241 = vunpack.c.h.b16 %v3442
        %v4242 = vunpack.c.l.b16 %v3443
        %v4243 = vunpack.c.h.b16 %v3443
        %v4244 = vunpack.c.l.b16 %v3444
        %v4245 = vunpack.c.h.b16 %v3444
        %v4246 = vunpack.c.l.b16 %v3445
        %v4247 = vunpack.c.h.b16 %v3445
        %v4248 = vunpack.c.l.b16 %v3446
        %v4249 = vunpack.c.h.b16 %v3446
        %v4250 = vunpack.c.l.b16 %v3447
        %v4251 = vunpack.c.h.b16 %v3447
        %v4252 = vunpack.c.l.b16 %v3448
        %v4253 = vunpack.c.h.b16 %v3448
        %v4254 = vunpack.c.l.b16 %v3449
        %v4255 = vunpack.c.h.b16 %v3449
        %v4256 = vunpack.c.l.b16 %v3450
        %v4257 = vunpack.c.h.b16 %v3450
        %v4258 = vunpack.c.l.b16 %v3451
        %v4259 = vunpack.c.h.b16 %v3451
        %v4260 = vunpack.c.l.b16 %v3452
        %v4261 = vunpack.c.h.b16 %v3452
        %v4262 = vunpack.c.l.b16 %v3453
        %v4263 = vunpack.c.h.b16 %v3453
        %v4264 = vunpack.c.l.b16 %v3454
        %v4265 = vunpack.c.h.b16 %v3454
        %v4266 = vunpack.c.l.b16 %v3455
        %v4267 = vunpack.c.h.b16 %v3455
        %v4268 = vunpack.c.l.b16 %v3456
        %v4269 = vunpack.c.h.b16 %v3456
        %v4270 = vunpack.c.l.b16 %v3457
        %v4271 = vunpack.c.h.b16 %v3457
        %v4272 = vunpack.c.l.b16 %v3458
        %v4273 = vunpack.c.h.b16 %v3458
        %v4274 = vunpack.c.l.b16 %v3459
        %v4275 = vunpack.c.h.b16 %v3459
        %v4276 = vunpack.c.l.b16 %v3460
        %v4277 = vunpack.c.h.b16 %v3460
        %v4278 = vunpack.c.l.b16 %v3461
        %v4279 = vunpack.c.h.b16 %v3461
        %v4280 = vunpack.c.l.b16 %v3462
        %v4281 = vunpack.c.h.b16 %v3462
        %v4282 = vunpack.c.l.b16 %v3463
        %v4283 = vunpack.c.h.b16 %v3463
        %v4284 = vunpack.c.l.b16 %v3464
        %v4285 = vunpack.c.h.b16 %v3464
        %v4286 = vunpack.c.l.b16 %v3465
        %v4287 = vunpack.c.h.b16 %v3465
        %v4288 = vunpack.c.l.b16 %v3466
        %v4289 = vunpack.c.h.b16 %v3466
        %v4290 = vunpack.c.l.b16 %v3467
        %v4291 = vunpack.c.h.b16 %v3467
        %v4292 = vunpack.c.l.b16 %v3468
        %v4293 = vunpack.c.h.b16 %v3468
        %v4294 = vunpack.c.l.b16 %v3469
        %v4295 = vunpack.c.h.b16 %v3469
        %v4296 = vunpack.c.l.b16 %v3470
        %v4297 = vunpack.c.h.b16 %v3470
        %v4298 = vunpack.c.l.b16 %v3471
        %v4299 = vunpack.c.h.b16 %v3471
        %v4300 = vunpack.c.l.b16 %v3472
        %v4301 = vunpack.c.h.b16 %v3472
        %v4302 = vunpack.c.l.b16 %v3473
        %v4303 = vunpack.c.h.b16 %v3473
        %v4304 = vunpack.c.l.b16 %v3474
        %v4305 = vunpack.c.h.b16 %v3474
        %v4306 = vunpack.c.l.b16 %v3475
        %v4307 = vunpack.c.h.b16 %v3475
        %v4308 = vunpack.c.l.b16 %v3476
        %v4309 = vunpack.c.h.b16 %v3476
        %v4310 = vunpack.c.l.b16 %v3477
        %v4311 = vunpack.c.h.b16 %v3477
        %v4312 = vunpack.c.l.b16 %v3478
        %v4313 = vunpack.c.h.b16 %v3478
        %v4314 = vunpack.c.l.b16 %v3479
        %v4315 = vunpack.c.h.b16 %v3479
        %v4316 = vunpack.c.l.b16 %v3480
        %v4317 = vunpack.c.h.b16 %v3480
        %v4318 = vunpack.c.l.b16 %v3481
        %v4319 = vunpack.c.h.b16 %v3481
        %v4320 = vunpack.c.l.b16 %v3482
        %v4321 = vunpack.c.h.b16 %v3482
        %v4322 = vunpack.c.l.b16 %v3483
        %v4323 = vunpack.c.h.b16 %v3483
        %v4324 = vunpack.c.l.b16 %v3484
        %v4325 = vunpack.c.h.b16 %v3484
        %v4326 = vunpack.c.l.b16 %v3485
        %v4327 = vunpack.c.h.b16 %v3485
        %v4328 = vunpack.c.l.b16 %v3486
        %v4329 = vunpack.c.h.b16 %v3486
        %v4330 = vunpack.c.l.b16 %v3487
        %v4331 = vunpack.c.h.b16 %v3487
        %v4332 = vunpack.c.l.b16 %v3488
        %v4333 = vunpack.c.h.b16 %v3488
        %v4334 = vunpack.c.l.b16 %v3489
        %v4335 = vunpack.c.h.b16 %v3489
        %v4336 = vunpack.c.l.b16 %v3490
        %v4337 = vunpack.c.h.b16 %v3490
        %v4338 = vunpack.c.l.b16 %v3491
        %v4339 = vunpack.c.h.b16 %v3491
        %v4340 = vunpack.c.l.b16 %v3492
        %v4341 = vunpack.c.h.b16 %v3492
        %v4342 = vunpack.c.l.b16 %v3493
        %v4343 = vunpack.c.h.b16 %v3493
        %v4344 = vunpack.c.l.b16 %v3494
        %v4345 = vunpack.c.h.b16 %v3494
        %v4346 = vunpack.c.l.b16 %v3495
        %v4347 = vunpack.c.h.b16 %v3495
        %v4348 = vunpack.c.l.b16 %v3496
        %v4349 = vunpack.c.h.b16 %v3496
        %v4350 = vunpack.c.l.b16 %v3497
        %v4351 = vunpack.c.h.b16 %v3497
        %v4352 = vunpack.c.l.b16 %v3498
        %v4353 = vunpack.c.h.b16 %v3498
        %v4354 = vunpack.c.l.b16 %v3499
        %v4355 = vunpack.c.h.b16 %v3499
        %v4356 = vunpack.c.l.b16 %v3500
        %v4357 = vunpack.c.h.b16 %v3500
        %v4358 = vunpack.c.l.b16 %v3501
        %v4359 = vunpack.c.h.b16 %v3501
        %v4360 = vunpack.c.l.b16 %v3502
        %v4361 = vunpack.c.h.b16 %v3502
        %v4362 = vunpack.c.l.b16 %v3503
        %v4363 = vunpack.c.h.b16 %v3503
        %v4364 = vunpack.c.l.b16 %v3504
        %v4365 = vunpack.c.h.b16 %v3504
        %v4366 = vunpack.c.l.b16 %v3505
        %v4367 = vunpack.c.h.b16 %v3505
        %v4368 = vunpack.c.l.b16 %v3506
        %v4369 = vunpack.c.h.b16 %v3506
        %v4370 = vunpack.c.l.b16 %v3507
        %v4371 = vunpack.c.h.b16 %v3507
        %v4372 = vunpack.c.l.b16 %v3508
        %v4373 = vunpack.c.h.b16 %v3508
        %v4374 = vunpack.c.l.b16 %v3509
        %v4375 = vunpack.c.h.b16 %v3509
        %v4376 = vunpack.c.l.b16 %v3510
        %v4377 = vunpack.c.h.b16 %v3510
        %v4378 = vunpack.c.l.b16 %v3511
        %v4379 = vunpack.c.h.b16 %v3511
        %v4380 = vunpack.c.l.b16 %v3512
        %v4381 = vunpack.c.h.b16 %v3512
        %v4382 = vunpack.c.l.b16 %v3513
        %v4383 = vunpack.c.h.b16 %v3513
        %v4384 = vunpack.c.l.b16 %v3514
        %v4385 = vunpack.c.h.b16 %v3514
        %v4386 = vunpack.c.l.b16 %v3515
        %v4387 = vunpack.c.h.b16 %v3515
        %v4388 = vunpack.c.l.b16 %v3516
        %v4389 = vunpack.c.h.b16 %v3516
        %v4390 = vunpack.c.l.b16 %v3517
        %v4391 = vunpack.c.h.b16 %v3517
        %v4392 = vunpack.c.l.b16 %v3518
        %v4393 = vunpack.c.h.b16 %v3518
        %v4394 = vunpack.c.l.b16 %v3519
        %v4395 = vunpack.c.h.b16 %v3519
        %v4396 = vunpack.c.l.b16 %v3520
        %v4397 = vunpack.c.h.b16 %v3520
        %v4398 = vunpack.c.l.b16 %v3521
        %v4399 = vunpack.c.h.b16 %v3521
        %v4400 = vunpack.c.l.b16 %v3522
        %v4401 = vunpack.c.h.b16 %v3522
        %v4402 = vunpack.c.l.b16 %v3523
        %v4403 = vunpack.c.h.b16 %v3523
        %v4404 = vunpack.c.l.b16 %v3524
        %v4405 = vunpack.c.h.b16 %v3524
        %v4406 = vunpack.c.l.b16 %v3525
        %v4407 = vunpack.c.h.b16 %v3525
        %v4408 = vunpack.c.l.b16 %v3526
        %v4409 = vunpack.c.h.b16 %v3526
        %v4410 = vunpack.c.l.b16 %v3527
        %v4411 = vunpack.c.h.b16 %v3527
        %v4412 = vunpack.c.l.b16 %v3528
        %v4413 = vunpack.c.h.b16 %v3528
        %v4414 = vunpack.c.l.b16 %v3529
        %v4415 = vunpack.c.h.b16 %v3529
        %v4416 = vunpack.c.l.b16 %v3530
        %v4417 = vunpack.c.h.b16 %v3530
        %v4418 = vunpack.c.l.b16 %v3531
        %v4419 = vunpack.c.h.b16 %v3531
        %v4420 = vunpack.c.l.b16 %v3532
        %v4421 = vunpack.c.h.b16 %v3532
        %v4422 = vunpack.c.l.b16 %v3533
        %v4423 = vunpack.c.h.b16 %v3533
        %v4424 = vunpack.c.l.b16 %v3534
        %v4425 = vunpack.c.h.b16 %v3534
        %v4426 = vunpack.c.l.b16 %v3535
        %v4427 = vunpack.c.h.b16 %v3535
        %v4428 = vpack.c.b16 %v3864, %v3852
        %v4429 = vpack.c.b16 %v3865, %v3853
        %v4430 = vpack.c.b16 %v3866, %v3854
        %v4431 = vpack.c.b16 %v3867, %v3855
        %v4432 = vpack.c.b16 %v3868, %v3856
        %v4433 = vpack.c.b16 %v3869, %v3857
        %v4434 = vpack.c.b16 %v3870, %v3858
        %v4435 = vpack.c.b16 %v3871, %v3859
        %v4436 = vpack.c.b16 %v3872, %v3860
        %v4437 = vpack.c.b16 %v3873, %v3861
        %v4438 = vpack.c.b16 %v3874, %v3862
        %v4439 = vpack.c.b16 %v3875, %v3863
        %v4440 = vpack.c.b16 %v3888, %v3876
        %v4441 = vpack.c.b16 %v3889, %v3877
        %v4442 = vpack.c.b16 %v3890, %v3878
        %v4443 = vpack.c.b16 %v3891, %v3879
        %v4444 = vpack.c.b16 %v3892, %v3880
        %v4445 = vpack.c.b16 %v3893, %v3881
        %v4446 = vpack.c.b16 %v3894, %v3882
        %v4447 = vpack.c.b16 %v3895, %v3883
        %v4448 = vpack.c.b16 %v3896, %v3884
        %v4449 = vpack.c.b16 %v3897, %v3885
        %v4450 = vpack.c.b16 %v3898, %v3886
        %v4451 = vpack.c.b16 %v3899, %v3887
        %v4452 = vpack.c.b16 %v3912, %v3900
        %v4453 = vpack.c.b16 %v3913, %v3901
        %v4454 = vpack.c.b16 %v3914, %v3902
        %v4455 = vpack.c.b16 %v3915, %v3903
        %v4456 = vpack.c.b16 %v3916, %v3904
        %v4457 = vpack.c.b16 %v3917, %v3905
        %v4458 = vpack.c.b16 %v3918, %v3906
        %v4459 = vpack.c.b16 %v3919, %v3907
        %v4460 = vpack.c.b16 %v3920, %v3908
        %v4461 = vpack.c.b16 %v3921, %v3909
        %v4462 = vpack.c.b16 %v3922, %v3910
        %v4463 = vpack.c.b16 %v3923, %v3911
        %v4464 = vpack.c.b16 %v3936, %v3924
        %v4465 = vpack.c.b16 %v3937, %v3925
        %v4466 = vpack.c.b16 %v3938, %v3926
        %v4467 = vpack.c.b16 %v3939, %v3927
        %v4468 = vpack.c.b16 %v3940, %v3928
        %v4469 = vpack.c.b16 %v3941, %v3929
        %v4470 = vpack.c.b16 %v3942, %v3930
        %v4471 = vpack.c.b16 %v3943, %v3931
        %v4472 = vpack.c.b16 %v3944, %v3932
        %v4473 = vpack.c.b16 %v3945, %v3933
        %v4474 = vpack.c.b16 %v3946, %v3934
        %v4475 = vpack.c.b16 %v3947, %v3935
        %v4476 = vpack.c.b16 %v3960, %v3948
        %v4477 = vpack.c.b16 %v3961, %v3949
        %v4478 = vpack.c.b16 %v3962, %v3950
        %v4479 = vpack.c.b16 %v3963, %v3951
        %v4480 = vpack.c.b16 %v3964, %v3952
        %v4481 = vpack.c.b16 %v3965, %v3953
        %v4482 = vpack.c.b16 %v3966, %v3954
        %v4483 = vpack.c.b16 %v3967, %v3955
        %v4484 = vpack.c.b16 %v3968, %v3956
        %v4485 = vpack.c.b16 %v3969, %v3957
        %v4486 = vpack.c.b16 %v3970, %v3958
        %v4487 = vpack.c.b16 %v3971, %v3959
        %v4488 = vpack.c.b16 %v3984, %v3972
        %v4489 = vpack.c.b16 %v3985, %v3973
        %v4490 = vpack.c.b16 %v3986, %v3974
        %v4491 = vpack.c.b16 %v3987, %v3975
        %v4492 = vpack.c.b16 %v3988, %v3976
        %v4493 = vpack.c.b16 %v3989, %v3977
        %v4494 = vpack.c.b16 %v3990, %v3978
        %v4495 = vpack.c.b16 %v3991, %v3979
        %v4496 = vpack.c.b16 %v3992, %v3980
        %v4497 = vpack.c.b16 %v3993, %v3981
        %v4498 = vpack.c.b16 %v3994, %v3982
        %v4499 = vpack.c.b16 %v3995, %v3983
        %v4500 = vpack.c.b16 %v4008, %v3996
        %v4501 = vpack.c.b16 %v4009, %v3997
        %v4502 = vpack.c.b16 %v4010, %v3998
        %v4503 = vpack.c.b16 %v4011, %v3999
        %v4504 = vpack.c.b16 %v4012, %v4000
        %v4505 = vpack.c.b16 %v4013, %v4001
        %v4506 = vpack.c.b16 %v4014, %v4002
        %v4507 = vpack.c.b16 %v4015, %v4003
        %v4508 = vpack.c.b16 %v4016, %v4004
        %v4509 = vpack.c.b16 %v4017, %v4005
        %v4510 = vpack.c.b16 %v4018, %v4006
        %v4511 = vpack.c.b16 %v4019, %v4007
        %v4512 = vpack.c.b16 %v4032, %v4020
        %v4513 = vpack.c.b16 %v4033, %v4021
        %v4514 = vpack.c.b16 %v4034, %v4022
        %v4515 = vpack.c.b16 %v4035, %v4023
        %v4516 = vpack.c.b16 %v4036, %v4024
        %v4517 = vpack.c.b16 %v4037, %v4025
        %v4518 = vpack.c.b16 %v4038, %v4026
        %v4519 = vpack.c.b16 %v4039, %v4027
        %v4520 = vpack.c.b16 %v4040, %v4028
        %v4521 = vpack.c.b16 %v4041, %v4029
        %v4522 = vpack.c.b16 %v4042, %v4030
        %v4523 = vpack.c.b16 %v4043, %v4031
        %v4524 = vpack.c.b16 %v4056, %v4044
        %v4525 = vpack.c.b16 %v4057, %v4045
        %v4526 = vpack.c.b16 %v4058, %v4046
        %v4527 = vpack.c.b16 %v4059, %v4047
        %v4528 = vpack.c.b16 %v4060, %v4048
        %v4529 = vpack.c.b16 %v4061, %v4049
        %v4530 = vpack.c.b16 %v4062, %v4050
        %v4531 = vpack.c.b16 %v4063, %v4051
        %v4532 = vpack.c.b16 %v4064, %v4052
        %v4533 = vpack.c.b16 %v4065, %v4053
        %v4534 = vpack.c.b16 %v4066, %v4054
        %v4535 = vpack.c.b16 %v4067, %v4055
        %v4536 = vpack.c.b16 %v4080, %v4068
        %v4537 = vpack.c.b16 %v4081, %v4069
        %v4538 = vpack.c.b16 %v4082, %v4070
        %v4539 = vpack.c.b16 %v4083, %v4071
        %v4540 = vpack.c.b16 %v4084, %v4072
        %v4541 = vpack.c.b16 %v4085, %v4073
        %v4542 = vpack.c.b16 %v4086, %v4074
        %v4543 = vpack.c.b16 %v4087, %v4075
        %v4544 = vpack.c.b16 %v4088, %v4076
        %v4545 = vpack.c.b16 %v4089, %v4077
        %v4546 = vpack.c.b16 %v4090, %v4078
        %v4547 = vpack.c.b16 %v4091, %v4079
        %v4548 = vpack.c.b16 %v4104, %v4092
        %v4549 = vpack.c.b16 %v4105, %v4093
        %v4550 = vpack.c.b16 %v4106, %v4094
        %v4551 = vpack.c.b16 %v4107, %v4095
        %v4552 = vpack.c.b16 %v4108, %v4096
        %v4553 = vpack.c.b16 %v4109, %v4097
        %v4554 = vpack.c.b16 %v4110, %v4098
        %v4555 = vpack.c.b16 %v4111, %v4099
        %v4556 = vpack.c.b16 %v4112, %v4100
        %v4557 = vpack.c.b16 %v4113, %v4101
        %v4558 = vpack.c.b16 %v4114, %v4102
        %v4559 = vpack.c.b16 %v4115, %v4103
        %v4560 = vpack.c.b16 %v4128, %v4116
        %v4561 = vpack.c.b16 %v4129, %v4117
        %v4562 = vpack.c.b16 %v4130, %v4118
        %v4563 = vpack.c.b16 %v4131, %v4119
        %v4564 = vpack.c.b16 %v4132, %v4120
        %v4565 = vpack.c.b16 %v4133, %v4121
        %v4566 = vpack.c.b16 %v4134, %v4122
        %v4567 = vpack.c.b16 %v4135, %v4123
        %v4568 = vpack.c.b16 %v4136, %v4124
        %v4569 = vpack.c.b16 %v4137, %v4125
        %v4570 = vpack.c.b16 %v4138, %v4126
        %v4571 = vpack.c.b16 %v4139, %v4127
        %v4572 = vpack.c.b16 %v4152, %v4140
        %v4573 = vpack.c.b16 %v4153, %v4141
        %v4574 = vpack.c.b16 %v4154, %v4142
        %v4575 = vpack.c.b16 %v4155, %v4143
        %v4576 = vpack.c.b16 %v4156, %v4144
        %v4577 = vpack.c.b16 %v4157, %v4145
        %v4578 = vpack.c.b16 %v4158, %v4146
        %v4579 = vpack.c.b16 %v4159, %v4147
        %v4580 = vpack.c.b16 %v4160, %v4148
        %v4581 = vpack.c.b16 %v4161, %v4149
        %v4582 = vpack.c.b16 %v4162, %v4150
        %v4583 = vpack.c.b16 %v4163, %v4151
        %v4584 = vpack.c.b16 %v4176, %v4164
        %v4585 = vpack.c.b16 %v4177, %v4165
        %v4586 = vpack.c.b16 %v4178, %v4166
        %v4587 = vpack.c.b16 %v4179, %v4167
        %v4588 = vpack.c.b16 %v4180, %v4168
        %v4589 = vpack.c.b16 %v4181, %v4169
        %v4590 = vpack.c.b16 %v4182, %v4170
        %v4591 = vpack.c.b16 %v4183, %v4171
        %v4592 = vpack.c.b16 %v4184, %v4172
        %v4593 = vpack.c.b16 %v4185, %v4173
        %v4594 = vpack.c.b16 %v4186, %v4174
        %v4595 = vpack.c.b16 %v4187, %v4175
        %v4596 = vpack.c.b16 %v4200, %v4188
        %v4597 = vpack.c.b16 %v4201, %v4189
        %v4598 = vpack.c.b16 %v4202, %v4190
        %v4599 = vpack.c.b16 %v4203, %v4191
        %v4600 = vpack.c.b16 %v4204, %v4192
        %v4601 = vpack.c.b16 %v4205, %v4193
        %v4602 = vpack.c.b16 %v4206, %v4194
        %v4603 = vpack.c.b16 %v4207, %v4195
        %v4604 = vpack.c.b16 %v4208, %v4196
        %v4605 = vpack.c.b16 %v4209, %v4197
        %v4606 = vpack.c.b16 %v4210, %v4198
        %v4607 = vpack.c.b16 %v4211, %v4199
        %v4608 = vpack.c.b16 %v4224, %v4212
        %v4609 = vpack.c.b16 %v4225, %v4213
        %v4610 = vpack.c.b16 %v4226, %v4214
        %v4611 = vpack.c.b16 %v4227, %v4215
        %v4612 = vpack.c.b16 %v4228, %v4216
        %v4613 = vpack.c.b16 %v4229, %v4217
        %v4614 = vpack.c.b16 %v4230, %v4218
        %v4615 = vpack.c.b16 %v4231, %v4219
        %v4616 = vpack.c.b16 %v4232, %v4220
        %v4617 = vpack.c.b16 %v4233, %v4221
        %v4618 = vpack.c.b16 %v4234, %v4222
        %v4619 = vpack.c.b16 %v4235, %v4223
        %v4620 = vpack.c.b16 %v4248, %v4236
        %v4621 = vpack.c.b16 %v4249, %v4237
        %v4622 = vpack.c.b16 %v4250, %v4238
        %v4623 = vpack.c.b16 %v4251, %v4239
        %v4624 = vpack.c.b16 %v4252, %v4240
        %v4625 = vpack.c.b16 %v4253, %v4241
        %v4626 = vpack.c.b16 %v4254, %v4242
        %v4627 = vpack.c.b16 %v4255, %v4243
        %v4628 = vpack.c.b16 %v4256, %v4244
        %v4629 = vpack.c.b16 %v4257, %v4245
        %v4630 = vpack.c.b16 %v4258, %v4246
        %v4631 = vpack.c.b16 %v4259, %v4247
        %v4632 = vpack.c.b16 %v4272, %v4260
        %v4633 = vpack.c.b16 %v4273, %v4261
        %v4634 = vpack.c.b16 %v4274, %v4262
        %v4635 = vpack.c.b16 %v4275, %v4263
        %v4636 = vpack.c.b16 %v4276, %v4264
        %v4637 = vpack.c.b16 %v4277, %v4265
        %v4638 = vpack.c.b16 %v4278, %v4266
        %v4639 = vpack.c.b16 %v4279, %v4267
        %v4640 = vpack.c.b16 %v4280, %v4268
        %v4641 = vpack.c.b16 %v4281, %v4269
        %v4642 = vpack.c.b16 %v4282, %v4270
        %v4643 = vpack.c.b16 %v4283, %v4271
        %v4644 = vpack.c.b16 %v4296, %v4284
        %v4645 = vpack.c.b16 %v4297, %v4285
        %v4646 = vpack.c.b16 %v4298, %v4286
        %v4647 = vpack.c.b16 %v4299, %v4287
        %v4648 = vpack.c.b16 %v4300, %v4288
        %v4649 = vpack.c.b16 %v4301, %v4289
        %v4650 = vpack.c.b16 %v4302, %v4290
        %v4651 = vpack.c.b16 %v4303, %v4291
        %v4652 = vpack.c.b16 %v4304, %v4292
        %v4653 = vpack.c.b16 %v4305, %v4293
        %v4654 = vpack.c.b16 %v4306, %v4294
        %v4655 = vpack.c.b16 %v4307, %v4295
        %v4656 = vpack.c.b16 %v4320, %v4308
        %v4657 = vpack.c.b16 %v4321, %v4309
        %v4658 = vpack.c.b16 %v4322, %v4310
        %v4659 = vpack.c.b16 %v4323, %v4311
        %v4660 = vpack.c.b16 %v4324, %v4312
        %v4661 = vpack.c.b16 %v4325, %v4313
        %v4662 = vpack.c.b16 %v4326, %v4314
        %v4663 = vpack.c.b16 %v4327, %v4315
        %v4664 = vpack.c.b16 %v4328, %v4316
        %v4665 = vpack.c.b16 %v4329, %v4317
        %v4666 = vpack.c.b16 %v4330, %v4318
        %v4667 = vpack.c.b16 %v4331, %v4319
        %v4668 = vpack.c.b16 %v4344, %v4332
        %v4669 = vpack.c.b16 %v4345, %v4333
        %v4670 = vpack.c.b16 %v4346, %v4334
        %v4671 = vpack.c.b16 %v4347, %v4335
        %v4672 = vpack.c.b16 %v4348, %v4336
        %v4673 = vpack.c.b16 %v4349, %v4337
        %v4674 = vpack.c.b16 %v4350, %v4338
        %v4675 = vpack.c.b16 %v4351, %v4339
        %v4676 = vpack.c.b16 %v4352, %v4340
        %v4677 = vpack.c.b16 %v4353, %v4341
        %v4678 = vpack.c.b16 %v4354, %v4342
        %v4679 = vpack.c.b16 %v4355, %v4343
        %v4680 = vpack.c.b16 %v4368, %v4356
        %v4681 = vpack.c.b16 %v4369, %v4357
        %v4682 = vpack.c.b16 %v4370, %v4358
        %v4683 = vpack.c.b16 %v4371, %v4359
        %v4684 = vpack.c.b16 %v4372, %v4360
        %v4685 = vpack.c.b16 %v4373, %v4361
        %v4686 = vpack.c.b16 %v4374, %v4362
        %v4687 = vpack.c.b16 %v4375, %v4363
        %v4688 = vpack.c.b16 %v4376, %v4364
        %v4689 = vpack.c.b16 %v4377, %v4365
        %v4690 = vpack.c.b16 %v4378, %v4366
        %v4691 = vpack.c.b16 %v4379, %v4367
        %v4692 = vpack.c.b16 %v4392, %v4380
        %v4693 = vpack.c.b16 %v4393, %v4381
        %v4694 = vpack.c.b16 %v4394, %v4382
        %v4695 = vpack.c.b16 %v4395, %v4383
        %v4696 = vpack.c.b16 %v4396, %v4384
        %v4697 = vpack.c.b16 %v4397, %v4385
        %v4698 = vpack.c.b16 %v4398, %v4386
        %v4699 = vpack.c.b16 %v4399, %v4387
        %v4700 = vpack.c.b16 %v4400, %v4388
        %v4701 = vpack.c.b16 %v4401, %v4389
        %v4702 = vpack.c.b16 %v4402, %v4390
        %v4703 = vpack.c.b16 %v4403, %v4391
        %v4704 = vpack.c.b16 %v4416, %v4404
        %v4705 = vpack.c.b16 %v4417, %v4405
        %v4706 = vpack.c.b16 %v4418, %v4406
        %v4707 = vpack.c.b16 %v4419, %v4407
        %v4708 = vpack.c.b16 %v4420, %v4408
        %v4709 = vpack.c.b16 %v4421, %v4409
        %v4710 = vpack.c.b16 %v4422, %v4410
        %v4711 = vpack.c.b16 %v4423, %v4411
        %v4712 = vpack.c.b16 %v4424, %v4412
        %v4713 = vpack.c.b16 %v4425, %v4413
        %v4714 = vpack.c.b16 %v4426, %v4414
        %v4715 = vpack.c.b16 %v4427, %v4415
        %5004 = vmatpush.bf16.msra.mxu0 %v4512
        %5005 = vmatpush.bf16.msra.mxu0 %v4500
        %5006 = vmatpush.bf16.msra.mxu0 %v4488
        %5007 = vmatpush.bf16.msra.mxu0 %v4476
        %5008 = vmatpush.bf16.msra.mxu0 %v4464
        %5009 = vmatpush.bf16.msra.mxu0 %v4452
        %5010 = vmatpush.bf16.msra.mxu0 %v4440
        %5011 = vmatpush.bf16.msra.mxu0 %v4428
        %5012 = vmatmul.bf16.gmra.mxu0 %v3245
        %v5013 = vpop.f32.mrf.mxu0
        %v5014 = vadd.f32 %v3540, %v5013
        %v5015 = vpop.f32.mrf.mxu0
        %5016 = vdwg.mxu0
        %5017 = vmatpush.bf16.msra.mxu0 %v4608
        %5018 = vmatpush.bf16.msra.mxu0 %v4596
        %5019 = vmatpush.bf16.msra.mxu0 %v4584
        %5020 = vmatpush.bf16.msra.mxu0 %v4572
        %5021 = vmatpush.bf16.msra.mxu0 %v4560
        %5022 = vmatpush.bf16.msra.mxu0 %v4548
        %5023 = vmatpush.bf16.msra.mxu0 %v4536
        %5024 = vmatpush.bf16.msra.mxu0 %v4524
        %5025 = vmatmul.bf16.gmra.mxu0 %v3246
        %v5026 = vpop.f32.mrf.mxu0
        %v5027 = vadd.f32 %v5014, %v5026
        %v5028 = vpop.f32.mrf.mxu0
        %5029 = vdwg.mxu0
        %5030 = vmatpush.bf16.msra.mxu0 %v4704
        %5031 = vmatpush.bf16.msra.mxu0 %v4692
        %5032 = vmatpush.bf16.msra.mxu0 %v4680
        %5033 = vmatpush.bf16.msra.mxu0 %v4668
        %5034 = vmatpush.bf16.msra.mxu0 %v4656
        %5035 = vmatpush.bf16.msra.mxu0 %v4644
        %5036 = vmatpush.bf16.msra.mxu0 %v4632
        %5037 = vmatpush.bf16.msra.mxu0 %v4620
        %5038 = vmatmul.bf16.gmra.mxu0 %v3247
        %v5039 = vpop.f32.mrf.mxu0
        %v5040 = vadd.f32 %v5027, %v5039
        %v5041 = vpop.f32.mrf.mxu0
        %5042 = vdwg.mxu0
        %5043 = vmatpush.bf16.msra.mxu0 %v4513
        %5044 = vmatpush.bf16.msra.mxu0 %v4501
        %5045 = vmatpush.bf16.msra.mxu0 %v4489
        %5046 = vmatpush.bf16.msra.mxu0 %v4477
        %5047 = vmatpush.bf16.msra.mxu0 %v4465
        %5048 = vmatpush.bf16.msra.mxu0 %v4453
        %5049 = vmatpush.bf16.msra.mxu0 %v4441
        %5050 = vmatpush.bf16.msra.mxu0 %v4429
        %5051 = vmatmul.bf16.gmra.mxu0 %v3245
        %v5052 = vpop.f32.mrf.mxu0
        %v5053 = vadd.f32 %v3541, %v5052
        %v5054 = vpop.f32.mrf.mxu0
        %5055 = vdwg.mxu0
        %5056 = vmatpush.bf16.msra.mxu0 %v4609
        %5057 = vmatpush.bf16.msra.mxu0 %v4597
        %5058 = vmatpush.bf16.msra.mxu0 %v4585
        %5059 = vmatpush.bf16.msra.mxu0 %v4573
        %5060 = vmatpush.bf16.msra.mxu0 %v4561
        %5061 = vmatpush.bf16.msra.mxu0 %v4549
        %5062 = vmatpush.bf16.msra.mxu0 %v4537
        %5063 = vmatpush.bf16.msra.mxu0 %v4525
        %5064 = vmatmul.bf16.gmra.mxu0 %v3246
        %v5065 = vpop.f32.mrf.mxu0
        %v5066 = vadd.f32 %v5053, %v5065
        %v5067 = vpop.f32.mrf.mxu0
        %5068 = vdwg.mxu0
        %5069 = vmatpush.bf16.msra.mxu0 %v4705
        %5070 = vmatpush.bf16.msra.mxu0 %v4693
        %5071 = vmatpush.bf16.msra.mxu0 %v4681
        %5072 = vmatpush.bf16.msra.mxu0 %v4669
        %5073 = vmatpush.bf16.msra.mxu0 %v4657
        %5074 = vmatpush.bf16.msra.mxu0 %v4645
        %5075 = vmatpush.bf16.msra.mxu0 %v4633
        %5076 = vmatpush.bf16.msra.mxu0 %v4621
        %5077 = vmatmul.bf16.gmra.mxu0 %v3247
        %v5078 = vpop.f32.mrf.mxu0
        %v5079 = vadd.f32 %v5066, %v5078
        %v5080 = vpop.f32.mrf.mxu0
        %5081 = vdwg.mxu0
        %5082 = vmatpush.bf16.msra.mxu0 %v4514
        %5083 = vmatpush.bf16.msra.mxu0 %v4502
        %5084 = vmatpush.bf16.msra.mxu0 %v4490
        %5085 = vmatpush.bf16.msra.mxu0 %v4478
        %5086 = vmatpush.bf16.msra.mxu0 %v4466
        %5087 = vmatpush.bf16.msra.mxu0 %v4454
        %5088 = vmatpush.bf16.msra.mxu0 %v4442
        %5089 = vmatpush.bf16.msra.mxu0 %v4430
        %5090 = vmatmul.bf16.gmra.mxu0 %v3245
        %v5091 = vpop.f32.mrf.mxu0
        %v5092 = vadd.f32 %v3542, %v5091
        %v5093 = vpop.f32.mrf.mxu0
        %5094 = vdwg.mxu0
        %5095 = vmatpush.bf16.msra.mxu0 %v4610
        %5096 = vmatpush.bf16.msra.mxu0 %v4598
        %5097 = vmatpush.bf16.msra.mxu0 %v4586
        %5098 = vmatpush.bf16.msra.mxu0 %v4574
        %5099 = vmatpush.bf16.msra.mxu0 %v4562
        %5100 = vmatpush.bf16.msra.mxu0 %v4550
        %5101 = vmatpush.bf16.msra.mxu0 %v4538
        %5102 = vmatpush.bf16.msra.mxu0 %v4526
        %5103 = vmatmul.bf16.gmra.mxu0 %v3246
        %v5104 = vpop.f32.mrf.mxu0
        %v5105 = vadd.f32 %v5092, %v5104
        %v5106 = vpop.f32.mrf.mxu0
        %5107 = vdwg.mxu0
        %5108 = vmatpush.bf16.msra.mxu0 %v4706
        %5109 = vmatpush.bf16.msra.mxu0 %v4694
        %5110 = vmatpush.bf16.msra.mxu0 %v4682
        %5111 = vmatpush.bf16.msra.mxu0 %v4670
        %5112 = vmatpush.bf16.msra.mxu0 %v4658
        %5113 = vmatpush.bf16.msra.mxu0 %v4646
        %5114 = vmatpush.bf16.msra.mxu0 %v4634
        %5115 = vmatpush.bf16.msra.mxu0 %v4622
        %5116 = vmatmul.bf16.gmra.mxu0 %v3247
        %v5117 = vpop.f32.mrf.mxu0
        %v5118 = vadd.f32 %v5105, %v5117
        %v5119 = vpop.f32.mrf.mxu0
        %5120 = vdwg.mxu0
        %5121 = vmatpush.bf16.msra.mxu0 %v4515
        %5122 = vmatpush.bf16.msra.mxu0 %v4503
        %5123 = vmatpush.bf16.msra.mxu0 %v4491
        %5124 = vmatpush.bf16.msra.mxu0 %v4479
        %5125 = vmatpush.bf16.msra.mxu0 %v4467
        %5126 = vmatpush.bf16.msra.mxu0 %v4455
        %5127 = vmatpush.bf16.msra.mxu0 %v4443
        %5128 = vmatpush.bf16.msra.mxu0 %v4431
        %5129 = vmatmul.bf16.gmra.mxu0 %v3245
        %v5130 = vpop.f32.mrf.mxu0
        %v5131 = vadd.f32 %v3543, %v5130
        %v5132 = vpop.f32.mrf.mxu0
        %5133 = vdwg.mxu0
        %5134 = vmatpush.bf16.msra.mxu0 %v4611
        %5135 = vmatpush.bf16.msra.mxu0 %v4599
        %5136 = vmatpush.bf16.msra.mxu0 %v4587
        %5137 = vmatpush.bf16.msra.mxu0 %v4575
        %5138 = vmatpush.bf16.msra.mxu0 %v4563
        %5139 = vmatpush.bf16.msra.mxu0 %v4551
        %5140 = vmatpush.bf16.msra.mxu0 %v4539
        %5141 = vmatpush.bf16.msra.mxu0 %v4527
        %5142 = vmatmul.bf16.gmra.mxu0 %v3246
        %v5143 = vpop.f32.mrf.mxu0
        %v5144 = vadd.f32 %v5131, %v5143
        %v5145 = vpop.f32.mrf.mxu0
        %5146 = vdwg.mxu0
        %5147 = vmatpush.bf16.msra.mxu0 %v4707
        %5148 = vmatpush.bf16.msra.mxu0 %v4695
        %5149 = vmatpush.bf16.msra.mxu0 %v4683
        %5150 = vmatpush.bf16.msra.mxu0 %v4671
        %5151 = vmatpush.bf16.msra.mxu0 %v4659
        %5152 = vmatpush.bf16.msra.mxu0 %v4647
        %5153 = vmatpush.bf16.msra.mxu0 %v4635
        %5154 = vmatpush.bf16.msra.mxu0 %v4623
        %5155 = vmatmul.bf16.gmra.mxu0 %v3247
        %v5156 = vpop.f32.mrf.mxu0
        %v5157 = vadd.f32 %v5144, %v5156
        %v5158 = vpop.f32.mrf.mxu0
        %5159 = vdwg.mxu0
        %5160 = vmatpush.bf16.msra.mxu0 %v4516
        %5161 = vmatpush.bf16.msra.mxu0 %v4504
        %5162 = vmatpush.bf16.msra.mxu0 %v4492
        %5163 = vmatpush.bf16.msra.mxu0 %v4480
        %5164 = vmatpush.bf16.msra.mxu0 %v4468
        %5165 = vmatpush.bf16.msra.mxu0 %v4456
        %5166 = vmatpush.bf16.msra.mxu0 %v4444
        %5167 = vmatpush.bf16.msra.mxu0 %v4432
        %5168 = vmatmul.bf16.gmra.mxu0 %v3245
        %v5169 = vpop.f32.mrf.mxu0
        %v5170 = vadd.f32 %v3544, %v5169
        %v5171 = vpop.f32.mrf.mxu0
        %5172 = vdwg.mxu0
        %5173 = vmatpush.bf16.msra.mxu0 %v4612
        %5174 = vmatpush.bf16.msra.mxu0 %v4600
        %5175 = vmatpush.bf16.msra.mxu0 %v4588
        %5176 = vmatpush.bf16.msra.mxu0 %v4576
        %5177 = vmatpush.bf16.msra.mxu0 %v4564
        %5178 = vmatpush.bf16.msra.mxu0 %v4552
        %5179 = vmatpush.bf16.msra.mxu0 %v4540
        %5180 = vmatpush.bf16.msra.mxu0 %v4528
        %5181 = vmatmul.bf16.gmra.mxu0 %v3246
        %v5182 = vpop.f32.mrf.mxu0
        %v5183 = vadd.f32 %v5170, %v5182
        %v5184 = vpop.f32.mrf.mxu0
        %5185 = vdwg.mxu0
        %5186 = vmatpush.bf16.msra.mxu0 %v4708
        %5187 = vmatpush.bf16.msra.mxu0 %v4696
        %5188 = vmatpush.bf16.msra.mxu0 %v4684
        %5189 = vmatpush.bf16.msra.mxu0 %v4672
        %5190 = vmatpush.bf16.msra.mxu0 %v4660
        %5191 = vmatpush.bf16.msra.mxu0 %v4648
        %5192 = vmatpush.bf16.msra.mxu0 %v4636
        %5193 = vmatpush.bf16.msra.mxu0 %v4624
        %5194 = vmatmul.bf16.gmra.mxu0 %v3247
        %v5195 = vpop.f32.mrf.mxu0
        %v5196 = vadd.f32 %v5183, %v5195
        %v5197 = vpop.f32.mrf.mxu0
        %5198 = vdwg.mxu0
        %5199 = vmatpush.bf16.msra.mxu0 %v4517
        %5200 = vmatpush.bf16.msra.mxu0 %v4505
        %5201 = vmatpush.bf16.msra.mxu0 %v4493
        %5202 = vmatpush.bf16.msra.mxu0 %v4481
        %5203 = vmatpush.bf16.msra.mxu0 %v4469
        %5204 = vmatpush.bf16.msra.mxu0 %v4457
        %5205 = vmatpush.bf16.msra.mxu0 %v4445
        %5206 = vmatpush.bf16.msra.mxu0 %v4433
        %5207 = vmatmul.bf16.gmra.mxu0 %v3245
        %v5208 = vpop.f32.mrf.mxu0
        %v5209 = vadd.f32 %v3545, %v5208
        %v5210 = vpop.f32.mrf.mxu0
        %5211 = vdwg.mxu0
        %5212 = vmatpush.bf16.msra.mxu0 %v4613
        %5213 = vmatpush.bf16.msra.mxu0 %v4601
        %5214 = vmatpush.bf16.msra.mxu0 %v4589
        %5215 = vmatpush.bf16.msra.mxu0 %v4577
        %5216 = vmatpush.bf16.msra.mxu0 %v4565
        %5217 = vmatpush.bf16.msra.mxu0 %v4553
        %5218 = vmatpush.bf16.msra.mxu0 %v4541
        %5219 = vmatpush.bf16.msra.mxu0 %v4529
        %5220 = vmatmul.bf16.gmra.mxu0 %v3246
        %v5221 = vpop.f32.mrf.mxu0
        %v5222 = vadd.f32 %v5209, %v5221
        %v5223 = vpop.f32.mrf.mxu0
        %5224 = vdwg.mxu0
        %5225 = vmatpush.bf16.msra.mxu0 %v4709
        %5226 = vmatpush.bf16.msra.mxu0 %v4697
        %5227 = vmatpush.bf16.msra.mxu0 %v4685
        %5228 = vmatpush.bf16.msra.mxu0 %v4673
        %5229 = vmatpush.bf16.msra.mxu0 %v4661
        %5230 = vmatpush.bf16.msra.mxu0 %v4649
        %5231 = vmatpush.bf16.msra.mxu0 %v4637
        %5232 = vmatpush.bf16.msra.mxu0 %v4625
        %5233 = vmatmul.bf16.gmra.mxu0 %v3247
        %v5234 = vpop.f32.mrf.mxu0
        %v5235 = vadd.f32 %v5222, %v5234
        %v5236 = vpop.f32.mrf.mxu0
        %5237 = vdwg.mxu0
        %5238 = vmatpush.bf16.msra.mxu0 %v4518
        %5239 = vmatpush.bf16.msra.mxu0 %v4506
        %5240 = vmatpush.bf16.msra.mxu0 %v4494
        %5241 = vmatpush.bf16.msra.mxu0 %v4482
        %5242 = vmatpush.bf16.msra.mxu0 %v4470
        %5243 = vmatpush.bf16.msra.mxu0 %v4458
        %5244 = vmatpush.bf16.msra.mxu0 %v4446
        %5245 = vmatpush.bf16.msra.mxu0 %v4434
        %5246 = vmatmul.bf16.gmra.mxu0 %v3245
        %v5247 = vpop.f32.mrf.mxu0
        %v5248 = vadd.f32 %v3546, %v5247
        %v5249 = vpop.f32.mrf.mxu0
        %5250 = vdwg.mxu0
        %5251 = vmatpush.bf16.msra.mxu0 %v4614
        %5252 = vmatpush.bf16.msra.mxu0 %v4602
        %5253 = vmatpush.bf16.msra.mxu0 %v4590
        %5254 = vmatpush.bf16.msra.mxu0 %v4578
        %5255 = vmatpush.bf16.msra.mxu0 %v4566
        %5256 = vmatpush.bf16.msra.mxu0 %v4554
        %5257 = vmatpush.bf16.msra.mxu0 %v4542
        %5258 = vmatpush.bf16.msra.mxu0 %v4530
        %5259 = vmatmul.bf16.gmra.mxu0 %v3246
        %v5260 = vpop.f32.mrf.mxu0
        %v5261 = vadd.f32 %v5248, %v5260
        %v5262 = vpop.f32.mrf.mxu0
        %5263 = vdwg.mxu0
        %5264 = vmatpush.bf16.msra.mxu0 %v4710
        %5265 = vmatpush.bf16.msra.mxu0 %v4698
        %5266 = vmatpush.bf16.msra.mxu0 %v4686
        %5267 = vmatpush.bf16.msra.mxu0 %v4674
        %5268 = vmatpush.bf16.msra.mxu0 %v4662
        %5269 = vmatpush.bf16.msra.mxu0 %v4650
        %5270 = vmatpush.bf16.msra.mxu0 %v4638
        %5271 = vmatpush.bf16.msra.mxu0 %v4626
        %5272 = vmatmul.bf16.gmra.mxu0 %v3247
        %v5273 = vpop.f32.mrf.mxu0
        %v5274 = vadd.f32 %v5261, %v5273
        %v5275 = vpop.f32.mrf.mxu0
        %5276 = vdwg.mxu0
        %5277 = vmatpush.bf16.msra.mxu0 %v4519
        %5278 = vmatpush.bf16.msra.mxu0 %v4507
        %5279 = vmatpush.bf16.msra.mxu0 %v4495
        %5280 = vmatpush.bf16.msra.mxu0 %v4483
        %5281 = vmatpush.bf16.msra.mxu0 %v4471
        %5282 = vmatpush.bf16.msra.mxu0 %v4459
        %5283 = vmatpush.bf16.msra.mxu0 %v4447
        %5284 = vmatpush.bf16.msra.mxu0 %v4435
        %5285 = vmatmul.bf16.gmra.mxu0 %v3245
        %v5286 = vpop.f32.mrf.mxu0
        %v5287 = vadd.f32 %v3547, %v5286
        %v5288 = vpop.f32.mrf.mxu0
        %5289 = vdwg.mxu0
        %5290 = vmatpush.bf16.msra.mxu0 %v4615
        %5291 = vmatpush.bf16.msra.mxu0 %v4603
        %5292 = vmatpush.bf16.msra.mxu0 %v4591
        %5293 = vmatpush.bf16.msra.mxu0 %v4579
        %5294 = vmatpush.bf16.msra.mxu0 %v4567
        %5295 = vmatpush.bf16.msra.mxu0 %v4555
        %5296 = vmatpush.bf16.msra.mxu0 %v4543
        %5297 = vmatpush.bf16.msra.mxu0 %v4531
        %5298 = vmatmul.bf16.gmra.mxu0 %v3246
        %v5299 = vpop.f32.mrf.mxu0
        %v5300 = vadd.f32 %v5287, %v5299
        %v5301 = vpop.f32.mrf.mxu0
        %5302 = vdwg.mxu0
        %5303 = vmatpush.bf16.msra.mxu0 %v4711
        %5304 = vmatpush.bf16.msra.mxu0 %v4699
        %5305 = vmatpush.bf16.msra.mxu0 %v4687
        %5306 = vmatpush.bf16.msra.mxu0 %v4675
        %5307 = vmatpush.bf16.msra.mxu0 %v4663
        %5308 = vmatpush.bf16.msra.mxu0 %v4651
        %5309 = vmatpush.bf16.msra.mxu0 %v4639
        %5310 = vmatpush.bf16.msra.mxu0 %v4627
        %5311 = vmatmul.bf16.gmra.mxu0 %v3247
        %v5312 = vpop.f32.mrf.mxu0
        %v5313 = vadd.f32 %v5300, %v5312
        %v5314 = vpop.f32.mrf.mxu0
        %5315 = vdwg.mxu0
        %5316 = vmatpush.bf16.msra.mxu0 %v4520
        %5317 = vmatpush.bf16.msra.mxu0 %v4508
        %5318 = vmatpush.bf16.msra.mxu0 %v4496
        %5319 = vmatpush.bf16.msra.mxu0 %v4484
        %5320 = vmatpush.bf16.msra.mxu0 %v4472
        %5321 = vmatpush.bf16.msra.mxu0 %v4460
        %5322 = vmatpush.bf16.msra.mxu0 %v4448
        %5323 = vmatpush.bf16.msra.mxu0 %v4436
        %5324 = vmatmul.bf16.gmra.mxu0 %v3245
        %v5325 = vpop.f32.mrf.mxu0
        %v5326 = vadd.f32 %v3548, %v5325
        %v5327 = vpop.f32.mrf.mxu0
        %5328 = vdwg.mxu0
        %5329 = vmatpush.bf16.msra.mxu0 %v4616
        %5330 = vmatpush.bf16.msra.mxu0 %v4604
        %5331 = vmatpush.bf16.msra.mxu0 %v4592
        %5332 = vmatpush.bf16.msra.mxu0 %v4580
        %5333 = vmatpush.bf16.msra.mxu0 %v4568
        %5334 = vmatpush.bf16.msra.mxu0 %v4556
        %5335 = vmatpush.bf16.msra.mxu0 %v4544
        %5336 = vmatpush.bf16.msra.mxu0 %v4532
        %5337 = vmatmul.bf16.gmra.mxu0 %v3246
        %v5338 = vpop.f32.mrf.mxu0
        %v5339 = vadd.f32 %v5326, %v5338
        %v5340 = vpop.f32.mrf.mxu0
        %5341 = vdwg.mxu0
        %5342 = vmatpush.bf16.msra.mxu0 %v4712
        %5343 = vmatpush.bf16.msra.mxu0 %v4700
        %5344 = vmatpush.bf16.msra.mxu0 %v4688
        %5345 = vmatpush.bf16.msra.mxu0 %v4676
        %5346 = vmatpush.bf16.msra.mxu0 %v4664
        %5347 = vmatpush.bf16.msra.mxu0 %v4652
        %5348 = vmatpush.bf16.msra.mxu0 %v4640
        %5349 = vmatpush.bf16.msra.mxu0 %v4628
        %5350 = vmatmul.bf16.gmra.mxu0 %v3247
        %v5351 = vpop.f32.mrf.mxu0
        %v5352 = vadd.f32 %v5339, %v5351
        %v5353 = vpop.f32.mrf.mxu0
        %5354 = vdwg.mxu0
        %5355 = vmatpush.bf16.msra.mxu0 %v4521
        %5356 = vmatpush.bf16.msra.mxu0 %v4509
        %5357 = vmatpush.bf16.msra.mxu0 %v4497
        %5358 = vmatpush.bf16.msra.mxu0 %v4485
        %5359 = vmatpush.bf16.msra.mxu0 %v4473
        %5360 = vmatpush.bf16.msra.mxu0 %v4461
        %5361 = vmatpush.bf16.msra.mxu0 %v4449
        %5362 = vmatpush.bf16.msra.mxu0 %v4437
        %5363 = vmatmul.bf16.gmra.mxu0 %v3245
        %v5364 = vpop.f32.mrf.mxu0
        %v5365 = vadd.f32 %v3549, %v5364
        %v5366 = vpop.f32.mrf.mxu0
        %5367 = vdwg.mxu0
        %5368 = vmatpush.bf16.msra.mxu0 %v4617
        %5369 = vmatpush.bf16.msra.mxu0 %v4605
        %5370 = vmatpush.bf16.msra.mxu0 %v4593
        %5371 = vmatpush.bf16.msra.mxu0 %v4581
        %5372 = vmatpush.bf16.msra.mxu0 %v4569
        %5373 = vmatpush.bf16.msra.mxu0 %v4557
        %5374 = vmatpush.bf16.msra.mxu0 %v4545
        %5375 = vmatpush.bf16.msra.mxu0 %v4533
        %5376 = vmatmul.bf16.gmra.mxu0 %v3246
        %v5377 = vpop.f32.mrf.mxu0
        %v5378 = vadd.f32 %v5365, %v5377
        %v5379 = vpop.f32.mrf.mxu0
        %5380 = vdwg.mxu0
        %5381 = vmatpush.bf16.msra.mxu0 %v4713
        %5382 = vmatpush.bf16.msra.mxu0 %v4701
        %5383 = vmatpush.bf16.msra.mxu0 %v4689
        %5384 = vmatpush.bf16.msra.mxu0 %v4677
        %5385 = vmatpush.bf16.msra.mxu0 %v4665
        %5386 = vmatpush.bf16.msra.mxu0 %v4653
        %5387 = vmatpush.bf16.msra.mxu0 %v4641
        %5388 = vmatpush.bf16.msra.mxu0 %v4629
        %5389 = vmatmul.bf16.gmra.mxu0 %v3247
        %v5390 = vpop.f32.mrf.mxu0
        %v5391 = vadd.f32 %v5378, %v5390
        %v5392 = vpop.f32.mrf.mxu0
        %5393 = vdwg.mxu0
        %5394 = vmatpush.bf16.msra.mxu0 %v4522
        %5395 = vmatpush.bf16.msra.mxu0 %v4510
        %5396 = vmatpush.bf16.msra.mxu0 %v4498
        %5397 = vmatpush.bf16.msra.mxu0 %v4486
        %5398 = vmatpush.bf16.msra.mxu0 %v4474
        %5399 = vmatpush.bf16.msra.mxu0 %v4462
        %5400 = vmatpush.bf16.msra.mxu0 %v4450
        %5401 = vmatpush.bf16.msra.mxu0 %v4438
        %5402 = vmatmul.bf16.gmra.mxu0 %v3245
        %v5403 = vpop.f32.mrf.mxu0
        %v5404 = vadd.f32 %v3550, %v5403
        %v5405 = vpop.f32.mrf.mxu0
        %5406 = vdwg.mxu0
        %5407 = vmatpush.bf16.msra.mxu0 %v4618
        %5408 = vmatpush.bf16.msra.mxu0 %v4606
        %5409 = vmatpush.bf16.msra.mxu0 %v4594
        %5410 = vmatpush.bf16.msra.mxu0 %v4582
        %5411 = vmatpush.bf16.msra.mxu0 %v4570
        %5412 = vmatpush.bf16.msra.mxu0 %v4558
        %5413 = vmatpush.bf16.msra.mxu0 %v4546
        %5414 = vmatpush.bf16.msra.mxu0 %v4534
        %5415 = vmatmul.bf16.gmra.mxu0 %v3246
        %v5416 = vpop.f32.mrf.mxu0
        %v5417 = vadd.f32 %v5404, %v5416
        %v5418 = vpop.f32.mrf.mxu0
        %5419 = vdwg.mxu0
        %5420 = vmatpush.bf16.msra.mxu0 %v4714
        %5421 = vmatpush.bf16.msra.mxu0 %v4702
        %5422 = vmatpush.bf16.msra.mxu0 %v4690
        %5423 = vmatpush.bf16.msra.mxu0 %v4678
        %5424 = vmatpush.bf16.msra.mxu0 %v4666
        %5425 = vmatpush.bf16.msra.mxu0 %v4654
        %5426 = vmatpush.bf16.msra.mxu0 %v4642
        %5427 = vmatpush.bf16.msra.mxu0 %v4630
        %5428 = vmatmul.bf16.gmra.mxu0 %v3247
        %v5429 = vpop.f32.mrf.mxu0
        %v5430 = vadd.f32 %v5417, %v5429
        %v5431 = vpop.f32.mrf.mxu0
        %5432 = vdwg.mxu0
        %5433 = vmatpush.bf16.msra.mxu0 %v4523
        %5434 = vmatpush.bf16.msra.mxu0 %v4511
        %5435 = vmatpush.bf16.msra.mxu0 %v4499
        %5436 = vmatpush.bf16.msra.mxu0 %v4487
        %5437 = vmatpush.bf16.msra.mxu0 %v4475
        %5438 = vmatpush.bf16.msra.mxu0 %v4463
        %5439 = vmatpush.bf16.msra.mxu0 %v4451
        %5440 = vmatpush.bf16.msra.mxu0 %v4439
        %5441 = vmatmul.bf16.gmra.mxu0 %v3245
        %v5442 = vpop.f32.mrf.mxu0
        %v5443 = vadd.f32 %v3551, %v5442
        %v5444 = vpop.f32.mrf.mxu0
        %5445 = vdwg.mxu0
        %5446 = vmatpush.bf16.msra.mxu0 %v4619
        %5447 = vmatpush.bf16.msra.mxu0 %v4607
        %5448 = vmatpush.bf16.msra.mxu0 %v4595
        %5449 = vmatpush.bf16.msra.mxu0 %v4583
        %5450 = vmatpush.bf16.msra.mxu0 %v4571
        %5451 = vmatpush.bf16.msra.mxu0 %v4559
        %5452 = vmatpush.bf16.msra.mxu0 %v4547
        %5453 = vmatpush.bf16.msra.mxu0 %v4535
        %5454 = vmatmul.bf16.gmra.mxu0 %v3246
        %v5455 = vpop.f32.mrf.mxu0
        %v5456 = vadd.f32 %v5443, %v5455
        %v5457 = vpop.f32.mrf.mxu0
        %5458 = vdwg.mxu0
        %5459 = vmatpush.bf16.msra.mxu0 %v4715
        %5460 = vmatpush.bf16.msra.mxu0 %v4703
        %5461 = vmatpush.bf16.msra.mxu0 %v4691
        %5462 = vmatpush.bf16.msra.mxu0 %v4679
        %5463 = vmatpush.bf16.msra.mxu0 %v4667
        %5464 = vmatpush.bf16.msra.mxu0 %v4655
        %5465 = vmatpush.bf16.msra.mxu0 %v4643
        %5466 = vmatpush.bf16.msra.mxu0 %v4631
        %5467 = vmatmul.bf16.gmra.mxu0 %v3247
        %v5468 = vpop.f32.mrf.mxu0
        %v5469 = vadd.f32 %v5456, %v5468
        %v5470 = vpop.f32.mrf.mxu0
        %5471 = vdwg.mxu0
        %v5472 = vmax.f32 %v5040, 0.0
        %v5473 = vmax.f32 %v5079, 0.0
        %v5474 = vmax.f32 %v5118, 0.0
        %v5475 = vmax.f32 %v5157, 0.0
        %v5476 = vmax.f32 %v5196, 0.0
        %v5477 = vmax.f32 %v5235, 0.0
        %v5478 = vmax.f32 %v5274, 0.0
        %v5479 = vmax.f32 %v5313, 0.0
        %v5480 = vmax.f32 %v5352, 0.0
        %v5481 = vmax.f32 %v5391, 0.0
        %v5482 = vmax.f32 %v5430, 0.0
        %v5483 = vmax.f32 %v5469, 0.0
        %v5484 = vpack.c.bf16 %v5472, %v5472
        %v5485 = vpack.c.bf16 %v5473, %v5473
        %v5486 = vpack.c.bf16 %v5474, %v5474
        %v5487 = vpack.c.bf16 %v5475, %v5475
        %v5488 = vpack.c.bf16 %v5476, %v5476
        %v5489 = vpack.c.bf16 %v5477, %v5477
        %v5490 = vpack.c.bf16 %v5478, %v5478
        %v5491 = vpack.c.bf16 %v5479, %v5479
        %v5492 = vpack.c.bf16 %v5480, %v5480
        %v5493 = vpack.c.bf16 %v5481, %v5481
        %v5494 = vpack.c.bf16 %v5482, %v5482
        %v5495 = vpack.c.bf16 %v5483, %v5483
        %v5496 = vld [vmem:[#allocation15] sm:$0xff]
        %v5497 = vld [vmem:[#allocation15 + $0x8] sm:$0xf]
        %v5498 = vld [vmem:[#allocation15 + $0xc] sm:$0xff]
        %v5499 = vld [vmem:[#allocation15 + $0x14] sm:$0xf]
        %v5500 = vld [vmem:[#allocation15 + $0x18] sm:$0xff]
        %v5501 = vld [vmem:[#allocation15 + $0x20] sm:$0xf]
        %v5502 = vld [vmem:[#allocation15 + $0x24] sm:$0xff]
        %v5503 = vld [vmem:[#allocation15 + $0x2c] sm:$0xf]
        %v5504 = vld [vmem:[#allocation15 + $0x30] sm:$0xff]
        %v5505 = vld [vmem:[#allocation15 + $0x38] sm:$0xf]
        %v5506 = vld [vmem:[#allocation15 + $0x3c] sm:$0xff]
        %v5507 = vld [vmem:[#allocation15 + $0x44] sm:$0xf]
        %v5508 = vld [vmem:[#allocation15 + $0x48] sm:$0xff]
        %v5509 = vld [vmem:[#allocation15 + $0x50] sm:$0xf]
        %v5510 = vld [vmem:[#allocation15 + $0x54] sm:$0xff]
        %v5511 = vld [vmem:[#allocation15 + $0x5c] sm:$0xf]
        %v5512 = vld [vmem:[#allocation15 + $0x60] sm:$0xff]
        %v5513 = vld [vmem:[#allocation15 + $0x68] sm:$0xf]
        %v5514 = vld [vmem:[#allocation15 + $0x6c] sm:$0xff]
        %v5515 = vld [vmem:[#allocation15 + $0x74] sm:$0xf]
        %v5516 = vld [vmem:[#allocation15 + $0x78] sm:$0xff]
        %v5517 = vld [vmem:[#allocation15 + $0x80] sm:$0xf]
        %v5518 = vld [vmem:[#allocation15 + $0x84] sm:$0xff]
        %v5519 = vld [vmem:[#allocation15 + $0x8c] sm:$0xf]
        %v5520 = vld [vmem:[#allocation15 + $0x90] sm:$0xff]
        %v5521 = vld [vmem:[#allocation15 + $0x98] sm:$0xf]
        %v5522 = vld [vmem:[#allocation15 + $0x9c] sm:$0xff]
        %v5523 = vld [vmem:[#allocation15 + $0xa4] sm:$0xf]
        %v5524 = vld [vmem:[#allocation15 + $0xa8] sm:$0xff]
        %v5525 = vld [vmem:[#allocation15 + $0xb0] sm:$0xf]
        %v5526 = vld [vmem:[#allocation15 + $0xb4] sm:$0xff]
        %v5527 = vld [vmem:[#allocation15 + $0xbc] sm:$0xf]
        %v5528 = vld [vmem:[#allocation15 + $0xc0] sm:$0xff]
        %v5529 = vld [vmem:[#allocation15 + $0xc8] sm:$0xf]
        %v5530 = vld [vmem:[#allocation15 + $0xcc] sm:$0xff]
        %v5531 = vld [vmem:[#allocation15 + $0xd4] sm:$0xf]
        %v5532 = vld [vmem:[#allocation15 + $0xd8] sm:$0xff]
        %v5533 = vld [vmem:[#allocation15 + $0xe0] sm:$0xf]
        %v5534 = vld [vmem:[#allocation15 + $0xe4] sm:$0xff]
        %v5535 = vld [vmem:[#allocation15 + $0xec] sm:$0xf]
        %v5536 = vld [vmem:[#allocation15 + $0xf0] sm:$0xff]
        %v5537 = vld [vmem:[#allocation15 + $0xf8] sm:$0xf]
        %v5538 = vld [vmem:[#allocation15 + $0xfc] sm:$0xff]
        %v5539 = vld [vmem:[#allocation15 + $0x104] sm:$0xf]
        %v5540 = vld [vmem:[#allocation15 + $0x108] sm:$0xff]
        %v5541 = vld [vmem:[#allocation15 + $0x110] sm:$0xf]
        %v5542 = vld [vmem:[#allocation15 + $0x114] sm:$0xff]
        %v5543 = vld [vmem:[#allocation15 + $0x11c] sm:$0xf]
        %v5544 = vld [vmem:[#allocation15 + $0x120] sm:$0xff]
        %v5545 = vld [vmem:[#allocation15 + $0x128] sm:$0xf]
        %v5546 = vld [vmem:[#allocation15 + $0x12c] sm:$0xff]
        %v5547 = vld [vmem:[#allocation15 + $0x134] sm:$0xf]
        %v5548 = vld [vmem:[#allocation15 + $0x138] sm:$0xff]
        %v5549 = vld [vmem:[#allocation15 + $0x140] sm:$0xf]
        %v5550 = vld [vmem:[#allocation15 + $0x144] sm:$0xff]
        %v5551 = vld [vmem:[#allocation15 + $0x14c] sm:$0xf]
        %v5552 = vld [vmem:[#allocation15 + $0x150] sm:$0xff]
        %v5553 = vld [vmem:[#allocation15 + $0x158] sm:$0xf]
        %v5554 = vld [vmem:[#allocation15 + $0x15c] sm:$0xff]
        %v5555 = vld [vmem:[#allocation15 + $0x164] sm:$0xf]
        %v5556 = vld [vmem:[#allocation15 + $0x168] sm:$0xff]
        %v5557 = vld [vmem:[#allocation15 + $0x170] sm:$0xf]
        %v5558 = vld [vmem:[#allocation15 + $0x174] sm:$0xff]
        %v5559 = vld [vmem:[#allocation15 + $0x17c] sm:$0xf]
        %v5560 = vld [vmem:[#allocation15 + $0x180] sm:$0xff]
        %v5561 = vld [vmem:[#allocation15 + $0x188] sm:$0xf]
        %v5562 = vld [vmem:[#allocation15 + $0x18c] sm:$0xff]
        %v5563 = vld [vmem:[#allocation15 + $0x194] sm:$0xf]
        %v5564 = vld [vmem:[#allocation15 + $0x198] sm:$0xff]
        %v5565 = vld [vmem:[#allocation15 + $0x1a0] sm:$0xf]
        %v5566 = vld [vmem:[#allocation15 + $0x1a4] sm:$0xff]
        %v5567 = vld [vmem:[#allocation15 + $0x1ac] sm:$0xf]
        %v5568 = vld [vmem:[#allocation15 + $0x1b0] sm:$0xff]
        %v5569 = vld [vmem:[#allocation15 + $0x1b8] sm:$0xf]
        %v5570 = vld [vmem:[#allocation15 + $0x1bc] sm:$0xff]
        %v5571 = vld [vmem:[#allocation15 + $0x1c4] sm:$0xf]
        %v5572 = vld [vmem:[#allocation15 + $0x1c8] sm:$0xff]
        %v5573 = vld [vmem:[#allocation15 + $0x1d0] sm:$0xf]
        %v5574 = vld [vmem:[#allocation15 + $0x1d4] sm:$0xff]
        %v5575 = vld [vmem:[#allocation15 + $0x1dc] sm:$0xf]
        %v5576 = vld [vmem:[#allocation15 + $0x1e0] sm:$0xff]
        %v5577 = vld [vmem:[#allocation15 + $0x1e8] sm:$0xf]
        %v5578 = vld [vmem:[#allocation15 + $0x1ec] sm:$0xff]
        %v5579 = vld [vmem:[#allocation15 + $0x1f4] sm:$0xf]
        %v5580 = vld [vmem:[#allocation15 + $0x1f8] sm:$0xff]
        %v5581 = vld [vmem:[#allocation15 + $0x200] sm:$0xf]
        %v5582 = vld [vmem:[#allocation15 + $0x204] sm:$0xff]
        %v5583 = vld [vmem:[#allocation15 + $0x20c] sm:$0xf]
        %v5584 = vld [vmem:[#allocation15 + $0x210] sm:$0xff]
        %v5585 = vld [vmem:[#allocation15 + $0x218] sm:$0xf]
        %v5586 = vld [vmem:[#allocation15 + $0x21c] sm:$0xff]
        %v5587 = vld [vmem:[#allocation15 + $0x224] sm:$0xf]
        %v5588 = vld [vmem:[#allocation15 + $0x228] sm:$0xff]
        %v5589 = vld [vmem:[#allocation15 + $0x230] sm:$0xf]
        %v5590 = vld [vmem:[#allocation15 + $0x234] sm:$0xff]
        %v5591 = vld [vmem:[#allocation15 + $0x23c] sm:$0xf]
        %v5592 = vld [vmem:[#allocation15 + $0x240] sm:$0xff]
        %v5593 = vld [vmem:[#allocation15 + $0x248] sm:$0xf]
        %v5594 = vld [vmem:[#allocation15 + $0x24c] sm:$0xff]
        %v5595 = vld [vmem:[#allocation15 + $0x254] sm:$0xf]
        %v5596 = vld [vmem:[#allocation15 + $0x258] sm:$0xff]
        %v5597 = vld [vmem:[#allocation15 + $0x260] sm:$0xf]
        %v5598 = vld [vmem:[#allocation15 + $0x264] sm:$0xff]
        %v5599 = vld [vmem:[#allocation15 + $0x26c] sm:$0xf]
        %v5600 = vld [vmem:[#allocation15 + $0x270] sm:$0xff]
        %v5601 = vld [vmem:[#allocation15 + $0x278] sm:$0xf]
        %v5602 = vld [vmem:[#allocation15 + $0x27c] sm:$0xff]
        %v5603 = vld [vmem:[#allocation15 + $0x284] sm:$0xf]
        %v5604 = vld [vmem:[#allocation15 + $0x288] sm:$0xff]
        %v5605 = vld [vmem:[#allocation15 + $0x290] sm:$0xf]
        %v5606 = vld [vmem:[#allocation15 + $0x294] sm:$0xff]
        %v5607 = vld [vmem:[#allocation15 + $0x29c] sm:$0xf]
        %v5608 = vld [vmem:[#allocation15 + $0x2a0] sm:$0xff]
        %v5609 = vld [vmem:[#allocation15 + $0x2a8] sm:$0xf]
        %v5610 = vld [vmem:[#allocation15 + $0x2ac] sm:$0xff]
        %v5611 = vld [vmem:[#allocation15 + $0x2b4] sm:$0xf]
        %v5612 = vld [vmem:[#allocation15 + $0x2b8] sm:$0xff]
        %v5613 = vld [vmem:[#allocation15 + $0x2c0] sm:$0xf]
        %v5614 = vld [vmem:[#allocation15 + $0x2c4] sm:$0xff]
        %v5615 = vld [vmem:[#allocation15 + $0x2cc] sm:$0xf]
        %v5616 = vld [vmem:[#allocation15 + $0x2d0] sm:$0xff]
        %v5617 = vld [vmem:[#allocation15 + $0x2d8] sm:$0xf]
        %v5618 = vld [vmem:[#allocation15 + $0x2dc] sm:$0xff]
        %v5619 = vld [vmem:[#allocation15 + $0x2e4] sm:$0xf]
        %v5620 = vld [vmem:[#allocation15 + $0x2e8] sm:$0xff]
        %v5621 = vld [vmem:[#allocation15 + $0x2f0] sm:$0xf]
        %v5622 = vld [vmem:[#allocation15 + $0x2f4] sm:$0xff]
        %v5623 = vld [vmem:[#allocation15 + $0x2fc] sm:$0xf]
        %v5624 = vld [vmem:[#allocation15 + $0x300] sm:$0xff]
        %v5625 = vld [vmem:[#allocation15 + $0x308] sm:$0xf]
        %v5626 = vld [vmem:[#allocation15 + $0x30c] sm:$0xff]
        %v5627 = vld [vmem:[#allocation15 + $0x314] sm:$0xf]
        %v5628 = vld [vmem:[#allocation15 + $0x318] sm:$0xff]
        %v5629 = vld [vmem:[#allocation15 + $0x320] sm:$0xf]
        %v5630 = vld [vmem:[#allocation15 + $0x324] sm:$0xff]
        %v5631 = vld [vmem:[#allocation15 + $0x32c] sm:$0xf]
        %v5632 = vld [vmem:[#allocation15 + $0x330] sm:$0xff]
        %v5633 = vld [vmem:[#allocation15 + $0x338] sm:$0xf]
        %v5634 = vld [vmem:[#allocation15 + $0x33c] sm:$0xff]
        %v5635 = vld [vmem:[#allocation15 + $0x344] sm:$0xf]
        %v5636 = vld [vmem:[#allocation15 + $0x348] sm:$0xff]
        %v5637 = vld [vmem:[#allocation15 + $0x350] sm:$0xf]
        %v5638 = vld [vmem:[#allocation15 + $0x354] sm:$0xff]
        %v5639 = vld [vmem:[#allocation15 + $0x35c] sm:$0xf]
        %v5640 = vld [vmem:[#allocation15 + $0x360] sm:$0xff]
        %v5641 = vld [vmem:[#allocation15 + $0x368] sm:$0xf]
        %v5642 = vld [vmem:[#allocation15 + $0x36c] sm:$0xff]
        %v5643 = vld [vmem:[#allocation15 + $0x374] sm:$0xf]
        %v5644 = vld [vmem:[#allocation15 + $0x378] sm:$0xff]
        %v5645 = vld [vmem:[#allocation15 + $0x380] sm:$0xf]
        %v5646 = vld [vmem:[#allocation15 + $0x384] sm:$0xff]
        %v5647 = vld [vmem:[#allocation15 + $0x38c] sm:$0xf]
        %v5648 = vld [vmem:[#allocation15 + $0x390] sm:$0xff]
        %v5649 = vld [vmem:[#allocation15 + $0x398] sm:$0xf]
        %v5650 = vld [vmem:[#allocation15 + $0x39c] sm:$0xff]
        %v5651 = vld [vmem:[#allocation15 + $0x3a4] sm:$0xf]
        %v5652 = vld [vmem:[#allocation15 + $0x3a8] sm:$0xff]
        %v5653 = vld [vmem:[#allocation15 + $0x3b0] sm:$0xf]
        %v5654 = vld [vmem:[#allocation15 + $0x3b4] sm:$0xff]
        %v5655 = vld [vmem:[#allocation15 + $0x3bc] sm:$0xf]
        %v5656 = vld [vmem:[#allocation15 + $0x3c0] sm:$0xff]
        %v5657 = vld [vmem:[#allocation15 + $0x3c8] sm:$0xf]
        %v5658 = vld [vmem:[#allocation15 + $0x3cc] sm:$0xff]
        %v5659 = vld [vmem:[#allocation15 + $0x3d4] sm:$0xf]
        %v5660 = vld [vmem:[#allocation15 + $0x3d8] sm:$0xff]
        %v5661 = vld [vmem:[#allocation15 + $0x3e0] sm:$0xf]
        %v5662 = vld [vmem:[#allocation15 + $0x3e4] sm:$0xff]
        %v5663 = vld [vmem:[#allocation15 + $0x3ec] sm:$0xf]
        %v5664 = vld [vmem:[#allocation15 + $0x3f0] sm:$0xff]
        %v5665 = vld [vmem:[#allocation15 + $0x3f8] sm:$0xf]
        %v5666 = vld [vmem:[#allocation15 + $0x3fc] sm:$0xff]
        %v5667 = vld [vmem:[#allocation15 + $0x404] sm:$0xf]
        %v5668 = vld [vmem:[#allocation15 + $0x408] sm:$0xff]
        %v5669 = vld [vmem:[#allocation15 + $0x410] sm:$0xf]
        %v5670 = vld [vmem:[#allocation15 + $0x414] sm:$0xff]
        %v5671 = vld [vmem:[#allocation15 + $0x41c] sm:$0xf]
        %v5672 = vld [vmem:[#allocation15 + $0x420] sm:$0xff]
        %v5673 = vld [vmem:[#allocation15 + $0x428] sm:$0xf]
        %v5674 = vld [vmem:[#allocation15 + $0x42c] sm:$0xff]
        %v5675 = vld [vmem:[#allocation15 + $0x434] sm:$0xf]
        %v5676 = vld [vmem:[#allocation15 + $0x438] sm:$0xff]
        %v5677 = vld [vmem:[#allocation15 + $0x440] sm:$0xf]
        %v5678 = vld [vmem:[#allocation15 + $0x444] sm:$0xff]
        %v5679 = vld [vmem:[#allocation15 + $0x44c] sm:$0xf]
        %v5680 = vld [vmem:[#allocation15 + $0x450] sm:$0xff]
        %v5681 = vld [vmem:[#allocation15 + $0x458] sm:$0xf]
        %v5682 = vld [vmem:[#allocation15 + $0x45c] sm:$0xff]
        %v5683 = vld [vmem:[#allocation15 + $0x464] sm:$0xf]
        %v5684 = vld [vmem:[#allocation15 + $0x468] sm:$0xff]
        %v5685 = vld [vmem:[#allocation15 + $0x470] sm:$0xf]
        %v5686 = vld [vmem:[#allocation15 + $0x474] sm:$0xff]
        %v5687 = vld [vmem:[#allocation15 + $0x47c] sm:$0xf]
        %v5688 = vld [vmem:[#allocation15 + $0x480] sm:$0xff]
        %v5689 = vld [vmem:[#allocation15 + $0x488] sm:$0xf]
        %v5690 = vld [vmem:[#allocation15 + $0x48c] sm:$0xff]
        %v5691 = vld [vmem:[#allocation15 + $0x494] sm:$0xf]
        %v5692 = vld [vmem:[#allocation15 + $0x498] sm:$0xff]
        %v5693 = vld [vmem:[#allocation15 + $0x4a0] sm:$0xf]
        %v5694 = vld [vmem:[#allocation15 + $0x4a4] sm:$0xff]
        %v5695 = vld [vmem:[#allocation15 + $0x4ac] sm:$0xf]
        %v5696 = vld [vmem:[#allocation15 + $0x4b0] sm:$0xff]
        %v5697 = vld [vmem:[#allocation15 + $0x4b8] sm:$0xf]
        %v5698 = vld [vmem:[#allocation15 + $0x4bc] sm:$0xff]
        %v5699 = vld [vmem:[#allocation15 + $0x4c4] sm:$0xf]
        %v5700 = vld [vmem:[#allocation15 + $0x4c8] sm:$0xff]
        %v5701 = vld [vmem:[#allocation15 + $0x4d0] sm:$0xf]
        %v5702 = vld [vmem:[#allocation15 + $0x4d4] sm:$0xff]
        %v5703 = vld [vmem:[#allocation15 + $0x4dc] sm:$0xf]
        %v5704 = vld [vmem:[#allocation15 + $0x4e0] sm:$0xff]
        %v5705 = vld [vmem:[#allocation15 + $0x4e8] sm:$0xf]
        %v5706 = vld [vmem:[#allocation15 + $0x4ec] sm:$0xff]
        %v5707 = vld [vmem:[#allocation15 + $0x4f4] sm:$0xf]
        %v5708 = vld [vmem:[#allocation15 + $0x4f8] sm:$0xff]
        %v5709 = vld [vmem:[#allocation15 + $0x500] sm:$0xf]
        %v5710 = vld [vmem:[#allocation15 + $0x504] sm:$0xff]
        %v5711 = vld [vmem:[#allocation15 + $0x50c] sm:$0xf]
        %v5712 = vld [vmem:[#allocation15 + $0x510] sm:$0xff]
        %v5713 = vld [vmem:[#allocation15 + $0x518] sm:$0xf]
        %v5714 = vld [vmem:[#allocation15 + $0x51c] sm:$0xff]
        %v5715 = vld [vmem:[#allocation15 + $0x524] sm:$0xf]
        %v5716 = vld [vmem:[#allocation15 + $0x528] sm:$0xff]
        %v5717 = vld [vmem:[#allocation15 + $0x530] sm:$0xf]
        %v5718 = vld [vmem:[#allocation15 + $0x534] sm:$0xff]
        %v5719 = vld [vmem:[#allocation15 + $0x53c] sm:$0xf]
        %v5720 = vld [vmem:[#allocation15 + $0x540] sm:$0xff]
        %v5721 = vld [vmem:[#allocation15 + $0x548] sm:$0xf]
        %v5722 = vld [vmem:[#allocation15 + $0x54c] sm:$0xff]
        %v5723 = vld [vmem:[#allocation15 + $0x554] sm:$0xf]
        %v5724 = vld [vmem:[#allocation15 + $0x558] sm:$0xff]
        %v5725 = vld [vmem:[#allocation15 + $0x560] sm:$0xf]
        %v5726 = vld [vmem:[#allocation15 + $0x564] sm:$0xff]
        %v5727 = vld [vmem:[#allocation15 + $0x56c] sm:$0xf]
        %v5728 = vld [vmem:[#allocation15 + $0x570] sm:$0xff]
        %v5729 = vld [vmem:[#allocation15 + $0x578] sm:$0xf]
        %v5730 = vld [vmem:[#allocation15 + $0x57c] sm:$0xff]
        %v5731 = vld [vmem:[#allocation15 + $0x584] sm:$0xf]
        %v5732 = vld [vmem:[#allocation15 + $0x588] sm:$0xff]
        %v5733 = vld [vmem:[#allocation15 + $0x590] sm:$0xf]
        %v5734 = vld [vmem:[#allocation15 + $0x594] sm:$0xff]
        %v5735 = vld [vmem:[#allocation15 + $0x59c] sm:$0xf]
        %v5736 = vld [vmem:[#allocation15 + $0x5a0] sm:$0xff]
        %v5737 = vld [vmem:[#allocation15 + $0x5a8] sm:$0xf]
        %v5738 = vld [vmem:[#allocation15 + $0x5ac] sm:$0xff]
        %v5739 = vld [vmem:[#allocation15 + $0x5b4] sm:$0xf]
        %v5740 = vld [vmem:[#allocation15 + $0x5b8] sm:$0xff]
        %v5741 = vld [vmem:[#allocation15 + $0x5c0] sm:$0xf]
        %v5742 = vld [vmem:[#allocation15 + $0x5c4] sm:$0xff]
        %v5743 = vld [vmem:[#allocation15 + $0x5cc] sm:$0xf]
        %v5744 = vld [vmem:[#allocation15 + $0x5d0] sm:$0xff]
        %v5745 = vld [vmem:[#allocation15 + $0x5d8] sm:$0xf]
        %v5746 = vld [vmem:[#allocation15 + $0x5dc] sm:$0xff]
        %v5747 = vld [vmem:[#allocation15 + $0x5e4] sm:$0xf]
        %v5748 = vld [vmem:[#allocation15 + $0x5e8] sm:$0xff]
        %v5749 = vld [vmem:[#allocation15 + $0x5f0] sm:$0xf]
        %v5750 = vld [vmem:[#allocation15 + $0x5f4] sm:$0xff]
        %v5751 = vld [vmem:[#allocation15 + $0x5fc] sm:$0xf]
        %v5752 = vld [vmem:[#allocation15 + $0x600] sm:$0xff]
        %v5753 = vld [vmem:[#allocation15 + $0x608] sm:$0xf]
        %v5754 = vld [vmem:[#allocation15 + $0x60c] sm:$0xff]
        %v5755 = vld [vmem:[#allocation15 + $0x614] sm:$0xf]
        %v5756 = vld [vmem:[#allocation15 + $0x618] sm:$0xff]
        %v5757 = vld [vmem:[#allocation15 + $0x620] sm:$0xf]
        %v5758 = vld [vmem:[#allocation15 + $0x624] sm:$0xff]
        %v5759 = vld [vmem:[#allocation15 + $0x62c] sm:$0xf]
        %v5760 = vld [vmem:[#allocation15 + $0x630] sm:$0xff]
        %v5761 = vld [vmem:[#allocation15 + $0x638] sm:$0xf]
        %v5762 = vld [vmem:[#allocation15 + $0x63c] sm:$0xff]
        %v5763 = vld [vmem:[#allocation15 + $0x644] sm:$0xf]
        %v5764 = vld [vmem:[#allocation15 + $0x648] sm:$0xff]
        %v5765 = vld [vmem:[#allocation15 + $0x650] sm:$0xf]
        %v5766 = vld [vmem:[#allocation15 + $0x654] sm:$0xff]
        %v5767 = vld [vmem:[#allocation15 + $0x65c] sm:$0xf]
        %v5768 = vld [vmem:[#allocation15 + $0x660] sm:$0xff]
        %v5769 = vld [vmem:[#allocation15 + $0x668] sm:$0xf]
        %v5770 = vld [vmem:[#allocation15 + $0x66c] sm:$0xff]
        %v5771 = vld [vmem:[#allocation15 + $0x674] sm:$0xf]
        %v5772 = vld [vmem:[#allocation15 + $0x678] sm:$0xff]
        %v5773 = vld [vmem:[#allocation15 + $0x680] sm:$0xf]
        %v5774 = vld [vmem:[#allocation15 + $0x684] sm:$0xff]
        %v5775 = vld [vmem:[#allocation15 + $0x68c] sm:$0xf]
        %v5776 = vld [vmem:[#allocation15 + $0x690] sm:$0xff]
        %v5777 = vld [vmem:[#allocation15 + $0x698] sm:$0xf]
        %v5778 = vld [vmem:[#allocation15 + $0x69c] sm:$0xff]
        %v5779 = vld [vmem:[#allocation15 + $0x6a4] sm:$0xf]
        %v5780 = vld [vmem:[#allocation15 + $0x6a8] sm:$0xff]
        %v5781 = vld [vmem:[#allocation15 + $0x6b0] sm:$0xf]
        %v5782 = vld [vmem:[#allocation15 + $0x6b4] sm:$0xff]
        %v5783 = vld [vmem:[#allocation15 + $0x6bc] sm:$0xf]
        %v5784 = vld [vmem:[#allocation15 + $0x6c0] sm:$0xff]
        %v5785 = vld [vmem:[#allocation15 + $0x6c8] sm:$0xf]
        %v5786 = vld [vmem:[#allocation15 + $0x6cc] sm:$0xff]
        %v5787 = vld [vmem:[#allocation15 + $0x6d4] sm:$0xf]
        %v5788 = vld [vmem:[#allocation15 + $0x6d8] sm:$0xff]
        %v5789 = vld [vmem:[#allocation15 + $0x6e0] sm:$0xf]
        %v5790 = vld [vmem:[#allocation15 + $0x6e4] sm:$0xff]
        %v5791 = vld [vmem:[#allocation15 + $0x6ec] sm:$0xf]
        %v5792 = vld [vmem:[#allocation15 + $0x6f0] sm:$0xff]
        %v5793 = vld [vmem:[#allocation15 + $0x6f8] sm:$0xf]
        %v5794 = vld [vmem:[#allocation15 + $0x6fc] sm:$0xff]
        %v5795 = vld [vmem:[#allocation15 + $0x704] sm:$0xf]
        %v5796 = vld [vmem:[#allocation15 + $0x708] sm:$0xff]
        %v5797 = vld [vmem:[#allocation15 + $0x710] sm:$0xf]
        %v5798 = vld [vmem:[#allocation15 + $0x714] sm:$0xff]
        %v5799 = vld [vmem:[#allocation15 + $0x71c] sm:$0xf]
        %v5800 = vld [vmem:[#allocation15 + $0x720] sm:$0xff]
        %v5801 = vld [vmem:[#allocation15 + $0x728] sm:$0xf]
        %v5802 = vld [vmem:[#allocation15 + $0x72c] sm:$0xff]
        %v5803 = vld [vmem:[#allocation15 + $0x734] sm:$0xf]
        %v5804 = vld [vmem:[#allocation15 + $0x738] sm:$0xff]
        %v5805 = vld [vmem:[#allocation15 + $0x740] sm:$0xf]
        %v5806 = vld [vmem:[#allocation15 + $0x744] sm:$0xff]
        %v5807 = vld [vmem:[#allocation15 + $0x74c] sm:$0xf]
        %v5808 = vld [vmem:[#allocation15 + $0x750] sm:$0xff]
        %v5809 = vld [vmem:[#allocation15 + $0x758] sm:$0xf]
        %v5810 = vld [vmem:[#allocation15 + $0x75c] sm:$0xff]
        %v5811 = vld [vmem:[#allocation15 + $0x764] sm:$0xf]
        %v5812 = vld [vmem:[#allocation15 + $0x768] sm:$0xff]
        %v5813 = vld [vmem:[#allocation15 + $0x770] sm:$0xf]
        %v5814 = vld [vmem:[#allocation15 + $0x774] sm:$0xff]
        %v5815 = vld [vmem:[#allocation15 + $0x77c] sm:$0xf]
        %v5816 = vld [vmem:[#allocation15 + $0x780] sm:$0xff]
        %v5817 = vld [vmem:[#allocation15 + $0x788] sm:$0xf]
        %v5818 = vld [vmem:[#allocation15 + $0x78c] sm:$0xff]
        %v5819 = vld [vmem:[#allocation15 + $0x794] sm:$0xf]
        %v5820 = vld [vmem:[#allocation15 + $0x798] sm:$0xff]
        %v5821 = vld [vmem:[#allocation15 + $0x7a0] sm:$0xf]
        %v5822 = vld [vmem:[#allocation15 + $0x7a4] sm:$0xff]
        %v5823 = vld [vmem:[#allocation15 + $0x7ac] sm:$0xf]
        %v5824 = vld [vmem:[#allocation15 + $0x7b0] sm:$0xff]
        %v5825 = vld [vmem:[#allocation15 + $0x7b8] sm:$0xf]
        %v5826 = vld [vmem:[#allocation15 + $0x7bc] sm:$0xff]
        %v5827 = vld [vmem:[#allocation15 + $0x7c4] sm:$0xf]
        %v5828 = vld [vmem:[#allocation15 + $0x7c8] sm:$0xff]
        %v5829 = vld [vmem:[#allocation15 + $0x7d0] sm:$0xf]
        %v5830 = vld [vmem:[#allocation15 + $0x7d4] sm:$0xff]
        %v5831 = vld [vmem:[#allocation15 + $0x7dc] sm:$0xf]
        %v5832 = vld [vmem:[#allocation15 + $0x7e0] sm:$0xff]
        %v5833 = vld [vmem:[#allocation15 + $0x7e8] sm:$0xf]
        %v5834 = vld [vmem:[#allocation15 + $0x7ec] sm:$0xff]
        %v5835 = vld [vmem:[#allocation15 + $0x7f4] sm:$0xf]
        %v5836 = vld [vmem:[#allocation15 + $0x7f8] sm:$0xff]
        %v5837 = vld [vmem:[#allocation15 + $0x800] sm:$0xf]
        %v5838 = vld [vmem:[#allocation15 + $0x804] sm:$0xff]
        %v5839 = vld [vmem:[#allocation15 + $0x80c] sm:$0xf]
        %v5840 = vld [vmem:[#allocation15 + $0x810] sm:$0xff]
        %v5841 = vld [vmem:[#allocation15 + $0x818] sm:$0xf]
        %v5842 = vld [vmem:[#allocation15 + $0x81c] sm:$0xff]
        %v5843 = vld [vmem:[#allocation15 + $0x824] sm:$0xf]
        %v5844 = vld [vmem:[#allocation15 + $0x828] sm:$0xff]
        %v5845 = vld [vmem:[#allocation15 + $0x830] sm:$0xf]
        %v5846 = vld [vmem:[#allocation15 + $0x834] sm:$0xff]
        %v5847 = vld [vmem:[#allocation15 + $0x83c] sm:$0xf]
        %v5848 = vld [vmem:[#allocation15 + $0x840] sm:$0xff]
        %v5849 = vld [vmem:[#allocation15 + $0x848] sm:$0xf]
        %v5850 = vld [vmem:[#allocation15 + $0x84c] sm:$0xff]
        %v5851 = vld [vmem:[#allocation15 + $0x854] sm:$0xf]
        %v5852 = vld [vmem:[#allocation15 + $0x858] sm:$0xff]
        %v5853 = vld [vmem:[#allocation15 + $0x860] sm:$0xf]
        %v5854 = vld [vmem:[#allocation15 + $0x864] sm:$0xff]
        %v5855 = vld [vmem:[#allocation15 + $0x86c] sm:$0xf]
        %v5856 = vld [vmem:[#allocation15 + $0x870] sm:$0xff]
        %v5857 = vld [vmem:[#allocation15 + $0x878] sm:$0xf]
        %v5858 = vld [vmem:[#allocation15 + $0x87c] sm:$0xff]
        %v5859 = vld [vmem:[#allocation15 + $0x884] sm:$0xf]
        %v5860 = vld [vmem:[#allocation15 + $0x888] sm:$0xff]
        %v5861 = vld [vmem:[#allocation15 + $0x890] sm:$0xf]
        %v5862 = vld [vmem:[#allocation15 + $0x894] sm:$0xff]
        %v5863 = vld [vmem:[#allocation15 + $0x89c] sm:$0xf]
        %v5864 = vld [vmem:[#allocation15 + $0x8a0] sm:$0xff]
        %v5865 = vld [vmem:[#allocation15 + $0x8a8] sm:$0xf]
        %v5866 = vld [vmem:[#allocation15 + $0x8ac] sm:$0xff]
        %v5867 = vld [vmem:[#allocation15 + $0x8b4] sm:$0xf]
        %v5868 = vld [vmem:[#allocation15 + $0x8b8] sm:$0xff]
        %v5869 = vld [vmem:[#allocation15 + $0x8c0] sm:$0xf]
        %v5870 = vld [vmem:[#allocation15 + $0x8c4] sm:$0xff]
        %v5871 = vld [vmem:[#allocation15 + $0x8cc] sm:$0xf]
        %v5872 = vld [vmem:[#allocation15 + $0x8d0] sm:$0xff]
        %v5873 = vld [vmem:[#allocation15 + $0x8d8] sm:$0xf]
        %v5874 = vld [vmem:[#allocation15 + $0x8dc] sm:$0xff]
        %v5875 = vld [vmem:[#allocation15 + $0x8e4] sm:$0xf]
        %v5876 = vld [vmem:[#allocation15 + $0x8e8] sm:$0xff]
        %v5877 = vld [vmem:[#allocation15 + $0x8f0] sm:$0xf]
        %v5878 = vld [vmem:[#allocation15 + $0x8f4] sm:$0xff]
        %v5879 = vld [vmem:[#allocation15 + $0x8fc] sm:$0xf]
        %v5880 = vld [vmem:[#allocation17] sm:$0x7]
        %v5882 = vperm.slane %v5880, 0
        %v5883 = vperm.slane %v5880, 1
        %v5884 = vperm.slane %v5880, 2
        %v6272 = vunpack.c.l.b16 %v5496
        %v6273 = vunpack.c.h.b16 %v5496
        %v6274 = vunpack.c.l.b16 %v5497
        %v6275 = vunpack.c.l.b16 %v5498
        %v6276 = vunpack.c.h.b16 %v5498
        %v6277 = vunpack.c.l.b16 %v5499
        %v6278 = vunpack.c.l.b16 %v5500
        %v6279 = vunpack.c.h.b16 %v5500
        %v6280 = vunpack.c.l.b16 %v5501
        %v6281 = vunpack.c.l.b16 %v5502
        %v6282 = vunpack.c.h.b16 %v5502
        %v6283 = vunpack.c.l.b16 %v5503
        %v6284 = vunpack.c.l.b16 %v5504
        %v6285 = vunpack.c.h.b16 %v5504
        %v6286 = vunpack.c.l.b16 %v5505
        %v6287 = vunpack.c.l.b16 %v5506
        %v6288 = vunpack.c.h.b16 %v5506
        %v6289 = vunpack.c.l.b16 %v5507
        %v6290 = vunpack.c.l.b16 %v5508
        %v6291 = vunpack.c.h.b16 %v5508
        %v6292 = vunpack.c.l.b16 %v5509
        %v6293 = vunpack.c.l.b16 %v5510
        %v6294 = vunpack.c.h.b16 %v5510
        %v6295 = vunpack.c.l.b16 %v5511
        %v6296 = vunpack.c.l.b16 %v5512
        %v6297 = vunpack.c.h.b16 %v5512
        %v6298 = vunpack.c.l.b16 %v5513
        %v6299 = vunpack.c.l.b16 %v5514
        %v6300 = vunpack.c.h.b16 %v5514
        %v6301 = vunpack.c.l.b16 %v5515
        %v6302 = vunpack.c.l.b16 %v5516
        %v6303 = vunpack.c.h.b16 %v5516
        %v6304 = vunpack.c.l.b16 %v5517
        %v6305 = vunpack.c.l.b16 %v5518
        %v6306 = vunpack.c.h.b16 %v5518
        %v6307 = vunpack.c.l.b16 %v5519
        %v6308 = vunpack.c.l.b16 %v5520
        %v6309 = vunpack.c.h.b16 %v5520
        %v6310 = vunpack.c.l.b16 %v5521
        %v6311 = vunpack.c.l.b16 %v5522
        %v6312 = vunpack.c.h.b16 %v5522
        %v6313 = vunpack.c.l.b16 %v5523
        %v6314 = vunpack.c.l.b16 %v5524
        %v6315 = vunpack.c.h.b16 %v5524
        %v6316 = vunpack.c.l.b16 %v5525
        %v6317 = vunpack.c.l.b16 %v5526
        %v6318 = vunpack.c.h.b16 %v5526
        %v6319 = vunpack.c.l.b16 %v5527
        %v6320 = vunpack.c.l.b16 %v5528
        %v6321 = vunpack.c.h.b16 %v5528
        %v6322 = vunpack.c.l.b16 %v5529
        %v6323 = vunpack.c.l.b16 %v5530
        %v6324 = vunpack.c.h.b16 %v5530
        %v6325 = vunpack.c.l.b16 %v5531
        %v6326 = vunpack.c.l.b16 %v5532
        %v6327 = vunpack.c.h.b16 %v5532
        %v6328 = vunpack.c.l.b16 %v5533
        %v6329 = vunpack.c.l.b16 %v5534
        %v6330 = vunpack.c.h.b16 %v5534
        %v6331 = vunpack.c.l.b16 %v5535
        %v6332 = vunpack.c.l.b16 %v5536
        %v6333 = vunpack.c.h.b16 %v5536
        %v6334 = vunpack.c.l.b16 %v5537
        %v6335 = vunpack.c.l.b16 %v5538
        %v6336 = vunpack.c.h.b16 %v5538
        %v6337 = vunpack.c.l.b16 %v5539
        %v6338 = vunpack.c.l.b16 %v5540
        %v6339 = vunpack.c.h.b16 %v5540
        %v6340 = vunpack.c.l.b16 %v5541
        %v6341 = vunpack.c.l.b16 %v5542
        %v6342 = vunpack.c.h.b16 %v5542
        %v6343 = vunpack.c.l.b16 %v5543
        %v6344 = vunpack.c.l.b16 %v5544
        %v6345 = vunpack.c.h.b16 %v5544
        %v6346 = vunpack.c.l.b16 %v5545
        %v6347 = vunpack.c.l.b16 %v5546
        %v6348 = vunpack.c.h.b16 %v5546
        %v6349 = vunpack.c.l.b16 %v5547
        %v6350 = vunpack.c.l.b16 %v5548
        %v6351 = vunpack.c.h.b16 %v5548
        %v6352 = vunpack.c.l.b16 %v5549
        %v6353 = vunpack.c.l.b16 %v5550
        %v6354 = vunpack.c.h.b16 %v5550
        %v6355 = vunpack.c.l.b16 %v5551
        %v6356 = vunpack.c.l.b16 %v5552
        %v6357 = vunpack.c.h.b16 %v5552
        %v6358 = vunpack.c.l.b16 %v5553
        %v6359 = vunpack.c.l.b16 %v5554
        %v6360 = vunpack.c.h.b16 %v5554
        %v6361 = vunpack.c.l.b16 %v5555
        %v6362 = vunpack.c.l.b16 %v5556
        %v6363 = vunpack.c.h.b16 %v5556
        %v6364 = vunpack.c.l.b16 %v5557
        %v6365 = vunpack.c.l.b16 %v5558
        %v6366 = vunpack.c.h.b16 %v5558
        %v6367 = vunpack.c.l.b16 %v5559
        %v6368 = vunpack.c.l.b16 %v5560
        %v6369 = vunpack.c.h.b16 %v5560
        %v6370 = vunpack.c.l.b16 %v5561
        %v6371 = vunpack.c.l.b16 %v5562
        %v6372 = vunpack.c.h.b16 %v5562
        %v6373 = vunpack.c.l.b16 %v5563
        %v6374 = vunpack.c.l.b16 %v5564
        %v6375 = vunpack.c.h.b16 %v5564
        %v6376 = vunpack.c.l.b16 %v5565
        %v6377 = vunpack.c.l.b16 %v5566
        %v6378 = vunpack.c.h.b16 %v5566
        %v6379 = vunpack.c.l.b16 %v5567
        %v6380 = vunpack.c.l.b16 %v5568
        %v6381 = vunpack.c.h.b16 %v5568
        %v6382 = vunpack.c.l.b16 %v5569
        %v6383 = vunpack.c.l.b16 %v5570
        %v6384 = vunpack.c.h.b16 %v5570
        %v6385 = vunpack.c.l.b16 %v5571
        %v6386 = vunpack.c.l.b16 %v5572
        %v6387 = vunpack.c.h.b16 %v5572
        %v6388 = vunpack.c.l.b16 %v5573
        %v6389 = vunpack.c.l.b16 %v5574
        %v6390 = vunpack.c.h.b16 %v5574
        %v6391 = vunpack.c.l.b16 %v5575
        %v6392 = vunpack.c.l.b16 %v5576
        %v6393 = vunpack.c.h.b16 %v5576
        %v6394 = vunpack.c.l.b16 %v5577
        %v6395 = vunpack.c.l.b16 %v5578
        %v6396 = vunpack.c.h.b16 %v5578
        %v6397 = vunpack.c.l.b16 %v5579
        %v6398 = vunpack.c.l.b16 %v5580
        %v6399 = vunpack.c.h.b16 %v5580
        %v6400 = vunpack.c.l.b16 %v5581
        %v6401 = vunpack.c.l.b16 %v5582
        %v6402 = vunpack.c.h.b16 %v5582
        %v6403 = vunpack.c.l.b16 %v5583
        %v6404 = vunpack.c.l.b16 %v5584
        %v6405 = vunpack.c.h.b16 %v5584
        %v6406 = vunpack.c.l.b16 %v5585
        %v6407 = vunpack.c.l.b16 %v5586
        %v6408 = vunpack.c.h.b16 %v5586
        %v6409 = vunpack.c.l.b16 %v5587
        %v6410 = vunpack.c.l.b16 %v5588
        %v6411 = vunpack.c.h.b16 %v5588
        %v6412 = vunpack.c.l.b16 %v5589
        %v6413 = vunpack.c.l.b16 %v5590
        %v6414 = vunpack.c.h.b16 %v5590
        %v6415 = vunpack.c.l.b16 %v5591
        %v6416 = vunpack.c.l.b16 %v5592
        %v6417 = vunpack.c.h.b16 %v5592
        %v6418 = vunpack.c.l.b16 %v5593
        %v6419 = vunpack.c.l.b16 %v5594
        %v6420 = vunpack.c.h.b16 %v5594
        %v6421 = vunpack.c.l.b16 %v5595
        %v6422 = vunpack.c.l.b16 %v5596
        %v6423 = vunpack.c.h.b16 %v5596
        %v6424 = vunpack.c.l.b16 %v5597
        %v6425 = vunpack.c.l.b16 %v5598
        %v6426 = vunpack.c.h.b16 %v5598
        %v6427 = vunpack.c.l.b16 %v5599
        %v6428 = vunpack.c.l.b16 %v5600
        %v6429 = vunpack.c.h.b16 %v5600
        %v6430 = vunpack.c.l.b16 %v5601
        %v6431 = vunpack.c.l.b16 %v5602
        %v6432 = vunpack.c.h.b16 %v5602
        %v6433 = vunpack.c.l.b16 %v5603
        %v6434 = vunpack.c.l.b16 %v5604
        %v6435 = vunpack.c.h.b16 %v5604
        %v6436 = vunpack.c.l.b16 %v5605
        %v6437 = vunpack.c.l.b16 %v5606
        %v6438 = vunpack.c.h.b16 %v5606
        %v6439 = vunpack.c.l.b16 %v5607
        %v6440 = vunpack.c.l.b16 %v5608
        %v6441 = vunpack.c.h.b16 %v5608
        %v6442 = vunpack.c.l.b16 %v5609
        %v6443 = vunpack.c.l.b16 %v5610
        %v6444 = vunpack.c.h.b16 %v5610
        %v6445 = vunpack.c.l.b16 %v5611
        %v6446 = vunpack.c.l.b16 %v5612
        %v6447 = vunpack.c.h.b16 %v5612
        %v6448 = vunpack.c.l.b16 %v5613
        %v6449 = vunpack.c.l.b16 %v5614
        %v6450 = vunpack.c.h.b16 %v5614
        %v6451 = vunpack.c.l.b16 %v5615
        %v6452 = vunpack.c.l.b16 %v5616
        %v6453 = vunpack.c.h.b16 %v5616
        %v6454 = vunpack.c.l.b16 %v5617
        %v6455 = vunpack.c.l.b16 %v5618
        %v6456 = vunpack.c.h.b16 %v5618
        %v6457 = vunpack.c.l.b16 %v5619
        %v6458 = vunpack.c.l.b16 %v5620
        %v6459 = vunpack.c.h.b16 %v5620
        %v6460 = vunpack.c.l.b16 %v5621
        %v6461 = vunpack.c.l.b16 %v5622
        %v6462 = vunpack.c.h.b16 %v5622
        %v6463 = vunpack.c.l.b16 %v5623
        %v6464 = vunpack.c.l.b16 %v5624
        %v6465 = vunpack.c.h.b16 %v5624
        %v6466 = vunpack.c.l.b16 %v5625
        %v6467 = vunpack.c.l.b16 %v5626
        %v6468 = vunpack.c.h.b16 %v5626
        %v6469 = vunpack.c.l.b16 %v5627
        %v6470 = vunpack.c.l.b16 %v5628
        %v6471 = vunpack.c.h.b16 %v5628
        %v6472 = vunpack.c.l.b16 %v5629
        %v6473 = vunpack.c.l.b16 %v5630
        %v6474 = vunpack.c.h.b16 %v5630
        %v6475 = vunpack.c.l.b16 %v5631
        %v6476 = vunpack.c.l.b16 %v5632
        %v6477 = vunpack.c.h.b16 %v5632
        %v6478 = vunpack.c.l.b16 %v5633
        %v6479 = vunpack.c.l.b16 %v5634
        %v6480 = vunpack.c.h.b16 %v5634
        %v6481 = vunpack.c.l.b16 %v5635
        %v6482 = vunpack.c.l.b16 %v5636
        %v6483 = vunpack.c.h.b16 %v5636
        %v6484 = vunpack.c.l.b16 %v5637
        %v6485 = vunpack.c.l.b16 %v5638
        %v6486 = vunpack.c.h.b16 %v5638
        %v6487 = vunpack.c.l.b16 %v5639
        %v6488 = vunpack.c.l.b16 %v5640
        %v6489 = vunpack.c.h.b16 %v5640
        %v6490 = vunpack.c.l.b16 %v5641
        %v6491 = vunpack.c.l.b16 %v5642
        %v6492 = vunpack.c.h.b16 %v5642
        %v6493 = vunpack.c.l.b16 %v5643
        %v6494 = vunpack.c.l.b16 %v5644
        %v6495 = vunpack.c.h.b16 %v5644
        %v6496 = vunpack.c.l.b16 %v5645
        %v6497 = vunpack.c.l.b16 %v5646
        %v6498 = vunpack.c.h.b16 %v5646
        %v6499 = vunpack.c.l.b16 %v5647
        %v6500 = vunpack.c.l.b16 %v5648
        %v6501 = vunpack.c.h.b16 %v5648
        %v6502 = vunpack.c.l.b16 %v5649
        %v6503 = vunpack.c.l.b16 %v5650
        %v6504 = vunpack.c.h.b16 %v5650
        %v6505 = vunpack.c.l.b16 %v5651
        %v6506 = vunpack.c.l.b16 %v5652
        %v6507 = vunpack.c.h.b16 %v5652
        %v6508 = vunpack.c.l.b16 %v5653
        %v6509 = vunpack.c.l.b16 %v5654
        %v6510 = vunpack.c.h.b16 %v5654
        %v6511 = vunpack.c.l.b16 %v5655
        %v6512 = vunpack.c.l.b16 %v5656
        %v6513 = vunpack.c.h.b16 %v5656
        %v6514 = vunpack.c.l.b16 %v5657
        %v6515 = vunpack.c.l.b16 %v5658
        %v6516 = vunpack.c.h.b16 %v5658
        %v6517 = vunpack.c.l.b16 %v5659
        %v6518 = vunpack.c.l.b16 %v5660
        %v6519 = vunpack.c.h.b16 %v5660
        %v6520 = vunpack.c.l.b16 %v5661
        %v6521 = vunpack.c.l.b16 %v5662
        %v6522 = vunpack.c.h.b16 %v5662
        %v6523 = vunpack.c.l.b16 %v5663
        %v6524 = vunpack.c.l.b16 %v5664
        %v6525 = vunpack.c.h.b16 %v5664
        %v6526 = vunpack.c.l.b16 %v5665
        %v6527 = vunpack.c.l.b16 %v5666
        %v6528 = vunpack.c.h.b16 %v5666
        %v6529 = vunpack.c.l.b16 %v5667
        %v6530 = vunpack.c.l.b16 %v5668
        %v6531 = vunpack.c.h.b16 %v5668
        %v6532 = vunpack.c.l.b16 %v5669
        %v6533 = vunpack.c.l.b16 %v5670
        %v6534 = vunpack.c.h.b16 %v5670
        %v6535 = vunpack.c.l.b16 %v5671
        %v6536 = vunpack.c.l.b16 %v5672
        %v6537 = vunpack.c.h.b16 %v5672
        %v6538 = vunpack.c.l.b16 %v5673
        %v6539 = vunpack.c.l.b16 %v5674
        %v6540 = vunpack.c.h.b16 %v5674
        %v6541 = vunpack.c.l.b16 %v5675
        %v6542 = vunpack.c.l.b16 %v5676
        %v6543 = vunpack.c.h.b16 %v5676
        %v6544 = vunpack.c.l.b16 %v5677
        %v6545 = vunpack.c.l.b16 %v5678
        %v6546 = vunpack.c.h.b16 %v5678
        %v6547 = vunpack.c.l.b16 %v5679
        %v6548 = vunpack.c.l.b16 %v5680
        %v6549 = vunpack.c.h.b16 %v5680
        %v6550 = vunpack.c.l.b16 %v5681
        %v6551 = vunpack.c.l.b16 %v5682
        %v6552 = vunpack.c.h.b16 %v5682
        %v6553 = vunpack.c.l.b16 %v5683
        %v6554 = vunpack.c.l.b16 %v5684
        %v6555 = vunpack.c.h.b16 %v5684
        %v6556 = vunpack.c.l.b16 %v5685
        %v6557 = vunpack.c.l.b16 %v5686
        %v6558 = vunpack.c.h.b16 %v5686
        %v6559 = vunpack.c.l.b16 %v5687
        %v6560 = vunpack.c.l.b16 %v5688
        %v6561 = vunpack.c.h.b16 %v5688
        %v6562 = vunpack.c.l.b16 %v5689
        %v6563 = vunpack.c.l.b16 %v5690
        %v6564 = vunpack.c.h.b16 %v5690
        %v6565 = vunpack.c.l.b16 %v5691
        %v6566 = vunpack.c.l.b16 %v5692
        %v6567 = vunpack.c.h.b16 %v5692
        %v6568 = vunpack.c.l.b16 %v5693
        %v6569 = vunpack.c.l.b16 %v5694
        %v6570 = vunpack.c.h.b16 %v5694
        %v6571 = vunpack.c.l.b16 %v5695
        %v6572 = vunpack.c.l.b16 %v5696
        %v6573 = vunpack.c.h.b16 %v5696
        %v6574 = vunpack.c.l.b16 %v5697
        %v6575 = vunpack.c.l.b16 %v5698
        %v6576 = vunpack.c.h.b16 %v5698
        %v6577 = vunpack.c.l.b16 %v5699
        %v6578 = vunpack.c.l.b16 %v5700
        %v6579 = vunpack.c.h.b16 %v5700
        %v6580 = vunpack.c.l.b16 %v5701
        %v6581 = vunpack.c.l.b16 %v5702
        %v6582 = vunpack.c.h.b16 %v5702
        %v6583 = vunpack.c.l.b16 %v5703
        %v6584 = vunpack.c.l.b16 %v5704
        %v6585 = vunpack.c.h.b16 %v5704
        %v6586 = vunpack.c.l.b16 %v5705
        %v6587 = vunpack.c.l.b16 %v5706
        %v6588 = vunpack.c.h.b16 %v5706
        %v6589 = vunpack.c.l.b16 %v5707
        %v6590 = vunpack.c.l.b16 %v5708
        %v6591 = vunpack.c.h.b16 %v5708
        %v6592 = vunpack.c.l.b16 %v5709
        %v6593 = vunpack.c.l.b16 %v5710
        %v6594 = vunpack.c.h.b16 %v5710
        %v6595 = vunpack.c.l.b16 %v5711
        %v6596 = vunpack.c.l.b16 %v5712
        %v6597 = vunpack.c.h.b16 %v5712
        %v6598 = vunpack.c.l.b16 %v5713
        %v6599 = vunpack.c.l.b16 %v5714
        %v6600 = vunpack.c.h.b16 %v5714
        %v6601 = vunpack.c.l.b16 %v5715
        %v6602 = vunpack.c.l.b16 %v5716
        %v6603 = vunpack.c.h.b16 %v5716
        %v6604 = vunpack.c.l.b16 %v5717
        %v6605 = vunpack.c.l.b16 %v5718
        %v6606 = vunpack.c.h.b16 %v5718
        %v6607 = vunpack.c.l.b16 %v5719
        %v6608 = vunpack.c.l.b16 %v5720
        %v6609 = vunpack.c.h.b16 %v5720
        %v6610 = vunpack.c.l.b16 %v5721
        %v6611 = vunpack.c.l.b16 %v5722
        %v6612 = vunpack.c.h.b16 %v5722
        %v6613 = vunpack.c.l.b16 %v5723
        %v6614 = vunpack.c.l.b16 %v5724
        %v6615 = vunpack.c.h.b16 %v5724
        %v6616 = vunpack.c.l.b16 %v5725
        %v6617 = vunpack.c.l.b16 %v5726
        %v6618 = vunpack.c.h.b16 %v5726
        %v6619 = vunpack.c.l.b16 %v5727
        %v6620 = vunpack.c.l.b16 %v5728
        %v6621 = vunpack.c.h.b16 %v5728
        %v6622 = vunpack.c.l.b16 %v5729
        %v6623 = vunpack.c.l.b16 %v5730
        %v6624 = vunpack.c.h.b16 %v5730
        %v6625 = vunpack.c.l.b16 %v5731
        %v6626 = vunpack.c.l.b16 %v5732
        %v6627 = vunpack.c.h.b16 %v5732
        %v6628 = vunpack.c.l.b16 %v5733
        %v6629 = vunpack.c.l.b16 %v5734
        %v6630 = vunpack.c.h.b16 %v5734
        %v6631 = vunpack.c.l.b16 %v5735
        %v6632 = vunpack.c.l.b16 %v5736
        %v6633 = vunpack.c.h.b16 %v5736
        %v6634 = vunpack.c.l.b16 %v5737
        %v6635 = vunpack.c.l.b16 %v5738
        %v6636 = vunpack.c.h.b16 %v5738
        %v6637 = vunpack.c.l.b16 %v5739
        %v6638 = vunpack.c.l.b16 %v5740
        %v6639 = vunpack.c.h.b16 %v5740
        %v6640 = vunpack.c.l.b16 %v5741
        %v6641 = vunpack.c.l.b16 %v5742
        %v6642 = vunpack.c.h.b16 %v5742
        %v6643 = vunpack.c.l.b16 %v5743
        %v6644 = vunpack.c.l.b16 %v5744
        %v6645 = vunpack.c.h.b16 %v5744
        %v6646 = vunpack.c.l.b16 %v5745
        %v6647 = vunpack.c.l.b16 %v5746
        %v6648 = vunpack.c.h.b16 %v5746
        %v6649 = vunpack.c.l.b16 %v5747
        %v6650 = vunpack.c.l.b16 %v5748
        %v6651 = vunpack.c.h.b16 %v5748
        %v6652 = vunpack.c.l.b16 %v5749
        %v6653 = vunpack.c.l.b16 %v5750
        %v6654 = vunpack.c.h.b16 %v5750
        %v6655 = vunpack.c.l.b16 %v5751
        %v6656 = vunpack.c.l.b16 %v5752
        %v6657 = vunpack.c.h.b16 %v5752
        %v6658 = vunpack.c.l.b16 %v5753
        %v6659 = vunpack.c.l.b16 %v5754
        %v6660 = vunpack.c.h.b16 %v5754
        %v6661 = vunpack.c.l.b16 %v5755
        %v6662 = vunpack.c.l.b16 %v5756
        %v6663 = vunpack.c.h.b16 %v5756
        %v6664 = vunpack.c.l.b16 %v5757
        %v6665 = vunpack.c.l.b16 %v5758
        %v6666 = vunpack.c.h.b16 %v5758
        %v6667 = vunpack.c.l.b16 %v5759
        %v6668 = vunpack.c.l.b16 %v5760
        %v6669 = vunpack.c.h.b16 %v5760
        %v6670 = vunpack.c.l.b16 %v5761
        %v6671 = vunpack.c.l.b16 %v5762
        %v6672 = vunpack.c.h.b16 %v5762
        %v6673 = vunpack.c.l.b16 %v5763
        %v6674 = vunpack.c.l.b16 %v5764
        %v6675 = vunpack.c.h.b16 %v5764
        %v6676 = vunpack.c.l.b16 %v5765
        %v6677 = vunpack.c.l.b16 %v5766
        %v6678 = vunpack.c.h.b16 %v5766
        %v6679 = vunpack.c.l.b16 %v5767
        %v6680 = vunpack.c.l.b16 %v5768
        %v6681 = vunpack.c.h.b16 %v5768
        %v6682 = vunpack.c.l.b16 %v5769
        %v6683 = vunpack.c.l.b16 %v5770
        %v6684 = vunpack.c.h.b16 %v5770
        %v6685 = vunpack.c.l.b16 %v5771
        %v6686 = vunpack.c.l.b16 %v5772
        %v6687 = vunpack.c.h.b16 %v5772
        %v6688 = vunpack.c.l.b16 %v5773
        %v6689 = vunpack.c.l.b16 %v5774
        %v6690 = vunpack.c.h.b16 %v5774
        %v6691 = vunpack.c.l.b16 %v5775
        %v6692 = vunpack.c.l.b16 %v5776
        %v6693 = vunpack.c.h.b16 %v5776
        %v6694 = vunpack.c.l.b16 %v5777
        %v6695 = vunpack.c.l.b16 %v5778
        %v6696 = vunpack.c.h.b16 %v5778
        %v6697 = vunpack.c.l.b16 %v5779
        %v6698 = vunpack.c.l.b16 %v5780
        %v6699 = vunpack.c.h.b16 %v5780
        %v6700 = vunpack.c.l.b16 %v5781
        %v6701 = vunpack.c.l.b16 %v5782
        %v6702 = vunpack.c.h.b16 %v5782
        %v6703 = vunpack.c.l.b16 %v5783
        %v6704 = vunpack.c.l.b16 %v5784
        %v6705 = vunpack.c.h.b16 %v5784
        %v6706 = vunpack.c.l.b16 %v5785
        %v6707 = vunpack.c.l.b16 %v5786
        %v6708 = vunpack.c.h.b16 %v5786
        %v6709 = vunpack.c.l.b16 %v5787
        %v6710 = vunpack.c.l.b16 %v5788
        %v6711 = vunpack.c.h.b16 %v5788
        %v6712 = vunpack.c.l.b16 %v5789
        %v6713 = vunpack.c.l.b16 %v5790
        %v6714 = vunpack.c.h.b16 %v5790
        %v6715 = vunpack.c.l.b16 %v5791
        %v6716 = vunpack.c.l.b16 %v5792
        %v6717 = vunpack.c.h.b16 %v5792
        %v6718 = vunpack.c.l.b16 %v5793
        %v6719 = vunpack.c.l.b16 %v5794
        %v6720 = vunpack.c.h.b16 %v5794
        %v6721 = vunpack.c.l.b16 %v5795
        %v6722 = vunpack.c.l.b16 %v5796
        %v6723 = vunpack.c.h.b16 %v5796
        %v6724 = vunpack.c.l.b16 %v5797
        %v6725 = vunpack.c.l.b16 %v5798
        %v6726 = vunpack.c.h.b16 %v5798
        %v6727 = vunpack.c.l.b16 %v5799
        %v6728 = vunpack.c.l.b16 %v5800
        %v6729 = vunpack.c.h.b16 %v5800
        %v6730 = vunpack.c.l.b16 %v5801
        %v6731 = vunpack.c.l.b16 %v5802
        %v6732 = vunpack.c.h.b16 %v5802
        %v6733 = vunpack.c.l.b16 %v5803
        %v6734 = vunpack.c.l.b16 %v5804
        %v6735 = vunpack.c.h.b16 %v5804
        %v6736 = vunpack.c.l.b16 %v5805
        %v6737 = vunpack.c.l.b16 %v5806
        %v6738 = vunpack.c.h.b16 %v5806
        %v6739 = vunpack.c.l.b16 %v5807
        %v6740 = vunpack.c.l.b16 %v5808
        %v6741 = vunpack.c.h.b16 %v5808
        %v6742 = vunpack.c.l.b16 %v5809
        %v6743 = vunpack.c.l.b16 %v5810
        %v6744 = vunpack.c.h.b16 %v5810
        %v6745 = vunpack.c.l.b16 %v5811
        %v6746 = vunpack.c.l.b16 %v5812
        %v6747 = vunpack.c.h.b16 %v5812
        %v6748 = vunpack.c.l.b16 %v5813
        %v6749 = vunpack.c.l.b16 %v5814
        %v6750 = vunpack.c.h.b16 %v5814
        %v6751 = vunpack.c.l.b16 %v5815
        %v6752 = vunpack.c.l.b16 %v5816
        %v6753 = vunpack.c.h.b16 %v5816
        %v6754 = vunpack.c.l.b16 %v5817
        %v6755 = vunpack.c.l.b16 %v5818
        %v6756 = vunpack.c.h.b16 %v5818
        %v6757 = vunpack.c.l.b16 %v5819
        %v6758 = vunpack.c.l.b16 %v5820
        %v6759 = vunpack.c.h.b16 %v5820
        %v6760 = vunpack.c.l.b16 %v5821
        %v6761 = vunpack.c.l.b16 %v5822
        %v6762 = vunpack.c.h.b16 %v5822
        %v6763 = vunpack.c.l.b16 %v5823
        %v6764 = vunpack.c.l.b16 %v5824
        %v6765 = vunpack.c.h.b16 %v5824
        %v6766 = vunpack.c.l.b16 %v5825
        %v6767 = vunpack.c.l.b16 %v5826
        %v6768 = vunpack.c.h.b16 %v5826
        %v6769 = vunpack.c.l.b16 %v5827
        %v6770 = vunpack.c.l.b16 %v5828
        %v6771 = vunpack.c.h.b16 %v5828
        %v6772 = vunpack.c.l.b16 %v5829
        %v6773 = vunpack.c.l.b16 %v5830
        %v6774 = vunpack.c.h.b16 %v5830
        %v6775 = vunpack.c.l.b16 %v5831
        %v6776 = vunpack.c.l.b16 %v5832
        %v6777 = vunpack.c.h.b16 %v5832
        %v6778 = vunpack.c.l.b16 %v5833
        %v6779 = vunpack.c.l.b16 %v5834
        %v6780 = vunpack.c.h.b16 %v5834
        %v6781 = vunpack.c.l.b16 %v5835
        %v6782 = vunpack.c.l.b16 %v5836
        %v6783 = vunpack.c.h.b16 %v5836
        %v6784 = vunpack.c.l.b16 %v5837
        %v6785 = vunpack.c.l.b16 %v5838
        %v6786 = vunpack.c.h.b16 %v5838
        %v6787 = vunpack.c.l.b16 %v5839
        %v6788 = vunpack.c.l.b16 %v5840
        %v6789 = vunpack.c.h.b16 %v5840
        %v6790 = vunpack.c.l.b16 %v5841
        %v6791 = vunpack.c.l.b16 %v5842
        %v6792 = vunpack.c.h.b16 %v5842
        %v6793 = vunpack.c.l.b16 %v5843
        %v6794 = vunpack.c.l.b16 %v5844
        %v6795 = vunpack.c.h.b16 %v5844
        %v6796 = vunpack.c.l.b16 %v5845
        %v6797 = vunpack.c.l.b16 %v5846
        %v6798 = vunpack.c.h.b16 %v5846
        %v6799 = vunpack.c.l.b16 %v5847
        %v6800 = vunpack.c.l.b16 %v5848
        %v6801 = vunpack.c.h.b16 %v5848
        %v6802 = vunpack.c.l.b16 %v5849
        %v6803 = vunpack.c.l.b16 %v5850
        %v6804 = vunpack.c.h.b16 %v5850
        %v6805 = vunpack.c.l.b16 %v5851
        %v6806 = vunpack.c.l.b16 %v5852
        %v6807 = vunpack.c.h.b16 %v5852
        %v6808 = vunpack.c.l.b16 %v5853
        %v6809 = vunpack.c.l.b16 %v5854
        %v6810 = vunpack.c.h.b16 %v5854
        %v6811 = vunpack.c.l.b16 %v5855
        %v6812 = vunpack.c.l.b16 %v5856
        %v6813 = vunpack.c.h.b16 %v5856
        %v6814 = vunpack.c.l.b16 %v5857
        %v6815 = vunpack.c.l.b16 %v5858
        %v6816 = vunpack.c.h.b16 %v5858
        %v6817 = vunpack.c.l.b16 %v5859
        %v6818 = vunpack.c.l.b16 %v5860
        %v6819 = vunpack.c.h.b16 %v5860
        %v6820 = vunpack.c.l.b16 %v5861
        %v6821 = vunpack.c.l.b16 %v5862
        %v6822 = vunpack.c.h.b16 %v5862
        %v6823 = vunpack.c.l.b16 %v5863
        %v6824 = vunpack.c.l.b16 %v5864
        %v6825 = vunpack.c.h.b16 %v5864
        %v6826 = vunpack.c.l.b16 %v5865
        %v6827 = vunpack.c.l.b16 %v5866
        %v6828 = vunpack.c.h.b16 %v5866
        %v6829 = vunpack.c.l.b16 %v5867
        %v6830 = vunpack.c.l.b16 %v5868
        %v6831 = vunpack.c.h.b16 %v5868
        %v6832 = vunpack.c.l.b16 %v5869
        %v6833 = vunpack.c.l.b16 %v5870
        %v6834 = vunpack.c.h.b16 %v5870
        %v6835 = vunpack.c.l.b16 %v5871
        %v6836 = vunpack.c.l.b16 %v5872
        %v6837 = vunpack.c.h.b16 %v5872
        %v6838 = vunpack.c.l.b16 %v5873
        %v6839 = vunpack.c.l.b16 %v5874
        %v6840 = vunpack.c.h.b16 %v5874
        %v6841 = vunpack.c.l.b16 %v5875
        %v6842 = vunpack.c.l.b16 %v5876
        %v6843 = vunpack.c.h.b16 %v5876
        %v6844 = vunpack.c.l.b16 %v5877
        %v6845 = vunpack.c.l.b16 %v5878
        %v6846 = vunpack.c.h.b16 %v5878
        %v6847 = vunpack.c.l.b16 %v5879
        %v6848 = vpack.c.b16 %v6275, %v6272
        %v6849 = vpack.c.b16 %v6276, %v6273
        %v6850 = vpack.c.b16 %v6277, %v6274
        %v6851 = vpack.c.b16 %v6281, %v6278
        %v6852 = vpack.c.b16 %v6282, %v6279
        %v6853 = vpack.c.b16 %v6283, %v6280
        %v6854 = vpack.c.b16 %v6287, %v6284
        %v6855 = vpack.c.b16 %v6288, %v6285
        %v6856 = vpack.c.b16 %v6289, %v6286
        %v6857 = vpack.c.b16 %v6293, %v6290
        %v6858 = vpack.c.b16 %v6294, %v6291
        %v6859 = vpack.c.b16 %v6295, %v6292
        %v6860 = vpack.c.b16 %v6299, %v6296
        %v6861 = vpack.c.b16 %v6300, %v6297
        %v6862 = vpack.c.b16 %v6301, %v6298
        %v6863 = vpack.c.b16 %v6305, %v6302
        %v6864 = vpack.c.b16 %v6306, %v6303
        %v6865 = vpack.c.b16 %v6307, %v6304
        %v6866 = vpack.c.b16 %v6311, %v6308
        %v6867 = vpack.c.b16 %v6312, %v6309
        %v6868 = vpack.c.b16 %v6313, %v6310
        %v6869 = vpack.c.b16 %v6317, %v6314
        %v6870 = vpack.c.b16 %v6318, %v6315
        %v6871 = vpack.c.b16 %v6319, %v6316
        %v6872 = vpack.c.b16 %v6323, %v6320
        %v6873 = vpack.c.b16 %v6324, %v6321
        %v6874 = vpack.c.b16 %v6325, %v6322
        %v6875 = vpack.c.b16 %v6329, %v6326
        %v6876 = vpack.c.b16 %v6330, %v6327
        %v6877 = vpack.c.b16 %v6331, %v6328
        %v6878 = vpack.c.b16 %v6335, %v6332
        %v6879 = vpack.c.b16 %v6336, %v6333
        %v6880 = vpack.c.b16 %v6337, %v6334
        %v6881 = vpack.c.b16 %v6341, %v6338
        %v6882 = vpack.c.b16 %v6342, %v6339
        %v6883 = vpack.c.b16 %v6343, %v6340
        %v6884 = vpack.c.b16 %v6347, %v6344
        %v6885 = vpack.c.b16 %v6348, %v6345
        %v6886 = vpack.c.b16 %v6349, %v6346
        %v6887 = vpack.c.b16 %v6353, %v6350
        %v6888 = vpack.c.b16 %v6354, %v6351
        %v6889 = vpack.c.b16 %v6355, %v6352
        %v6890 = vpack.c.b16 %v6359, %v6356
        %v6891 = vpack.c.b16 %v6360, %v6357
        %v6892 = vpack.c.b16 %v6361, %v6358
        %v6893 = vpack.c.b16 %v6365, %v6362
        %v6894 = vpack.c.b16 %v6366, %v6363
        %v6895 = vpack.c.b16 %v6367, %v6364
        %v6896 = vpack.c.b16 %v6371, %v6368
        %v6897 = vpack.c.b16 %v6372, %v6369
        %v6898 = vpack.c.b16 %v6373, %v6370
        %v6899 = vpack.c.b16 %v6377, %v6374
        %v6900 = vpack.c.b16 %v6378, %v6375
        %v6901 = vpack.c.b16 %v6379, %v6376
        %v6902 = vpack.c.b16 %v6383, %v6380
        %v6903 = vpack.c.b16 %v6384, %v6381
        %v6904 = vpack.c.b16 %v6385, %v6382
        %v6905 = vpack.c.b16 %v6389, %v6386
        %v6906 = vpack.c.b16 %v6390, %v6387
        %v6907 = vpack.c.b16 %v6391, %v6388
        %v6908 = vpack.c.b16 %v6395, %v6392
        %v6909 = vpack.c.b16 %v6396, %v6393
        %v6910 = vpack.c.b16 %v6397, %v6394
        %v6911 = vpack.c.b16 %v6401, %v6398
        %v6912 = vpack.c.b16 %v6402, %v6399
        %v6913 = vpack.c.b16 %v6403, %v6400
        %v6914 = vpack.c.b16 %v6407, %v6404
        %v6915 = vpack.c.b16 %v6408, %v6405
        %v6916 = vpack.c.b16 %v6409, %v6406
        %v6917 = vpack.c.b16 %v6413, %v6410
        %v6918 = vpack.c.b16 %v6414, %v6411
        %v6919 = vpack.c.b16 %v6415, %v6412
        %v6920 = vpack.c.b16 %v6419, %v6416
        %v6921 = vpack.c.b16 %v6420, %v6417
        %v6922 = vpack.c.b16 %v6421, %v6418
        %v6923 = vpack.c.b16 %v6425, %v6422
        %v6924 = vpack.c.b16 %v6426, %v6423
        %v6925 = vpack.c.b16 %v6427, %v6424
        %v6926 = vpack.c.b16 %v6431, %v6428
        %v6927 = vpack.c.b16 %v6432, %v6429
        %v6928 = vpack.c.b16 %v6433, %v6430
        %v6929 = vpack.c.b16 %v6437, %v6434
        %v6930 = vpack.c.b16 %v6438, %v6435
        %v6931 = vpack.c.b16 %v6439, %v6436
        %v6932 = vpack.c.b16 %v6443, %v6440
        %v6933 = vpack.c.b16 %v6444, %v6441
        %v6934 = vpack.c.b16 %v6445, %v6442
        %v6935 = vpack.c.b16 %v6449, %v6446
        %v6936 = vpack.c.b16 %v6450, %v6447
        %v6937 = vpack.c.b16 %v6451, %v6448
        %v6938 = vpack.c.b16 %v6455, %v6452
        %v6939 = vpack.c.b16 %v6456, %v6453
        %v6940 = vpack.c.b16 %v6457, %v6454
        %v6941 = vpack.c.b16 %v6461, %v6458
        %v6942 = vpack.c.b16 %v6462, %v6459
        %v6943 = vpack.c.b16 %v6463, %v6460
        %v6944 = vpack.c.b16 %v6467, %v6464
        %v6945 = vpack.c.b16 %v6468, %v6465
        %v6946 = vpack.c.b16 %v6469, %v6466
        %v6947 = vpack.c.b16 %v6473, %v6470
        %v6948 = vpack.c.b16 %v6474, %v6471
        %v6949 = vpack.c.b16 %v6475, %v6472
        %v6950 = vpack.c.b16 %v6479, %v6476
        %v6951 = vpack.c.b16 %v6480, %v6477
        %v6952 = vpack.c.b16 %v6481, %v6478
        %v6953 = vpack.c.b16 %v6485, %v6482
        %v6954 = vpack.c.b16 %v6486, %v6483
        %v6955 = vpack.c.b16 %v6487, %v6484
        %v6956 = vpack.c.b16 %v6491, %v6488
        %v6957 = vpack.c.b16 %v6492, %v6489
        %v6958 = vpack.c.b16 %v6493, %v6490
        %v6959 = vpack.c.b16 %v6497, %v6494
        %v6960 = vpack.c.b16 %v6498, %v6495
        %v6961 = vpack.c.b16 %v6499, %v6496
        %v6962 = vpack.c.b16 %v6503, %v6500
        %v6963 = vpack.c.b16 %v6504, %v6501
        %v6964 = vpack.c.b16 %v6505, %v6502
        %v6965 = vpack.c.b16 %v6509, %v6506
        %v6966 = vpack.c.b16 %v6510, %v6507
        %v6967 = vpack.c.b16 %v6511, %v6508
        %v6968 = vpack.c.b16 %v6515, %v6512
        %v6969 = vpack.c.b16 %v6516, %v6513
        %v6970 = vpack.c.b16 %v6517, %v6514
        %v6971 = vpack.c.b16 %v6521, %v6518
        %v6972 = vpack.c.b16 %v6522, %v6519
        %v6973 = vpack.c.b16 %v6523, %v6520
        %v6974 = vpack.c.b16 %v6527, %v6524
        %v6975 = vpack.c.b16 %v6528, %v6525
        %v6976 = vpack.c.b16 %v6529, %v6526
        %v6977 = vpack.c.b16 %v6533, %v6530
        %v6978 = vpack.c.b16 %v6534, %v6531
        %v6979 = vpack.c.b16 %v6535, %v6532
        %v6980 = vpack.c.b16 %v6539, %v6536
        %v6981 = vpack.c.b16 %v6540, %v6537
        %v6982 = vpack.c.b16 %v6541, %v6538
        %v6983 = vpack.c.b16 %v6545, %v6542
        %v6984 = vpack.c.b16 %v6546, %v6543
        %v6985 = vpack.c.b16 %v6547, %v6544
        %v6986 = vpack.c.b16 %v6551, %v6548
        %v6987 = vpack.c.b16 %v6552, %v6549
        %v6988 = vpack.c.b16 %v6553, %v6550
        %v6989 = vpack.c.b16 %v6557, %v6554
        %v6990 = vpack.c.b16 %v6558, %v6555
        %v6991 = vpack.c.b16 %v6559, %v6556
        %v6992 = vpack.c.b16 %v6563, %v6560
        %v6993 = vpack.c.b16 %v6564, %v6561
        %v6994 = vpack.c.b16 %v6565, %v6562
        %v6995 = vpack.c.b16 %v6569, %v6566
        %v6996 = vpack.c.b16 %v6570, %v6567
        %v6997 = vpack.c.b16 %v6571, %v6568
        %v6998 = vpack.c.b16 %v6575, %v6572
        %v6999 = vpack.c.b16 %v6576, %v6573
        %v7000 = vpack.c.b16 %v6577, %v6574
        %v7001 = vpack.c.b16 %v6581, %v6578
        %v7002 = vpack.c.b16 %v6582, %v6579
        %v7003 = vpack.c.b16 %v6583, %v6580
        %v7004 = vpack.c.b16 %v6587, %v6584
        %v7005 = vpack.c.b16 %v6588, %v6585
        %v7006 = vpack.c.b16 %v6589, %v6586
        %v7007 = vpack.c.b16 %v6593, %v6590
        %v7008 = vpack.c.b16 %v6594, %v6591
        %v7009 = vpack.c.b16 %v6595, %v6592
        %v7010 = vpack.c.b16 %v6599, %v6596
        %v7011 = vpack.c.b16 %v6600, %v6597
        %v7012 = vpack.c.b16 %v6601, %v6598
        %v7013 = vpack.c.b16 %v6605, %v6602
        %v7014 = vpack.c.b16 %v6606, %v6603
        %v7015 = vpack.c.b16 %v6607, %v6604
        %v7016 = vpack.c.b16 %v6611, %v6608
        %v7017 = vpack.c.b16 %v6612, %v6609
        %v7018 = vpack.c.b16 %v6613, %v6610
        %v7019 = vpack.c.b16 %v6617, %v6614
        %v7020 = vpack.c.b16 %v6618, %v6615
        %v7021 = vpack.c.b16 %v6619, %v6616
        %v7022 = vpack.c.b16 %v6623, %v6620
        %v7023 = vpack.c.b16 %v6624, %v6621
        %v7024 = vpack.c.b16 %v6625, %v6622
        %v7025 = vpack.c.b16 %v6629, %v6626
        %v7026 = vpack.c.b16 %v6630, %v6627
        %v7027 = vpack.c.b16 %v6631, %v6628
        %v7028 = vpack.c.b16 %v6635, %v6632
        %v7029 = vpack.c.b16 %v6636, %v6633
        %v7030 = vpack.c.b16 %v6637, %v6634
        %v7031 = vpack.c.b16 %v6641, %v6638
        %v7032 = vpack.c.b16 %v6642, %v6639
        %v7033 = vpack.c.b16 %v6643, %v6640
        %v7034 = vpack.c.b16 %v6647, %v6644
        %v7035 = vpack.c.b16 %v6648, %v6645
        %v7036 = vpack.c.b16 %v6649, %v6646
        %v7037 = vpack.c.b16 %v6653, %v6650
        %v7038 = vpack.c.b16 %v6654, %v6651
        %v7039 = vpack.c.b16 %v6655, %v6652
        %v7040 = vpack.c.b16 %v6659, %v6656
        %v7041 = vpack.c.b16 %v6660, %v6657
        %v7042 = vpack.c.b16 %v6661, %v6658
        %v7043 = vpack.c.b16 %v6665, %v6662
        %v7044 = vpack.c.b16 %v6666, %v6663
        %v7045 = vpack.c.b16 %v6667, %v6664
        %v7046 = vpack.c.b16 %v6671, %v6668
        %v7047 = vpack.c.b16 %v6672, %v6669
        %v7048 = vpack.c.b16 %v6673, %v6670
        %v7049 = vpack.c.b16 %v6677, %v6674
        %v7050 = vpack.c.b16 %v6678, %v6675
        %v7051 = vpack.c.b16 %v6679, %v6676
        %v7052 = vpack.c.b16 %v6683, %v6680
        %v7053 = vpack.c.b16 %v6684, %v6681
        %v7054 = vpack.c.b16 %v6685, %v6682
        %v7055 = vpack.c.b16 %v6689, %v6686
        %v7056 = vpack.c.b16 %v6690, %v6687
        %v7057 = vpack.c.b16 %v6691, %v6688
        %v7058 = vpack.c.b16 %v6695, %v6692
        %v7059 = vpack.c.b16 %v6696, %v6693
        %v7060 = vpack.c.b16 %v6697, %v6694
        %v7061 = vpack.c.b16 %v6701, %v6698
        %v7062 = vpack.c.b16 %v6702, %v6699
        %v7063 = vpack.c.b16 %v6703, %v6700
        %v7064 = vpack.c.b16 %v6707, %v6704
        %v7065 = vpack.c.b16 %v6708, %v6705
        %v7066 = vpack.c.b16 %v6709, %v6706
        %v7067 = vpack.c.b16 %v6713, %v6710
        %v7068 = vpack.c.b16 %v6714, %v6711
        %v7069 = vpack.c.b16 %v6715, %v6712
        %v7070 = vpack.c.b16 %v6719, %v6716
        %v7071 = vpack.c.b16 %v6720, %v6717
        %v7072 = vpack.c.b16 %v6721, %v6718
        %v7073 = vpack.c.b16 %v6725, %v6722
        %v7074 = vpack.c.b16 %v6726, %v6723
        %v7075 = vpack.c.b16 %v6727, %v6724
        %v7076 = vpack.c.b16 %v6731, %v6728
        %v7077 = vpack.c.b16 %v6732, %v6729
        %v7078 = vpack.c.b16 %v6733, %v6730
        %v7079 = vpack.c.b16 %v6737, %v6734
        %v7080 = vpack.c.b16 %v6738, %v6735
        %v7081 = vpack.c.b16 %v6739, %v6736
        %v7082 = vpack.c.b16 %v6743, %v6740
        %v7083 = vpack.c.b16 %v6744, %v6741
        %v7084 = vpack.c.b16 %v6745, %v6742
        %v7085 = vpack.c.b16 %v6749, %v6746
        %v7086 = vpack.c.b16 %v6750, %v6747
        %v7087 = vpack.c.b16 %v6751, %v6748
        %v7088 = vpack.c.b16 %v6755, %v6752
        %v7089 = vpack.c.b16 %v6756, %v6753
        %v7090 = vpack.c.b16 %v6757, %v6754
        %v7091 = vpack.c.b16 %v6761, %v6758
        %v7092 = vpack.c.b16 %v6762, %v6759
        %v7093 = vpack.c.b16 %v6763, %v6760
        %v7094 = vpack.c.b16 %v6767, %v6764
        %v7095 = vpack.c.b16 %v6768, %v6765
        %v7096 = vpack.c.b16 %v6769, %v6766
        %v7097 = vpack.c.b16 %v6773, %v6770
        %v7098 = vpack.c.b16 %v6774, %v6771
        %v7099 = vpack.c.b16 %v6775, %v6772
        %v7100 = vpack.c.b16 %v6779, %v6776
        %v7101 = vpack.c.b16 %v6780, %v6777
        %v7102 = vpack.c.b16 %v6781, %v6778
        %v7103 = vpack.c.b16 %v6785, %v6782
        %v7104 = vpack.c.b16 %v6786, %v6783
        %v7105 = vpack.c.b16 %v6787, %v6784
        %v7106 = vpack.c.b16 %v6791, %v6788
        %v7107 = vpack.c.b16 %v6792, %v6789
        %v7108 = vpack.c.b16 %v6793, %v6790
        %v7109 = vpack.c.b16 %v6797, %v6794
        %v7110 = vpack.c.b16 %v6798, %v6795
        %v7111 = vpack.c.b16 %v6799, %v6796
        %v7112 = vpack.c.b16 %v6803, %v6800
        %v7113 = vpack.c.b16 %v6804, %v6801
        %v7114 = vpack.c.b16 %v6805, %v6802
        %v7115 = vpack.c.b16 %v6809, %v6806
        %v7116 = vpack.c.b16 %v6810, %v6807
        %v7117 = vpack.c.b16 %v6811, %v6808
        %v7118 = vpack.c.b16 %v6815, %v6812
        %v7119 = vpack.c.b16 %v6816, %v6813
        %v7120 = vpack.c.b16 %v6817, %v6814
        %v7121 = vpack.c.b16 %v6821, %v6818
        %v7122 = vpack.c.b16 %v6822, %v6819
        %v7123 = vpack.c.b16 %v6823, %v6820
        %v7124 = vpack.c.b16 %v6827, %v6824
        %v7125 = vpack.c.b16 %v6828, %v6825
        %v7126 = vpack.c.b16 %v6829, %v6826
        %v7127 = vpack.c.b16 %v6833, %v6830
        %v7128 = vpack.c.b16 %v6834, %v6831
        %v7129 = vpack.c.b16 %v6835, %v6832
        %v7130 = vpack.c.b16 %v6839, %v6836
        %v7131 = vpack.c.b16 %v6840, %v6837
        %v7132 = vpack.c.b16 %v6841, %v6838
        %v7133 = vpack.c.b16 %v6845, %v6842
        %v7134 = vpack.c.b16 %v6846, %v6843
        %v7135 = vpack.c.b16 %v6847, %v6844
        %7424 = vmatpush.bf16.msra.mxu0 %v6869
        %7425 = vmatpush.bf16.msra.mxu0 %v6866
        %7426 = vmatpush.bf16.msra.mxu0 %v6863
        %7427 = vmatpush.bf16.msra.mxu0 %v6860
        %7428 = vmatpush.bf16.msra.mxu0 %v6857
        %7429 = vmatpush.bf16.msra.mxu0 %v6854
        %7430 = vmatpush.bf16.msra.mxu0 %v6851
        %7431 = vmatpush.bf16.msra.mxu0 %v6848
        %7432 = vmatmul.bf16.gmra.mxu0 %v5484
        %v7433 = vpop.f32.mrf.mxu0
        %v7434 = vadd.f32 %v5882, %v7433
        %v7435 = vpop.f32.mrf.mxu0
        %7436 = vdwg.mxu0
        %7437 = vmatpush.bf16.msra.mxu0 %v6893
        %7438 = vmatpush.bf16.msra.mxu0 %v6890
        %7439 = vmatpush.bf16.msra.mxu0 %v6887
        %7440 = vmatpush.bf16.msra.mxu0 %v6884
        %7441 = vmatpush.bf16.msra.mxu0 %v6881
        %7442 = vmatpush.bf16.msra.mxu0 %v6878
        %7443 = vmatpush.bf16.msra.mxu0 %v6875
        %7444 = vmatpush.bf16.msra.mxu0 %v6872
        %7445 = vmatmul.bf16.gmra.mxu0 %v5485
        %v7446 = vpop.f32.mrf.mxu0
        %v7447 = vadd.f32 %v7434, %v7446
        %v7448 = vpop.f32.mrf.mxu0
        %7449 = vdwg.mxu0
        %7450 = vmatpush.bf16.msra.mxu0 %v6917
        %7451 = vmatpush.bf16.msra.mxu0 %v6914
        %7452 = vmatpush.bf16.msra.mxu0 %v6911
        %7453 = vmatpush.bf16.msra.mxu0 %v6908
        %7454 = vmatpush.bf16.msra.mxu0 %v6905
        %7455 = vmatpush.bf16.msra.mxu0 %v6902
        %7456 = vmatpush.bf16.msra.mxu0 %v6899
        %7457 = vmatpush.bf16.msra.mxu0 %v6896
        %7458 = vmatmul.bf16.gmra.mxu0 %v5486
        %v7459 = vpop.f32.mrf.mxu0
        %v7460 = vadd.f32 %v7447, %v7459
        %v7461 = vpop.f32.mrf.mxu0
        %7462 = vdwg.mxu0
        %7463 = vmatpush.bf16.msra.mxu0 %v6941
        %7464 = vmatpush.bf16.msra.mxu0 %v6938
        %7465 = vmatpush.bf16.msra.mxu0 %v6935
        %7466 = vmatpush.bf16.msra.mxu0 %v6932
        %7467 = vmatpush.bf16.msra.mxu0 %v6929
        %7468 = vmatpush.bf16.msra.mxu0 %v6926
        %7469 = vmatpush.bf16.msra.mxu0 %v6923
        %7470 = vmatpush.bf16.msra.mxu0 %v6920
        %7471 = vmatmul.bf16.gmra.mxu0 %v5487
        %v7472 = vpop.f32.mrf.mxu0
        %v7473 = vadd.f32 %v7460, %v7472
        %v7474 = vpop.f32.mrf.mxu0
        %7475 = vdwg.mxu0
        %7476 = vmatpush.bf16.msra.mxu0 %v6965
        %7477 = vmatpush.bf16.msra.mxu0 %v6962
        %7478 = vmatpush.bf16.msra.mxu0 %v6959
        %7479 = vmatpush.bf16.msra.mxu0 %v6956
        %7480 = vmatpush.bf16.msra.mxu0 %v6953
        %7481 = vmatpush.bf16.msra.mxu0 %v6950
        %7482 = vmatpush.bf16.msra.mxu0 %v6947
        %7483 = vmatpush.bf16.msra.mxu0 %v6944
        %7484 = vmatmul.bf16.gmra.mxu0 %v5488
        %v7485 = vpop.f32.mrf.mxu0
        %v7486 = vadd.f32 %v7473, %v7485
        %v7487 = vpop.f32.mrf.mxu0
        %7488 = vdwg.mxu0
        %7489 = vmatpush.bf16.msra.mxu0 %v6989
        %7490 = vmatpush.bf16.msra.mxu0 %v6986
        %7491 = vmatpush.bf16.msra.mxu0 %v6983
        %7492 = vmatpush.bf16.msra.mxu0 %v6980
        %7493 = vmatpush.bf16.msra.mxu0 %v6977
        %7494 = vmatpush.bf16.msra.mxu0 %v6974
        %7495 = vmatpush.bf16.msra.mxu0 %v6971
        %7496 = vmatpush.bf16.msra.mxu0 %v6968
        %7497 = vmatmul.bf16.gmra.mxu0 %v5489
        %v7498 = vpop.f32.mrf.mxu0
        %v7499 = vadd.f32 %v7486, %v7498
        %v7500 = vpop.f32.mrf.mxu0
        %7501 = vdwg.mxu0
        %7502 = vmatpush.bf16.msra.mxu0 %v7013
        %7503 = vmatpush.bf16.msra.mxu0 %v7010
        %7504 = vmatpush.bf16.msra.mxu0 %v7007
        %7505 = vmatpush.bf16.msra.mxu0 %v7004
        %7506 = vmatpush.bf16.msra.mxu0 %v7001
        %7507 = vmatpush.bf16.msra.mxu0 %v6998
        %7508 = vmatpush.bf16.msra.mxu0 %v6995
        %7509 = vmatpush.bf16.msra.mxu0 %v6992
        %7510 = vmatmul.bf16.gmra.mxu0 %v5490
        %v7511 = vpop.f32.mrf.mxu0
        %v7512 = vadd.f32 %v7499, %v7511
        %v7513 = vpop.f32.mrf.mxu0
        %7514 = vdwg.mxu0
        %7515 = vmatpush.bf16.msra.mxu0 %v7037
        %7516 = vmatpush.bf16.msra.mxu0 %v7034
        %7517 = vmatpush.bf16.msra.mxu0 %v7031
        %7518 = vmatpush.bf16.msra.mxu0 %v7028
        %7519 = vmatpush.bf16.msra.mxu0 %v7025
        %7520 = vmatpush.bf16.msra.mxu0 %v7022
        %7521 = vmatpush.bf16.msra.mxu0 %v7019
        %7522 = vmatpush.bf16.msra.mxu0 %v7016
        %7523 = vmatmul.bf16.gmra.mxu0 %v5491
        %v7524 = vpop.f32.mrf.mxu0
        %v7525 = vadd.f32 %v7512, %v7524
        %v7526 = vpop.f32.mrf.mxu0
        %7527 = vdwg.mxu0
        %7528 = vmatpush.bf16.msra.mxu0 %v7061
        %7529 = vmatpush.bf16.msra.mxu0 %v7058
        %7530 = vmatpush.bf16.msra.mxu0 %v7055
        %7531 = vmatpush.bf16.msra.mxu0 %v7052
        %7532 = vmatpush.bf16.msra.mxu0 %v7049
        %7533 = vmatpush.bf16.msra.mxu0 %v7046
        %7534 = vmatpush.bf16.msra.mxu0 %v7043
        %7535 = vmatpush.bf16.msra.mxu0 %v7040
        %7536 = vmatmul.bf16.gmra.mxu0 %v5492
        %v7537 = vpop.f32.mrf.mxu0
        %v7538 = vadd.f32 %v7525, %v7537
        %v7539 = vpop.f32.mrf.mxu0
        %7540 = vdwg.mxu0
        %7541 = vmatpush.bf16.msra.mxu0 %v7085
        %7542 = vmatpush.bf16.msra.mxu0 %v7082
        %7543 = vmatpush.bf16.msra.mxu0 %v7079
        %7544 = vmatpush.bf16.msra.mxu0 %v7076
        %7545 = vmatpush.bf16.msra.mxu0 %v7073
        %7546 = vmatpush.bf16.msra.mxu0 %v7070
        %7547 = vmatpush.bf16.msra.mxu0 %v7067
        %7548 = vmatpush.bf16.msra.mxu0 %v7064
        %7549 = vmatmul.bf16.gmra.mxu0 %v5493
        %v7550 = vpop.f32.mrf.mxu0
        %v7551 = vadd.f32 %v7538, %v7550
        %v7552 = vpop.f32.mrf.mxu0
        %7553 = vdwg.mxu0
        %7554 = vmatpush.bf16.msra.mxu0 %v7109
        %7555 = vmatpush.bf16.msra.mxu0 %v7106
        %7556 = vmatpush.bf16.msra.mxu0 %v7103
        %7557 = vmatpush.bf16.msra.mxu0 %v7100
        %7558 = vmatpush.bf16.msra.mxu0 %v7097
        %7559 = vmatpush.bf16.msra.mxu0 %v7094
        %7560 = vmatpush.bf16.msra.mxu0 %v7091
        %7561 = vmatpush.bf16.msra.mxu0 %v7088
        %7562 = vmatmul.bf16.gmra.mxu0 %v5494
        %v7563 = vpop.f32.mrf.mxu0
        %v7564 = vadd.f32 %v7551, %v7563
        %v7565 = vpop.f32.mrf.mxu0
        %7566 = vdwg.mxu0
        %7567 = vmatpush.bf16.msra.mxu0 %v7133
        %7568 = vmatpush.bf16.msra.mxu0 %v7130
        %7569 = vmatpush.bf16.msra.mxu0 %v7127
        %7570 = vmatpush.bf16.msra.mxu0 %v7124
        %7571 = vmatpush.bf16.msra.mxu0 %v7121
        %7572 = vmatpush.bf16.msra.mxu0 %v7118
        %7573 = vmatpush.bf16.msra.mxu0 %v7115
        %7574 = vmatpush.bf16.msra.mxu0 %v7112
        %7575 = vmatmul.bf16.gmra.mxu0 %v5495
        %v7576 = vpop.f32.mrf.mxu0
        %v7577 = vadd.f32 %v7564, %v7576
        %v7578 = vpop.f32.mrf.mxu0
        %7579 = vdwg.mxu0
        %7580 = vmatpush.bf16.msra.mxu0 %v6870
        %7581 = vmatpush.bf16.msra.mxu0 %v6867
        %7582 = vmatpush.bf16.msra.mxu0 %v6864
        %7583 = vmatpush.bf16.msra.mxu0 %v6861
        %7584 = vmatpush.bf16.msra.mxu0 %v6858
        %7585 = vmatpush.bf16.msra.mxu0 %v6855
        %7586 = vmatpush.bf16.msra.mxu0 %v6852
        %7587 = vmatpush.bf16.msra.mxu0 %v6849
        %7588 = vmatmul.bf16.gmra.mxu0 %v5484
        %v7589 = vpop.f32.mrf.mxu0
        %v7590 = vadd.f32 %v5883, %v7589
        %v7591 = vpop.f32.mrf.mxu0
        %7592 = vdwg.mxu0
        %7593 = vmatpush.bf16.msra.mxu0 %v6894
        %7594 = vmatpush.bf16.msra.mxu0 %v6891
        %7595 = vmatpush.bf16.msra.mxu0 %v6888
        %7596 = vmatpush.bf16.msra.mxu0 %v6885
        %7597 = vmatpush.bf16.msra.mxu0 %v6882
        %7598 = vmatpush.bf16.msra.mxu0 %v6879
        %7599 = vmatpush.bf16.msra.mxu0 %v6876
        %7600 = vmatpush.bf16.msra.mxu0 %v6873
        %7601 = vmatmul.bf16.gmra.mxu0 %v5485
        %v7602 = vpop.f32.mrf.mxu0
        %v7603 = vadd.f32 %v7590, %v7602
        %v7604 = vpop.f32.mrf.mxu0
        %7605 = vdwg.mxu0
        %7606 = vmatpush.bf16.msra.mxu0 %v6918
        %7607 = vmatpush.bf16.msra.mxu0 %v6915
        %7608 = vmatpush.bf16.msra.mxu0 %v6912
        %7609 = vmatpush.bf16.msra.mxu0 %v6909
        %7610 = vmatpush.bf16.msra.mxu0 %v6906
        %7611 = vmatpush.bf16.msra.mxu0 %v6903
        %7612 = vmatpush.bf16.msra.mxu0 %v6900
        %7613 = vmatpush.bf16.msra.mxu0 %v6897
        %7614 = vmatmul.bf16.gmra.mxu0 %v5486
        %v7615 = vpop.f32.mrf.mxu0
        %v7616 = vadd.f32 %v7603, %v7615
        %v7617 = vpop.f32.mrf.mxu0
        %7618 = vdwg.mxu0
        %7619 = vmatpush.bf16.msra.mxu0 %v6942
        %7620 = vmatpush.bf16.msra.mxu0 %v6939
        %7621 = vmatpush.bf16.msra.mxu0 %v6936
        %7622 = vmatpush.bf16.msra.mxu0 %v6933
        %7623 = vmatpush.bf16.msra.mxu0 %v6930
        %7624 = vmatpush.bf16.msra.mxu0 %v6927
        %7625 = vmatpush.bf16.msra.mxu0 %v6924
        %7626 = vmatpush.bf16.msra.mxu0 %v6921
        %7627 = vmatmul.bf16.gmra.mxu0 %v5487
        %v7628 = vpop.f32.mrf.mxu0
        %v7629 = vadd.f32 %v7616, %v7628
        %v7630 = vpop.f32.mrf.mxu0
        %7631 = vdwg.mxu0
        %7632 = vmatpush.bf16.msra.mxu0 %v6966
        %7633 = vmatpush.bf16.msra.mxu0 %v6963
        %7634 = vmatpush.bf16.msra.mxu0 %v6960
        %7635 = vmatpush.bf16.msra.mxu0 %v6957
        %7636 = vmatpush.bf16.msra.mxu0 %v6954
        %7637 = vmatpush.bf16.msra.mxu0 %v6951
        %7638 = vmatpush.bf16.msra.mxu0 %v6948
        %7639 = vmatpush.bf16.msra.mxu0 %v6945
        %7640 = vmatmul.bf16.gmra.mxu0 %v5488
        %v7641 = vpop.f32.mrf.mxu0
        %v7642 = vadd.f32 %v7629, %v7641
        %v7643 = vpop.f32.mrf.mxu0
        %7644 = vdwg.mxu0
        %7645 = vmatpush.bf16.msra.mxu0 %v6990
        %7646 = vmatpush.bf16.msra.mxu0 %v6987
        %7647 = vmatpush.bf16.msra.mxu0 %v6984
        %7648 = vmatpush.bf16.msra.mxu0 %v6981
        %7649 = vmatpush.bf16.msra.mxu0 %v6978
        %7650 = vmatpush.bf16.msra.mxu0 %v6975
        %7651 = vmatpush.bf16.msra.mxu0 %v6972
        %7652 = vmatpush.bf16.msra.mxu0 %v6969
        %7653 = vmatmul.bf16.gmra.mxu0 %v5489
        %v7654 = vpop.f32.mrf.mxu0
        %v7655 = vadd.f32 %v7642, %v7654
        %v7656 = vpop.f32.mrf.mxu0
        %7657 = vdwg.mxu0
        %7658 = vmatpush.bf16.msra.mxu0 %v7014
        %7659 = vmatpush.bf16.msra.mxu0 %v7011
        %7660 = vmatpush.bf16.msra.mxu0 %v7008
        %7661 = vmatpush.bf16.msra.mxu0 %v7005
        %7662 = vmatpush.bf16.msra.mxu0 %v7002
        %7663 = vmatpush.bf16.msra.mxu0 %v6999
        %7664 = vmatpush.bf16.msra.mxu0 %v6996
        %7665 = vmatpush.bf16.msra.mxu0 %v6993
        %7666 = vmatmul.bf16.gmra.mxu0 %v5490
        %v7667 = vpop.f32.mrf.mxu0
        %v7668 = vadd.f32 %v7655, %v7667
        %v7669 = vpop.f32.mrf.mxu0
        %7670 = vdwg.mxu0
        %7671 = vmatpush.bf16.msra.mxu0 %v7038
        %7672 = vmatpush.bf16.msra.mxu0 %v7035
        %7673 = vmatpush.bf16.msra.mxu0 %v7032
        %7674 = vmatpush.bf16.msra.mxu0 %v7029
        %7675 = vmatpush.bf16.msra.mxu0 %v7026
        %7676 = vmatpush.bf16.msra.mxu0 %v7023
        %7677 = vmatpush.bf16.msra.mxu0 %v7020
        %7678 = vmatpush.bf16.msra.mxu0 %v7017
        %7679 = vmatmul.bf16.gmra.mxu0 %v5491
        %v7680 = vpop.f32.mrf.mxu0
        %v7681 = vadd.f32 %v7668, %v7680
        %v7682 = vpop.f32.mrf.mxu0
        %7683 = vdwg.mxu0
        %7684 = vmatpush.bf16.msra.mxu0 %v7062
        %7685 = vmatpush.bf16.msra.mxu0 %v7059
        %7686 = vmatpush.bf16.msra.mxu0 %v7056
        %7687 = vmatpush.bf16.msra.mxu0 %v7053
        %7688 = vmatpush.bf16.msra.mxu0 %v7050
        %7689 = vmatpush.bf16.msra.mxu0 %v7047
        %7690 = vmatpush.bf16.msra.mxu0 %v7044
        %7691 = vmatpush.bf16.msra.mxu0 %v7041
        %7692 = vmatmul.bf16.gmra.mxu0 %v5492
        %v7693 = vpop.f32.mrf.mxu0
        %v7694 = vadd.f32 %v7681, %v7693
        %v7695 = vpop.f32.mrf.mxu0
        %7696 = vdwg.mxu0
        %7697 = vmatpush.bf16.msra.mxu0 %v7086
        %7698 = vmatpush.bf16.msra.mxu0 %v7083
        %7699 = vmatpush.bf16.msra.mxu0 %v7080
        %7700 = vmatpush.bf16.msra.mxu0 %v7077
        %7701 = vmatpush.bf16.msra.mxu0 %v7074
        %7702 = vmatpush.bf16.msra.mxu0 %v7071
        %7703 = vmatpush.bf16.msra.mxu0 %v7068
        %7704 = vmatpush.bf16.msra.mxu0 %v7065
        %7705 = vmatmul.bf16.gmra.mxu0 %v5493
        %v7706 = vpop.f32.mrf.mxu0
        %v7707 = vadd.f32 %v7694, %v7706
        %v7708 = vpop.f32.mrf.mxu0
        %7709 = vdwg.mxu0
        %7710 = vmatpush.bf16.msra.mxu0 %v7110
        %7711 = vmatpush.bf16.msra.mxu0 %v7107
        %7712 = vmatpush.bf16.msra.mxu0 %v7104
        %7713 = vmatpush.bf16.msra.mxu0 %v7101
        %7714 = vmatpush.bf16.msra.mxu0 %v7098
        %7715 = vmatpush.bf16.msra.mxu0 %v7095
        %7716 = vmatpush.bf16.msra.mxu0 %v7092
        %7717 = vmatpush.bf16.msra.mxu0 %v7089
        %7718 = vmatmul.bf16.gmra.mxu0 %v5494
        %v7719 = vpop.f32.mrf.mxu0
        %v7720 = vadd.f32 %v7707, %v7719
        %v7721 = vpop.f32.mrf.mxu0
        %7722 = vdwg.mxu0
        %7723 = vmatpush.bf16.msra.mxu0 %v7134
        %7724 = vmatpush.bf16.msra.mxu0 %v7131
        %7725 = vmatpush.bf16.msra.mxu0 %v7128
        %7726 = vmatpush.bf16.msra.mxu0 %v7125
        %7727 = vmatpush.bf16.msra.mxu0 %v7122
        %7728 = vmatpush.bf16.msra.mxu0 %v7119
        %7729 = vmatpush.bf16.msra.mxu0 %v7116
        %7730 = vmatpush.bf16.msra.mxu0 %v7113
        %7731 = vmatmul.bf16.gmra.mxu0 %v5495
        %v7732 = vpop.f32.mrf.mxu0
        %v7733 = vadd.f32 %v7720, %v7732
        %v7734 = vpop.f32.mrf.mxu0
        %7735 = vdwg.mxu0
        %7736 = vmatpush.bf16.msra.mxu0 %v6871
        %7737 = vmatpush.bf16.msra.mxu0 %v6868
        %7738 = vmatpush.bf16.msra.mxu0 %v6865
        %7739 = vmatpush.bf16.msra.mxu0 %v6862
        %7740 = vmatpush.bf16.msra.mxu0 %v6859
        %7741 = vmatpush.bf16.msra.mxu0 %v6856
        %7742 = vmatpush.bf16.msra.mxu0 %v6853
        %7743 = vmatpush.bf16.msra.mxu0 %v6850
        %7744 = vmatmul.bf16.gmra.mxu0 %v5484
        %v7745 = vpop.f32.mrf.mxu0
        %v7746 = vadd.f32 %v5884, %v7745
        %v7747 = vpop.f32.mrf.mxu0
        %7748 = vdwg.mxu0
        %7749 = vmatpush.bf16.msra.mxu0 %v6895
        %7750 = vmatpush.bf16.msra.mxu0 %v6892
        %7751 = vmatpush.bf16.msra.mxu0 %v6889
        %7752 = vmatpush.bf16.msra.mxu0 %v6886
        %7753 = vmatpush.bf16.msra.mxu0 %v6883
        %7754 = vmatpush.bf16.msra.mxu0 %v6880
        %7755 = vmatpush.bf16.msra.mxu0 %v6877
        %7756 = vmatpush.bf16.msra.mxu0 %v6874
        %7757 = vmatmul.bf16.gmra.mxu0 %v5485
        %v7758 = vpop.f32.mrf.mxu0
        %v7759 = vadd.f32 %v7746, %v7758
        %v7760 = vpop.f32.mrf.mxu0
        %7761 = vdwg.mxu0
        %7762 = vmatpush.bf16.msra.mxu0 %v6919
        %7763 = vmatpush.bf16.msra.mxu0 %v6916
        %7764 = vmatpush.bf16.msra.mxu0 %v6913
        %7765 = vmatpush.bf16.msra.mxu0 %v6910
        %7766 = vmatpush.bf16.msra.mxu0 %v6907
        %7767 = vmatpush.bf16.msra.mxu0 %v6904
        %7768 = vmatpush.bf16.msra.mxu0 %v6901
        %7769 = vmatpush.bf16.msra.mxu0 %v6898
        %7770 = vmatmul.bf16.gmra.mxu0 %v5486
        %v7771 = vpop.f32.mrf.mxu0
        %v7772 = vadd.f32 %v7759, %v7771
        %v7773 = vpop.f32.mrf.mxu0
        %7774 = vdwg.mxu0
        %7775 = vmatpush.bf16.msra.mxu0 %v6943
        %7776 = vmatpush.bf16.msra.mxu0 %v6940
        %7777 = vmatpush.bf16.msra.mxu0 %v6937
        %7778 = vmatpush.bf16.msra.mxu0 %v6934
        %7779 = vmatpush.bf16.msra.mxu0 %v6931
        %7780 = vmatpush.bf16.msra.mxu0 %v6928
        %7781 = vmatpush.bf16.msra.mxu0 %v6925
        %7782 = vmatpush.bf16.msra.mxu0 %v6922
        %7783 = vmatmul.bf16.gmra.mxu0 %v5487
        %v7784 = vpop.f32.mrf.mxu0
        %v7785 = vadd.f32 %v7772, %v7784
        %v7786 = vpop.f32.mrf.mxu0
        %7787 = vdwg.mxu0
        %7788 = vmatpush.bf16.msra.mxu0 %v6967
        %7789 = vmatpush.bf16.msra.mxu0 %v6964
        %7790 = vmatpush.bf16.msra.mxu0 %v6961
        %7791 = vmatpush.bf16.msra.mxu0 %v6958
        %7792 = vmatpush.bf16.msra.mxu0 %v6955
        %7793 = vmatpush.bf16.msra.mxu0 %v6952
        %7794 = vmatpush.bf16.msra.mxu0 %v6949
        %7795 = vmatpush.bf16.msra.mxu0 %v6946
        %7796 = vmatmul.bf16.gmra.mxu0 %v5488
        %v7797 = vpop.f32.mrf.mxu0
        %v7798 = vadd.f32 %v7785, %v7797
        %v7799 = vpop.f32.mrf.mxu0
        %7800 = vdwg.mxu0
        %7801 = vmatpush.bf16.msra.mxu0 %v6991
        %7802 = vmatpush.bf16.msra.mxu0 %v6988
        %7803 = vmatpush.bf16.msra.mxu0 %v6985
        %7804 = vmatpush.bf16.msra.mxu0 %v6982
        %7805 = vmatpush.bf16.msra.mxu0 %v6979
        %7806 = vmatpush.bf16.msra.mxu0 %v6976
        %7807 = vmatpush.bf16.msra.mxu0 %v6973
        %7808 = vmatpush.bf16.msra.mxu0 %v6970
        %7809 = vmatmul.bf16.gmra.mxu0 %v5489
        %v7810 = vpop.f32.mrf.mxu0
        %v7811 = vadd.f32 %v7798, %v7810
        %v7812 = vpop.f32.mrf.mxu0
        %7813 = vdwg.mxu0
        %7814 = vmatpush.bf16.msra.mxu0 %v7015
        %7815 = vmatpush.bf16.msra.mxu0 %v7012
        %7816 = vmatpush.bf16.msra.mxu0 %v7009
        %7817 = vmatpush.bf16.msra.mxu0 %v7006
        %7818 = vmatpush.bf16.msra.mxu0 %v7003
        %7819 = vmatpush.bf16.msra.mxu0 %v7000
        %7820 = vmatpush.bf16.msra.mxu0 %v6997
        %7821 = vmatpush.bf16.msra.mxu0 %v6994
        %7822 = vmatmul.bf16.gmra.mxu0 %v5490
        %v7823 = vpop.f32.mrf.mxu0
        %v7824 = vadd.f32 %v7811, %v7823
        %v7825 = vpop.f32.mrf.mxu0
        %7826 = vdwg.mxu0
        %7827 = vmatpush.bf16.msra.mxu0 %v7039
        %7828 = vmatpush.bf16.msra.mxu0 %v7036
        %7829 = vmatpush.bf16.msra.mxu0 %v7033
        %7830 = vmatpush.bf16.msra.mxu0 %v7030
        %7831 = vmatpush.bf16.msra.mxu0 %v7027
        %7832 = vmatpush.bf16.msra.mxu0 %v7024
        %7833 = vmatpush.bf16.msra.mxu0 %v7021
        %7834 = vmatpush.bf16.msra.mxu0 %v7018
        %7835 = vmatmul.bf16.gmra.mxu0 %v5491
        %v7836 = vpop.f32.mrf.mxu0
        %v7837 = vadd.f32 %v7824, %v7836
        %v7838 = vpop.f32.mrf.mxu0
        %7839 = vdwg.mxu0
        %7840 = vmatpush.bf16.msra.mxu0 %v7063
        %7841 = vmatpush.bf16.msra.mxu0 %v7060
        %7842 = vmatpush.bf16.msra.mxu0 %v7057
        %7843 = vmatpush.bf16.msra.mxu0 %v7054
        %7844 = vmatpush.bf16.msra.mxu0 %v7051
        %7845 = vmatpush.bf16.msra.mxu0 %v7048
        %7846 = vmatpush.bf16.msra.mxu0 %v7045
        %7847 = vmatpush.bf16.msra.mxu0 %v7042
        %7848 = vmatmul.bf16.gmra.mxu0 %v5492
        %v7849 = vpop.f32.mrf.mxu0
        %v7850 = vadd.f32 %v7837, %v7849
        %v7851 = vpop.f32.mrf.mxu0
        %7852 = vdwg.mxu0
        %7853 = vmatpush.bf16.msra.mxu0 %v7087
        %7854 = vmatpush.bf16.msra.mxu0 %v7084
        %7855 = vmatpush.bf16.msra.mxu0 %v7081
        %7856 = vmatpush.bf16.msra.mxu0 %v7078
        %7857 = vmatpush.bf16.msra.mxu0 %v7075
        %7858 = vmatpush.bf16.msra.mxu0 %v7072
        %7859 = vmatpush.bf16.msra.mxu0 %v7069
        %7860 = vmatpush.bf16.msra.mxu0 %v7066
        %7861 = vmatmul.bf16.gmra.mxu0 %v5493
        %v7862 = vpop.f32.mrf.mxu0
        %v7863 = vadd.f32 %v7850, %v7862
        %v7864 = vpop.f32.mrf.mxu0
        %7865 = vdwg.mxu0
        %7866 = vmatpush.bf16.msra.mxu0 %v7111
        %7867 = vmatpush.bf16.msra.mxu0 %v7108
        %7868 = vmatpush.bf16.msra.mxu0 %v7105
        %7869 = vmatpush.bf16.msra.mxu0 %v7102
        %7870 = vmatpush.bf16.msra.mxu0 %v7099
        %7871 = vmatpush.bf16.msra.mxu0 %v7096
        %7872 = vmatpush.bf16.msra.mxu0 %v7093
        %7873 = vmatpush.bf16.msra.mxu0 %v7090
        %7874 = vmatmul.bf16.gmra.mxu0 %v5494
        %v7875 = vpop.f32.mrf.mxu0
        %v7876 = vadd.f32 %v7863, %v7875
        %v7877 = vpop.f32.mrf.mxu0
        %7878 = vdwg.mxu0
        %7879 = vmatpush.bf16.msra.mxu0 %v7135
        %7880 = vmatpush.bf16.msra.mxu0 %v7132
        %7881 = vmatpush.bf16.msra.mxu0 %v7129
        %7882 = vmatpush.bf16.msra.mxu0 %v7126
        %7883 = vmatpush.bf16.msra.mxu0 %v7123
        %7884 = vmatpush.bf16.msra.mxu0 %v7120
        %7885 = vmatpush.bf16.msra.mxu0 %v7117
        %7886 = vmatpush.bf16.msra.mxu0 %v7114
        %7887 = vmatmul.bf16.gmra.mxu0 %v5495
        %v7888 = vpop.f32.mrf.mxu0
        %v7889 = vadd.f32 %v7876, %v7888
        %v7890 = vpop.f32.mrf.mxu0
        %7891 = vdwg.mxu0
        %v7892 = vadd.f32 %v3212, %v7577
        %v7893 = vadd.f32 %v3213, %v7733
        %v7894 = vadd.f32 %v3214, %v7889
        %7895 = vst [vmem:[%s474] sm:$0xff] %v7892
        %7896 = vst [vmem:[%s474 + $0x8] sm:$0xff] %v7893
        %7897 = vst [vmem:[%s474 + $0x10] sm:$0xff] %v7894
        %s7898 = sand.u32 %s232, 1
        %s7899 = scalar_lea.sflag [#allocation5], %s7898
        %s7900 = sand.u32 %s232, 1
        %s7901 = smul.addr %s7900, 24
        %s7902 = scalar_lea.vmem [#allocation18], %s7901
        // Predicated region
        $region93: #{tpu_custom_call.1} parent=55 // pred_check
          %p7903 = pneg %p242
        $region94: #{tpu_custom_call.1} parent=55 // pred_check_branch
          %7905 = sbr.rel (%p7903) target = $region96
        $region95: #{tpu_custom_call.1} parent=55 // pred_region
          %7907 = vsyncadd %s7899, 0
          %s7908 = smul.addr %s30, 3
          %s7909 = smul.addr %s7908, 8
          %s7910 = scalar_lea.hbm %s9, %s7909
          %s7912 = sshll.u32 %s7902, 4
          %s7913 = int_to_ptr.vmem [resolvable:$true] %s7912
          %s7914 = sshll.u32 %s7910, 4
          %s7915 = int_to_ptr.hbm [resolvable:$true] %s7914
          %7917 = dma.vmem_to_hbm [thread:$0]  %s7913, 384, %s7915, %s7899
        $region96: #{tpu_custom_call.1} parent=55 // pred_fallthru
          _
      $region56: #{tpu_custom_call.1} parent=5 // pred_fallthru
        _
      %p7918 = scmp.le.s32.totalorder 2, %s25
      // Predicated region
      $region97: #{tpu_custom_call.1} parent=5 // pred_check
        %p7919 = pneg %p7918
      $region98: #{tpu_custom_call.1} parent=5 // pred_check_branch
        %7921 = sbr.rel (%p7919) target = $region100
      $region99: #{tpu_custom_call.1} parent=5 // pred_region
        %s7922 = ssub.s32 %s25, 2
        // Predicated region
        $region101: #{tpu_custom_call.1} parent=99 // pred_check
          %p7923 = pneg %p248
        $region102: #{tpu_custom_call.1} parent=99 // pred_check_branch
          %7925 = sbr.rel (%p7923) target = $region104
        $region103: #{tpu_custom_call.1} parent=99 // pred_region
          %s7926 = sand.u32 %s233, 1
          %s7927 = scalar_lea.sflag [#allocation5], %s7926
          %s7928 = sand.u32 %s233, 1
          %s7929 = smul.addr %s7928, 24
          %s7930 = scalar_lea.vmem [#allocation18], %s7929
          %7932 = dma.done %s7927, 384
        $region104: #{tpu_custom_call.1} parent=99 // pred_fallthru
          _
      $region100: #{tpu_custom_call.1} parent=5 // pred_fallthru
        _
    $region6: #{tpu_custom_call.1} parent=1 // loop_footer
      %s29 = sadd.s32 1, %s25
    $region7: #{tpu_custom_call.1} parent=1 // loop_footer_branch
      %24 = sbr.rel target = $region3
    $region8: #{tpu_custom_call.1} parent=1 // loop_exit
      _
    %7933 = vsyncpa [#allocation4], 1
    %s7934 = scalar_lea.sflag [#allocation4], 1
    %7935 = vsyncpa %s7934, 1
    %7936 = vsyncpa [#allocation7], 1
    %7937 = vsyncpa [#allocation10], 1
    %7938 = vsyncpa [#allocation13], 1
    %7939 = vsyncpa [#allocation16], 1
    %7940 = vsyncpa [#allocation5], 1
    %s7941 = scalar_lea.sflag [#allocation5], 1
    %7942 = vsyncpa %s7941, 1

</llo_original>
